<compile_context>
chip_gen: v7x
topology: tpu7x:2x2x1
jax: 0.10.0
libtpu: 0.0.40
codegen_flags: <defaults>
</compile_context>

<pallas_src>
import functools

import jax
import jax.numpy as jnp
from jax.experimental import pallas as pl
from jax.experimental.pallas import tpu as pltpu


def _round_up(x, m):
    return ((x + m - 1) // m) * m


# --------------------------------------------------------------------------------------
# Prologue kernel: fused [W_g | W_phi] 1x1x1 conv + (t, h) max-pool window.
# --------------------------------------------------------------------------------------
def _proj_pool_th_kernel(x_ref, w_ref, b_ref, o_ref):
    """x_ref: (s, s, W, C) channels-last window; w_ref: (C, 2*Ci_pad); b_ref: (1, 2*Ci_pad);
    o_ref: (W, 2*Ci_pad) = projection max-pooled over the (t, h) window."""
    cd = w_ref.dtype
    s_t, s_h = x_ref.shape[0], x_ref.shape[1]
    acc = None
    # Static unroll: s*s small MXU matmuls sharing the same resident RHS, VPU max-merge.
    for ti in range(s_t):
        for hi in range(s_h):
            r = jnp.dot(x_ref[ti, hi].astype(cd), w_ref[...],
                        preferred_element_type=jnp.float32)            # (W, 2*Ci_pad) f32
            acc = r if acc is None else jnp.maximum(acc, r)
    # max(v + b_const) == max(v) + b_const: add the bias once, after the window max.
    o_ref[...] = (acc + b_ref[...]).astype(o_ref.dtype)


# --------------------------------------------------------------------------------------
# Main attention kernel: theta proj -> flash attention (online softmax over key blocks)
# -> W proj (BN folded) + residual.
# --------------------------------------------------------------------------------------
def _attn_kernel(x_ref, phit_ref, g_ref, wt_ref, bt_ref, ww_ref, shift_ref, o_ref,
                 theta_sc, m_sc, l_sc, acc_sc, *,
                 ns_valid, tile_k, mask_keys, approx_recip):
    k = pl.program_id(2)
    nk = pl.num_programs(2)
    cd = wt_ref.dtype

    @pl.when(k == 0)
    def _init():
        # theta 1x1x1 conv, computed once per (batch, N-tile); kept in VMEM scratch.
        th = jnp.dot(x_ref[...].astype(cd), wt_ref[...],
                     preferred_element_type=jnp.float32) + bt_ref[...]
        theta_sc[...] = th.astype(cd)
        m_sc[...] = jnp.full(m_sc.shape, -jnp.inf, m_sc.dtype)
        l_sc[...] = jnp.zeros(l_sc.shape, l_sc.dtype)
        acc_sc[...] = jnp.zeros(acc_sc.shape, acc_sc.dtype)

    # scores for this key block: (tile_n, tile_k), lane-dense keys (phi pre-transposed).
    f = jnp.dot(theta_sc[...], phit_ref[...], preferred_element_type=jnp.float32)

    if mask_keys:  # only the last key block can contain padded columns
        col = k * tile_k + jax.lax.broadcasted_iota(jnp.int32, f.shape, 1)
        f = jnp.where(col < ns_valid, f, -jnp.inf)

    m_prev = m_sc[...]
    m_new = jnp.maximum(m_prev, jnp.max(f, axis=-1, keepdims=True))
    alpha = jnp.exp(m_prev - m_new)                                    # (tile_n, 1) f32
    # exp in compute dtype (bf16 EUP on v6e/v7x); row-sum accumulated in f32.
    p = jnp.exp((f - m_new).astype(cd))                                # (tile_n, tile_k)
    l_sc[...] = alpha * l_sc[...] + jnp.sum(p, axis=-1, keepdims=True, dtype=jnp.float32)
    acc_sc[...] = alpha * acc_sc[...] + jnp.dot(p, g_ref[...],
                                                preferred_element_type=jnp.float32)
    m_sc[...] = m_new

    @pl.when(k == nk - 1)
    def _finalize():
        y = acc_sc[...] * pl.reciprocal(l_sc[...], approx=approx_recip)   # deferred softmax norm
        wy = jnp.dot(y.astype(cd), ww_ref[...], preferred_element_type=jnp.float32)
        o_ref[...] = (wy + shift_ref[...] + x_ref[...]).astype(o_ref.dtype)


# --------------------------------------------------------------------------------------
# Wrapper
# --------------------------------------------------------------------------------------
def nonlocal_block_embedded_gaussian(x_ncdhw, params, *, sub_sample=4, tile_n=512,
                                     max_tile_k=512, compute_dtype=jnp.bfloat16,
                                     vmem_limit_bytes=None):
    B, C, T, H, W = x_ncdhw.shape
    Ci = params["w_theta"].shape[1]
    s = sub_sample
    assert T % s == 0 and H % s == 0 and W % s == 0, "spatial dims must be divisible by pool factor"
    N = T * H * W
    cd = jnp.dtype(compute_dtype)
    approx_recip = (cd != jnp.dtype(jnp.float32))   # exact reciprocal on the f32 check path

    # Per-chip VMEM budget (v5e/v6e: 128 MiB physical -> ~96 MiB; v7x: 64 MiB -> ~48 MiB).
    if vmem_limit_bytes is None:
        try:
            cap = int(pltpu.get_tpu_info().vmem_capacity_bytes)
        except Exception:  # not on a TPU / API shape changed
            cap = 64 * 1024 * 1024
        vmem_limit_bytes = int(min(int(0.75 * cap), 112 * 1024 * 1024))

    # Pad inter-channels to a lane / MXU-width multiple; padded channels are exact zeros.
    Ci_pad = _round_up(Ci, 128)

    # Channels-last view shared by both kernels (materialized once).
    x_cl = jnp.transpose(x_ncdhw, (0, 2, 3, 4, 1))          # (B, T, H, W, C)
    x_flat = x_cl.reshape(B, N, C)
    # TODO(synk): drop this transpose + the final one if the model can stay channels-last.

    Ts, Hs, Ws = T // s, H // s, W // s
    Ns = Ts * Hs * Ws

    def _pad_w(w):   # (C, Ci) -> (C, Ci_pad)
        return jnp.pad(w, ((0, 0), (0, Ci_pad - Ci)))

    def _pad_b(b):   # (Ci,) -> (Ci_pad,)
        return jnp.pad(b, (0, Ci_pad - Ci))

    # ---- prologue: fused g+phi projection + (t, h) max-pool ----
    K2 = 2 * Ci_pad
    w_gp = jnp.concatenate([_pad_w(params["w_g"]), _pad_w(params["w_phi"])], axis=1).astype(cd)
    b_gp = jnp.concatenate([_pad_b(params["b_g"]), _pad_b(params["b_phi"])], axis=0)
    b_gp = b_gp.reshape(1, K2).astype(jnp.float32)

    u = pl.pallas_call(
        _proj_pool_th_kernel,
        out_shape=jax.ShapeDtypeStruct((B, Ts, Hs, W, K2), cd),
        grid_spec=pltpu.PrefetchScalarGridSpec(
            num_scalar_prefetch=0,
            grid=(B, Ts, Hs),
            in_specs=[
                pl.BlockSpec((None, s, s, W, C), lambda b, t, h: (b, t, h, 0, 0)),
                pl.BlockSpec((C, K2), lambda b, t, h: (0, 0)),
                pl.BlockSpec((1, K2), lambda b, t, h: (0, 0)),
            ],
            out_specs=pl.BlockSpec((None, None, None, W, K2), lambda b, t, h: (b, t, h, 0, 0)),
        ),
        compiler_params=pltpu.CompilerParams(
            dimension_semantics=("parallel", "parallel", "parallel"),
            vmem_limit_bytes=vmem_limit_bytes),
    )(x_cl, w_gp, b_gp)

    # Tiny XLA epilogue on an N/(s*s)-sized tensor: finish the W-window pool, split g/phi,
    # pad keys to the key-tile size and pre-transpose phi (lane-dense keys in the kernel).
    u = u.reshape(B, Ts * Hs, Ws, s, K2).max(axis=3)         # (B, Ts*Hs, Ws, K2)
    u = u.reshape(B, Ns, K2)
    g_x = u[..., :Ci_pad]                                     # (B, Ns, Ci_pad)
    phi = u[..., Ci_pad:]                                     # (B, Ns, Ci_pad)

    max_tile_k = max(128, 128 * (int(max_tile_k) // 128))
    tile_k = min(_round_up(Ns, 128), max_tile_k)
    Ns_pad = _round_up(Ns, tile_k)
    if Ns_pad != Ns:
        g_x = jnp.pad(g_x, ((0, 0), (0, Ns_pad - Ns), (0, 0)))
        phi = jnp.pad(phi, ((0, 0), (0, Ns_pad - Ns), (0, 0)))
    phi_t = jnp.swapaxes(phi, 1, 2)                           # (B, Ci_pad, Ns_pad)

    # ---- theta / W weights: pad Ci, fold BatchNorm(eval) scale into W_w ----
    eps = 1e-5
    scale = params["bn_gamma"] * jax.lax.rsqrt(params["bn_var"] + eps)          # (C,)
    shift = (params["b_w"] - params["bn_mean"]) * scale + params["bn_beta"]     # (C,)
    w_theta = _pad_w(params["w_theta"]).astype(cd)                              # (C, Ci_pad)
    bt2d = _pad_b(params["b_theta"]).reshape(1, Ci_pad).astype(jnp.float32)
    w_w = jnp.pad(params["w_w"] * scale[None, :],
                  ((0, Ci_pad - Ci), (0, 0))).astype(cd)                        # (Ci_pad, C)
    shift2d = shift.reshape(1, C).astype(jnp.float32)

    # ---- tile_n: largest multiple of 8 that divides N and fits the VMEM budget ----
    item_x = jnp.dtype(x_flat.dtype).itemsize
    item_c = cd.itemsize

    def _tile_bytes(tn):
        io = 2 * 2 * tn * C * item_x                          # x in + out tiles, double-buffered
        kv = 2 * 2 * tile_k * Ci_pad * item_c                 # phi_t + g key blocks, double-buffered
        wts = 2 * 2 * C * Ci_pad * item_c + 8 * (Ci_pad + C)  # W_theta + W_w + biases
        scr = tn * Ci_pad * (item_c + 4) + 8 * tn             # theta(cd) + acc(f32) + m/l scratch
        mid = 2 * tn * tile_k * 4                             # f / p intermediates (slack)
        return io + kv + wts + scr + mid

    budget = int(0.9 * vmem_limit_bytes)
    tn = max(8, min(int(tile_n), N))
    tn -= tn % 8
    tn = max(tn, 8)
    while tn > 8 and (N % tn != 0 or _tile_bytes(tn) > budget):
        tn -= 8
    if N % tn != 0 or tn % 8 != 0:
        # TODO(synk): ragged-tail masking for N that is not a multiple of 8.
        raise ValueError(f"N={N} has no usable tile size <= {tile_n}")
    tile_n = tn

    nk = Ns_pad // tile_k
    mask_keys = (Ns_pad != Ns)
    grid = (B, N // tile_n, nk)   # batch / N-tiles 'parallel', key blocks innermost 'arbitrary'

    kernel = functools.partial(_attn_kernel, ns_valid=Ns, tile_k=tile_k,
                               mask_keys=mask_keys, approx_recip=approx_recip)

    out = pl.pallas_call(
        kernel,
        out_shape=jax.ShapeDtypeStruct((B, N, C), x_flat.dtype),
        grid_spec=pltpu.PrefetchScalarGridSpec(
            num_scalar_prefetch=0,
            grid=grid,
            in_specs=[
                pl.BlockSpec((None, tile_n, C), lambda b, i, k: (b, i, 0)),        # x (resident over k)
                pl.BlockSpec((None, Ci_pad, tile_k), lambda b, i, k: (b, 0, k)),   # phi^T key block
                pl.BlockSpec((None, tile_k, Ci_pad), lambda b, i, k: (b, k, 0)),   # g key block
                pl.BlockSpec((C, Ci_pad), lambda b, i, k: (0, 0)),                 # W_theta
                pl.BlockSpec((1, Ci_pad), lambda b, i, k: (0, 0)),                 # b_theta
                pl.BlockSpec((Ci_pad, C), lambda b, i, k: (0, 0)),                 # W_w * bn_scale
                pl.BlockSpec((1, C), lambda b, i, k: (0, 0)),                      # folded bias/BN shift
            ],
            out_specs=pl.BlockSpec((None, tile_n, C), lambda b, i, k: (b, i, 0)),
            scratch_shapes=[
                pltpu.VMEM((tile_n, Ci_pad), cd),           # theta
                pltpu.VMEM((tile_n, 1), jnp.float32),       # m (online softmax max)
                pltpu.VMEM((tile_n, 1), jnp.float32),       # l (online softmax sum)
                pltpu.VMEM((tile_n, Ci_pad), jnp.float32),  # acc
            ],
        ),
        compiler_params=pltpu.CompilerParams(
            dimension_semantics=("parallel", "parallel", "arbitrary"),
            vmem_limit_bytes=vmem_limit_bytes),
    )(x_flat, phi_t, g_x, w_theta, bt2d, w_w, shift2d)

    # (B, N, C) -> NCDHW
    return jnp.transpose(out.reshape(B, T, H, W, C), (0, 4, 1, 2, 3))


# --------------------------------------------------------------------------------------
# Pure-JAX (f32) replica of _embedded_gaussian for verification.
# Note: this module uses MaxPool3d(kernel_size=sub_sample_factor), i.e. it pools T, H
# and W all by the factor (default 4), which is what both the reference and the kernels do.
# --------------------------------------------------------------------------------------
def _reference(x_ncdhw, params, *, sub_sample=4):
    B, C, T, H, W = x_ncdhw.shape
    Ci = params["w_theta"].shape[1]
    s = sub_sample
    N = T * H * W
    xf = jnp.transpose(x_ncdhw, (0, 2, 3, 4, 1)).reshape(B, N, C)

    def proj_pool(w, b):
        v = (jnp.einsum("bnc,cd->bnd", xf, w) + b).reshape(B, T, H, W, Ci)
        v = v.reshape(B, T // s, s, H // s, s, W // s, s, Ci).max(axis=(2, 4, 6))
        return v.reshape(B, -1, Ci)

    g_x = proj_pool(params["w_g"], params["b_g"])
    phi_x = proj_pool(params["w_phi"], params["b_phi"])
    theta_x = jnp.einsum("bnc,cd->bnd", xf, params["w_theta"]) + params["b_theta"]
    f = jnp.einsum("bnd,bmd->bnm", theta_x, phi_x)
    f = jax.nn.softmax(f, axis=-1)
    y = jnp.einsum("bnm,bmd->bnd", f, g_x)
    wy = jnp.einsum("bnd,dc->bnc", y, params["w_w"]) + params["b_w"]
    eps = 1e-5
    wy = (wy - params["bn_mean"]) / jnp.sqrt(params["bn_var"] + eps) * params["bn_gamma"] \
         + params["bn_beta"]
    z = wy + xf
    return jnp.transpose(z.reshape(B, T, H, W, C), (0, 4, 1, 2, 3))


def _make_params(key, in_channels, inter_channels):
    """Deterministic parameters mirroring the module's __init__ shapes.
    Conv3d(k=1) weights (Cout, Cin, 1, 1, 1) stored transposed as (Cin, Cout);
    kaiming-normal (fan_in) std = sqrt(2 / Cin).  BatchNorm weight ~ N(1, 0.02), bias 0
    (weights_init_kaiming re-initializes the BN after the constant init)."""
    ks = jax.random.split(key, 10)
    C, Ci = in_channels, inter_channels

    def conv_w(k, cin, cout):
        return jax.random.normal(k, (cin, cout), jnp.float32) * jnp.sqrt(2.0 / cin)

    def conv_b(k, cin, cout):
        bound = 1.0 / jnp.sqrt(cin)
        return jax.random.uniform(k, (cout,), jnp.float32, -bound, bound)

    return {
        "w_g": conv_w(ks[0], C, Ci),     "b_g": conv_b(ks[1], C, Ci),
        "w_theta": conv_w(ks[2], C, Ci), "b_theta": conv_b(ks[3], C, Ci),
        "w_phi": conv_w(ks[4], C, Ci),   "b_phi": conv_b(ks[5], C, Ci),
        "w_w": conv_w(ks[6], Ci, C),     "b_w": conv_b(ks[7], Ci, C),
        "bn_gamma": 1.0 + 0.02 * jax.random.normal(ks[8], (C,), jnp.float32),
        "bn_beta": jnp.zeros((C,), jnp.float32),
        "bn_mean": jnp.zeros((C,), jnp.float32),
        "bn_var": jnp.ones((C,), jnp.float32),
    }


if __name__ == "__main__":
    key = jax.random.PRNGKey(0)
    kx, kp, kx2, kp2 = jax.random.split(key, 4)

    # --- Test 1: Ns=16 (not a lane multiple) -> exercises key padding + in-kernel masking,
    #             single key block; both f32 (tight) and bf16 (fast) compute paths.
    B, C, T, H, W = 2, 128, 4, 16, 16        # N = 1024, Ns = 16, Ci = 64 -> Ci_pad = 128
    Ci = C // 2
    x = jax.random.normal(kx, (B, C, T, H, W), jnp.float32)
    params = _make_params(kp, C, Ci)
    z_ref = _reference(x, params)

    run_f32 = jax.jit(functools.partial(nonlocal_block_embedded_gaussian,
                                        compute_dtype=jnp.float32))
    z32 = jax.block_until_ready(run_f32(x, params))
    assert z32.shape == x.shape
    assert jnp.allclose(z32, z_ref, atol=2e-3, rtol=2e-3), \
        float(jnp.max(jnp.abs(z32 - z_ref)))

    run_bf16 = jax.jit(functools.partial(nonlocal_block_embedded_gaussian,
                                         compute_dtype=jnp.bfloat16))
    z16 = jax.block_until_ready(run_bf16(x, params))
    rel_l2 = float(jnp.linalg.norm(z16 - z_ref) / (jnp.linalg.norm(z_ref) + 1e-12))
    # Loose bound: bf16 attention logits can slightly re-rank near-tied keys vs the f32
    # reference; the tight semantic validation is the f32 path above.
    assert rel_l2 < 1e-1, rel_l2

    # --- Test 2: multiple key blocks (flash path, nk=2), no key padding; f32 tight check.
    B2, C2, T2, H2, W2 = 1, 64, 8, 32, 64    # N = 16384, Ns = 256, tile_k forced to 128
    Ci2 = C2 // 2
    x2 = jax.random.normal(kx2, (B2, C2, T2, H2, W2), jnp.float32)
    params2 = _make_params(kp2, C2, Ci2)
    z2_ref = _reference(x2, params2)
    run2 = jax.jit(functools.partial(nonlocal_block_embedded_gaussian,
                                     compute_dtype=jnp.float32, max_tile_k=128))
    z2 = jax.block_until_ready(run2(x2, params2))
    assert jnp.allclose(z2, z2_ref, atol=2e-3, rtol=2e-3), \
        float(jnp.max(jnp.abs(z2 - z2_ref)))

    print("KERNEL_OK")
</pallas_src>

<mosaic_0001>
module attributes {stable_mosaic.version = 11 : i64} {
  func.func @_proj_pool_th_kernel(%arg0: i32, %arg1: i32, %arg2: i32, %arg3: memref<1x4x4x16x128xf32, #tpu.memory_space<vmem>>, %arg4: memref<128x256xf32, #tpu.memory_space<vmem>>, %arg5: memref<1x256xf32, #tpu.memory_space<vmem>>, %arg6: memref<1x1x1x16x256xf32, #tpu.memory_space<vmem>>) attributes {dimension_semantics = [#tpu.dimension_semantics<parallel>, #tpu.dimension_semantics<parallel>, #tpu.dimension_semantics<parallel>], iteration_bounds = array<i64: 2, 1, 4>, scalar_prefetch = 0 : i64, scratch_operands = 0 : i64, tpu.core_type = #tpu.core_type<tc>, window_params = [{transform_indices = @transform_0, window_bounds = array<i64: 1, 4, 4, 16, 128>}, {pipeline_mode = #tpu.pipeline_mode<synchronous>, transform_indices = @transform_1, window_bounds = array<i64: 128, 256>}, {pipeline_mode = #tpu.pipeline_mode<synchronous>, transform_indices = @transform_2, window_bounds = array<i64: 1, 256>}, {transform_indices = @transform_3, window_bounds = array<i64: 1, 1, 1, 16, 256>}]} {
    %c0 = arith.constant 0 : index
    %c0_0 = arith.constant 0 : index
    %c0_1 = arith.constant 0 : index
    %c0_2 = arith.constant 0 : index
    %c0_3 = arith.constant 0 : index
    %0 = vector.load %arg3[%c0, %c0_0, %c0_1, %c0_2, %c0_3] : memref<1x4x4x16x128xf32, #tpu.memory_space<vmem>>, vector<1x1x1x16x128xf32>
    %1 = vector.shape_cast %0 : vector<1x1x1x16x128xf32> to vector<16x128xf32>
    %c0_4 = arith.constant 0 : index
    %c0_5 = arith.constant 0 : index
    %2 = vector.load %arg4[%c0_4, %c0_5] : memref<128x256xf32, #tpu.memory_space<vmem>>, vector<128x256xf32>
    %cst = arith.constant dense<0.000000e+00> : vector<16x256xf32>
    %3 = tpu.matmul %1, %2, %cst {dimension_numbers = #tpu.dot_dimension_numbers<[1], [0], [0], [1], [0, 0, 1, 1], [], []>} : vector<16x128xf32>, vector<128x256xf32>, vector<16x256xf32> -> vector<16x256xf32>
    %c0_6 = arith.constant 0 : index
    %c0_7 = arith.constant 0 : index
    %c1 = arith.constant 1 : index
    %c0_8 = arith.constant 0 : index
    %c0_9 = arith.constant 0 : index
    %4 = vector.load %arg3[%c0_6, %c0_7, %c1, %c0_8, %c0_9] : memref<1x4x4x16x128xf32, #tpu.memory_space<vmem>>, vector<1x1x1x16x128xf32>
    %5 = vector.shape_cast %4 : vector<1x1x1x16x128xf32> to vector<16x128xf32>
    %c0_10 = arith.constant 0 : index
    %c0_11 = arith.constant 0 : index
    %6 = vector.load %arg4[%c0_10, %c0_11] : memref<128x256xf32, #tpu.memory_space<vmem>>, vector<128x256xf32>
    %cst_12 = arith.constant dense<0.000000e+00> : vector<16x256xf32>
    %7 = tpu.matmul %5, %6, %cst_12 {dimension_numbers = #tpu.dot_dimension_numbers<[1], [0], [0], [1], [0, 0, 1, 1], [], []>} : vector<16x128xf32>, vector<128x256xf32>, vector<16x256xf32> -> vector<16x256xf32>
    %8 = arith.maximumf %3, %7 : vector<16x256xf32>
    %c0_13 = arith.constant 0 : index
    %c0_14 = arith.constant 0 : index
    %c2 = arith.constant 2 : index
    %c0_15 = arith.constant 0 : index
    %c0_16 = arith.constant 0 : index
    %9 = vector.load %arg3[%c0_13, %c0_14, %c2, %c0_15, %c0_16] : memref<1x4x4x16x128xf32, #tpu.memory_space<vmem>>, vector<1x1x1x16x128xf32>
    %10 = vector.shape_cast %9 : vector<1x1x1x16x128xf32> to vector<16x128xf32>
    %c0_17 = arith.constant 0 : index
    %c0_18 = arith.constant 0 : index
    %11 = vector.load %arg4[%c0_17, %c0_18] : memref<128x256xf32, #tpu.memory_space<vmem>>, vector<128x256xf32>
    %cst_19 = arith.constant dense<0.000000e+00> : vector<16x256xf32>
    %12 = tpu.matmul %10, %11, %cst_19 {dimension_numbers = #tpu.dot_dimension_numbers<[1], [0], [0], [1], [0, 0, 1, 1], [], []>} : vector<16x128xf32>, vector<128x256xf32>, vector<16x256xf32> -> vector<16x256xf32>
    %13 = arith.maximumf %8, %12 : vector<16x256xf32>
    %c0_20 = arith.constant 0 : index
    %c0_21 = arith.constant 0 : index
    %c3 = arith.constant 3 : index
    %c0_22 = arith.constant 0 : index
    %c0_23 = arith.constant 0 : index
    %14 = vector.load %arg3[%c0_20, %c0_21, %c3, %c0_22, %c0_23] : memref<1x4x4x16x128xf32, #tpu.memory_space<vmem>>, vector<1x1x1x16x128xf32>
    %15 = vector.shape_cast %14 : vector<1x1x1x16x128xf32> to vector<16x128xf32>
    %c0_24 = arith.constant 0 : index
    %c0_25 = arith.constant 0 : index
    %16 = vector.load %arg4[%c0_24, %c0_25] : memref<128x256xf32, #tpu.memory_space<vmem>>, vector<128x256xf32>
    %cst_26 = arith.constant dense<0.000000e+00> : vector<16x256xf32>
    %17 = tpu.matmul %15, %16, %cst_26 {dimension_numbers = #tpu.dot_dimension_numbers<[1], [0], [0], [1], [0, 0, 1, 1], [], []>} : vector<16x128xf32>, vector<128x256xf32>, vector<16x256xf32> -> vector<16x256xf32>
    %18 = arith.maximumf %13, %17 : vector<16x256xf32>
    %c0_27 = arith.constant 0 : index
    %c1_28 = arith.constant 1 : index
    %c0_29 = arith.constant 0 : index
    %c0_30 = arith.constant 0 : index
    %c0_31 = arith.constant 0 : index
    %19 = vector.load %arg3[%c0_27, %c1_28, %c0_29, %c0_30, %c0_31] : memref<1x4x4x16x128xf32, #tpu.memory_space<vmem>>, vector<1x1x1x16x128xf32>
    %20 = vector.shape_cast %19 : vector<1x1x1x16x128xf32> to vector<16x128xf32>
    %c0_32 = arith.constant 0 : index
    %c0_33 = arith.constant 0 : index
    %21 = vector.load %arg4[%c0_32, %c0_33] : memref<128x256xf32, #tpu.memory_space<vmem>>, vector<128x256xf32>
    %cst_34 = arith.constant dense<0.000000e+00> : vector<16x256xf32>
    %22 = tpu.matmul %20, %21, %cst_34 {dimension_numbers = #tpu.dot_dimension_numbers<[1], [0], [0], [1], [0, 0, 1, 1], [], []>} : vector<16x128xf32>, vector<128x256xf32>, vector<16x256xf32> -> vector<16x256xf32>
    %23 = arith.maximumf %18, %22 : vector<16x256xf32>
    %c0_35 = arith.constant 0 : index
    %c1_36 = arith.constant 1 : index
    %c1_37 = arith.constant 1 : index
    %c0_38 = arith.constant 0 : index
    %c0_39 = arith.constant 0 : index
    %24 = vector.load %arg3[%c0_35, %c1_36, %c1_37, %c0_38, %c0_39] : memref<1x4x4x16x128xf32, #tpu.memory_space<vmem>>, vector<1x1x1x16x128xf32>
    %25 = vector.shape_cast %24 : vector<1x1x1x16x128xf32> to vector<16x128xf32>
    %c0_40 = arith.constant 0 : index
    %c0_41 = arith.constant 0 : index
    %26 = vector.load %arg4[%c0_40, %c0_41] : memref<128x256xf32, #tpu.memory_space<vmem>>, vector<128x256xf32>
    %cst_42 = arith.constant dense<0.000000e+00> : vector<16x256xf32>
    %27 = tpu.matmul %25, %26, %cst_42 {dimension_numbers = #tpu.dot_dimension_numbers<[1], [0], [0], [1], [0, 0, 1, 1], [], []>} : vector<16x128xf32>, vector<128x256xf32>, vector<16x256xf32> -> vector<16x256xf32>
    %28 = arith.maximumf %23, %27 : vector<16x256xf32>
    %c0_43 = arith.constant 0 : index
    %c1_44 = arith.constant 1 : index
    %c2_45 = arith.constant 2 : index
    %c0_46 = arith.constant 0 : index
    %c0_47 = arith.constant 0 : index
    %29 = vector.load %arg3[%c0_43, %c1_44, %c2_45, %c0_46, %c0_47] : memref<1x4x4x16x128xf32, #tpu.memory_space<vmem>>, vector<1x1x1x16x128xf32>
    %30 = vector.shape_cast %29 : vector<1x1x1x16x128xf32> to vector<16x128xf32>
    %c0_48 = arith.constant 0 : index
    %c0_49 = arith.constant 0 : index
    %31 = vector.load %arg4[%c0_48, %c0_49] : memref<128x256xf32, #tpu.memory_space<vmem>>, vector<128x256xf32>
    %cst_50 = arith.constant dense<0.000000e+00> : vector<16x256xf32>
    %32 = tpu.matmul %30, %31, %cst_50 {dimension_numbers = #tpu.dot_dimension_numbers<[1], [0], [0], [1], [0, 0, 1, 1], [], []>} : vector<16x128xf32>, vector<128x256xf32>, vector<16x256xf32> -> vector<16x256xf32>
    %33 = arith.maximumf %28, %32 : vector<16x256xf32>
    %c0_51 = arith.constant 0 : index
    %c1_52 = arith.constant 1 : index
    %c3_53 = arith.constant 3 : index
    %c0_54 = arith.constant 0 : index
    %c0_55 = arith.constant 0 : index
    %34 = vector.load %arg3[%c0_51, %c1_52, %c3_53, %c0_54, %c0_55] : memref<1x4x4x16x128xf32, #tpu.memory_space<vmem>>, vector<1x1x1x16x128xf32>
    %35 = vector.shape_cast %34 : vector<1x1x1x16x128xf32> to vector<16x128xf32>
    %c0_56 = arith.constant 0 : index
    %c0_57 = arith.constant 0 : index
    %36 = vector.load %arg4[%c0_56, %c0_57] : memref<128x256xf32, #tpu.memory_space<vmem>>, vector<128x256xf32>
    %cst_58 = arith.constant dense<0.000000e+00> : vector<16x256xf32>
    %37 = tpu.matmul %35, %36, %cst_58 {dimension_numbers = #tpu.dot_dimension_numbers<[1], [0], [0], [1], [0, 0, 1, 1], [], []>} : vector<16x128xf32>, vector<128x256xf32>, vector<16x256xf32> -> vector<16x256xf32>
    %38 = arith.maximumf %33, %37 : vector<16x256xf32>
    %c0_59 = arith.constant 0 : index
    %c2_60 = arith.constant 2 : index
    %c0_61 = arith.constant 0 : index
    %c0_62 = arith.constant 0 : index
    %c0_63 = arith.constant 0 : index
    %39 = vector.load %arg3[%c0_59, %c2_60, %c0_61, %c0_62, %c0_63] : memref<1x4x4x16x128xf32, #tpu.memory_space<vmem>>, vector<1x1x1x16x128xf32>
    %40 = vector.shape_cast %39 : vector<1x1x1x16x128xf32> to vector<16x128xf32>
    %c0_64 = arith.constant 0 : index
    %c0_65 = arith.constant 0 : index
    %41 = vector.load %arg4[%c0_64, %c0_65] : memref<128x256xf32, #tpu.memory_space<vmem>>, vector<128x256xf32>
    %cst_66 = arith.constant dense<0.000000e+00> : vector<16x256xf32>
    %42 = tpu.matmul %40, %41, %cst_66 {dimension_numbers = #tpu.dot_dimension_numbers<[1], [0], [0], [1], [0, 0, 1, 1], [], []>} : vector<16x128xf32>, vector<128x256xf32>, vector<16x256xf32> -> vector<16x256xf32>
    %43 = arith.maximumf %38, %42 : vector<16x256xf32>
    %c0_67 = arith.constant 0 : index
    %c2_68 = arith.constant 2 : index
    %c1_69 = arith.constant 1 : index
    %c0_70 = arith.constant 0 : index
    %c0_71 = arith.constant 0 : index
    %44 = vector.load %arg3[%c0_67, %c2_68, %c1_69, %c0_70, %c0_71] : memref<1x4x4x16x128xf32, #tpu.memory_space<vmem>>, vector<1x1x1x16x128xf32>
    %45 = vector.shape_cast %44 : vector<1x1x1x16x128xf32> to vector<16x128xf32>
    %c0_72 = arith.constant 0 : index
    %c0_73 = arith.constant 0 : index
    %46 = vector.load %arg4[%c0_72, %c0_73] : memref<128x256xf32, #tpu.memory_space<vmem>>, vector<128x256xf32>
    %cst_74 = arith.constant dense<0.000000e+00> : vector<16x256xf32>
    %47 = tpu.matmul %45, %46, %cst_74 {dimension_numbers = #tpu.dot_dimension_numbers<[1], [0], [0], [1], [0, 0, 1, 1], [], []>} : vector<16x128xf32>, vector<128x256xf32>, vector<16x256xf32> -> vector<16x256xf32>
    %48 = arith.maximumf %43, %47 : vector<16x256xf32>
    %c0_75 = arith.constant 0 : index
    %c2_76 = arith.constant 2 : index
    %c2_77 = arith.constant 2 : index
    %c0_78 = arith.constant 0 : index
    %c0_79 = arith.constant 0 : index
    %49 = vector.load %arg3[%c0_75, %c2_76, %c2_77, %c0_78, %c0_79] : memref<1x4x4x16x128xf32, #tpu.memory_space<vmem>>, vector<1x1x1x16x128xf32>
    %50 = vector.shape_cast %49 : vector<1x1x1x16x128xf32> to vector<16x128xf32>
    %c0_80 = arith.constant 0 : index
    %c0_81 = arith.constant 0 : index
    %51 = vector.load %arg4[%c0_80, %c0_81] : memref<128x256xf32, #tpu.memory_space<vmem>>, vector<128x256xf32>
    %cst_82 = arith.constant dense<0.000000e+00> : vector<16x256xf32>
    %52 = tpu.matmul %50, %51, %cst_82 {dimension_numbers = #tpu.dot_dimension_numbers<[1], [0], [0], [1], [0, 0, 1, 1], [], []>} : vector<16x128xf32>, vector<128x256xf32>, vector<16x256xf32> -> vector<16x256xf32>
    %53 = arith.maximumf %48, %52 : vector<16x256xf32>
    %c0_83 = arith.constant 0 : index
    %c2_84 = arith.constant 2 : index
    %c3_85 = arith.constant 3 : index
    %c0_86 = arith.constant 0 : index
    %c0_87 = arith.constant 0 : index
    %54 = vector.load %arg3[%c0_83, %c2_84, %c3_85, %c0_86, %c0_87] : memref<1x4x4x16x128xf32, #tpu.memory_space<vmem>>, vector<1x1x1x16x128xf32>
    %55 = vector.shape_cast %54 : vector<1x1x1x16x128xf32> to vector<16x128xf32>
    %c0_88 = arith.constant 0 : index
    %c0_89 = arith.constant 0 : index
    %56 = vector.load %arg4[%c0_88, %c0_89] : memref<128x256xf32, #tpu.memory_space<vmem>>, vector<128x256xf32>
    %cst_90 = arith.constant dense<0.000000e+00> : vector<16x256xf32>
    %57 = tpu.matmul %55, %56, %cst_90 {dimension_numbers = #tpu.dot_dimension_numbers<[1], [0], [0], [1], [0, 0, 1, 1], [], []>} : vector<16x128xf32>, vector<128x256xf32>, vector<16x256xf32> -> vector<16x256xf32>
    %58 = arith.maximumf %53, %57 : vector<16x256xf32>
    %c0_91 = arith.constant 0 : index
    %c3_92 = arith.constant 3 : index
    %c0_93 = arith.constant 0 : index
    %c0_94 = arith.constant 0 : index
    %c0_95 = arith.constant 0 : index
    %59 = vector.load %arg3[%c0_91, %c3_92, %c0_93, %c0_94, %c0_95] : memref<1x4x4x16x128xf32, #tpu.memory_space<vmem>>, vector<1x1x1x16x128xf32>
    %60 = vector.shape_cast %59 : vector<1x1x1x16x128xf32> to vector<16x128xf32>
    %c0_96 = arith.constant 0 : index
    %c0_97 = arith.constant 0 : index
    %61 = vector.load %arg4[%c0_96, %c0_97] : memref<128x256xf32, #tpu.memory_space<vmem>>, vector<128x256xf32>
    %cst_98 = arith.constant dense<0.000000e+00> : vector<16x256xf32>
    %62 = tpu.matmul %60, %61, %cst_98 {dimension_numbers = #tpu.dot_dimension_numbers<[1], [0], [0], [1], [0, 0, 1, 1], [], []>} : vector<16x128xf32>, vector<128x256xf32>, vector<16x256xf32> -> vector<16x256xf32>
    %63 = arith.maximumf %58, %62 : vector<16x256xf32>
    %c0_99 = arith.constant 0 : index
    %c3_100 = arith.constant 3 : index
    %c1_101 = arith.constant 1 : index
    %c0_102 = arith.constant 0 : index
    %c0_103 = arith.constant 0 : index
    %64 = vector.load %arg3[%c0_99, %c3_100, %c1_101, %c0_102, %c0_103] : memref<1x4x4x16x128xf32, #tpu.memory_space<vmem>>, vector<1x1x1x16x128xf32>
    %65 = vector.shape_cast %64 : vector<1x1x1x16x128xf32> to vector<16x128xf32>
    %c0_104 = arith.constant 0 : index
    %c0_105 = arith.constant 0 : index
    %66 = vector.load %arg4[%c0_104, %c0_105] : memref<128x256xf32, #tpu.memory_space<vmem>>, vector<128x256xf32>
    %cst_106 = arith.constant dense<0.000000e+00> : vector<16x256xf32>
    %67 = tpu.matmul %65, %66, %cst_106 {dimension_numbers = #tpu.dot_dimension_numbers<[1], [0], [0], [1], [0, 0, 1, 1], [], []>} : vector<16x128xf32>, vector<128x256xf32>, vector<16x256xf32> -> vector<16x256xf32>
    %68 = arith.maximumf %63, %67 : vector<16x256xf32>
    %c0_107 = arith.constant 0 : index
    %c3_108 = arith.constant 3 : index
    %c2_109 = arith.constant 2 : index
    %c0_110 = arith.constant 0 : index
    %c0_111 = arith.constant 0 : index
    %69 = vector.load %arg3[%c0_107, %c3_108, %c2_109, %c0_110, %c0_111] : memref<1x4x4x16x128xf32, #tpu.memory_space<vmem>>, vector<1x1x1x16x128xf32>
    %70 = vector.shape_cast %69 : vector<1x1x1x16x128xf32> to vector<16x128xf32>
    %c0_112 = arith.constant 0 : index
    %c0_113 = arith.constant 0 : index
    %71 = vector.load %arg4[%c0_112, %c0_113] : memref<128x256xf32, #tpu.memory_space<vmem>>, vector<128x256xf32>
    %cst_114 = arith.constant dense<0.000000e+00> : vector<16x256xf32>
    %72 = tpu.matmul %70, %71, %cst_114 {dimension_numbers = #tpu.dot_dimension_numbers<[1], [0], [0], [1], [0, 0, 1, 1], [], []>} : vector<16x128xf32>, vector<128x256xf32>, vector<16x256xf32> -> vector<16x256xf32>
    %73 = arith.maximumf %68, %72 : vector<16x256xf32>
    %c0_115 = arith.constant 0 : index
    %c3_116 = arith.constant 3 : index
    %c3_117 = arith.constant 3 : index
    %c0_118 = arith.constant 0 : index
    %c0_119 = arith.constant 0 : index
    %74 = vector.load %arg3[%c0_115, %c3_116, %c3_117, %c0_118, %c0_119] : memref<1x4x4x16x128xf32, #tpu.memory_space<vmem>>, vector<1x1x1x16x128xf32>
    %75 = vector.shape_cast %74 : vector<1x1x1x16x128xf32> to vector<16x128xf32>
    %c0_120 = arith.constant 0 : index
    %c0_121 = arith.constant 0 : index
    %76 = vector.load %arg4[%c0_120, %c0_121] : memref<128x256xf32, #tpu.memory_space<vmem>>, vector<128x256xf32>
    %cst_122 = arith.constant dense<0.000000e+00> : vector<16x256xf32>
    %77 = tpu.matmul %75, %76, %cst_122 {dimension_numbers = #tpu.dot_dimension_numbers<[1], [0], [0], [1], [0, 0, 1, 1], [], []>} : vector<16x128xf32>, vector<128x256xf32>, vector<16x256xf32> -> vector<16x256xf32>
    %78 = arith.maximumf %73, %77 : vector<16x256xf32>
    %c0_123 = arith.constant 0 : index
    %c0_124 = arith.constant 0 : index
    %79 = vector.load %arg5[%c0_123, %c0_124] : memref<1x256xf32, #tpu.memory_space<vmem>>, vector<1x256xf32>
    %80 = vector.broadcast %79 : vector<1x256xf32> to vector<16x256xf32>
    %81 = arith.addf %78, %80 : vector<16x256xf32>
    %c0_125 = arith.constant 0 : index
    %c0_126 = arith.constant 0 : index
    %c0_127 = arith.constant 0 : index
    %c0_128 = arith.constant 0 : index
    %c0_129 = arith.constant 0 : index
    %82 = vector.load %arg6[%c0_125, %c0_126, %c0_127, %c0_128, %c0_129] : memref<1x1x1x16x256xf32, #tpu.memory_space<vmem>>, vector<1x1x1x16x256xf32>
    %83 = vector.shape_cast %82 : vector<1x1x1x16x256xf32> to vector<16x256xf32>
    %84 = vector.shape_cast %81 : vector<16x256xf32> to vector<1x1x1x16x256xf32>
    tpu.vector_store %arg6[%c0_125, %c0_126, %c0_127, %c0_128, %c0_129], %84 {strides = array<i32>} : memref<1x1x1x16x256xf32, #tpu.memory_space<vmem>>, vector<1x1x1x16x256xf32>,
    return
  }
  func.func @transform_0(%arg0: i32, %arg1: i32, %arg2: i32) -> (i32, i32, i32, i32, i32) {
    %c0_i32 = arith.constant 0 : i32
    %c0_i32_0 = arith.constant 0 : i32
    %c0_i32_1 = arith.constant 0 : i32
    return %arg0, %arg1, %arg2, %c0_i32, %c0_i32_0 : i32, i32, i32, i32, i32
  }
  func.func @transform_1(%arg0: i32, %arg1: i32, %arg2: i32) -> (i32, i32) {
    %c0_i32 = arith.constant 0 : i32
    %c0_i32_0 = arith.constant 0 : i32
    %c0_i32_1 = arith.constant 0 : i32
    return %c0_i32, %c0_i32_0 : i32, i32
  }
  func.func @transform_2(%arg0: i32, %arg1: i32, %arg2: i32) -> (i32, i32) {
    %c0_i32 = arith.constant 0 : i32
    %c0_i32_0 = arith.constant 0 : i32
    %c0_i32_1 = arith.constant 0 : i32
    return %c0_i32, %c0_i32_0 : i32, i32
  }
  func.func @transform_3(%arg0: i32, %arg1: i32, %arg2: i32) -> (i32, i32, i32, i32, i32) {
    %c0_i32 = arith.constant 0 : i32
    %c0_i32_0 = arith.constant 0 : i32
    %c0_i32_1 = arith.constant 0 : i32
    return %arg0, %arg1, %arg2, %c0_i32, %c0_i32_0 : i32, i32, i32, i32, i32
  }
}

module attributes {stable_mosaic.version = 11 : i64} {
  func.func @_attn_kernel(%arg0: i32, %arg1: i32, %arg2: i32, %arg3: memref<1x512x128xf32, #tpu.memory_space<vmem>>, %arg4: memref<1x128x128xf32, #tpu.memory_space<vmem>>, %arg5: memref<1x128x128xf32, #tpu.memory_space<vmem>>, %arg6: memref<128x128xf32, #tpu.memory_space<vmem>>, %arg7: memref<1x128xf32, #tpu.memory_space<vmem>>, %arg8: memref<128x128xf32, #tpu.memory_space<vmem>>, %arg9: memref<1x128xf32, #tpu.memory_space<vmem>>, %arg10: memref<1x512x128xf32, #tpu.memory_space<vmem>>, %arg11: memref<512x128xf32, #tpu.memory_space<vmem>>, %arg12: memref<512x1xf32, #tpu.memory_space<vmem>>, %arg13: memref<512x1xf32, #tpu.memory_space<vmem>>, %arg14: memref<512x128xf32, #tpu.memory_space<vmem>>) attributes {dimension_semantics = [#tpu.dimension_semantics<parallel>, #tpu.dimension_semantics<parallel>, #tpu.dimension_semantics<arbitrary>], iteration_bounds = array<i64: 2, 2, 1>, scalar_prefetch = 0 : i64, scratch_operands = 4 : i64, tpu.core_type = #tpu.core_type<tc>, window_params = [{transform_indices = @transform_0, window_bounds = array<i64: 1, 512, 128>}, {transform_indices = @transform_1, window_bounds = array<i64: 1, 128, 128>}, {transform_indices = @transform_2, window_bounds = array<i64: 1, 128, 128>}, {pipeline_mode = #tpu.pipeline_mode<synchronous>, transform_indices = @transform_3, window_bounds = array<i64: 128, 128>}, {pipeline_mode = #tpu.pipeline_mode<synchronous>, transform_indices = @transform_4, window_bounds = array<i64: 1, 128>}, {pipeline_mode = #tpu.pipeline_mode<synchronous>, transform_indices = @transform_5, window_bounds = array<i64: 128, 128>}, {pipeline_mode = #tpu.pipeline_mode<synchronous>, transform_indices = @transform_6, window_bounds = array<i64: 1, 128>}, {transform_indices = @transform_7, window_bounds = array<i64: 1, 512, 128>}]} {
    %c0_i32 = arith.constant 0 : i32
    %0 = arith.cmpi eq, %arg2, %c0_i32 : i32
    %1 = arith.extui %0 : i1 to i32
    %c0_i32_0 = arith.constant 0 : i32
    %2 = arith.cmpi ne, %1, %c0_i32_0 : i32
    scf.if %2 {
      %c0_26 = arith.constant 0 : index
      %c0_27 = arith.constant 0 : index
      %c0_28 = arith.constant 0 : index
      %42 = vector.load %arg3[%c0_26, %c0_27, %c0_28] : memref<1x512x128xf32, #tpu.memory_space<vmem>>, vector<1x512x128xf32>
      %43 = vector.shape_cast %42 : vector<1x512x128xf32> to vector<512x128xf32>
      %c0_29 = arith.constant 0 : index
      %c0_30 = arith.constant 0 : index
      %44 = vector.load %arg6[%c0_29, %c0_30] : memref<128x128xf32, #tpu.memory_space<vmem>>, vector<128x128xf32>
      %cst_31 = arith.constant dense<0.000000e+00> : vector<512x128xf32>
      %45 = tpu.matmul %43, %44, %cst_31 {dimension_numbers = #tpu.dot_dimension_numbers<[1], [0], [0], [1], [0, 0, 1, 1], [], []>} : vector<512x128xf32>, vector<128x128xf32>, vector<512x128xf32> -> vector<512x128xf32>
      %c0_32 = arith.constant 0 : index
      %c0_33 = arith.constant 0 : index
      %46 = vector.load %arg7[%c0_32, %c0_33] : memref<1x128xf32, #tpu.memory_space<vmem>>, vector<1x128xf32>
      %47 = vector.broadcast %46 : vector<1x128xf32> to vector<512x128xf32>
      %48 = arith.addf %45, %47 : vector<512x128xf32>
      %c0_34 = arith.constant 0 : index
      %c0_35 = arith.constant 0 : index
      %49 = vector.load %arg11[%c0_34, %c0_35] : memref<512x128xf32, #tpu.memory_space<vmem>>, vector<512x128xf32>
      tpu.vector_store %arg11[%c0_34, %c0_35], %48 {strides = array<i32>} : memref<512x128xf32, #tpu.memory_space<vmem>>, vector<512x128xf32>,
      %cst_36 = arith.constant 0xFF800000 : f32
      %50 = vector.broadcast %cst_36 : f32 to vector<512x1xf32>
      %c0_37 = arith.constant 0 : index
      %c0_38 = arith.constant 0 : index
      %51 = vector.load %arg12[%c0_37, %c0_38] : memref<512x1xf32, #tpu.memory_space<vmem>>, vector<512x1xf32>
      tpu.vector_store %arg12[%c0_37, %c0_38], %50 {strides = array<i32>} : memref<512x1xf32, #tpu.memory_space<vmem>>, vector<512x1xf32>,
      %cst_39 = arith.constant 0.000000e+00 : f32
      %52 = vector.broadcast %cst_39 : f32 to vector<512x1xf32>
      %c0_40 = arith.constant 0 : index
      %c0_41 = arith.constant 0 : index
      %53 = vector.load %arg13[%c0_40, %c0_41] : memref<512x1xf32, #tpu.memory_space<vmem>>, vector<512x1xf32>
      tpu.vector_store %arg13[%c0_40, %c0_41], %52 {strides = array<i32>} : memref<512x1xf32, #tpu.memory_space<vmem>>, vector<512x1xf32>,
      %cst_42 = arith.constant 0.000000e+00 : f32
      %54 = vector.broadcast %cst_42 : f32 to vector<512x128xf32>
      %c0_43 = arith.constant 0 : index
      %c0_44 = arith.constant 0 : index
      %55 = vector.load %arg14[%c0_43, %c0_44] : memref<512x128xf32, #tpu.memory_space<vmem>>, vector<512x128xf32>
      tpu.vector_store %arg14[%c0_43, %c0_44], %54 {strides = array<i32>} : memref<512x128xf32, #tpu.memory_space<vmem>>, vector<512x128xf32>,
    } else {
    }
    %c0 = arith.constant 0 : index
    %c0_1 = arith.constant 0 : index
    %3 = vector.load %arg11[%c0, %c0_1] : memref<512x128xf32, #tpu.memory_space<vmem>>, vector<512x128xf32>
    %c0_2 = arith.constant 0 : index
    %c0_3 = arith.constant 0 : index
    %c0_4 = arith.constant 0 : index
    %4 = vector.load %arg4[%c0_2, %c0_3, %c0_4] : memref<1x128x128xf32, #tpu.memory_space<vmem>>, vector<1x128x128xf32>
    %5 = vector.shape_cast %4 : vector<1x128x128xf32> to vector<128x128xf32>
    %cst = arith.constant dense<0.000000e+00> : vector<512x128xf32>
    %6 = tpu.matmul %3, %5, %cst {dimension_numbers = #tpu.dot_dimension_numbers<[1], [0], [0], [1], [0, 0, 1, 1], [], []>} : vector<512x128xf32>, vector<128x128xf32>, vector<512x128xf32> -> vector<512x128xf32>
    %c128_i32 = arith.constant 128 : i32
    %7 = arith.muli %arg2, %c128_i32 : i32
    %8 = tpu.iota {dimensions = array<i32: 1>} : vector<512x128xi32>
    %9 = vector.broadcast %7 : i32 to vector<512x128xi32>
    %10 = arith.addi %9, %8 : vector<512x128xi32>
    %c16_i32 = arith.constant 16 : i32
    %11 = vector.broadcast %c16_i32 : i32 to vector<512x128xi32>
    %12 = arith.cmpi slt, %10, %11 : vector<512x128xi32>
    %cst_5 = arith.constant 0xFF800000 : f32
    %13 = vector.broadcast %cst_5 : f32 to vector<512x128xf32>
    %14 = arith.select %12, %6, %13 : vector<512x128xi1>, vector<512x128xf32>
    %c0_6 = arith.constant 0 : index
    %c0_7 = arith.constant 0 : index
    %15 = vector.load %arg12[%c0_6, %c0_7] : memref<512x1xf32, #tpu.memory_space<vmem>>, vector<512x1xf32>
    %cst_8 = arith.constant dense<0xFF800000> : vector<512xf32>
    %16 = vector.multi_reduction <maximumf>, %14, %cst_8 [1] : vector<512x128xf32> to vector<512xf32>
    %17 = vector.shape_cast %16 : vector<512xf32> to vector<512x1xf32>
    %18 = arith.maximumf %15, %17 : vector<512x1xf32>
    %19 = arith.subf %15, %18 : vector<512x1xf32>
    %20 = math.exp %19 : vector<512x1xf32>
    %21 = vector.broadcast %18 : vector<512x1xf32> to vector<512x128xf32>
    %22 = arith.subf %14, %21 : vector<512x128xf32>
    %23 = math.exp %22 : vector<512x128xf32>
    %c0_9 = arith.constant 0 : index
    %c0_10 = arith.constant 0 : index
    %24 = vector.load %arg13[%c0_9, %c0_10] : memref<512x1xf32, #tpu.memory_space<vmem>>, vector<512x1xf32>
    %25 = arith.mulf %20, %24 : vector<512x1xf32>
    %cst_11 = arith.constant dense<0.000000e+00> : vector<512xf32>
    %26 = vector.multi_reduction <add>, %23, %cst_11 [1] : vector<512x128xf32> to vector<512xf32>
    %27 = vector.shape_cast %26 : vector<512xf32> to vector<512x1xf32>
    %28 = arith.addf %25, %27 : vector<512x1xf32>
    %c0_12 = arith.constant 0 : index
    %c0_13 = arith.constant 0 : index
    %29 = vector.load %arg13[%c0_12, %c0_13] : memref<512x1xf32, #tpu.memory_space<vmem>>, vector<512x1xf32>
    tpu.vector_store %arg13[%c0_12, %c0_13], %28 {strides = array<i32>} : memref<512x1xf32, #tpu.memory_space<vmem>>, vector<512x1xf32>,
    %c0_14 = arith.constant 0 : index
    %c0_15 = arith.constant 0 : index
    %30 = vector.load %arg14[%c0_14, %c0_15] : memref<512x128xf32, #tpu.memory_space<vmem>>, vector<512x128xf32>
    %31 = vector.broadcast %20 : vector<512x1xf32> to vector<512x128xf32>
    %32 = arith.mulf %31, %30 : vector<512x128xf32>
    %c0_16 = arith.constant 0 : index
    %c0_17 = arith.constant 0 : index
    %c0_18 = arith.constant 0 : index
    %33 = vector.load %arg5[%c0_16, %c0_17, %c0_18] : memref<1x128x128xf32, #tpu.memory_space<vmem>>, vector<1x128x128xf32>
    %34 = vector.shape_cast %33 : vector<1x128x128xf32> to vector<128x128xf32>
    %cst_19 = arith.constant dense<0.000000e+00> : vector<512x128xf32>
    %35 = tpu.matmul %23, %34, %cst_19 {dimension_numbers = #tpu.dot_dimension_numbers<[1], [0], [0], [1], [0, 0, 1, 1], [], []>} : vector<512x128xf32>, vector<128x128xf32>, vector<512x128xf32> -> vector<512x128xf32>
    %36 = arith.addf %32, %35 : vector<512x128xf32>
    %c0_20 = arith.constant 0 : index
    %c0_21 = arith.constant 0 : index
    %37 = vector.load %arg14[%c0_20, %c0_21] : memref<512x128xf32, #tpu.memory_space<vmem>>, vector<512x128xf32>
    tpu.vector_store %arg14[%c0_20, %c0_21], %36 {strides = array<i32>} : memref<512x128xf32, #tpu.memory_space<vmem>>, vector<512x128xf32>,
    %c0_22 = arith.constant 0 : index
    %c0_23 = arith.constant 0 : index
    %38 = vector.load %arg12[%c0_22, %c0_23] : memref<512x1xf32, #tpu.memory_space<vmem>>, vector<512x1xf32>
    tpu.vector_store %arg12[%c0_22, %c0_23], %18 {strides = array<i32>} : memref<512x1xf32, #tpu.memory_space<vmem>>, vector<512x1xf32>,
    %c0_i32_24 = arith.constant 0 : i32
    %39 = arith.cmpi eq, %arg2, %c0_i32_24 : i32
    %40 = arith.extui %39 : i1 to i32
    %c0_i32_25 = arith.constant 0 : i32
    %41 = arith.cmpi ne, %40, %c0_i32_25 : i32
    scf.if %41 {
      %c0_26 = arith.constant 0 : index
      %c0_27 = arith.constant 0 : index
      %42 = vector.load %arg14[%c0_26, %c0_27] : memref<512x128xf32, #tpu.memory_space<vmem>>, vector<512x128xf32>
      %c0_28 = arith.constant 0 : index
      %c0_29 = arith.constant 0 : index
      %43 = vector.load %arg13[%c0_28, %c0_29] : memref<512x1xf32, #tpu.memory_space<vmem>>, vector<512x1xf32>
      %44 = tpu.reciprocal %43 : vector<512x1xf32> -> vector<512x1xf32>
      %45 = vector.broadcast %44 : vector<512x1xf32> to vector<512x128xf32>
      %46 = arith.mulf %42, %45 : vector<512x128xf32>
      %c0_30 = arith.constant 0 : index
      %c0_31 = arith.constant 0 : index
      %47 = vector.load %arg8[%c0_30, %c0_31] : memref<128x128xf32, #tpu.memory_space<vmem>>, vector<128x128xf32>
      %cst_32 = arith.constant dense<0.000000e+00> : vector<512x128xf32>
      %48 = tpu.matmul %46, %47, %cst_32 {dimension_numbers = #tpu.dot_dimension_numbers<[1], [0], [0], [1], [0, 0, 1, 1], [], []>} : vector<512x128xf32>, vector<128x128xf32>, vector<512x128xf32> -> vector<512x128xf32>
      %c0_33 = arith.constant 0 : index
      %c0_34 = arith.constant 0 : index
      %49 = vector.load %arg9[%c0_33, %c0_34] : memref<1x128xf32, #tpu.memory_space<vmem>>, vector<1x128xf32>
      %50 = vector.broadcast %49 : vector<1x128xf32> to vector<512x128xf32>
      %51 = arith.addf %48, %50 : vector<512x128xf32>
      %c0_35 = arith.constant 0 : index
      %c0_36 = arith.constant 0 : index
      %c0_37 = arith.constant 0 : index
      %52 = vector.load %arg3[%c0_35, %c0_36, %c0_37] : memref<1x512x128xf32, #tpu.memory_space<vmem>>, vector<1x512x128xf32>
      %53 = vector.shape_cast %52 : vector<1x512x128xf32> to vector<512x128xf32>
      %54 = arith.addf %51, %53 : vector<512x128xf32>
      %c0_38 = arith.constant 0 : index
      %c0_39 = arith.constant 0 : index
      %c0_40 = arith.constant 0 : index
      %55 = vector.load %arg10[%c0_38, %c0_39, %c0_40] : memref<1x512x128xf32, #tpu.memory_space<vmem>>, vector<1x512x128xf32>
      %56 = vector.shape_cast %55 : vector<1x512x128xf32> to vector<512x128xf32>
      %57 = vector.shape_cast %54 : vector<512x128xf32> to vector<1x512x128xf32>
      tpu.vector_store %arg10[%c0_38, %c0_39, %c0_40], %57 {strides = array<i32>} : memref<1x512x128xf32, #tpu.memory_space<vmem>>, vector<1x512x128xf32>,
    } else {
    }
    return
  }
  func.func @transform_0(%arg0: i32, %arg1: i32, %arg2: i32) -> (i32, i32, i32) {
    %c0_i32 = arith.constant 0 : i32
    %c0_i32_0 = arith.constant 0 : i32
    return %arg0, %arg1, %c0_i32 : i32, i32, i32
  }
  func.func @transform_1(%arg0: i32, %arg1: i32, %arg2: i32) -> (i32, i32, i32) {
    %c0_i32 = arith.constant 0 : i32
    %c0_i32_0 = arith.constant 0 : i32
    return %arg0, %c0_i32, %arg2 : i32, i32, i32
  }
  func.func @transform_2(%arg0: i32, %arg1: i32, %arg2: i32) -> (i32, i32, i32) {
    %c0_i32 = arith.constant 0 : i32
    %c0_i32_0 = arith.constant 0 : i32
    return %arg0, %arg2, %c0_i32 : i32, i32, i32
  }
  func.func @transform_3(%arg0: i32, %arg1: i32, %arg2: i32) -> (i32, i32) {
    %c0_i32 = arith.constant 0 : i32
    %c0_i32_0 = arith.constant 0 : i32
    %c0_i32_1 = arith.constant 0 : i32
    return %c0_i32, %c0_i32_0 : i32, i32
  }
  func.func @transform_4(%arg0: i32, %arg1: i32, %arg2: i32) -> (i32, i32) {
    %c0_i32 = arith.constant 0 : i32
    %c0_i32_0 = arith.constant 0 : i32
    %c0_i32_1 = arith.constant 0 : i32
    return %c0_i32, %c0_i32_0 : i32, i32
  }
  func.func @transform_5(%arg0: i32, %arg1: i32, %arg2: i32) -> (i32, i32) {
    %c0_i32 = arith.constant 0 : i32
    %c0_i32_0 = arith.constant 0 : i32
    %c0_i32_1 = arith.constant 0 : i32
    return %c0_i32, %c0_i32_0 : i32, i32
  }
  func.func @transform_6(%arg0: i32, %arg1: i32, %arg2: i32) -> (i32, i32) {
    %c0_i32 = arith.constant 0 : i32
    %c0_i32_0 = arith.constant 0 : i32
    %c0_i32_1 = arith.constant 0 : i32
    return %c0_i32, %c0_i32_0 : i32, i32
  }
  func.func @transform_7(%arg0: i32, %arg1: i32, %arg2: i32) -> (i32, i32, i32) {
    %c0_i32 = arith.constant 0 : i32
    %c0_i32_0 = arith.constant 0 : i32
    return %arg0, %arg1, %c0_i32 : i32, i32, i32
  }
}

</mosaic_0001>

<llo_original>
// kernel: nonlocal_block_embedded_gaussian.2
$region0: #{nonlocal_block_embedded_gaussian.2}
  #allocation0 [shape = 'u32[]', space=smem, size = 0x4, offset = 0x4, fixed_abs, tag = 'smem constant byte address 0x4 - core index']
  #allocation1 [shape = 'u32[144,128]{1,0:T(1,128)}', space=vmem, size = 0x12000, scoped, tag = 'internal scratch']
  #allocation4 [shape = 's32[]', space=sflag, size = 0x4, offset = 0, fixed_abs, tag = 'sflag constant byte address 0x0 - dummy sync flag']
  %s0 = inlined_call_operand.hbm [shape: f32[2,4,16,16,128], index: 0, kind: input, shape index: {}]
  %s1 = inlined_call_operand.vmem [shape: f32[128,256], index: 1, kind: input, shape index: {}]
  %s2 = inlined_call_operand.vmem [shape: f32[1,256], index: 2, kind: input, shape index: {}]
  %s3 = inlined_call_operand.vmem [shape: f32[2,1,4,16,256], index: 3, kind: output, shape index: {}]
  %s4 = sld [smem:[#allocation0]]
  $region49: #{nonlocal_block_embedded_gaussian.2} parent=0
    _
  %s6 = ssub.s32 1, %s4
  %s7 = scalar_select 0, %s6, %s4
  $region1: #{nonlocal_block_embedded_gaussian.2} parent=0
    #allocation2 [shape = 'u8[262144]{0}', space=vmem, size = 0x40000, scoped, tag = 'input window, operand 0']
    #allocation3 [shape = 's32[2]{0}', space=sflag, size = 0x8, scoped, tag = 'scoped memory for nonlocal_block_embedded_gaussian.2']
    %8 = vsyncpa [#allocation3], 0
    %s9 = scalar_lea.sflag [#allocation3], 1
    %10 = vsyncpa %s9, 0
    loop: start=0, step=1, limit=10
    $region2: #{nonlocal_block_embedded_gaussian.2} parent=1 // loop_pre_header
      _
    $region3: #{nonlocal_block_embedded_gaussian.2} parent=1 // loop_header
      %s12 = sphi 0, %s16
      %p13 = scmp.ge.s32.totalorder %s12, 10
      %s19 = sphi 0, %s38
      %s20 = sphi 0, %s34
      %s21 = sphi 0, %s30
      %s22 = sphi 0, %s19
      %s23 = sphi 0, %s20
      %s24 = sphi 0, %s21
      %s25 = sphi 0, %s22
      %s26 = sphi 0, %s23
      %s27 = sphi 0, %s24
      %s45 = sphi 0, %s47
      %s48 = sphi 0, %s45
      %s49 = sphi 0, %s48
      %s65 = sphi 0, %s49
      %s69 = sphi 0, %s69
      %s71 = sphi 0, %s69
      %s72 = sphi 0, %s71
      %s86 = sphi 0, %s72
      %s90 = sphi 0, %s90
      %s92 = sphi 0, %s90
      %s93 = sphi 0, %s92
      %s107 = sphi 0, %s93
      %s117 = sphi 0, %s119
      %s120 = sphi 0, %s117
      %s121 = sphi 0, %s120
      %s137 = sphi 0, %s121
    $region4: #{nonlocal_block_embedded_gaussian.2} parent=1 // loop_header_branch
      %15 = sbr.rel (%p13) target = $region8
    $region5: #{nonlocal_block_embedded_gaussian.2} parent=1 // loop_body
      %s17 = ssub.s32 %s12, 1
      %s18 = ssub.s32 %s12, 2
      %s28 = sadd.s32 1, %s21
      %p29 = scmp.ge.s32.totalorder %s28, 4
      %s30 = scalar_select %p29, 0, %s28
      %s31 = sadd.s32 1, %s20
      %s32 = scalar_select %p29, %s31, %s20
      %p33 = scmp.ge.s32.totalorder %s32, 1
      %s34 = scalar_select %p33, 0, %s32
      %s35 = sadd.s32 1, %s19
      %s36 = scalar_select %p33, %s35, %s19
      %p37 = scmp.ge.s32.totalorder %s36, 2
      %s38 = scalar_select %p37, 0, %s36
      %s39 = ssub.s32 %s19, %s38
      %s40 = ssub.s32 %s20, %s34
      %s41 = sor.u32 %s39, %s40
      %s42 = ssub.s32 %s21, %s30
      %s43 = sor.u32 %s41, %s42
      %p44 = scmp.eq.s32.totalorder %s43, 0
      %s46 = sadd.s32 %s45, 1
      %s47 = scalar_select %p44, %s45, %s46
      %p50 = pneg %p44
      %p51 = scmp.eq.s32.totalorder %s12, 7
      %p52 = por %p50, %p51
      %p53 = scmp.ne.s32.totalorder %s45, %s48
      %p54 = scmp.eq.s32.totalorder %s12, 0
      %p55 = por %p53, %p54
      %p56 = scmp.ne.s32.totalorder %s45, %s48
      %p57 = scmp.eq.s32.totalorder %s17, 7
      %p58 = por %p56, %p57
      %p59 = scmp.ne.s32.totalorder %s48, %s49
      %p60 = scmp.eq.s32.totalorder %s17, 0
      %p61 = por %p59, %p60
      %p62 = scmp.ne.s32.totalorder %s48, %s49
      %p63 = scmp.eq.s32.totalorder %s18, 7
      %p64 = por %p62, %p63
      %p66 = scmp.ne.s32.totalorder %s49, %s65
      %p67 = scmp.eq.s32.totalorder %s18, 0
      %p68 = por %p66, %p67
      %s70 = sadd.s32 %s69, 1
      %p73 = scmp.eq.s32.totalorder %s12, 7
      %p74 = scmp.ne.s32.totalorder %s69, %s71
      %p75 = scmp.eq.s32.totalorder %s12, 0
      %p76 = por %p74, %p75
      %p77 = scmp.ne.s32.totalorder %s69, %s71
      %p78 = scmp.eq.s32.totalorder %s17, 7
      %p79 = por %p77, %p78
      %p80 = scmp.ne.s32.totalorder %s71, %s72
      %p81 = scmp.eq.s32.totalorder %s17, 0
      %p82 = por %p80, %p81
      %p83 = scmp.ne.s32.totalorder %s71, %s72
      %p84 = scmp.eq.s32.totalorder %s18, 7
      %p85 = por %p83, %p84
      %p87 = scmp.ne.s32.totalorder %s72, %s86
      %p88 = scmp.eq.s32.totalorder %s18, 0
      %p89 = por %p87, %p88
      %s91 = sadd.s32 %s90, 1
      %p94 = scmp.eq.s32.totalorder %s12, 7
      %p95 = scmp.ne.s32.totalorder %s90, %s92
      %p96 = scmp.eq.s32.totalorder %s12, 0
      %p97 = por %p95, %p96
      %p98 = scmp.ne.s32.totalorder %s90, %s92
      %p99 = scmp.eq.s32.totalorder %s17, 7
      %p100 = por %p98, %p99
      %p101 = scmp.ne.s32.totalorder %s92, %s93
      %p102 = scmp.eq.s32.totalorder %s17, 0
      %p103 = por %p101, %p102
      %p104 = scmp.ne.s32.totalorder %s92, %s93
      %p105 = scmp.eq.s32.totalorder %s18, 7
      %p106 = por %p104, %p105
      %p108 = scmp.ne.s32.totalorder %s93, %s107
      %p109 = scmp.eq.s32.totalorder %s18, 0
      %p110 = por %p108, %p109
      %s111 = ssub.s32 %s19, %s38
      %s112 = ssub.s32 %s20, %s34
      %s113 = sor.u32 %s111, %s112
      %s114 = ssub.s32 %s21, %s30
      %s115 = sor.u32 %s113, %s114
      %p116 = scmp.eq.s32.totalorder %s115, 0
      %s118 = sadd.s32 %s117, 1
      %s119 = scalar_select %p116, %s117, %s118
      %p122 = pneg %p116
      %p123 = scmp.eq.s32.totalorder %s12, 7
      %p124 = por %p122, %p123
      %p125 = scmp.ne.s32.totalorder %s117, %s120
      %p126 = scmp.eq.s32.totalorder %s12, 0
      %p127 = por %p125, %p126
      %p128 = scmp.ne.s32.totalorder %s117, %s120
      %p129 = scmp.eq.s32.totalorder %s17, 7
      %p130 = por %p128, %p129
      %p131 = scmp.ne.s32.totalorder %s120, %s121
      %p132 = scmp.eq.s32.totalorder %s17, 0
      %p133 = por %p131, %p132
      %p134 = scmp.ne.s32.totalorder %s120, %s121
      %p135 = scmp.eq.s32.totalorder %s18, 7
      %p136 = por %p134, %p135
      %p138 = scmp.ne.s32.totalorder %s121, %s137
      %p139 = scmp.eq.s32.totalorder %s18, 0
      %p140 = por %p138, %p139
      %p141 = scmp.le.s32.totalorder 1, %s12
      %p142 = scmp.lt.s32.totalorder %s12, 9
      %p143 = pnand %p141, %p142
      %p144 = pneg %p143
      // Predicated region
      $region9: #{nonlocal_block_embedded_gaussian.2} parent=5 // pred_check
        _
      $region10: #{nonlocal_block_embedded_gaussian.2} parent=5 // pred_check_branch
        %146 = sbr.rel (%p143) target = $region12
      $region11: #{nonlocal_block_embedded_gaussian.2} parent=5 // pred_region
        %s147 = ssub.s32 %s12, 1
        // Predicated region
        $region13: #{nonlocal_block_embedded_gaussian.2} parent=11 // pred_check
          %p148 = pneg %p82
        $region14: #{nonlocal_block_embedded_gaussian.2} parent=11 // pred_check_branch
          %150 = sbr.rel (%p148) target = $region16
        $region15: #{nonlocal_block_embedded_gaussian.2} parent=11 // pred_region
          _
        $region16: #{nonlocal_block_embedded_gaussian.2} parent=11 // pred_fallthru
          _
        // Predicated region
        $region17: #{nonlocal_block_embedded_gaussian.2} parent=11 // pred_check
          %p151 = pneg %p103
        $region18: #{nonlocal_block_embedded_gaussian.2} parent=11 // pred_check_branch
          %153 = sbr.rel (%p151) target = $region20
        $region19: #{nonlocal_block_embedded_gaussian.2} parent=11 // pred_region
          _
        $region20: #{nonlocal_block_embedded_gaussian.2} parent=11 // pred_fallthru
          _
      $region12: #{nonlocal_block_embedded_gaussian.2} parent=5 // pred_fallthru
        _
      %p154 = scmp.lt.s32.totalorder %s12, 8
      // Predicated region
      $region21: #{nonlocal_block_embedded_gaussian.2} parent=5 // pred_check
        %p155 = pneg %p154
      $region22: #{nonlocal_block_embedded_gaussian.2} parent=5 // pred_check_branch
        %157 = sbr.rel (%p155) target = $region24
      $region23: #{nonlocal_block_embedded_gaussian.2} parent=5 // pred_region
        // Predicated region
        $region25: #{nonlocal_block_embedded_gaussian.2} parent=23 // pred_check
          %p158 = pneg %p55
        $region26: #{nonlocal_block_embedded_gaussian.2} parent=23 // pred_check_branch
          %160 = sbr.rel (%p158) target = $region28
        $region27: #{nonlocal_block_embedded_gaussian.2} parent=23 // pred_region
          #allocation5 [shape = 'u32[6]{0}', space=smem, size = 0x18, scoped, tag = 'DMA stride descriptor']
          %s161 = sand.u32 %s45, 1
          %s162 = scalar_lea.sflag [#allocation3], %s161
          %s163 = sand.u32 %s45, 1
          %s164 = smul.addr %s163, 256
          %s165 = scalar_lea.vmem [#allocation2], %s164
          %s166 = smul.u32 4, %s20
          %s167 = smul.u32 4, %s21
          %s169 = ssub.s32 4096, 4096
          %170 = vsyncadd %s162, %s169
          %s171 = smul.addr %s167, 2
          %s172 = smul.addr %s166, 32
          %s173 = sadd.s32 %s171, %s172
          %s174 = smul.addr %s19, 128
          %s175 = sadd.s32 %s173, %s174
          %s176 = smul.addr %s175, 128
          %s177 = scalar_lea.hbm %s0, %s176
          %s179 = sshll.u32 1, 14
          %s180 = sxor.u32 4294967295, %s179
          %s182 = sld [smem:[#allocation0]]
          %s183 = sadd.s32 2, %s182
          %s185 = sshll.u32 7, 26
          %s186 = sxor.u32 4294967295, %s185
          %s187 = sand.u32 0, %s186
          %s188 = sshll.u32 %s183, 26
          %s189 = sor.u32 %s187, %s188
          %s190 = sshll.u32 %s165, 4
          %s191 = int_to_ptr.vmem [resolvable:$true] %s190
          %197 = sst [smem:[#allocation5]] 4096
          %s198 = scalar_lea.smem [#allocation5], 1
          %199 = sst [smem:[%s198]] 1024
          %s200 = scalar_lea.smem [#allocation5], 2
          %201 = sst [smem:[%s200]] 8
          %s202 = scalar_lea.smem [#allocation5], 3
          %203 = sst [smem:[%s202]] 128
          %s204 = scalar_lea.smem [#allocation5], 4
          %205 = sst [smem:[%s204]] 128
          %s206 = scalar_lea.smem [#allocation5], 5
          %207 = sst [smem:[%s206]] 8
          %209 = dma.general %s177, 4096, %s191, %s162, [#allocation4], [#allocation5], %s189, 0
        $region28: #{nonlocal_block_embedded_gaussian.2} parent=23 // pred_fallthru
          _
      $region24: #{nonlocal_block_embedded_gaussian.2} parent=5 // pred_fallthru
        _
      %p210 = scmp.le.s32.totalorder 1, %s12
      %p211 = scmp.lt.s32.totalorder %s12, 9
      %p212 = pnand %p210, %p211
      %p213 = pneg %p212
      // Predicated region
      $region29: #{nonlocal_block_embedded_gaussian.2} parent=5 // pred_check
        _
      $region30: #{nonlocal_block_embedded_gaussian.2} parent=5 // pred_check_branch
        %215 = sbr.rel (%p212) target = $region32
      $region31: #{nonlocal_block_embedded_gaussian.2} parent=5 // pred_region
        %s216 = ssub.s32 %s12, 1
        %s217 = sand.u32 %s48, 1
        %s218 = scalar_lea.sflag [#allocation3], %s217
        %s219 = sand.u32 %s48, 1
        %s220 = smul.addr %s219, 256
        %s221 = scalar_lea.vmem [#allocation2], %s220
        // Predicated region
        $region33: #{nonlocal_block_embedded_gaussian.2} parent=31 // pred_check
          %p222 = pneg %p61
        $region34: #{nonlocal_block_embedded_gaussian.2} parent=31 // pred_check_branch
          %224 = sbr.rel (%p222) target = $region36
        $region35: #{nonlocal_block_embedded_gaussian.2} parent=31 // pred_region
          %225 = dma.done %s218, 4096
        $region36: #{nonlocal_block_embedded_gaussian.2} parent=31 // pred_fallthru
          _
        %s226 = sand.u32 %s48, 1
        %s227 = scalar_lea.sflag [#allocation3], %s226
        %s228 = sand.u32 %s48, 1
        %s229 = smul.addr %s228, 256
        %s230 = scalar_lea.vmem [#allocation2], %s229
        %p231 = pneg %p61
        %p232 = pneg %p58
        %p233 = pneg %p82
        %p234 = pneg %p79
        %p235 = pneg %p103
        %p236 = pneg %p100
        %p237 = pneg %p133
        %p238 = pneg %p130
        %p239 = scmp.lt.s32.totalorder %s22, 1
        %s240 = scalar_select %p239, %s22, 1
        %p241 = scmp.lt.s32.totalorder %s23, 0
        %s242 = scalar_select %p241, %s23, 0
        %p243 = scmp.lt.s32.totalorder %s24, 3
        %s244 = scalar_select %p243, %s24, 3
        %s245 = smul.addr %s244, 4
        %s246 = smul.addr %s242, 16
        %s247 = sadd.s32 %s245, %s246
        %s248 = smul.addr %s240, 16
        %s249 = sadd.s32 %s247, %s248
        %s250 = smul.addr %s249, 8
        %s251 = scalar_lea.vmem %s3, %s250
        %s252 = smul.u32 4, %s23
        %s253 = smul.u32 4, %s24
        %p254 = scmp.lt.s32.totalorder %s22, 1
        %s255 = scalar_select %p254, %s22, 1
        %p256 = scmp.lt.s32.totalorder %s23, 0
        %s257 = scalar_select %p256, %s23, 0
        %p258 = scmp.lt.s32.totalorder %s24, 3
        %s259 = scalar_select %p258, %s24, 3
        %s260 = smul.addr %s259, 4
        %s261 = smul.addr %s257, 16
        %s262 = sadd.s32 %s260, %s261
        %s263 = smul.addr %s255, 16
        %s264 = sadd.s32 %s262, %s263
        %s265 = smul.addr %s264, 8
        %s266 = scalar_lea.vmem %s3, %s265
        %v267 = vld [vmem:[%s221] sm:$0xff]
        %v268 = vld [vmem:[%s221 + $0x8] sm:$0xff]
        %v269 = vld [vmem:[%s1] sm:$0xff]
        %v270 = vld [vmem:[%s1 + $0x8] sm:$0xff]
        %v271 = vld [vmem:[%s1 + $0x10] sm:$0xff]
        %v272 = vld [vmem:[%s1 + $0x18] sm:$0xff]
        %v273 = vld [vmem:[%s1 + $0x20] sm:$0xff]
        %v274 = vld [vmem:[%s1 + $0x28] sm:$0xff]
        %v275 = vld [vmem:[%s1 + $0x30] sm:$0xff]
        %v276 = vld [vmem:[%s1 + $0x38] sm:$0xff]
        %v277 = vld [vmem:[%s1 + $0x40] sm:$0xff]
        %v278 = vld [vmem:[%s1 + $0x48] sm:$0xff]
        %v279 = vld [vmem:[%s1 + $0x50] sm:$0xff]
        %v280 = vld [vmem:[%s1 + $0x58] sm:$0xff]
        %v281 = vld [vmem:[%s1 + $0x60] sm:$0xff]
        %v282 = vld [vmem:[%s1 + $0x68] sm:$0xff]
        %v283 = vld [vmem:[%s1 + $0x70] sm:$0xff]
        %v284 = vld [vmem:[%s1 + $0x78] sm:$0xff]
        %v285 = vld [vmem:[%s1 + $0x80] sm:$0xff]
        %v286 = vld [vmem:[%s1 + $0x88] sm:$0xff]
        %v287 = vld [vmem:[%s1 + $0x90] sm:$0xff]
        %v288 = vld [vmem:[%s1 + $0x98] sm:$0xff]
        %v289 = vld [vmem:[%s1 + $0xa0] sm:$0xff]
        %v290 = vld [vmem:[%s1 + $0xa8] sm:$0xff]
        %v291 = vld [vmem:[%s1 + $0xb0] sm:$0xff]
        %v292 = vld [vmem:[%s1 + $0xb8] sm:$0xff]
        %v293 = vld [vmem:[%s1 + $0xc0] sm:$0xff]
        %v294 = vld [vmem:[%s1 + $0xc8] sm:$0xff]
        %v295 = vld [vmem:[%s1 + $0xd0] sm:$0xff]
        %v296 = vld [vmem:[%s1 + $0xd8] sm:$0xff]
        %v297 = vld [vmem:[%s1 + $0xe0] sm:$0xff]
        %v298 = vld [vmem:[%s1 + $0xe8] sm:$0xff]
        %v299 = vld [vmem:[%s1 + $0xf0] sm:$0xff]
        %v300 = vld [vmem:[%s1 + $0xf8] sm:$0xff]
        %301 = vmatprep.subr.mxu0 %v270
        %302 = vmatpush1.msra.mxu0 %v269
        %303 = vmatprep.subr.mxu0 %v272
        %304 = vmatpush1.msra.mxu0 %v271
        %305 = vmatprep.subr.mxu0 %v274
        %306 = vmatpush1.msra.mxu0 %v273
        %307 = vmatprep.subr.mxu0 %v276
        %308 = vmatpush1.msra.mxu0 %v275
        %309 = vmatprep.subr.mxu0 %v278
        %310 = vmatpush1.msra.mxu0 %v277
        %311 = vmatprep.subr.mxu0 %v280
        %312 = vmatpush1.msra.mxu0 %v279
        %313 = vmatprep.subr.mxu0 %v282
        %314 = vmatpush1.msra.mxu0 %v281
        %315 = vmatprep.subr.mxu0 %v284
        %316 = vmatpush1.msra.mxu0 %v283
        %317 = vmatprep.subr.mxu0 %v286
        %318 = vmatpush1.msra.mxu0 %v285
        %319 = vmatprep.subr.mxu0 %v288
        %320 = vmatpush1.msra.mxu0 %v287
        %321 = vmatprep.subr.mxu0 %v290
        %322 = vmatpush1.msra.mxu0 %v289
        %323 = vmatprep.subr.mxu0 %v292
        %324 = vmatpush1.msra.mxu0 %v291
        %325 = vmatprep.subr.mxu0 %v294
        %326 = vmatpush1.msra.mxu0 %v293
        %327 = vmatprep.subr.mxu0 %v296
        %328 = vmatpush1.msra.mxu0 %v295
        %329 = vmatprep.subr.mxu0 %v298
        %330 = vmatpush1.msra.mxu0 %v297
        %331 = vmatprep.subr.mxu0 %v300
        %332 = vmatpush1.msra.mxu0 %v299
        %333 = vmatprep.subr.mxu0 0.0
        %334 = vmatpush1.msra.mxu0 0.0
        %335 = vmatprep.subr.mxu0 0.0
        %336 = vmatpush1.msra.mxu0 0.0
        %337 = vmatprep.subr.mxu0 0.0
        %338 = vmatpush1.msra.mxu0 0.0
        %339 = vmatprep.subr.mxu0 0.0
        %340 = vmatpush1.msra.mxu0 0.0
        %341 = vmatprep.subr.mxu0 0.0
        %342 = vmatpush1.msra.mxu0 0.0
        %343 = vmatprep.subr.mxu0 0.0
        %344 = vmatpush1.msra.mxu0 0.0
        %345 = vmatprep.subr.mxu0 0.0
        %346 = vmatpush1.msra.mxu0 0.0
        %347 = vmatprep.subr.mxu0 0.0
        %348 = vmatpush1.msra.mxu0 0.0
        %349 = vmatprep.subr.mxu0 0.0
        %350 = vmatpush1.msra.mxu0 0.0
        %351 = vmatprep.subr.mxu0 0.0
        %352 = vmatpush1.msra.mxu0 0.0
        %353 = vmatprep.subr.mxu0 0.0
        %354 = vmatpush1.msra.mxu0 0.0
        %355 = vmatprep.subr.mxu0 0.0
        %356 = vmatpush1.msra.mxu0 0.0
        %357 = vmatprep.subr.mxu0 0.0
        %358 = vmatpush1.msra.mxu0 0.0
        %359 = vmatprep.subr.mxu0 0.0
        %360 = vmatpush1.msra.mxu0 0.0
        %361 = vmatprep.subr.mxu0 0.0
        %362 = vmatpush1.msra.mxu0 0.0
        %363 = vmatprep.subr.mxu0 0.0
        %364 = vmatpush1.msra.mxu0 0.0
        %365 = vmatprep.mubr.f32.mxu0 0.0
        %366 = vmatmul.mubr.f32.gmra.mrb[0].mxu0 %v267
        %v367 = vpop.f32.mrb[0].mxu0
        %v368 = vadd.f32 0.0, %v367
        %v369 = vpop.f32.mrb[0].mxu0
        %v370 = vadd.f32 0.0, %v369
        %371 = vmatprep.mubr.f32.mxu0 0.0
        %372 = vmatmul.mubr.f32.gmra.mrb[0].mxu0 %v268
        %v373 = vpop.f32.mrb[0].mxu0
        %v374 = vadd.f32 0.0, %v373
        %v375 = vpop.f32.mrb[0].mxu0
        %v376 = vadd.f32 0.0, %v375
        %377 = vdwg.mxu0
        %s378 = scalar_lea.vmem %s221, 16 [#allocation2]
        %v379 = vld [vmem:[%s378] sm:$0xff]
        %v380 = vld [vmem:[%s378 + $0x8] sm:$0xff]
        %381 = vmatprep.subr.mxu0 %v270
        %382 = vmatpush1.msra.mxu0 %v269
        %383 = vmatprep.subr.mxu0 %v272
        %384 = vmatpush1.msra.mxu0 %v271
        %385 = vmatprep.subr.mxu0 %v274
        %386 = vmatpush1.msra.mxu0 %v273
        %387 = vmatprep.subr.mxu0 %v276
        %388 = vmatpush1.msra.mxu0 %v275
        %389 = vmatprep.subr.mxu0 %v278
        %390 = vmatpush1.msra.mxu0 %v277
        %391 = vmatprep.subr.mxu0 %v280
        %392 = vmatpush1.msra.mxu0 %v279
        %393 = vmatprep.subr.mxu0 %v282
        %394 = vmatpush1.msra.mxu0 %v281
        %395 = vmatprep.subr.mxu0 %v284
        %396 = vmatpush1.msra.mxu0 %v283
        %397 = vmatprep.subr.mxu0 %v286
        %398 = vmatpush1.msra.mxu0 %v285
        %399 = vmatprep.subr.mxu0 %v288
        %400 = vmatpush1.msra.mxu0 %v287
        %401 = vmatprep.subr.mxu0 %v290
        %402 = vmatpush1.msra.mxu0 %v289
        %403 = vmatprep.subr.mxu0 %v292
        %404 = vmatpush1.msra.mxu0 %v291
        %405 = vmatprep.subr.mxu0 %v294
        %406 = vmatpush1.msra.mxu0 %v293
        %407 = vmatprep.subr.mxu0 %v296
        %408 = vmatpush1.msra.mxu0 %v295
        %409 = vmatprep.subr.mxu0 %v298
        %410 = vmatpush1.msra.mxu0 %v297
        %411 = vmatprep.subr.mxu0 %v300
        %412 = vmatpush1.msra.mxu0 %v299
        %413 = vmatprep.subr.mxu0 0.0
        %414 = vmatpush1.msra.mxu0 0.0
        %415 = vmatprep.subr.mxu0 0.0
        %416 = vmatpush1.msra.mxu0 0.0
        %417 = vmatprep.subr.mxu0 0.0
        %418 = vmatpush1.msra.mxu0 0.0
        %419 = vmatprep.subr.mxu0 0.0
        %420 = vmatpush1.msra.mxu0 0.0
        %421 = vmatprep.subr.mxu0 0.0
        %422 = vmatpush1.msra.mxu0 0.0
        %423 = vmatprep.subr.mxu0 0.0
        %424 = vmatpush1.msra.mxu0 0.0
        %425 = vmatprep.subr.mxu0 0.0
        %426 = vmatpush1.msra.mxu0 0.0
        %427 = vmatprep.subr.mxu0 0.0
        %428 = vmatpush1.msra.mxu0 0.0
        %429 = vmatprep.subr.mxu0 0.0
        %430 = vmatpush1.msra.mxu0 0.0
        %431 = vmatprep.subr.mxu0 0.0
        %432 = vmatpush1.msra.mxu0 0.0
        %433 = vmatprep.subr.mxu0 0.0
        %434 = vmatpush1.msra.mxu0 0.0
        %435 = vmatprep.subr.mxu0 0.0
        %436 = vmatpush1.msra.mxu0 0.0
        %437 = vmatprep.subr.mxu0 0.0
        %438 = vmatpush1.msra.mxu0 0.0
        %439 = vmatprep.subr.mxu0 0.0
        %440 = vmatpush1.msra.mxu0 0.0
        %441 = vmatprep.subr.mxu0 0.0
        %442 = vmatpush1.msra.mxu0 0.0
        %443 = vmatprep.subr.mxu0 0.0
        %444 = vmatpush1.msra.mxu0 0.0
        %445 = vmatprep.mubr.f32.mxu0 0.0
        %446 = vmatmul.mubr.f32.gmra.mrb[0].mxu0 %v379
        %v447 = vpop.f32.mrb[0].mxu0
        %v448 = vadd.f32 0.0, %v447
        %v449 = vpop.f32.mrb[0].mxu0
        %v450 = vadd.f32 0.0, %v449
        %451 = vmatprep.mubr.f32.mxu0 0.0
        %452 = vmatmul.mubr.f32.gmra.mrb[0].mxu0 %v380
        %v453 = vpop.f32.mrb[0].mxu0
        %v454 = vadd.f32 0.0, %v453
        %v455 = vpop.f32.mrb[0].mxu0
        %v456 = vadd.f32 0.0, %v455
        %457 = vdwg.mxu0
        %v458 = vmax.f32 %v368, %v448
        %v459 = vmax.f32 %v370, %v450
        %v460 = vmax.f32 %v374, %v454
        %v461 = vmax.f32 %v376, %v456
        %s462 = scalar_lea.vmem %s221, 32 [#allocation2]
        %v463 = vld [vmem:[%s462] sm:$0xff]
        %v464 = vld [vmem:[%s462 + $0x8] sm:$0xff]
        %465 = vmatprep.subr.mxu0 %v270
        %466 = vmatpush1.msra.mxu0 %v269
        %467 = vmatprep.subr.mxu0 %v272
        %468 = vmatpush1.msra.mxu0 %v271
        %469 = vmatprep.subr.mxu0 %v274
        %470 = vmatpush1.msra.mxu0 %v273
        %471 = vmatprep.subr.mxu0 %v276
        %472 = vmatpush1.msra.mxu0 %v275
        %473 = vmatprep.subr.mxu0 %v278
        %474 = vmatpush1.msra.mxu0 %v277
        %475 = vmatprep.subr.mxu0 %v280
        %476 = vmatpush1.msra.mxu0 %v279
        %477 = vmatprep.subr.mxu0 %v282
        %478 = vmatpush1.msra.mxu0 %v281
        %479 = vmatprep.subr.mxu0 %v284
        %480 = vmatpush1.msra.mxu0 %v283
        %481 = vmatprep.subr.mxu0 %v286
        %482 = vmatpush1.msra.mxu0 %v285
        %483 = vmatprep.subr.mxu0 %v288
        %484 = vmatpush1.msra.mxu0 %v287
        %485 = vmatprep.subr.mxu0 %v290
        %486 = vmatpush1.msra.mxu0 %v289
        %487 = vmatprep.subr.mxu0 %v292
        %488 = vmatpush1.msra.mxu0 %v291
        %489 = vmatprep.subr.mxu0 %v294
        %490 = vmatpush1.msra.mxu0 %v293
        %491 = vmatprep.subr.mxu0 %v296
        %492 = vmatpush1.msra.mxu0 %v295
        %493 = vmatprep.subr.mxu0 %v298
        %494 = vmatpush1.msra.mxu0 %v297
        %495 = vmatprep.subr.mxu0 %v300
        %496 = vmatpush1.msra.mxu0 %v299
        %497 = vmatprep.subr.mxu0 0.0
        %498 = vmatpush1.msra.mxu0 0.0
        %499 = vmatprep.subr.mxu0 0.0
        %500 = vmatpush1.msra.mxu0 0.0
        %501 = vmatprep.subr.mxu0 0.0
        %502 = vmatpush1.msra.mxu0 0.0
        %503 = vmatprep.subr.mxu0 0.0
        %504 = vmatpush1.msra.mxu0 0.0
        %505 = vmatprep.subr.mxu0 0.0
        %506 = vmatpush1.msra.mxu0 0.0
        %507 = vmatprep.subr.mxu0 0.0
        %508 = vmatpush1.msra.mxu0 0.0
        %509 = vmatprep.subr.mxu0 0.0
        %510 = vmatpush1.msra.mxu0 0.0
        %511 = vmatprep.subr.mxu0 0.0
        %512 = vmatpush1.msra.mxu0 0.0
        %513 = vmatprep.subr.mxu0 0.0
        %514 = vmatpush1.msra.mxu0 0.0
        %515 = vmatprep.subr.mxu0 0.0
        %516 = vmatpush1.msra.mxu0 0.0
        %517 = vmatprep.subr.mxu0 0.0
        %518 = vmatpush1.msra.mxu0 0.0
        %519 = vmatprep.subr.mxu0 0.0
        %520 = vmatpush1.msra.mxu0 0.0
        %521 = vmatprep.subr.mxu0 0.0
        %522 = vmatpush1.msra.mxu0 0.0
        %523 = vmatprep.subr.mxu0 0.0
        %524 = vmatpush1.msra.mxu0 0.0
        %525 = vmatprep.subr.mxu0 0.0
        %526 = vmatpush1.msra.mxu0 0.0
        %527 = vmatprep.subr.mxu0 0.0
        %528 = vmatpush1.msra.mxu0 0.0
        %529 = vmatprep.mubr.f32.mxu0 0.0
        %530 = vmatmul.mubr.f32.gmra.mrb[0].mxu0 %v463
        %v531 = vpop.f32.mrb[0].mxu0
        %v532 = vadd.f32 0.0, %v531
        %v533 = vpop.f32.mrb[0].mxu0
        %v534 = vadd.f32 0.0, %v533
        %535 = vmatprep.mubr.f32.mxu0 0.0
        %536 = vmatmul.mubr.f32.gmra.mrb[0].mxu0 %v464
        %v537 = vpop.f32.mrb[0].mxu0
        %v538 = vadd.f32 0.0, %v537
        %v539 = vpop.f32.mrb[0].mxu0
        %v540 = vadd.f32 0.0, %v539
        %541 = vdwg.mxu0
        %v542 = vmax.f32 %v458, %v532
        %v543 = vmax.f32 %v459, %v534
        %v544 = vmax.f32 %v460, %v538
        %v545 = vmax.f32 %v461, %v540
        %s546 = scalar_lea.vmem %s221, 48 [#allocation2]
        %v547 = vld [vmem:[%s546] sm:$0xff]
        %v548 = vld [vmem:[%s546 + $0x8] sm:$0xff]
        %549 = vmatprep.subr.mxu0 %v270
        %550 = vmatpush1.msra.mxu0 %v269
        %551 = vmatprep.subr.mxu0 %v272
        %552 = vmatpush1.msra.mxu0 %v271
        %553 = vmatprep.subr.mxu0 %v274
        %554 = vmatpush1.msra.mxu0 %v273
        %555 = vmatprep.subr.mxu0 %v276
        %556 = vmatpush1.msra.mxu0 %v275
        %557 = vmatprep.subr.mxu0 %v278
        %558 = vmatpush1.msra.mxu0 %v277
        %559 = vmatprep.subr.mxu0 %v280
        %560 = vmatpush1.msra.mxu0 %v279
        %561 = vmatprep.subr.mxu0 %v282
        %562 = vmatpush1.msra.mxu0 %v281
        %563 = vmatprep.subr.mxu0 %v284
        %564 = vmatpush1.msra.mxu0 %v283
        %565 = vmatprep.subr.mxu0 %v286
        %566 = vmatpush1.msra.mxu0 %v285
        %567 = vmatprep.subr.mxu0 %v288
        %568 = vmatpush1.msra.mxu0 %v287
        %569 = vmatprep.subr.mxu0 %v290
        %570 = vmatpush1.msra.mxu0 %v289
        %571 = vmatprep.subr.mxu0 %v292
        %572 = vmatpush1.msra.mxu0 %v291
        %573 = vmatprep.subr.mxu0 %v294
        %574 = vmatpush1.msra.mxu0 %v293
        %575 = vmatprep.subr.mxu0 %v296
        %576 = vmatpush1.msra.mxu0 %v295
        %577 = vmatprep.subr.mxu0 %v298
        %578 = vmatpush1.msra.mxu0 %v297
        %579 = vmatprep.subr.mxu0 %v300
        %580 = vmatpush1.msra.mxu0 %v299
        %581 = vmatprep.subr.mxu0 0.0
        %582 = vmatpush1.msra.mxu0 0.0
        %583 = vmatprep.subr.mxu0 0.0
        %584 = vmatpush1.msra.mxu0 0.0
        %585 = vmatprep.subr.mxu0 0.0
        %586 = vmatpush1.msra.mxu0 0.0
        %587 = vmatprep.subr.mxu0 0.0
        %588 = vmatpush1.msra.mxu0 0.0
        %589 = vmatprep.subr.mxu0 0.0
        %590 = vmatpush1.msra.mxu0 0.0
        %591 = vmatprep.subr.mxu0 0.0
        %592 = vmatpush1.msra.mxu0 0.0
        %593 = vmatprep.subr.mxu0 0.0
        %594 = vmatpush1.msra.mxu0 0.0
        %595 = vmatprep.subr.mxu0 0.0
        %596 = vmatpush1.msra.mxu0 0.0
        %597 = vmatprep.subr.mxu0 0.0
        %598 = vmatpush1.msra.mxu0 0.0
        %599 = vmatprep.subr.mxu0 0.0
        %600 = vmatpush1.msra.mxu0 0.0
        %601 = vmatprep.subr.mxu0 0.0
        %602 = vmatpush1.msra.mxu0 0.0
        %603 = vmatprep.subr.mxu0 0.0
        %604 = vmatpush1.msra.mxu0 0.0
        %605 = vmatprep.subr.mxu0 0.0
        %606 = vmatpush1.msra.mxu0 0.0
        %607 = vmatprep.subr.mxu0 0.0
        %608 = vmatpush1.msra.mxu0 0.0
        %609 = vmatprep.subr.mxu0 0.0
        %610 = vmatpush1.msra.mxu0 0.0
        %611 = vmatprep.subr.mxu0 0.0
        %612 = vmatpush1.msra.mxu0 0.0
        %613 = vmatprep.mubr.f32.mxu0 0.0
        %614 = vmatmul.mubr.f32.gmra.mrb[0].mxu0 %v547
        %v615 = vpop.f32.mrb[0].mxu0
        %v616 = vadd.f32 0.0, %v615
        %v617 = vpop.f32.mrb[0].mxu0
        %v618 = vadd.f32 0.0, %v617
        %619 = vmatprep.mubr.f32.mxu0 0.0
        %620 = vmatmul.mubr.f32.gmra.mrb[0].mxu0 %v548
        %v621 = vpop.f32.mrb[0].mxu0
        %v622 = vadd.f32 0.0, %v621
        %v623 = vpop.f32.mrb[0].mxu0
        %v624 = vadd.f32 0.0, %v623
        %625 = vdwg.mxu0
        %v626 = vmax.f32 %v542, %v616
        %v627 = vmax.f32 %v543, %v618
        %v628 = vmax.f32 %v544, %v622
        %v629 = vmax.f32 %v545, %v624
        %s630 = scalar_lea.vmem %s221, 64 [#allocation2]
        %v631 = vld [vmem:[%s630] sm:$0xff]
        %v632 = vld [vmem:[%s630 + $0x8] sm:$0xff]
        %633 = vmatprep.subr.mxu0 %v270
        %634 = vmatpush1.msra.mxu0 %v269
        %635 = vmatprep.subr.mxu0 %v272
        %636 = vmatpush1.msra.mxu0 %v271
        %637 = vmatprep.subr.mxu0 %v274
        %638 = vmatpush1.msra.mxu0 %v273
        %639 = vmatprep.subr.mxu0 %v276
        %640 = vmatpush1.msra.mxu0 %v275
        %641 = vmatprep.subr.mxu0 %v278
        %642 = vmatpush1.msra.mxu0 %v277
        %643 = vmatprep.subr.mxu0 %v280
        %644 = vmatpush1.msra.mxu0 %v279
        %645 = vmatprep.subr.mxu0 %v282
        %646 = vmatpush1.msra.mxu0 %v281
        %647 = vmatprep.subr.mxu0 %v284
        %648 = vmatpush1.msra.mxu0 %v283
        %649 = vmatprep.subr.mxu0 %v286
        %650 = vmatpush1.msra.mxu0 %v285
        %651 = vmatprep.subr.mxu0 %v288
        %652 = vmatpush1.msra.mxu0 %v287
        %653 = vmatprep.subr.mxu0 %v290
        %654 = vmatpush1.msra.mxu0 %v289
        %655 = vmatprep.subr.mxu0 %v292
        %656 = vmatpush1.msra.mxu0 %v291
        %657 = vmatprep.subr.mxu0 %v294
        %658 = vmatpush1.msra.mxu0 %v293
        %659 = vmatprep.subr.mxu0 %v296
        %660 = vmatpush1.msra.mxu0 %v295
        %661 = vmatprep.subr.mxu0 %v298
        %662 = vmatpush1.msra.mxu0 %v297
        %663 = vmatprep.subr.mxu0 %v300
        %664 = vmatpush1.msra.mxu0 %v299
        %665 = vmatprep.subr.mxu0 0.0
        %666 = vmatpush1.msra.mxu0 0.0
        %667 = vmatprep.subr.mxu0 0.0
        %668 = vmatpush1.msra.mxu0 0.0
        %669 = vmatprep.subr.mxu0 0.0
        %670 = vmatpush1.msra.mxu0 0.0
        %671 = vmatprep.subr.mxu0 0.0
        %672 = vmatpush1.msra.mxu0 0.0
        %673 = vmatprep.subr.mxu0 0.0
        %674 = vmatpush1.msra.mxu0 0.0
        %675 = vmatprep.subr.mxu0 0.0
        %676 = vmatpush1.msra.mxu0 0.0
        %677 = vmatprep.subr.mxu0 0.0
        %678 = vmatpush1.msra.mxu0 0.0
        %679 = vmatprep.subr.mxu0 0.0
        %680 = vmatpush1.msra.mxu0 0.0
        %681 = vmatprep.subr.mxu0 0.0
        %682 = vmatpush1.msra.mxu0 0.0
        %683 = vmatprep.subr.mxu0 0.0
        %684 = vmatpush1.msra.mxu0 0.0
        %685 = vmatprep.subr.mxu0 0.0
        %686 = vmatpush1.msra.mxu0 0.0
        %687 = vmatprep.subr.mxu0 0.0
        %688 = vmatpush1.msra.mxu0 0.0
        %689 = vmatprep.subr.mxu0 0.0
        %690 = vmatpush1.msra.mxu0 0.0
        %691 = vmatprep.subr.mxu0 0.0
        %692 = vmatpush1.msra.mxu0 0.0
        %693 = vmatprep.subr.mxu0 0.0
        %694 = vmatpush1.msra.mxu0 0.0
        %695 = vmatprep.subr.mxu0 0.0
        %696 = vmatpush1.msra.mxu0 0.0
        %697 = vmatprep.mubr.f32.mxu0 0.0
        %698 = vmatmul.mubr.f32.gmra.mrb[0].mxu0 %v631
        %v699 = vpop.f32.mrb[0].mxu0
        %v700 = vadd.f32 0.0, %v699
        %v701 = vpop.f32.mrb[0].mxu0
        %v702 = vadd.f32 0.0, %v701
        %703 = vmatprep.mubr.f32.mxu0 0.0
        %704 = vmatmul.mubr.f32.gmra.mrb[0].mxu0 %v632
        %v705 = vpop.f32.mrb[0].mxu0
        %v706 = vadd.f32 0.0, %v705
        %v707 = vpop.f32.mrb[0].mxu0
        %v708 = vadd.f32 0.0, %v707
        %709 = vdwg.mxu0
        %v710 = vmax.f32 %v626, %v700
        %v711 = vmax.f32 %v627, %v702
        %v712 = vmax.f32 %v628, %v706
        %v713 = vmax.f32 %v629, %v708
        %s714 = scalar_lea.vmem %s221, 80 [#allocation2]
        %v715 = vld [vmem:[%s714] sm:$0xff]
        %v716 = vld [vmem:[%s714 + $0x8] sm:$0xff]
        %717 = vmatprep.subr.mxu0 %v270
        %718 = vmatpush1.msra.mxu0 %v269
        %719 = vmatprep.subr.mxu0 %v272
        %720 = vmatpush1.msra.mxu0 %v271
        %721 = vmatprep.subr.mxu0 %v274
        %722 = vmatpush1.msra.mxu0 %v273
        %723 = vmatprep.subr.mxu0 %v276
        %724 = vmatpush1.msra.mxu0 %v275
        %725 = vmatprep.subr.mxu0 %v278
        %726 = vmatpush1.msra.mxu0 %v277
        %727 = vmatprep.subr.mxu0 %v280
        %728 = vmatpush1.msra.mxu0 %v279
        %729 = vmatprep.subr.mxu0 %v282
        %730 = vmatpush1.msra.mxu0 %v281
        %731 = vmatprep.subr.mxu0 %v284
        %732 = vmatpush1.msra.mxu0 %v283
        %733 = vmatprep.subr.mxu0 %v286
        %734 = vmatpush1.msra.mxu0 %v285
        %735 = vmatprep.subr.mxu0 %v288
        %736 = vmatpush1.msra.mxu0 %v287
        %737 = vmatprep.subr.mxu0 %v290
        %738 = vmatpush1.msra.mxu0 %v289
        %739 = vmatprep.subr.mxu0 %v292
        %740 = vmatpush1.msra.mxu0 %v291
        %741 = vmatprep.subr.mxu0 %v294
        %742 = vmatpush1.msra.mxu0 %v293
        %743 = vmatprep.subr.mxu0 %v296
        %744 = vmatpush1.msra.mxu0 %v295
        %745 = vmatprep.subr.mxu0 %v298
        %746 = vmatpush1.msra.mxu0 %v297
        %747 = vmatprep.subr.mxu0 %v300
        %748 = vmatpush1.msra.mxu0 %v299
        %749 = vmatprep.subr.mxu0 0.0
        %750 = vmatpush1.msra.mxu0 0.0
        %751 = vmatprep.subr.mxu0 0.0
        %752 = vmatpush1.msra.mxu0 0.0
        %753 = vmatprep.subr.mxu0 0.0
        %754 = vmatpush1.msra.mxu0 0.0
        %755 = vmatprep.subr.mxu0 0.0
        %756 = vmatpush1.msra.mxu0 0.0
        %757 = vmatprep.subr.mxu0 0.0
        %758 = vmatpush1.msra.mxu0 0.0
        %759 = vmatprep.subr.mxu0 0.0
        %760 = vmatpush1.msra.mxu0 0.0
        %761 = vmatprep.subr.mxu0 0.0
        %762 = vmatpush1.msra.mxu0 0.0
        %763 = vmatprep.subr.mxu0 0.0
        %764 = vmatpush1.msra.mxu0 0.0
        %765 = vmatprep.subr.mxu0 0.0
        %766 = vmatpush1.msra.mxu0 0.0
        %767 = vmatprep.subr.mxu0 0.0
        %768 = vmatpush1.msra.mxu0 0.0
        %769 = vmatprep.subr.mxu0 0.0
        %770 = vmatpush1.msra.mxu0 0.0
        %771 = vmatprep.subr.mxu0 0.0
        %772 = vmatpush1.msra.mxu0 0.0
        %773 = vmatprep.subr.mxu0 0.0
        %774 = vmatpush1.msra.mxu0 0.0
        %775 = vmatprep.subr.mxu0 0.0
        %776 = vmatpush1.msra.mxu0 0.0
        %777 = vmatprep.subr.mxu0 0.0
        %778 = vmatpush1.msra.mxu0 0.0
        %779 = vmatprep.subr.mxu0 0.0
        %780 = vmatpush1.msra.mxu0 0.0
        %781 = vmatprep.mubr.f32.mxu0 0.0
        %782 = vmatmul.mubr.f32.gmra.mrb[0].mxu0 %v715
        %v783 = vpop.f32.mrb[0].mxu0
        %v784 = vadd.f32 0.0, %v783
        %v785 = vpop.f32.mrb[0].mxu0
        %v786 = vadd.f32 0.0, %v785
        %787 = vmatprep.mubr.f32.mxu0 0.0
        %788 = vmatmul.mubr.f32.gmra.mrb[0].mxu0 %v716
        %v789 = vpop.f32.mrb[0].mxu0
        %v790 = vadd.f32 0.0, %v789
        %v791 = vpop.f32.mrb[0].mxu0
        %v792 = vadd.f32 0.0, %v791
        %793 = vdwg.mxu0
        %v794 = vmax.f32 %v710, %v784
        %v795 = vmax.f32 %v711, %v786
        %v796 = vmax.f32 %v712, %v790
        %v797 = vmax.f32 %v713, %v792
        %s798 = scalar_lea.vmem %s221, 96 [#allocation2]
        %v799 = vld [vmem:[%s798] sm:$0xff]
        %v800 = vld [vmem:[%s798 + $0x8] sm:$0xff]
        %801 = vmatprep.subr.mxu0 %v270
        %802 = vmatpush1.msra.mxu0 %v269
        %803 = vmatprep.subr.mxu0 %v272
        %804 = vmatpush1.msra.mxu0 %v271
        %805 = vmatprep.subr.mxu0 %v274
        %806 = vmatpush1.msra.mxu0 %v273
        %807 = vmatprep.subr.mxu0 %v276
        %808 = vmatpush1.msra.mxu0 %v275
        %809 = vmatprep.subr.mxu0 %v278
        %810 = vmatpush1.msra.mxu0 %v277
        %811 = vmatprep.subr.mxu0 %v280
        %812 = vmatpush1.msra.mxu0 %v279
        %813 = vmatprep.subr.mxu0 %v282
        %814 = vmatpush1.msra.mxu0 %v281
        %815 = vmatprep.subr.mxu0 %v284
        %816 = vmatpush1.msra.mxu0 %v283
        %817 = vmatprep.subr.mxu0 %v286
        %818 = vmatpush1.msra.mxu0 %v285
        %819 = vmatprep.subr.mxu0 %v288
        %820 = vmatpush1.msra.mxu0 %v287
        %821 = vmatprep.subr.mxu0 %v290
        %822 = vmatpush1.msra.mxu0 %v289
        %823 = vmatprep.subr.mxu0 %v292
        %824 = vmatpush1.msra.mxu0 %v291
        %825 = vmatprep.subr.mxu0 %v294
        %826 = vmatpush1.msra.mxu0 %v293
        %827 = vmatprep.subr.mxu0 %v296
        %828 = vmatpush1.msra.mxu0 %v295
        %829 = vmatprep.subr.mxu0 %v298
        %830 = vmatpush1.msra.mxu0 %v297
        %831 = vmatprep.subr.mxu0 %v300
        %832 = vmatpush1.msra.mxu0 %v299
        %833 = vmatprep.subr.mxu0 0.0
        %834 = vmatpush1.msra.mxu0 0.0
        %835 = vmatprep.subr.mxu0 0.0
        %836 = vmatpush1.msra.mxu0 0.0
        %837 = vmatprep.subr.mxu0 0.0
        %838 = vmatpush1.msra.mxu0 0.0
        %839 = vmatprep.subr.mxu0 0.0
        %840 = vmatpush1.msra.mxu0 0.0
        %841 = vmatprep.subr.mxu0 0.0
        %842 = vmatpush1.msra.mxu0 0.0
        %843 = vmatprep.subr.mxu0 0.0
        %844 = vmatpush1.msra.mxu0 0.0
        %845 = vmatprep.subr.mxu0 0.0
        %846 = vmatpush1.msra.mxu0 0.0
        %847 = vmatprep.subr.mxu0 0.0
        %848 = vmatpush1.msra.mxu0 0.0
        %849 = vmatprep.subr.mxu0 0.0
        %850 = vmatpush1.msra.mxu0 0.0
        %851 = vmatprep.subr.mxu0 0.0
        %852 = vmatpush1.msra.mxu0 0.0
        %853 = vmatprep.subr.mxu0 0.0
        %854 = vmatpush1.msra.mxu0 0.0
        %855 = vmatprep.subr.mxu0 0.0
        %856 = vmatpush1.msra.mxu0 0.0
        %857 = vmatprep.subr.mxu0 0.0
        %858 = vmatpush1.msra.mxu0 0.0
        %859 = vmatprep.subr.mxu0 0.0
        %860 = vmatpush1.msra.mxu0 0.0
        %861 = vmatprep.subr.mxu0 0.0
        %862 = vmatpush1.msra.mxu0 0.0
        %863 = vmatprep.subr.mxu0 0.0
        %864 = vmatpush1.msra.mxu0 0.0
        %865 = vmatprep.mubr.f32.mxu0 0.0
        %866 = vmatmul.mubr.f32.gmra.mrb[0].mxu0 %v799
        %v867 = vpop.f32.mrb[0].mxu0
        %v868 = vadd.f32 0.0, %v867
        %v869 = vpop.f32.mrb[0].mxu0
        %v870 = vadd.f32 0.0, %v869
        %871 = vmatprep.mubr.f32.mxu0 0.0
        %872 = vmatmul.mubr.f32.gmra.mrb[0].mxu0 %v800
        %v873 = vpop.f32.mrb[0].mxu0
        %v874 = vadd.f32 0.0, %v873
        %v875 = vpop.f32.mrb[0].mxu0
        %v876 = vadd.f32 0.0, %v875
        %877 = vdwg.mxu0
        %v878 = vmax.f32 %v794, %v868
        %v879 = vmax.f32 %v795, %v870
        %v880 = vmax.f32 %v796, %v874
        %v881 = vmax.f32 %v797, %v876
        %s882 = scalar_lea.vmem %s221, 112 [#allocation2]
        %v883 = vld [vmem:[%s882] sm:$0xff]
        %v884 = vld [vmem:[%s882 + $0x8] sm:$0xff]
        %885 = vmatprep.subr.mxu0 %v270
        %886 = vmatpush1.msra.mxu0 %v269
        %887 = vmatprep.subr.mxu0 %v272
        %888 = vmatpush1.msra.mxu0 %v271
        %889 = vmatprep.subr.mxu0 %v274
        %890 = vmatpush1.msra.mxu0 %v273
        %891 = vmatprep.subr.mxu0 %v276
        %892 = vmatpush1.msra.mxu0 %v275
        %893 = vmatprep.subr.mxu0 %v278
        %894 = vmatpush1.msra.mxu0 %v277
        %895 = vmatprep.subr.mxu0 %v280
        %896 = vmatpush1.msra.mxu0 %v279
        %897 = vmatprep.subr.mxu0 %v282
        %898 = vmatpush1.msra.mxu0 %v281
        %899 = vmatprep.subr.mxu0 %v284
        %900 = vmatpush1.msra.mxu0 %v283
        %901 = vmatprep.subr.mxu0 %v286
        %902 = vmatpush1.msra.mxu0 %v285
        %903 = vmatprep.subr.mxu0 %v288
        %904 = vmatpush1.msra.mxu0 %v287
        %905 = vmatprep.subr.mxu0 %v290
        %906 = vmatpush1.msra.mxu0 %v289
        %907 = vmatprep.subr.mxu0 %v292
        %908 = vmatpush1.msra.mxu0 %v291
        %909 = vmatprep.subr.mxu0 %v294
        %910 = vmatpush1.msra.mxu0 %v293
        %911 = vmatprep.subr.mxu0 %v296
        %912 = vmatpush1.msra.mxu0 %v295
        %913 = vmatprep.subr.mxu0 %v298
        %914 = vmatpush1.msra.mxu0 %v297
        %915 = vmatprep.subr.mxu0 %v300
        %916 = vmatpush1.msra.mxu0 %v299
        %917 = vmatprep.subr.mxu0 0.0
        %918 = vmatpush1.msra.mxu0 0.0
        %919 = vmatprep.subr.mxu0 0.0
        %920 = vmatpush1.msra.mxu0 0.0
        %921 = vmatprep.subr.mxu0 0.0
        %922 = vmatpush1.msra.mxu0 0.0
        %923 = vmatprep.subr.mxu0 0.0
        %924 = vmatpush1.msra.mxu0 0.0
        %925 = vmatprep.subr.mxu0 0.0
        %926 = vmatpush1.msra.mxu0 0.0
        %927 = vmatprep.subr.mxu0 0.0
        %928 = vmatpush1.msra.mxu0 0.0
        %929 = vmatprep.subr.mxu0 0.0
        %930 = vmatpush1.msra.mxu0 0.0
        %931 = vmatprep.subr.mxu0 0.0
        %932 = vmatpush1.msra.mxu0 0.0
        %933 = vmatprep.subr.mxu0 0.0
        %934 = vmatpush1.msra.mxu0 0.0
        %935 = vmatprep.subr.mxu0 0.0
        %936 = vmatpush1.msra.mxu0 0.0
        %937 = vmatprep.subr.mxu0 0.0
        %938 = vmatpush1.msra.mxu0 0.0
        %939 = vmatprep.subr.mxu0 0.0
        %940 = vmatpush1.msra.mxu0 0.0
        %941 = vmatprep.subr.mxu0 0.0
        %942 = vmatpush1.msra.mxu0 0.0
        %943 = vmatprep.subr.mxu0 0.0
        %944 = vmatpush1.msra.mxu0 0.0
        %945 = vmatprep.subr.mxu0 0.0
        %946 = vmatpush1.msra.mxu0 0.0
        %947 = vmatprep.subr.mxu0 0.0
        %948 = vmatpush1.msra.mxu0 0.0
        %949 = vmatprep.mubr.f32.mxu0 0.0
        %950 = vmatmul.mubr.f32.gmra.mrb[0].mxu0 %v883
        %v951 = vpop.f32.mrb[0].mxu0
        %v952 = vadd.f32 0.0, %v951
        %v953 = vpop.f32.mrb[0].mxu0
        %v954 = vadd.f32 0.0, %v953
        %955 = vmatprep.mubr.f32.mxu0 0.0
        %956 = vmatmul.mubr.f32.gmra.mrb[0].mxu0 %v884
        %v957 = vpop.f32.mrb[0].mxu0
        %v958 = vadd.f32 0.0, %v957
        %v959 = vpop.f32.mrb[0].mxu0
        %v960 = vadd.f32 0.0, %v959
        %961 = vdwg.mxu0
        %v962 = vmax.f32 %v878, %v952
        %v963 = vmax.f32 %v879, %v954
        %v964 = vmax.f32 %v880, %v958
        %v965 = vmax.f32 %v881, %v960
        %s966 = scalar_lea.vmem %s221, 128 [#allocation2]
        %v967 = vld [vmem:[%s966] sm:$0xff]
        %v968 = vld [vmem:[%s966 + $0x8] sm:$0xff]
        %969 = vmatprep.subr.mxu0 %v270
        %970 = vmatpush1.msra.mxu0 %v269
        %971 = vmatprep.subr.mxu0 %v272
        %972 = vmatpush1.msra.mxu0 %v271
        %973 = vmatprep.subr.mxu0 %v274
        %974 = vmatpush1.msra.mxu0 %v273
        %975 = vmatprep.subr.mxu0 %v276
        %976 = vmatpush1.msra.mxu0 %v275
        %977 = vmatprep.subr.mxu0 %v278
        %978 = vmatpush1.msra.mxu0 %v277
        %979 = vmatprep.subr.mxu0 %v280
        %980 = vmatpush1.msra.mxu0 %v279
        %981 = vmatprep.subr.mxu0 %v282
        %982 = vmatpush1.msra.mxu0 %v281
        %983 = vmatprep.subr.mxu0 %v284
        %984 = vmatpush1.msra.mxu0 %v283
        %985 = vmatprep.subr.mxu0 %v286
        %986 = vmatpush1.msra.mxu0 %v285
        %987 = vmatprep.subr.mxu0 %v288
        %988 = vmatpush1.msra.mxu0 %v287
        %989 = vmatprep.subr.mxu0 %v290
        %990 = vmatpush1.msra.mxu0 %v289
        %991 = vmatprep.subr.mxu0 %v292
        %992 = vmatpush1.msra.mxu0 %v291
        %993 = vmatprep.subr.mxu0 %v294
        %994 = vmatpush1.msra.mxu0 %v293
        %995 = vmatprep.subr.mxu0 %v296
        %996 = vmatpush1.msra.mxu0 %v295
        %997 = vmatprep.subr.mxu0 %v298
        %998 = vmatpush1.msra.mxu0 %v297
        %999 = vmatprep.subr.mxu0 %v300
        %1000 = vmatpush1.msra.mxu0 %v299
        %1001 = vmatprep.subr.mxu0 0.0
        %1002 = vmatpush1.msra.mxu0 0.0
        %1003 = vmatprep.subr.mxu0 0.0
        %1004 = vmatpush1.msra.mxu0 0.0
        %1005 = vmatprep.subr.mxu0 0.0
        %1006 = vmatpush1.msra.mxu0 0.0
        %1007 = vmatprep.subr.mxu0 0.0
        %1008 = vmatpush1.msra.mxu0 0.0
        %1009 = vmatprep.subr.mxu0 0.0
        %1010 = vmatpush1.msra.mxu0 0.0
        %1011 = vmatprep.subr.mxu0 0.0
        %1012 = vmatpush1.msra.mxu0 0.0
        %1013 = vmatprep.subr.mxu0 0.0
        %1014 = vmatpush1.msra.mxu0 0.0
        %1015 = vmatprep.subr.mxu0 0.0
        %1016 = vmatpush1.msra.mxu0 0.0
        %1017 = vmatprep.subr.mxu0 0.0
        %1018 = vmatpush1.msra.mxu0 0.0
        %1019 = vmatprep.subr.mxu0 0.0
        %1020 = vmatpush1.msra.mxu0 0.0
        %1021 = vmatprep.subr.mxu0 0.0
        %1022 = vmatpush1.msra.mxu0 0.0
        %1023 = vmatprep.subr.mxu0 0.0
        %1024 = vmatpush1.msra.mxu0 0.0
        %1025 = vmatprep.subr.mxu0 0.0
        %1026 = vmatpush1.msra.mxu0 0.0
        %1027 = vmatprep.subr.mxu0 0.0
        %1028 = vmatpush1.msra.mxu0 0.0
        %1029 = vmatprep.subr.mxu0 0.0
        %1030 = vmatpush1.msra.mxu0 0.0
        %1031 = vmatprep.subr.mxu0 0.0
        %1032 = vmatpush1.msra.mxu0 0.0
        %1033 = vmatprep.mubr.f32.mxu0 0.0
        %1034 = vmatmul.mubr.f32.gmra.mrb[0].mxu0 %v967
        %v1035 = vpop.f32.mrb[0].mxu0
        %v1036 = vadd.f32 0.0, %v1035
        %v1037 = vpop.f32.mrb[0].mxu0
        %v1038 = vadd.f32 0.0, %v1037
        %1039 = vmatprep.mubr.f32.mxu0 0.0
        %1040 = vmatmul.mubr.f32.gmra.mrb[0].mxu0 %v968
        %v1041 = vpop.f32.mrb[0].mxu0
        %v1042 = vadd.f32 0.0, %v1041
        %v1043 = vpop.f32.mrb[0].mxu0
        %v1044 = vadd.f32 0.0, %v1043
        %1045 = vdwg.mxu0
        %v1046 = vmax.f32 %v962, %v1036
        %v1047 = vmax.f32 %v963, %v1038
        %v1048 = vmax.f32 %v964, %v1042
        %v1049 = vmax.f32 %v965, %v1044
        %s1050 = scalar_lea.vmem %s221, 144 [#allocation2]
        %v1051 = vld [vmem:[%s1050] sm:$0xff]
        %v1052 = vld [vmem:[%s1050 + $0x8] sm:$0xff]
        %1053 = vmatprep.subr.mxu0 %v270
        %1054 = vmatpush1.msra.mxu0 %v269
        %1055 = vmatprep.subr.mxu0 %v272
        %1056 = vmatpush1.msra.mxu0 %v271
        %1057 = vmatprep.subr.mxu0 %v274
        %1058 = vmatpush1.msra.mxu0 %v273
        %1059 = vmatprep.subr.mxu0 %v276
        %1060 = vmatpush1.msra.mxu0 %v275
        %1061 = vmatprep.subr.mxu0 %v278
        %1062 = vmatpush1.msra.mxu0 %v277
        %1063 = vmatprep.subr.mxu0 %v280
        %1064 = vmatpush1.msra.mxu0 %v279
        %1065 = vmatprep.subr.mxu0 %v282
        %1066 = vmatpush1.msra.mxu0 %v281
        %1067 = vmatprep.subr.mxu0 %v284
        %1068 = vmatpush1.msra.mxu0 %v283
        %1069 = vmatprep.subr.mxu0 %v286
        %1070 = vmatpush1.msra.mxu0 %v285
        %1071 = vmatprep.subr.mxu0 %v288
        %1072 = vmatpush1.msra.mxu0 %v287
        %1073 = vmatprep.subr.mxu0 %v290
        %1074 = vmatpush1.msra.mxu0 %v289
        %1075 = vmatprep.subr.mxu0 %v292
        %1076 = vmatpush1.msra.mxu0 %v291
        %1077 = vmatprep.subr.mxu0 %v294
        %1078 = vmatpush1.msra.mxu0 %v293
        %1079 = vmatprep.subr.mxu0 %v296
        %1080 = vmatpush1.msra.mxu0 %v295
        %1081 = vmatprep.subr.mxu0 %v298
        %1082 = vmatpush1.msra.mxu0 %v297
        %1083 = vmatprep.subr.mxu0 %v300
        %1084 = vmatpush1.msra.mxu0 %v299
        %1085 = vmatprep.subr.mxu0 0.0
        %1086 = vmatpush1.msra.mxu0 0.0
        %1087 = vmatprep.subr.mxu0 0.0
        %1088 = vmatpush1.msra.mxu0 0.0
        %1089 = vmatprep.subr.mxu0 0.0
        %1090 = vmatpush1.msra.mxu0 0.0
        %1091 = vmatprep.subr.mxu0 0.0
        %1092 = vmatpush1.msra.mxu0 0.0
        %1093 = vmatprep.subr.mxu0 0.0
        %1094 = vmatpush1.msra.mxu0 0.0
        %1095 = vmatprep.subr.mxu0 0.0
        %1096 = vmatpush1.msra.mxu0 0.0
        %1097 = vmatprep.subr.mxu0 0.0
        %1098 = vmatpush1.msra.mxu0 0.0
        %1099 = vmatprep.subr.mxu0 0.0
        %1100 = vmatpush1.msra.mxu0 0.0
        %1101 = vmatprep.subr.mxu0 0.0
        %1102 = vmatpush1.msra.mxu0 0.0
        %1103 = vmatprep.subr.mxu0 0.0
        %1104 = vmatpush1.msra.mxu0 0.0
        %1105 = vmatprep.subr.mxu0 0.0
        %1106 = vmatpush1.msra.mxu0 0.0
        %1107 = vmatprep.subr.mxu0 0.0
        %1108 = vmatpush1.msra.mxu0 0.0
        %1109 = vmatprep.subr.mxu0 0.0
        %1110 = vmatpush1.msra.mxu0 0.0
        %1111 = vmatprep.subr.mxu0 0.0
        %1112 = vmatpush1.msra.mxu0 0.0
        %1113 = vmatprep.subr.mxu0 0.0
        %1114 = vmatpush1.msra.mxu0 0.0
        %1115 = vmatprep.subr.mxu0 0.0
        %1116 = vmatpush1.msra.mxu0 0.0
        %1117 = vmatprep.mubr.f32.mxu0 0.0
        %1118 = vmatmul.mubr.f32.gmra.mrb[0].mxu0 %v1051
        %v1119 = vpop.f32.mrb[0].mxu0
        %v1120 = vadd.f32 0.0, %v1119
        %v1121 = vpop.f32.mrb[0].mxu0
        %v1122 = vadd.f32 0.0, %v1121
        %1123 = vmatprep.mubr.f32.mxu0 0.0
        %1124 = vmatmul.mubr.f32.gmra.mrb[0].mxu0 %v1052
        %v1125 = vpop.f32.mrb[0].mxu0
        %v1126 = vadd.f32 0.0, %v1125
        %v1127 = vpop.f32.mrb[0].mxu0
        %v1128 = vadd.f32 0.0, %v1127
        %1129 = vdwg.mxu0
        %v1130 = vmax.f32 %v1046, %v1120
        %v1131 = vmax.f32 %v1047, %v1122
        %v1132 = vmax.f32 %v1048, %v1126
        %v1133 = vmax.f32 %v1049, %v1128
        %s1134 = scalar_lea.vmem %s221, 160 [#allocation2]
        %v1135 = vld [vmem:[%s1134] sm:$0xff]
        %v1136 = vld [vmem:[%s1134 + $0x8] sm:$0xff]
        %1137 = vmatprep.subr.mxu0 %v270
        %1138 = vmatpush1.msra.mxu0 %v269
        %1139 = vmatprep.subr.mxu0 %v272
        %1140 = vmatpush1.msra.mxu0 %v271
        %1141 = vmatprep.subr.mxu0 %v274
        %1142 = vmatpush1.msra.mxu0 %v273
        %1143 = vmatprep.subr.mxu0 %v276
        %1144 = vmatpush1.msra.mxu0 %v275
        %1145 = vmatprep.subr.mxu0 %v278
        %1146 = vmatpush1.msra.mxu0 %v277
        %1147 = vmatprep.subr.mxu0 %v280
        %1148 = vmatpush1.msra.mxu0 %v279
        %1149 = vmatprep.subr.mxu0 %v282
        %1150 = vmatpush1.msra.mxu0 %v281
        %1151 = vmatprep.subr.mxu0 %v284
        %1152 = vmatpush1.msra.mxu0 %v283
        %1153 = vmatprep.subr.mxu0 %v286
        %1154 = vmatpush1.msra.mxu0 %v285
        %1155 = vmatprep.subr.mxu0 %v288
        %1156 = vmatpush1.msra.mxu0 %v287
        %1157 = vmatprep.subr.mxu0 %v290
        %1158 = vmatpush1.msra.mxu0 %v289
        %1159 = vmatprep.subr.mxu0 %v292
        %1160 = vmatpush1.msra.mxu0 %v291
        %1161 = vmatprep.subr.mxu0 %v294
        %1162 = vmatpush1.msra.mxu0 %v293
        %1163 = vmatprep.subr.mxu0 %v296
        %1164 = vmatpush1.msra.mxu0 %v295
        %1165 = vmatprep.subr.mxu0 %v298
        %1166 = vmatpush1.msra.mxu0 %v297
        %1167 = vmatprep.subr.mxu0 %v300
        %1168 = vmatpush1.msra.mxu0 %v299
        %1169 = vmatprep.subr.mxu0 0.0
        %1170 = vmatpush1.msra.mxu0 0.0
        %1171 = vmatprep.subr.mxu0 0.0
        %1172 = vmatpush1.msra.mxu0 0.0
        %1173 = vmatprep.subr.mxu0 0.0
        %1174 = vmatpush1.msra.mxu0 0.0
        %1175 = vmatprep.subr.mxu0 0.0
        %1176 = vmatpush1.msra.mxu0 0.0
        %1177 = vmatprep.subr.mxu0 0.0
        %1178 = vmatpush1.msra.mxu0 0.0
        %1179 = vmatprep.subr.mxu0 0.0
        %1180 = vmatpush1.msra.mxu0 0.0
        %1181 = vmatprep.subr.mxu0 0.0
        %1182 = vmatpush1.msra.mxu0 0.0
        %1183 = vmatprep.subr.mxu0 0.0
        %1184 = vmatpush1.msra.mxu0 0.0
        %1185 = vmatprep.subr.mxu0 0.0
        %1186 = vmatpush1.msra.mxu0 0.0
        %1187 = vmatprep.subr.mxu0 0.0
        %1188 = vmatpush1.msra.mxu0 0.0
        %1189 = vmatprep.subr.mxu0 0.0
        %1190 = vmatpush1.msra.mxu0 0.0
        %1191 = vmatprep.subr.mxu0 0.0
        %1192 = vmatpush1.msra.mxu0 0.0
        %1193 = vmatprep.subr.mxu0 0.0
        %1194 = vmatpush1.msra.mxu0 0.0
        %1195 = vmatprep.subr.mxu0 0.0
        %1196 = vmatpush1.msra.mxu0 0.0
        %1197 = vmatprep.subr.mxu0 0.0
        %1198 = vmatpush1.msra.mxu0 0.0
        %1199 = vmatprep.subr.mxu0 0.0
        %1200 = vmatpush1.msra.mxu0 0.0
        %1201 = vmatprep.mubr.f32.mxu0 0.0
        %1202 = vmatmul.mubr.f32.gmra.mrb[0].mxu0 %v1135
        %v1203 = vpop.f32.mrb[0].mxu0
        %v1204 = vadd.f32 0.0, %v1203
        %v1205 = vpop.f32.mrb[0].mxu0
        %v1206 = vadd.f32 0.0, %v1205
        %1207 = vmatprep.mubr.f32.mxu0 0.0
        %1208 = vmatmul.mubr.f32.gmra.mrb[0].mxu0 %v1136
        %v1209 = vpop.f32.mrb[0].mxu0
        %v1210 = vadd.f32 0.0, %v1209
        %v1211 = vpop.f32.mrb[0].mxu0
        %v1212 = vadd.f32 0.0, %v1211
        %1213 = vdwg.mxu0
        %v1214 = vmax.f32 %v1130, %v1204
        %v1215 = vmax.f32 %v1131, %v1206
        %v1216 = vmax.f32 %v1132, %v1210
        %v1217 = vmax.f32 %v1133, %v1212
        %s1218 = scalar_lea.vmem %s221, 176 [#allocation2]
        %v1219 = vld [vmem:[%s1218] sm:$0xff]
        %v1220 = vld [vmem:[%s1218 + $0x8] sm:$0xff]
        %1221 = vmatprep.subr.mxu0 %v270
        %1222 = vmatpush1.msra.mxu0 %v269
        %1223 = vmatprep.subr.mxu0 %v272
        %1224 = vmatpush1.msra.mxu0 %v271
        %1225 = vmatprep.subr.mxu0 %v274
        %1226 = vmatpush1.msra.mxu0 %v273
        %1227 = vmatprep.subr.mxu0 %v276
        %1228 = vmatpush1.msra.mxu0 %v275
        %1229 = vmatprep.subr.mxu0 %v278
        %1230 = vmatpush1.msra.mxu0 %v277
        %1231 = vmatprep.subr.mxu0 %v280
        %1232 = vmatpush1.msra.mxu0 %v279
        %1233 = vmatprep.subr.mxu0 %v282
        %1234 = vmatpush1.msra.mxu0 %v281
        %1235 = vmatprep.subr.mxu0 %v284
        %1236 = vmatpush1.msra.mxu0 %v283
        %1237 = vmatprep.subr.mxu0 %v286
        %1238 = vmatpush1.msra.mxu0 %v285
        %1239 = vmatprep.subr.mxu0 %v288
        %1240 = vmatpush1.msra.mxu0 %v287
        %1241 = vmatprep.subr.mxu0 %v290
        %1242 = vmatpush1.msra.mxu0 %v289
        %1243 = vmatprep.subr.mxu0 %v292
        %1244 = vmatpush1.msra.mxu0 %v291
        %1245 = vmatprep.subr.mxu0 %v294
        %1246 = vmatpush1.msra.mxu0 %v293
        %1247 = vmatprep.subr.mxu0 %v296
        %1248 = vmatpush1.msra.mxu0 %v295
        %1249 = vmatprep.subr.mxu0 %v298
        %1250 = vmatpush1.msra.mxu0 %v297
        %1251 = vmatprep.subr.mxu0 %v300
        %1252 = vmatpush1.msra.mxu0 %v299
        %1253 = vmatprep.subr.mxu0 0.0
        %1254 = vmatpush1.msra.mxu0 0.0
        %1255 = vmatprep.subr.mxu0 0.0
        %1256 = vmatpush1.msra.mxu0 0.0
        %1257 = vmatprep.subr.mxu0 0.0
        %1258 = vmatpush1.msra.mxu0 0.0
        %1259 = vmatprep.subr.mxu0 0.0
        %1260 = vmatpush1.msra.mxu0 0.0
        %1261 = vmatprep.subr.mxu0 0.0
        %1262 = vmatpush1.msra.mxu0 0.0
        %1263 = vmatprep.subr.mxu0 0.0
        %1264 = vmatpush1.msra.mxu0 0.0
        %1265 = vmatprep.subr.mxu0 0.0
        %1266 = vmatpush1.msra.mxu0 0.0
        %1267 = vmatprep.subr.mxu0 0.0
        %1268 = vmatpush1.msra.mxu0 0.0
        %1269 = vmatprep.subr.mxu0 0.0
        %1270 = vmatpush1.msra.mxu0 0.0
        %1271 = vmatprep.subr.mxu0 0.0
        %1272 = vmatpush1.msra.mxu0 0.0
        %1273 = vmatprep.subr.mxu0 0.0
        %1274 = vmatpush1.msra.mxu0 0.0
        %1275 = vmatprep.subr.mxu0 0.0
        %1276 = vmatpush1.msra.mxu0 0.0
        %1277 = vmatprep.subr.mxu0 0.0
        %1278 = vmatpush1.msra.mxu0 0.0
        %1279 = vmatprep.subr.mxu0 0.0
        %1280 = vmatpush1.msra.mxu0 0.0
        %1281 = vmatprep.subr.mxu0 0.0
        %1282 = vmatpush1.msra.mxu0 0.0
        %1283 = vmatprep.subr.mxu0 0.0
        %1284 = vmatpush1.msra.mxu0 0.0
        %1285 = vmatprep.mubr.f32.mxu0 0.0
        %1286 = vmatmul.mubr.f32.gmra.mrb[0].mxu0 %v1219
        %v1287 = vpop.f32.mrb[0].mxu0
        %v1288 = vadd.f32 0.0, %v1287
        %v1289 = vpop.f32.mrb[0].mxu0
        %v1290 = vadd.f32 0.0, %v1289
        %1291 = vmatprep.mubr.f32.mxu0 0.0
        %1292 = vmatmul.mubr.f32.gmra.mrb[0].mxu0 %v1220
        %v1293 = vpop.f32.mrb[0].mxu0
        %v1294 = vadd.f32 0.0, %v1293
        %v1295 = vpop.f32.mrb[0].mxu0
        %v1296 = vadd.f32 0.0, %v1295
        %1297 = vdwg.mxu0
        %v1298 = vmax.f32 %v1214, %v1288
        %v1299 = vmax.f32 %v1215, %v1290
        %v1300 = vmax.f32 %v1216, %v1294
        %v1301 = vmax.f32 %v1217, %v1296
        %s1302 = scalar_lea.vmem %s221, 192 [#allocation2]
        %v1303 = vld [vmem:[%s1302] sm:$0xff]
        %v1304 = vld [vmem:[%s1302 + $0x8] sm:$0xff]
        %1305 = vmatprep.subr.mxu0 %v270
        %1306 = vmatpush1.msra.mxu0 %v269
        %1307 = vmatprep.subr.mxu0 %v272
        %1308 = vmatpush1.msra.mxu0 %v271
        %1309 = vmatprep.subr.mxu0 %v274
        %1310 = vmatpush1.msra.mxu0 %v273
        %1311 = vmatprep.subr.mxu0 %v276
        %1312 = vmatpush1.msra.mxu0 %v275
        %1313 = vmatprep.subr.mxu0 %v278
        %1314 = vmatpush1.msra.mxu0 %v277
        %1315 = vmatprep.subr.mxu0 %v280
        %1316 = vmatpush1.msra.mxu0 %v279
        %1317 = vmatprep.subr.mxu0 %v282
        %1318 = vmatpush1.msra.mxu0 %v281
        %1319 = vmatprep.subr.mxu0 %v284
        %1320 = vmatpush1.msra.mxu0 %v283
        %1321 = vmatprep.subr.mxu0 %v286
        %1322 = vmatpush1.msra.mxu0 %v285
        %1323 = vmatprep.subr.mxu0 %v288
        %1324 = vmatpush1.msra.mxu0 %v287
        %1325 = vmatprep.subr.mxu0 %v290
        %1326 = vmatpush1.msra.mxu0 %v289
        %1327 = vmatprep.subr.mxu0 %v292
        %1328 = vmatpush1.msra.mxu0 %v291
        %1329 = vmatprep.subr.mxu0 %v294
        %1330 = vmatpush1.msra.mxu0 %v293
        %1331 = vmatprep.subr.mxu0 %v296
        %1332 = vmatpush1.msra.mxu0 %v295
        %1333 = vmatprep.subr.mxu0 %v298
        %1334 = vmatpush1.msra.mxu0 %v297
        %1335 = vmatprep.subr.mxu0 %v300
        %1336 = vmatpush1.msra.mxu0 %v299
        %1337 = vmatprep.subr.mxu0 0.0
        %1338 = vmatpush1.msra.mxu0 0.0
        %1339 = vmatprep.subr.mxu0 0.0
        %1340 = vmatpush1.msra.mxu0 0.0
        %1341 = vmatprep.subr.mxu0 0.0
        %1342 = vmatpush1.msra.mxu0 0.0
        %1343 = vmatprep.subr.mxu0 0.0
        %1344 = vmatpush1.msra.mxu0 0.0
        %1345 = vmatprep.subr.mxu0 0.0
        %1346 = vmatpush1.msra.mxu0 0.0
        %1347 = vmatprep.subr.mxu0 0.0
        %1348 = vmatpush1.msra.mxu0 0.0
        %1349 = vmatprep.subr.mxu0 0.0
        %1350 = vmatpush1.msra.mxu0 0.0
        %1351 = vmatprep.subr.mxu0 0.0
        %1352 = vmatpush1.msra.mxu0 0.0
        %1353 = vmatprep.subr.mxu0 0.0
        %1354 = vmatpush1.msra.mxu0 0.0
        %1355 = vmatprep.subr.mxu0 0.0
        %1356 = vmatpush1.msra.mxu0 0.0
        %1357 = vmatprep.subr.mxu0 0.0
        %1358 = vmatpush1.msra.mxu0 0.0
        %1359 = vmatprep.subr.mxu0 0.0
        %1360 = vmatpush1.msra.mxu0 0.0
        %1361 = vmatprep.subr.mxu0 0.0
        %1362 = vmatpush1.msra.mxu0 0.0
        %1363 = vmatprep.subr.mxu0 0.0
        %1364 = vmatpush1.msra.mxu0 0.0
        %1365 = vmatprep.subr.mxu0 0.0
        %1366 = vmatpush1.msra.mxu0 0.0
        %1367 = vmatprep.subr.mxu0 0.0
        %1368 = vmatpush1.msra.mxu0 0.0
        %1369 = vmatprep.mubr.f32.mxu0 0.0
        %1370 = vmatmul.mubr.f32.gmra.mrb[0].mxu0 %v1303
        %v1371 = vpop.f32.mrb[0].mxu0
        %v1372 = vadd.f32 0.0, %v1371
        %v1373 = vpop.f32.mrb[0].mxu0
        %v1374 = vadd.f32 0.0, %v1373
        %1375 = vmatprep.mubr.f32.mxu0 0.0
        %1376 = vmatmul.mubr.f32.gmra.mrb[0].mxu0 %v1304
        %v1377 = vpop.f32.mrb[0].mxu0
        %v1378 = vadd.f32 0.0, %v1377
        %v1379 = vpop.f32.mrb[0].mxu0
        %v1380 = vadd.f32 0.0, %v1379
        %1381 = vdwg.mxu0
        %v1382 = vmax.f32 %v1298, %v1372
        %v1383 = vmax.f32 %v1299, %v1374
        %v1384 = vmax.f32 %v1300, %v1378
        %v1385 = vmax.f32 %v1301, %v1380
        %s1386 = scalar_lea.vmem %s221, 208 [#allocation2]
        %v1387 = vld [vmem:[%s1386] sm:$0xff]
        %v1388 = vld [vmem:[%s1386 + $0x8] sm:$0xff]
        %1389 = vmatprep.subr.mxu0 %v270
        %1390 = vmatpush1.msra.mxu0 %v269
        %1391 = vmatprep.subr.mxu0 %v272
        %1392 = vmatpush1.msra.mxu0 %v271
        %1393 = vmatprep.subr.mxu0 %v274
        %1394 = vmatpush1.msra.mxu0 %v273
        %1395 = vmatprep.subr.mxu0 %v276
        %1396 = vmatpush1.msra.mxu0 %v275
        %1397 = vmatprep.subr.mxu0 %v278
        %1398 = vmatpush1.msra.mxu0 %v277
        %1399 = vmatprep.subr.mxu0 %v280
        %1400 = vmatpush1.msra.mxu0 %v279
        %1401 = vmatprep.subr.mxu0 %v282
        %1402 = vmatpush1.msra.mxu0 %v281
        %1403 = vmatprep.subr.mxu0 %v284
        %1404 = vmatpush1.msra.mxu0 %v283
        %1405 = vmatprep.subr.mxu0 %v286
        %1406 = vmatpush1.msra.mxu0 %v285
        %1407 = vmatprep.subr.mxu0 %v288
        %1408 = vmatpush1.msra.mxu0 %v287
        %1409 = vmatprep.subr.mxu0 %v290
        %1410 = vmatpush1.msra.mxu0 %v289
        %1411 = vmatprep.subr.mxu0 %v292
        %1412 = vmatpush1.msra.mxu0 %v291
        %1413 = vmatprep.subr.mxu0 %v294
        %1414 = vmatpush1.msra.mxu0 %v293
        %1415 = vmatprep.subr.mxu0 %v296
        %1416 = vmatpush1.msra.mxu0 %v295
        %1417 = vmatprep.subr.mxu0 %v298
        %1418 = vmatpush1.msra.mxu0 %v297
        %1419 = vmatprep.subr.mxu0 %v300
        %1420 = vmatpush1.msra.mxu0 %v299
        %1421 = vmatprep.subr.mxu0 0.0
        %1422 = vmatpush1.msra.mxu0 0.0
        %1423 = vmatprep.subr.mxu0 0.0
        %1424 = vmatpush1.msra.mxu0 0.0
        %1425 = vmatprep.subr.mxu0 0.0
        %1426 = vmatpush1.msra.mxu0 0.0
        %1427 = vmatprep.subr.mxu0 0.0
        %1428 = vmatpush1.msra.mxu0 0.0
        %1429 = vmatprep.subr.mxu0 0.0
        %1430 = vmatpush1.msra.mxu0 0.0
        %1431 = vmatprep.subr.mxu0 0.0
        %1432 = vmatpush1.msra.mxu0 0.0
        %1433 = vmatprep.subr.mxu0 0.0
        %1434 = vmatpush1.msra.mxu0 0.0
        %1435 = vmatprep.subr.mxu0 0.0
        %1436 = vmatpush1.msra.mxu0 0.0
        %1437 = vmatprep.subr.mxu0 0.0
        %1438 = vmatpush1.msra.mxu0 0.0
        %1439 = vmatprep.subr.mxu0 0.0
        %1440 = vmatpush1.msra.mxu0 0.0
        %1441 = vmatprep.subr.mxu0 0.0
        %1442 = vmatpush1.msra.mxu0 0.0
        %1443 = vmatprep.subr.mxu0 0.0
        %1444 = vmatpush1.msra.mxu0 0.0
        %1445 = vmatprep.subr.mxu0 0.0
        %1446 = vmatpush1.msra.mxu0 0.0
        %1447 = vmatprep.subr.mxu0 0.0
        %1448 = vmatpush1.msra.mxu0 0.0
        %1449 = vmatprep.subr.mxu0 0.0
        %1450 = vmatpush1.msra.mxu0 0.0
        %1451 = vmatprep.subr.mxu0 0.0
        %1452 = vmatpush1.msra.mxu0 0.0
        %1453 = vmatprep.mubr.f32.mxu0 0.0
        %1454 = vmatmul.mubr.f32.gmra.mrb[0].mxu0 %v1387
        %v1455 = vpop.f32.mrb[0].mxu0
        %v1456 = vadd.f32 0.0, %v1455
        %v1457 = vpop.f32.mrb[0].mxu0
        %v1458 = vadd.f32 0.0, %v1457
        %1459 = vmatprep.mubr.f32.mxu0 0.0
        %1460 = vmatmul.mubr.f32.gmra.mrb[0].mxu0 %v1388
        %v1461 = vpop.f32.mrb[0].mxu0
        %v1462 = vadd.f32 0.0, %v1461
        %v1463 = vpop.f32.mrb[0].mxu0
        %v1464 = vadd.f32 0.0, %v1463
        %1465 = vdwg.mxu0
        %v1466 = vmax.f32 %v1382, %v1456
        %v1467 = vmax.f32 %v1383, %v1458
        %v1468 = vmax.f32 %v1384, %v1462
        %v1469 = vmax.f32 %v1385, %v1464
        %s1470 = scalar_lea.vmem %s221, 224 [#allocation2]
        %v1471 = vld [vmem:[%s1470] sm:$0xff]
        %v1472 = vld [vmem:[%s1470 + $0x8] sm:$0xff]
        %1473 = vmatprep.subr.mxu0 %v270
        %1474 = vmatpush1.msra.mxu0 %v269
        %1475 = vmatprep.subr.mxu0 %v272
        %1476 = vmatpush1.msra.mxu0 %v271
        %1477 = vmatprep.subr.mxu0 %v274
        %1478 = vmatpush1.msra.mxu0 %v273
        %1479 = vmatprep.subr.mxu0 %v276
        %1480 = vmatpush1.msra.mxu0 %v275
        %1481 = vmatprep.subr.mxu0 %v278
        %1482 = vmatpush1.msra.mxu0 %v277
        %1483 = vmatprep.subr.mxu0 %v280
        %1484 = vmatpush1.msra.mxu0 %v279
        %1485 = vmatprep.subr.mxu0 %v282
        %1486 = vmatpush1.msra.mxu0 %v281
        %1487 = vmatprep.subr.mxu0 %v284
        %1488 = vmatpush1.msra.mxu0 %v283
        %1489 = vmatprep.subr.mxu0 %v286
        %1490 = vmatpush1.msra.mxu0 %v285
        %1491 = vmatprep.subr.mxu0 %v288
        %1492 = vmatpush1.msra.mxu0 %v287
        %1493 = vmatprep.subr.mxu0 %v290
        %1494 = vmatpush1.msra.mxu0 %v289
        %1495 = vmatprep.subr.mxu0 %v292
        %1496 = vmatpush1.msra.mxu0 %v291
        %1497 = vmatprep.subr.mxu0 %v294
        %1498 = vmatpush1.msra.mxu0 %v293
        %1499 = vmatprep.subr.mxu0 %v296
        %1500 = vmatpush1.msra.mxu0 %v295
        %1501 = vmatprep.subr.mxu0 %v298
        %1502 = vmatpush1.msra.mxu0 %v297
        %1503 = vmatprep.subr.mxu0 %v300
        %1504 = vmatpush1.msra.mxu0 %v299
        %1505 = vmatprep.subr.mxu0 0.0
        %1506 = vmatpush1.msra.mxu0 0.0
        %1507 = vmatprep.subr.mxu0 0.0
        %1508 = vmatpush1.msra.mxu0 0.0
        %1509 = vmatprep.subr.mxu0 0.0
        %1510 = vmatpush1.msra.mxu0 0.0
        %1511 = vmatprep.subr.mxu0 0.0
        %1512 = vmatpush1.msra.mxu0 0.0
        %1513 = vmatprep.subr.mxu0 0.0
        %1514 = vmatpush1.msra.mxu0 0.0
        %1515 = vmatprep.subr.mxu0 0.0
        %1516 = vmatpush1.msra.mxu0 0.0
        %1517 = vmatprep.subr.mxu0 0.0
        %1518 = vmatpush1.msra.mxu0 0.0
        %1519 = vmatprep.subr.mxu0 0.0
        %1520 = vmatpush1.msra.mxu0 0.0
        %1521 = vmatprep.subr.mxu0 0.0
        %1522 = vmatpush1.msra.mxu0 0.0
        %1523 = vmatprep.subr.mxu0 0.0
        %1524 = vmatpush1.msra.mxu0 0.0
        %1525 = vmatprep.subr.mxu0 0.0
        %1526 = vmatpush1.msra.mxu0 0.0
        %1527 = vmatprep.subr.mxu0 0.0
        %1528 = vmatpush1.msra.mxu0 0.0
        %1529 = vmatprep.subr.mxu0 0.0
        %1530 = vmatpush1.msra.mxu0 0.0
        %1531 = vmatprep.subr.mxu0 0.0
        %1532 = vmatpush1.msra.mxu0 0.0
        %1533 = vmatprep.subr.mxu0 0.0
        %1534 = vmatpush1.msra.mxu0 0.0
        %1535 = vmatprep.subr.mxu0 0.0
        %1536 = vmatpush1.msra.mxu0 0.0
        %1537 = vmatprep.mubr.f32.mxu0 0.0
        %1538 = vmatmul.mubr.f32.gmra.mrb[0].mxu0 %v1471
        %v1539 = vpop.f32.mrb[0].mxu0
        %v1540 = vadd.f32 0.0, %v1539
        %v1541 = vpop.f32.mrb[0].mxu0
        %v1542 = vadd.f32 0.0, %v1541
        %1543 = vmatprep.mubr.f32.mxu0 0.0
        %1544 = vmatmul.mubr.f32.gmra.mrb[0].mxu0 %v1472
        %v1545 = vpop.f32.mrb[0].mxu0
        %v1546 = vadd.f32 0.0, %v1545
        %v1547 = vpop.f32.mrb[0].mxu0
        %v1548 = vadd.f32 0.0, %v1547
        %1549 = vdwg.mxu0
        %v1550 = vmax.f32 %v1466, %v1540
        %v1551 = vmax.f32 %v1467, %v1542
        %v1552 = vmax.f32 %v1468, %v1546
        %v1553 = vmax.f32 %v1469, %v1548
        %s1554 = scalar_lea.vmem %s221, 240 [#allocation2]
        %v1555 = vld [vmem:[%s1554] sm:$0xff]
        %v1556 = vld [vmem:[%s1554 + $0x8] sm:$0xff]
        %1557 = vmatprep.subr.mxu0 %v270
        %1558 = vmatpush1.msra.mxu0 %v269
        %1559 = vmatprep.subr.mxu0 %v272
        %1560 = vmatpush1.msra.mxu0 %v271
        %1561 = vmatprep.subr.mxu0 %v274
        %1562 = vmatpush1.msra.mxu0 %v273
        %1563 = vmatprep.subr.mxu0 %v276
        %1564 = vmatpush1.msra.mxu0 %v275
        %1565 = vmatprep.subr.mxu0 %v278
        %1566 = vmatpush1.msra.mxu0 %v277
        %1567 = vmatprep.subr.mxu0 %v280
        %1568 = vmatpush1.msra.mxu0 %v279
        %1569 = vmatprep.subr.mxu0 %v282
        %1570 = vmatpush1.msra.mxu0 %v281
        %1571 = vmatprep.subr.mxu0 %v284
        %1572 = vmatpush1.msra.mxu0 %v283
        %1573 = vmatprep.subr.mxu0 %v286
        %1574 = vmatpush1.msra.mxu0 %v285
        %1575 = vmatprep.subr.mxu0 %v288
        %1576 = vmatpush1.msra.mxu0 %v287
        %1577 = vmatprep.subr.mxu0 %v290
        %1578 = vmatpush1.msra.mxu0 %v289
        %1579 = vmatprep.subr.mxu0 %v292
        %1580 = vmatpush1.msra.mxu0 %v291
        %1581 = vmatprep.subr.mxu0 %v294
        %1582 = vmatpush1.msra.mxu0 %v293
        %1583 = vmatprep.subr.mxu0 %v296
        %1584 = vmatpush1.msra.mxu0 %v295
        %1585 = vmatprep.subr.mxu0 %v298
        %1586 = vmatpush1.msra.mxu0 %v297
        %1587 = vmatprep.subr.mxu0 %v300
        %1588 = vmatpush1.msra.mxu0 %v299
        %1589 = vmatprep.subr.mxu0 0.0
        %1590 = vmatpush1.msra.mxu0 0.0
        %1591 = vmatprep.subr.mxu0 0.0
        %1592 = vmatpush1.msra.mxu0 0.0
        %1593 = vmatprep.subr.mxu0 0.0
        %1594 = vmatpush1.msra.mxu0 0.0
        %1595 = vmatprep.subr.mxu0 0.0
        %1596 = vmatpush1.msra.mxu0 0.0
        %1597 = vmatprep.subr.mxu0 0.0
        %1598 = vmatpush1.msra.mxu0 0.0
        %1599 = vmatprep.subr.mxu0 0.0
        %1600 = vmatpush1.msra.mxu0 0.0
        %1601 = vmatprep.subr.mxu0 0.0
        %1602 = vmatpush1.msra.mxu0 0.0
        %1603 = vmatprep.subr.mxu0 0.0
        %1604 = vmatpush1.msra.mxu0 0.0
        %1605 = vmatprep.subr.mxu0 0.0
        %1606 = vmatpush1.msra.mxu0 0.0
        %1607 = vmatprep.subr.mxu0 0.0
        %1608 = vmatpush1.msra.mxu0 0.0
        %1609 = vmatprep.subr.mxu0 0.0
        %1610 = vmatpush1.msra.mxu0 0.0
        %1611 = vmatprep.subr.mxu0 0.0
        %1612 = vmatpush1.msra.mxu0 0.0
        %1613 = vmatprep.subr.mxu0 0.0
        %1614 = vmatpush1.msra.mxu0 0.0
        %1615 = vmatprep.subr.mxu0 0.0
        %1616 = vmatpush1.msra.mxu0 0.0
        %1617 = vmatprep.subr.mxu0 0.0
        %1618 = vmatpush1.msra.mxu0 0.0
        %1619 = vmatprep.subr.mxu0 0.0
        %1620 = vmatpush1.msra.mxu0 0.0
        %1621 = vmatprep.mubr.f32.mxu0 0.0
        %1622 = vmatmul.mubr.f32.gmra.mrb[0].mxu0 %v1555
        %v1623 = vpop.f32.mrb[0].mxu0
        %v1624 = vadd.f32 0.0, %v1623
        %v1625 = vpop.f32.mrb[0].mxu0
        %v1626 = vadd.f32 0.0, %v1625
        %1627 = vmatprep.mubr.f32.mxu0 0.0
        %1628 = vmatmul.mubr.f32.gmra.mrb[0].mxu0 %v1556
        %v1629 = vpop.f32.mrb[0].mxu0
        %v1630 = vadd.f32 0.0, %v1629
        %v1631 = vpop.f32.mrb[0].mxu0
        %v1632 = vadd.f32 0.0, %v1631
        %1633 = vdwg.mxu0
        %v1634 = vmax.f32 %v1550, %v1624
        %v1635 = vmax.f32 %v1551, %v1626
        %v1636 = vmax.f32 %v1552, %v1630
        %v1637 = vmax.f32 %v1553, %v1632
        %v1638 = vld [vmem:[%s2] sm:$0x3]
        %v1640 = vlaneseq
        %v1641 = vshrl.u32 %v1640, 7
        %v1642 = vsub.s32 0, %v1641
        %v1643 = vrot.slane %v1638, %v1642
        %v1644 = vlaneseq
        %v1645 = vshrl.u32 %v1644, 7
        %v1646 = vsub.s32 1, %v1645
        %v1647 = vrot.slane %v1638, %v1646
        %v1650 = vadd.f32 %v1634, %v1643
        %v1651 = vadd.f32 %v1635, %v1647
        %v1652 = vadd.f32 %v1636, %v1643
        %v1653 = vadd.f32 %v1637, %v1647
        %1654 = vst [vmem:[%s266] sm:$0xff] %v1650
        %1655 = vst [vmem:[%s266 + $0x8] sm:$0xff] %v1651
        %1656 = vst [vmem:[%s266 + $0x10] sm:$0xff] %v1652
        %1657 = vst [vmem:[%s266 + $0x18] sm:$0xff] %v1653
        %p1658 = scmp.lt.s32.totalorder %s22, 1
        %s1659 = scalar_select %p1658, %s22, 1
        %p1660 = scmp.lt.s32.totalorder %s23, 0
        %s1661 = scalar_select %p1660, %s23, 0
        %p1662 = scmp.lt.s32.totalorder %s24, 3
        %s1663 = scalar_select %p1662, %s24, 3
        %s1664 = smul.addr %s1663, 4
        %s1665 = smul.addr %s1661, 16
        %s1666 = sadd.s32 %s1664, %s1665
        %s1667 = smul.addr %s1659, 16
        %s1668 = sadd.s32 %s1666, %s1667
        %s1669 = smul.addr %s1668, 8
        %s1670 = scalar_lea.vmem %s3, %s1669
        // Predicated region
        $region37: #{nonlocal_block_embedded_gaussian.2} parent=31 // pred_check
          %p1671 = pneg %p130
        $region38: #{nonlocal_block_embedded_gaussian.2} parent=31 // pred_check_branch
          %1673 = sbr.rel (%p1671) target = $region40
        $region39: #{nonlocal_block_embedded_gaussian.2} parent=31 // pred_region
          _
        $region40: #{nonlocal_block_embedded_gaussian.2} parent=31 // pred_fallthru
          _
      $region32: #{nonlocal_block_embedded_gaussian.2} parent=5 // pred_fallthru
        _
      %p1674 = scmp.le.s32.totalorder 2, %s12
      // Predicated region
      $region41: #{nonlocal_block_embedded_gaussian.2} parent=5 // pred_check
        %p1675 = pneg %p1674
      $region42: #{nonlocal_block_embedded_gaussian.2} parent=5 // pred_check_branch
        %1677 = sbr.rel (%p1675) target = $region44
      $region43: #{nonlocal_block_embedded_gaussian.2} parent=5 // pred_region
        %s1678 = ssub.s32 %s12, 2
        // Predicated region
        $region45: #{nonlocal_block_embedded_gaussian.2} parent=43 // pred_check
          %p1679 = pneg %p136
        $region46: #{nonlocal_block_embedded_gaussian.2} parent=43 // pred_check_branch
          %1681 = sbr.rel (%p1679) target = $region48
        $region47: #{nonlocal_block_embedded_gaussian.2} parent=43 // pred_region
          %p1682 = scmp.lt.s32.totalorder %s25, 1
          %s1683 = scalar_select %p1682, %s25, 1
          %p1684 = scmp.lt.s32.totalorder %s26, 0
          %s1685 = scalar_select %p1684, %s26, 0
          %p1686 = scmp.lt.s32.totalorder %s27, 3
          %s1687 = scalar_select %p1686, %s27, 3
          %s1688 = smul.addr %s1687, 4
          %s1689 = smul.addr %s1685, 16
          %s1690 = sadd.s32 %s1688, %s1689
          %s1691 = smul.addr %s1683, 16
          %s1692 = sadd.s32 %s1690, %s1691
          %s1693 = smul.addr %s1692, 8
          %s1694 = scalar_lea.vmem %s3, %s1693
        $region48: #{nonlocal_block_embedded_gaussian.2} parent=43 // pred_fallthru
          _
      $region44: #{nonlocal_block_embedded_gaussian.2} parent=5 // pred_fallthru
        _
    $region6: #{nonlocal_block_embedded_gaussian.2} parent=1 // loop_footer
      %s16 = sadd.s32 1, %s12
    $region7: #{nonlocal_block_embedded_gaussian.2} parent=1 // loop_footer_branch
      %11 = sbr.rel target = $region3
    $region8: #{nonlocal_block_embedded_gaussian.2} parent=1 // loop_exit
      _
    %1695 = vsyncpa [#allocation3], 1
    %s1696 = scalar_lea.sflag [#allocation3], 1
    %1697 = vsyncpa %s1696, 1

// kernel: nonlocal_block_embedded_gaussian.3
$region0: #{nonlocal_block_embedded_gaussian.3}
  #allocation0 [shape = 'u32[]', space=smem, size = 0x4, offset = 0x4, fixed_abs, tag = 'smem constant byte address 0x4 - core index']
  #allocation1 [shape = 'u32[144,128]{1,0:T(1,128)}', space=vmem, size = 0x12000, scoped, tag = 'internal scratch']
  #allocation2 [shape = 'f32[512,128]{1,0:T(8,128)}', space=vmem, size = 0x40000, scoped, tag = 'scratch operand']
  #allocation3 [shape = 'f32[512,1]{1,0:T(8,128)}', space=vmem, size = 0x40000, scoped, tag = 'scratch operand']
  #allocation4 [shape = 'f32[512,1]{1,0:T(8,128)}', space=vmem, size = 0x40000, scoped, tag = 'scratch operand']
  #allocation5 [shape = 'f32[512,128]{1,0:T(8,128)}', space=vmem, size = 0x40000, scoped, tag = 'scratch operand']
  %s0 = inlined_call_operand.vmem [shape: f32[2,1024,128], index: 0, kind: input, shape index: {}]
  %s1 = inlined_call_operand.vmem [shape: f32[2,128,128], index: 1, kind: input, shape index: {}]
  %s2 = inlined_call_operand.vmem [shape: f32[2,128,128], index: 2, kind: input, shape index: {}]
  %s3 = inlined_call_operand.vmem [shape: f32[128,128], index: 3, kind: input, shape index: {}]
  %s4 = inlined_call_operand.vmem [shape: f32[1,128], index: 4, kind: input, shape index: {}]
  %s5 = inlined_call_operand.vmem [shape: f32[128,128], index: 5, kind: input, shape index: {}]
  %s6 = inlined_call_operand.vmem [shape: f32[1,128], index: 6, kind: input, shape index: {}]
  %s7 = inlined_call_operand.hbm [shape: f32[2,1024,128], index: 7, kind: output, shape index: {}]
  %s8 = sld [smem:[#allocation0]]
  $region69: #{nonlocal_block_embedded_gaussian.3} parent=0
    _
  %s10 = ssub.s32 1, %s8
  %s11 = scalar_select 0, %s10, %s8
  $region1: #{nonlocal_block_embedded_gaussian.3} parent=0
    #allocation6 [shape = 'u8[524288]{0}', space=vmem, size = 0x80000, scoped, tag = 'output window, operand 0']
    #allocation7 [shape = 's32[2]{0}', space=sflag, size = 0x8, scoped, tag = 'scoped memory for nonlocal_block_embedded_gaussian.3']
    %12 = vsyncpa [#allocation7], 0
    %s13 = scalar_lea.sflag [#allocation7], 1
    %14 = vsyncpa %s13, 0
    loop: start=0, step=1, limit=6
    $region2: #{nonlocal_block_embedded_gaussian.3} parent=1 // loop_pre_header
      _
    $region3: #{nonlocal_block_embedded_gaussian.3} parent=1 // loop_header
      %s16 = sphi 0, %s20
      %p17 = scmp.ge.s32.totalorder %s16, 6
      %s23 = sphi 0, %s42
      %s24 = sphi 0, %s38
      %s25 = sphi 0, %s34
      %s26 = sphi 0, %s23
      %s27 = sphi 0, %s24
      %s28 = sphi 0, %s25
      %s29 = sphi 0, %s26
      %s30 = sphi 0, %s27
      %s31 = sphi 0, %s28
      %s47 = sphi 0, %s49
      %s50 = sphi 0, %s47
      %s51 = sphi 0, %s50
      %s67 = sphi 0, %s51
      %s75 = sphi 0, %s77
      %s78 = sphi 0, %s75
      %s79 = sphi 0, %s78
      %s95 = sphi 0, %s79
      %s103 = sphi 0, %s105
      %s106 = sphi 0, %s103
      %s107 = sphi 0, %s106
      %s123 = sphi 0, %s107
      %s127 = sphi 0, %s127
      %s129 = sphi 0, %s127
      %s130 = sphi 0, %s129
      %s144 = sphi 0, %s130
      %s148 = sphi 0, %s148
      %s150 = sphi 0, %s148
      %s151 = sphi 0, %s150
      %s165 = sphi 0, %s151
      %s169 = sphi 0, %s169
      %s171 = sphi 0, %s169
      %s172 = sphi 0, %s171
      %s186 = sphi 0, %s172
      %s190 = sphi 0, %s190
      %s192 = sphi 0, %s190
      %s193 = sphi 0, %s192
      %s207 = sphi 0, %s193
      %s215 = sphi 0, %s217
      %s218 = sphi 0, %s215
      %s219 = sphi 0, %s218
      %s235 = sphi 0, %s219
    $region4: #{nonlocal_block_embedded_gaussian.3} parent=1 // loop_header_branch
      %19 = sbr.rel (%p17) target = $region8
    $region5: #{nonlocal_block_embedded_gaussian.3} parent=1 // loop_body
      %s21 = ssub.s32 %s16, 1
      %s22 = ssub.s32 %s16, 2
      %s32 = sadd.s32 1, %s25
      %p33 = scmp.ge.s32.totalorder %s32, 1
      %s34 = scalar_select %p33, 0, %s32
      %s35 = sadd.s32 1, %s24
      %s36 = scalar_select %p33, %s35, %s24
      %p37 = scmp.ge.s32.totalorder %s36, 2
      %s38 = scalar_select %p37, 0, %s36
      %s39 = sadd.s32 1, %s23
      %s40 = scalar_select %p37, %s39, %s23
      %p41 = scmp.ge.s32.totalorder %s40, 2
      %s42 = scalar_select %p41, 0, %s40
      %s43 = ssub.s32 %s23, %s42
      %s44 = ssub.s32 %s24, %s38
      %s45 = sor.u32 %s43, %s44
      %p46 = scmp.eq.s32.totalorder %s45, 0
      %s48 = sadd.s32 %s47, 1
      %s49 = scalar_select %p46, %s47, %s48
      %p52 = pneg %p46
      %p53 = scmp.eq.s32.totalorder %s16, 3
      %p54 = por %p52, %p53
      %p55 = scmp.ne.s32.totalorder %s47, %s50
      %p56 = scmp.eq.s32.totalorder %s16, 0
      %p57 = por %p55, %p56
      %p58 = scmp.ne.s32.totalorder %s47, %s50
      %p59 = scmp.eq.s32.totalorder %s21, 3
      %p60 = por %p58, %p59
      %p61 = scmp.ne.s32.totalorder %s50, %s51
      %p62 = scmp.eq.s32.totalorder %s21, 0
      %p63 = por %p61, %p62
      %p64 = scmp.ne.s32.totalorder %s50, %s51
      %p65 = scmp.eq.s32.totalorder %s22, 3
      %p66 = por %p64, %p65
      %p68 = scmp.ne.s32.totalorder %s51, %s67
      %p69 = scmp.eq.s32.totalorder %s22, 0
      %p70 = por %p68, %p69
      %s71 = ssub.s32 %s23, %s42
      %s72 = ssub.s32 %s25, %s34
      %s73 = sor.u32 %s71, %s72
      %p74 = scmp.eq.s32.totalorder %s73, 0
      %s76 = sadd.s32 %s75, 1
      %s77 = scalar_select %p74, %s75, %s76
      %p80 = pneg %p74
      %p81 = scmp.eq.s32.totalorder %s16, 3
      %p82 = por %p80, %p81
      %p83 = scmp.ne.s32.totalorder %s75, %s78
      %p84 = scmp.eq.s32.totalorder %s16, 0
      %p85 = por %p83, %p84
      %p86 = scmp.ne.s32.totalorder %s75, %s78
      %p87 = scmp.eq.s32.totalorder %s21, 3
      %p88 = por %p86, %p87
      %p89 = scmp.ne.s32.totalorder %s78, %s79
      %p90 = scmp.eq.s32.totalorder %s21, 0
      %p91 = por %p89, %p90
      %p92 = scmp.ne.s32.totalorder %s78, %s79
      %p93 = scmp.eq.s32.totalorder %s22, 3
      %p94 = por %p92, %p93
      %p96 = scmp.ne.s32.totalorder %s79, %s95
      %p97 = scmp.eq.s32.totalorder %s22, 0
      %p98 = por %p96, %p97
      %s99 = ssub.s32 %s23, %s42
      %s100 = ssub.s32 %s25, %s34
      %s101 = sor.u32 %s99, %s100
      %p102 = scmp.eq.s32.totalorder %s101, 0
      %s104 = sadd.s32 %s103, 1
      %s105 = scalar_select %p102, %s103, %s104
      %p108 = pneg %p102
      %p109 = scmp.eq.s32.totalorder %s16, 3
      %p110 = por %p108, %p109
      %p111 = scmp.ne.s32.totalorder %s103, %s106
      %p112 = scmp.eq.s32.totalorder %s16, 0
      %p113 = por %p111, %p112
      %p114 = scmp.ne.s32.totalorder %s103, %s106
      %p115 = scmp.eq.s32.totalorder %s21, 3
      %p116 = por %p114, %p115
      %p117 = scmp.ne.s32.totalorder %s106, %s107
      %p118 = scmp.eq.s32.totalorder %s21, 0
      %p119 = por %p117, %p118
      %p120 = scmp.ne.s32.totalorder %s106, %s107
      %p121 = scmp.eq.s32.totalorder %s22, 3
      %p122 = por %p120, %p121
      %p124 = scmp.ne.s32.totalorder %s107, %s123
      %p125 = scmp.eq.s32.totalorder %s22, 0
      %p126 = por %p124, %p125
      %s128 = sadd.s32 %s127, 1
      %p131 = scmp.eq.s32.totalorder %s16, 3
      %p132 = scmp.ne.s32.totalorder %s127, %s129
      %p133 = scmp.eq.s32.totalorder %s16, 0
      %p134 = por %p132, %p133
      %p135 = scmp.ne.s32.totalorder %s127, %s129
      %p136 = scmp.eq.s32.totalorder %s21, 3
      %p137 = por %p135, %p136
      %p138 = scmp.ne.s32.totalorder %s129, %s130
      %p139 = scmp.eq.s32.totalorder %s21, 0
      %p140 = por %p138, %p139
      %p141 = scmp.ne.s32.totalorder %s129, %s130
      %p142 = scmp.eq.s32.totalorder %s22, 3
      %p143 = por %p141, %p142
      %p145 = scmp.ne.s32.totalorder %s130, %s144
      %p146 = scmp.eq.s32.totalorder %s22, 0
      %p147 = por %p145, %p146
      %s149 = sadd.s32 %s148, 1
      %p152 = scmp.eq.s32.totalorder %s16, 3
      %p153 = scmp.ne.s32.totalorder %s148, %s150
      %p154 = scmp.eq.s32.totalorder %s16, 0
      %p155 = por %p153, %p154
      %p156 = scmp.ne.s32.totalorder %s148, %s150
      %p157 = scmp.eq.s32.totalorder %s21, 3
      %p158 = por %p156, %p157
      %p159 = scmp.ne.s32.totalorder %s150, %s151
      %p160 = scmp.eq.s32.totalorder %s21, 0
      %p161 = por %p159, %p160
      %p162 = scmp.ne.s32.totalorder %s150, %s151
      %p163 = scmp.eq.s32.totalorder %s22, 3
      %p164 = por %p162, %p163
      %p166 = scmp.ne.s32.totalorder %s151, %s165
      %p167 = scmp.eq.s32.totalorder %s22, 0
      %p168 = por %p166, %p167
      %s170 = sadd.s32 %s169, 1
      %p173 = scmp.eq.s32.totalorder %s16, 3
      %p174 = scmp.ne.s32.totalorder %s169, %s171
      %p175 = scmp.eq.s32.totalorder %s16, 0
      %p176 = por %p174, %p175
      %p177 = scmp.ne.s32.totalorder %s169, %s171
      %p178 = scmp.eq.s32.totalorder %s21, 3
      %p179 = por %p177, %p178
      %p180 = scmp.ne.s32.totalorder %s171, %s172
      %p181 = scmp.eq.s32.totalorder %s21, 0
      %p182 = por %p180, %p181
      %p183 = scmp.ne.s32.totalorder %s171, %s172
      %p184 = scmp.eq.s32.totalorder %s22, 3
      %p185 = por %p183, %p184
      %p187 = scmp.ne.s32.totalorder %s172, %s186
      %p188 = scmp.eq.s32.totalorder %s22, 0
      %p189 = por %p187, %p188
      %s191 = sadd.s32 %s190, 1
      %p194 = scmp.eq.s32.totalorder %s16, 3
      %p195 = scmp.ne.s32.totalorder %s190, %s192
      %p196 = scmp.eq.s32.totalorder %s16, 0
      %p197 = por %p195, %p196
      %p198 = scmp.ne.s32.totalorder %s190, %s192
      %p199 = scmp.eq.s32.totalorder %s21, 3
      %p200 = por %p198, %p199
      %p201 = scmp.ne.s32.totalorder %s192, %s193
      %p202 = scmp.eq.s32.totalorder %s21, 0
      %p203 = por %p201, %p202
      %p204 = scmp.ne.s32.totalorder %s192, %s193
      %p205 = scmp.eq.s32.totalorder %s22, 3
      %p206 = por %p204, %p205
      %p208 = scmp.ne.s32.totalorder %s193, %s207
      %p209 = scmp.eq.s32.totalorder %s22, 0
      %p210 = por %p208, %p209
      %s211 = ssub.s32 %s23, %s42
      %s212 = ssub.s32 %s24, %s38
      %s213 = sor.u32 %s211, %s212
      %p214 = scmp.eq.s32.totalorder %s213, 0
      %s216 = sadd.s32 %s215, 1
      %s217 = scalar_select %p214, %s215, %s216
      %p220 = pneg %p214
      %p221 = scmp.eq.s32.totalorder %s16, 3
      %p222 = por %p220, %p221
      %p223 = scmp.ne.s32.totalorder %s215, %s218
      %p224 = scmp.eq.s32.totalorder %s16, 0
      %p225 = por %p223, %p224
      %p226 = scmp.ne.s32.totalorder %s215, %s218
      %p227 = scmp.eq.s32.totalorder %s21, 3
      %p228 = por %p226, %p227
      %p229 = scmp.ne.s32.totalorder %s218, %s219
      %p230 = scmp.eq.s32.totalorder %s21, 0
      %p231 = por %p229, %p230
      %p232 = scmp.ne.s32.totalorder %s218, %s219
      %p233 = scmp.eq.s32.totalorder %s22, 3
      %p234 = por %p232, %p233
      %p236 = scmp.ne.s32.totalorder %s219, %s235
      %p237 = scmp.eq.s32.totalorder %s22, 0
      %p238 = por %p236, %p237
      %p239 = scmp.le.s32.totalorder 1, %s16
      %p240 = scmp.lt.s32.totalorder %s16, 5
      %p241 = pnand %p239, %p240
      %p242 = pneg %p241
      // Predicated region
      $region9: #{nonlocal_block_embedded_gaussian.3} parent=5 // pred_check
        _
      $region10: #{nonlocal_block_embedded_gaussian.3} parent=5 // pred_check_branch
        %244 = sbr.rel (%p241) target = $region12
      $region11: #{nonlocal_block_embedded_gaussian.3} parent=5 // pred_region
        %s245 = ssub.s32 %s16, 1
        // Predicated region
        $region13: #{nonlocal_block_embedded_gaussian.3} parent=11 // pred_check
          %p246 = pneg %p140
        $region14: #{nonlocal_block_embedded_gaussian.3} parent=11 // pred_check_branch
          %248 = sbr.rel (%p246) target = $region16
        $region15: #{nonlocal_block_embedded_gaussian.3} parent=11 // pred_region
          _
        $region16: #{nonlocal_block_embedded_gaussian.3} parent=11 // pred_fallthru
          _
        // Predicated region
        $region17: #{nonlocal_block_embedded_gaussian.3} parent=11 // pred_check
          %p249 = pneg %p161
        $region18: #{nonlocal_block_embedded_gaussian.3} parent=11 // pred_check_branch
          %251 = sbr.rel (%p249) target = $region20
        $region19: #{nonlocal_block_embedded_gaussian.3} parent=11 // pred_region
          _
        $region20: #{nonlocal_block_embedded_gaussian.3} parent=11 // pred_fallthru
          _
        // Predicated region
        $region21: #{nonlocal_block_embedded_gaussian.3} parent=11 // pred_check
          %p252 = pneg %p182
        $region22: #{nonlocal_block_embedded_gaussian.3} parent=11 // pred_check_branch
          %254 = sbr.rel (%p252) target = $region24
        $region23: #{nonlocal_block_embedded_gaussian.3} parent=11 // pred_region
          _
        $region24: #{nonlocal_block_embedded_gaussian.3} parent=11 // pred_fallthru
          _
        // Predicated region
        $region25: #{nonlocal_block_embedded_gaussian.3} parent=11 // pred_check
          %p255 = pneg %p203
        $region26: #{nonlocal_block_embedded_gaussian.3} parent=11 // pred_check_branch
          %257 = sbr.rel (%p255) target = $region28
        $region27: #{nonlocal_block_embedded_gaussian.3} parent=11 // pred_region
          _
        $region28: #{nonlocal_block_embedded_gaussian.3} parent=11 // pred_fallthru
          _
      $region12: #{nonlocal_block_embedded_gaussian.3} parent=5 // pred_fallthru
        _
      %p258 = scmp.lt.s32.totalorder %s16, 4
      // Predicated region
      $region29: #{nonlocal_block_embedded_gaussian.3} parent=5 // pred_check
        %p259 = pneg %p258
      $region30: #{nonlocal_block_embedded_gaussian.3} parent=5 // pred_check_branch
        %261 = sbr.rel (%p259) target = $region32
      $region31: #{nonlocal_block_embedded_gaussian.3} parent=5 // pred_region
        // Predicated region
        $region33: #{nonlocal_block_embedded_gaussian.3} parent=31 // pred_check
          %p262 = pneg %p57
        $region34: #{nonlocal_block_embedded_gaussian.3} parent=31 // pred_check_branch
          %264 = sbr.rel (%p262) target = $region36
        $region35: #{nonlocal_block_embedded_gaussian.3} parent=31 // pred_region
          %s265 = smul.u32 64, %s24
          %p266 = scmp.lt.s32.totalorder %s23, 1
          %s267 = scalar_select %p266, %s23, 1
          %p268 = scmp.lt.s32.totalorder %s265, 127
          %s269 = scalar_select %p268, %s265, 127
          %s270 = smul.addr %s267, 128
          %s271 = sadd.s32 %s269, %s270
          %s272 = smul.addr %s271, 8
          %s273 = scalar_lea.vmem %s0, %s272
          %s274 = smul.u32 64, %s24
        $region36: #{nonlocal_block_embedded_gaussian.3} parent=31 // pred_fallthru
          _
        // Predicated region
        $region37: #{nonlocal_block_embedded_gaussian.3} parent=31 // pred_check
          %p275 = pneg %p85
        $region38: #{nonlocal_block_embedded_gaussian.3} parent=31 // pred_check_branch
          %277 = sbr.rel (%p275) target = $region40
        $region39: #{nonlocal_block_embedded_gaussian.3} parent=31 // pred_region
          %p278 = scmp.lt.s32.totalorder %s23, 1
          %s279 = scalar_select %p278, %s23, 1
          %p280 = scmp.lt.s32.totalorder %s25, 0
          %s281 = scalar_select %p280, %s25, 0
          %s282 = smul.addr %s279, 16
          %s283 = sadd.s32 %s281, %s282
          %s284 = smul.addr %s283, 8
          %s285 = scalar_lea.vmem %s1, %s284
        $region40: #{nonlocal_block_embedded_gaussian.3} parent=31 // pred_fallthru
          _
        // Predicated region
        $region41: #{nonlocal_block_embedded_gaussian.3} parent=31 // pred_check
          %p286 = pneg %p113
        $region42: #{nonlocal_block_embedded_gaussian.3} parent=31 // pred_check_branch
          %288 = sbr.rel (%p286) target = $region44
        $region43: #{nonlocal_block_embedded_gaussian.3} parent=31 // pred_region
          %s289 = smul.u32 16, %s25
          %p290 = scmp.lt.s32.totalorder %s23, 1
          %s291 = scalar_select %p290, %s23, 1
          %p292 = scmp.lt.s32.totalorder %s289, 15
          %s293 = scalar_select %p292, %s289, 15
          %s294 = smul.addr %s291, 16
          %s295 = sadd.s32 %s293, %s294
          %s296 = smul.addr %s295, 8
          %s297 = scalar_lea.vmem %s2, %s296
          %s298 = smul.u32 16, %s25
        $region44: #{nonlocal_block_embedded_gaussian.3} parent=31 // pred_fallthru
          _
      $region32: #{nonlocal_block_embedded_gaussian.3} parent=5 // pred_fallthru
        _
      %p299 = scmp.le.s32.totalorder 1, %s16
      %p300 = scmp.lt.s32.totalorder %s16, 5
      %p301 = pnand %p299, %p300
      %p302 = pneg %p301
      // Predicated region
      $region45: #{nonlocal_block_embedded_gaussian.3} parent=5 // pred_check
        _
      $region46: #{nonlocal_block_embedded_gaussian.3} parent=5 // pred_check_branch
        %304 = sbr.rel (%p301) target = $region48
      $region47: #{nonlocal_block_embedded_gaussian.3} parent=5 // pred_region
        %s305 = ssub.s32 %s16, 1
        %s306 = smul.u32 64, %s27
        %p307 = scmp.lt.s32.totalorder %s26, 1
        %s308 = scalar_select %p307, %s26, 1
        %p309 = scmp.lt.s32.totalorder %s306, 127
        %s310 = scalar_select %p309, %s306, 127
        %s311 = smul.addr %s308, 128
        %s312 = sadd.s32 %s310, %s311
        %s313 = smul.addr %s312, 8
        %s314 = scalar_lea.vmem %s0, %s313
        %p315 = pneg %p63
        %p316 = pneg %p60
        %p317 = scmp.lt.s32.totalorder %s26, 1
        %s318 = scalar_select %p317, %s26, 1
        %p319 = scmp.lt.s32.totalorder %s28, 0
        %s320 = scalar_select %p319, %s28, 0
        %s321 = smul.addr %s318, 16
        %s322 = sadd.s32 %s320, %s321
        %s323 = smul.addr %s322, 8
        %s324 = scalar_lea.vmem %s1, %s323
        %p325 = pneg %p91
        %p326 = pneg %p88
        %s327 = smul.u32 16, %s28
        %p328 = scmp.lt.s32.totalorder %s26, 1
        %s329 = scalar_select %p328, %s26, 1
        %p330 = scmp.lt.s32.totalorder %s327, 15
        %s331 = scalar_select %p330, %s327, 15
        %s332 = smul.addr %s329, 16
        %s333 = sadd.s32 %s331, %s332
        %s334 = smul.addr %s333, 8
        %s335 = scalar_lea.vmem %s2, %s334
        %p336 = pneg %p119
        %p337 = pneg %p116
        %p338 = pneg %p140
        %p339 = pneg %p137
        %p340 = pneg %p161
        %p341 = pneg %p158
        %p342 = pneg %p182
        %p343 = pneg %p179
        %p344 = pneg %p203
        %p345 = pneg %p200
        %p346 = pneg %p231
        %p347 = pneg %p228
        %s348 = sand.u32 %s218, 1
        %s349 = scalar_lea.sflag [#allocation7], %s348
        %s350 = sand.u32 %s218, 1
        %s351 = smul.addr %s350, 512
        %s352 = scalar_lea.vmem [#allocation6], %s351
        %s353 = smul.u32 64, %s27
        %p354 = scmp.lt.s32.totalorder %s26, 1
        %s355 = scalar_select %p354, %s26, 1
        %p356 = scmp.lt.s32.totalorder %s353, 127
        %s357 = scalar_select %p356, %s353, 127
        %s358 = smul.addr %s355, 128
        %s359 = sadd.s32 %s357, %s358
        %s360 = smul.addr %s359, 8
        %s361 = scalar_lea.vmem %s0, %s360
        %s362 = smul.u32 64, %s27
        %p363 = scmp.lt.s32.totalorder %s26, 1
        %s364 = scalar_select %p363, %s26, 1
        %p365 = scmp.lt.s32.totalorder %s28, 0
        %s366 = scalar_select %p365, %s28, 0
        %s367 = smul.addr %s364, 16
        %s368 = sadd.s32 %s366, %s367
        %s369 = smul.addr %s368, 8
        %s370 = scalar_lea.vmem %s1, %s369
        %s371 = smul.u32 16, %s28
        %p372 = scmp.lt.s32.totalorder %s26, 1
        %s373 = scalar_select %p372, %s26, 1
        %p374 = scmp.lt.s32.totalorder %s371, 15
        %s375 = scalar_select %p374, %s371, 15
        %s376 = smul.addr %s373, 16
        %s377 = sadd.s32 %s375, %s376
        %s378 = smul.addr %s377, 8
        %s379 = scalar_lea.vmem %s2, %s378
        %s380 = smul.u32 16, %s28
        %s381 = smul.u32 64, %s27
        %p382 = scmp.eq.s32.totalorder %s28, 0
        // Predicated region
        $region49: #{nonlocal_block_embedded_gaussian.3} parent=47 // pred_check
          %p383 = pneg %p382
        $region50: #{nonlocal_block_embedded_gaussian.3} parent=47 // pred_check_branch
          %385 = sbr.rel (%p383) target = $region52
        $region51: #{nonlocal_block_embedded_gaussian.3} parent=47 // pred_region
          %v386 = vld [vmem:[%s361] sm:$0xff]
          %v387 = vld [vmem:[%s361 + $0x8] sm:$0xff]
          %v388 = vld [vmem:[%s361 + $0x10] sm:$0xff]
          %v389 = vld [vmem:[%s361 + $0x18] sm:$0xff]
          %v390 = vld [vmem:[%s361 + $0x20] sm:$0xff]
          %v391 = vld [vmem:[%s361 + $0x28] sm:$0xff]
          %v392 = vld [vmem:[%s361 + $0x30] sm:$0xff]
          %v393 = vld [vmem:[%s361 + $0x38] sm:$0xff]
          %v394 = vld [vmem:[%s361 + $0x40] sm:$0xff]
          %v395 = vld [vmem:[%s361 + $0x48] sm:$0xff]
          %v396 = vld [vmem:[%s361 + $0x50] sm:$0xff]
          %v397 = vld [vmem:[%s361 + $0x58] sm:$0xff]
          %v398 = vld [vmem:[%s361 + $0x60] sm:$0xff]
          %v399 = vld [vmem:[%s361 + $0x68] sm:$0xff]
          %v400 = vld [vmem:[%s361 + $0x70] sm:$0xff]
          %v401 = vld [vmem:[%s361 + $0x78] sm:$0xff]
          %v402 = vld [vmem:[%s361 + $0x80] sm:$0xff]
          %v403 = vld [vmem:[%s361 + $0x88] sm:$0xff]
          %v404 = vld [vmem:[%s361 + $0x90] sm:$0xff]
          %v405 = vld [vmem:[%s361 + $0x98] sm:$0xff]
          %v406 = vld [vmem:[%s361 + $0xa0] sm:$0xff]
          %v407 = vld [vmem:[%s361 + $0xa8] sm:$0xff]
          %v408 = vld [vmem:[%s361 + $0xb0] sm:$0xff]
          %v409 = vld [vmem:[%s361 + $0xb8] sm:$0xff]
          %v410 = vld [vmem:[%s361 + $0xc0] sm:$0xff]
          %v411 = vld [vmem:[%s361 + $0xc8] sm:$0xff]
          %v412 = vld [vmem:[%s361 + $0xd0] sm:$0xff]
          %v413 = vld [vmem:[%s361 + $0xd8] sm:$0xff]
          %v414 = vld [vmem:[%s361 + $0xe0] sm:$0xff]
          %v415 = vld [vmem:[%s361 + $0xe8] sm:$0xff]
          %v416 = vld [vmem:[%s361 + $0xf0] sm:$0xff]
          %v417 = vld [vmem:[%s361 + $0xf8] sm:$0xff]
          %v418 = vld [vmem:[%s361 + $0x100] sm:$0xff]
          %v419 = vld [vmem:[%s361 + $0x108] sm:$0xff]
          %v420 = vld [vmem:[%s361 + $0x110] sm:$0xff]
          %v421 = vld [vmem:[%s361 + $0x118] sm:$0xff]
          %v422 = vld [vmem:[%s361 + $0x120] sm:$0xff]
          %v423 = vld [vmem:[%s361 + $0x128] sm:$0xff]
          %v424 = vld [vmem:[%s361 + $0x130] sm:$0xff]
          %v425 = vld [vmem:[%s361 + $0x138] sm:$0xff]
          %v426 = vld [vmem:[%s361 + $0x140] sm:$0xff]
          %v427 = vld [vmem:[%s361 + $0x148] sm:$0xff]
          %v428 = vld [vmem:[%s361 + $0x150] sm:$0xff]
          %v429 = vld [vmem:[%s361 + $0x158] sm:$0xff]
          %v430 = vld [vmem:[%s361 + $0x160] sm:$0xff]
          %v431 = vld [vmem:[%s361 + $0x168] sm:$0xff]
          %v432 = vld [vmem:[%s361 + $0x170] sm:$0xff]
          %v433 = vld [vmem:[%s361 + $0x178] sm:$0xff]
          %v434 = vld [vmem:[%s361 + $0x180] sm:$0xff]
          %v435 = vld [vmem:[%s361 + $0x188] sm:$0xff]
          %v436 = vld [vmem:[%s361 + $0x190] sm:$0xff]
          %v437 = vld [vmem:[%s361 + $0x198] sm:$0xff]
          %v438 = vld [vmem:[%s361 + $0x1a0] sm:$0xff]
          %v439 = vld [vmem:[%s361 + $0x1a8] sm:$0xff]
          %v440 = vld [vmem:[%s361 + $0x1b0] sm:$0xff]
          %v441 = vld [vmem:[%s361 + $0x1b8] sm:$0xff]
          %v442 = vld [vmem:[%s361 + $0x1c0] sm:$0xff]
          %v443 = vld [vmem:[%s361 + $0x1c8] sm:$0xff]
          %v444 = vld [vmem:[%s361 + $0x1d0] sm:$0xff]
          %v445 = vld [vmem:[%s361 + $0x1d8] sm:$0xff]
          %v446 = vld [vmem:[%s361 + $0x1e0] sm:$0xff]
          %v447 = vld [vmem:[%s361 + $0x1e8] sm:$0xff]
          %v448 = vld [vmem:[%s361 + $0x1f0] sm:$0xff]
          %v449 = vld [vmem:[%s361 + $0x1f8] sm:$0xff]
          %v450 = vld [vmem:[%s3] sm:$0xff]
          %v451 = vld [vmem:[%s3 + $0x8] sm:$0xff]
          %v452 = vld [vmem:[%s3 + $0x10] sm:$0xff]
          %v453 = vld [vmem:[%s3 + $0x18] sm:$0xff]
          %v454 = vld [vmem:[%s3 + $0x20] sm:$0xff]
          %v455 = vld [vmem:[%s3 + $0x28] sm:$0xff]
          %v456 = vld [vmem:[%s3 + $0x30] sm:$0xff]
          %v457 = vld [vmem:[%s3 + $0x38] sm:$0xff]
          %v458 = vld [vmem:[%s3 + $0x40] sm:$0xff]
          %v459 = vld [vmem:[%s3 + $0x48] sm:$0xff]
          %v460 = vld [vmem:[%s3 + $0x50] sm:$0xff]
          %v461 = vld [vmem:[%s3 + $0x58] sm:$0xff]
          %v462 = vld [vmem:[%s3 + $0x60] sm:$0xff]
          %v463 = vld [vmem:[%s3 + $0x68] sm:$0xff]
          %v464 = vld [vmem:[%s3 + $0x70] sm:$0xff]
          %v465 = vld [vmem:[%s3 + $0x78] sm:$0xff]
          %v466 = vld [vmem:[%s4] sm:$0x1]
          %v468 = vlaneseq
          %v469 = vshrl.u32 %v468, 7
          %v470 = vsub.s32 0, %v469
          %v471 = vrot.slane %v466, %v470
          %473 = vmatprep.subr.mxu0 0.0
          %474 = vmatpush1.msra.mxu0 %v450
          %475 = vmatprep.subr.mxu0 0.0
          %476 = vmatpush1.msra.mxu0 %v451
          %477 = vmatprep.subr.mxu0 0.0
          %478 = vmatpush1.msra.mxu0 %v452
          %479 = vmatprep.subr.mxu0 0.0
          %480 = vmatpush1.msra.mxu0 %v453
          %481 = vmatprep.subr.mxu0 0.0
          %482 = vmatpush1.msra.mxu0 %v454
          %483 = vmatprep.subr.mxu0 0.0
          %484 = vmatpush1.msra.mxu0 %v455
          %485 = vmatprep.subr.mxu0 0.0
          %486 = vmatpush1.msra.mxu0 %v456
          %487 = vmatprep.subr.mxu0 0.0
          %488 = vmatpush1.msra.mxu0 %v457
          %489 = vmatprep.subr.mxu0 0.0
          %490 = vmatpush1.msra.mxu0 %v458
          %491 = vmatprep.subr.mxu0 0.0
          %492 = vmatpush1.msra.mxu0 %v459
          %493 = vmatprep.subr.mxu0 0.0
          %494 = vmatpush1.msra.mxu0 %v460
          %495 = vmatprep.subr.mxu0 0.0
          %496 = vmatpush1.msra.mxu0 %v461
          %497 = vmatprep.subr.mxu0 0.0
          %498 = vmatpush1.msra.mxu0 %v462
          %499 = vmatprep.subr.mxu0 0.0
          %500 = vmatpush1.msra.mxu0 %v463
          %501 = vmatprep.subr.mxu0 0.0
          %502 = vmatpush1.msra.mxu0 %v464
          %503 = vmatprep.subr.mxu0 0.0
          %504 = vmatpush1.msra.mxu0 %v465
          %505 = vmatprep.subr.mxu0 0.0
          %506 = vmatpush1.msra.mxu0 0.0
          %507 = vmatprep.subr.mxu0 0.0
          %508 = vmatpush1.msra.mxu0 0.0
          %509 = vmatprep.subr.mxu0 0.0
          %510 = vmatpush1.msra.mxu0 0.0
          %511 = vmatprep.subr.mxu0 0.0
          %512 = vmatpush1.msra.mxu0 0.0
          %513 = vmatprep.subr.mxu0 0.0
          %514 = vmatpush1.msra.mxu0 0.0
          %515 = vmatprep.subr.mxu0 0.0
          %516 = vmatpush1.msra.mxu0 0.0
          %517 = vmatprep.subr.mxu0 0.0
          %518 = vmatpush1.msra.mxu0 0.0
          %519 = vmatprep.subr.mxu0 0.0
          %520 = vmatpush1.msra.mxu0 0.0
          %521 = vmatprep.subr.mxu0 0.0
          %522 = vmatpush1.msra.mxu0 0.0
          %523 = vmatprep.subr.mxu0 0.0
          %524 = vmatpush1.msra.mxu0 0.0
          %525 = vmatprep.subr.mxu0 0.0
          %526 = vmatpush1.msra.mxu0 0.0
          %527 = vmatprep.subr.mxu0 0.0
          %528 = vmatpush1.msra.mxu0 0.0
          %529 = vmatprep.subr.mxu0 0.0
          %530 = vmatpush1.msra.mxu0 0.0
          %531 = vmatprep.subr.mxu0 0.0
          %532 = vmatpush1.msra.mxu0 0.0
          %533 = vmatprep.subr.mxu0 0.0
          %534 = vmatpush1.msra.mxu0 0.0
          %535 = vmatprep.subr.mxu0 0.0
          %536 = vmatpush1.msra.mxu0 0.0
          %537 = vmatprep.mubr.f32.mxu0 0.0
          %538 = vmatmul.mubr.f32.gmra.mrb[0].mxu0 %v386
          %v539 = vpop.f32.mrb[0].mxu0
          %v540 = vadd.f32 %v471, %v539
          %v541 = vpop.f32.mrb[0].mxu0
          %542 = vmatprep.mubr.f32.mxu0 0.0
          %543 = vmatmul.mubr.f32.gmra.mrb[0].mxu0 %v387
          %v544 = vpop.f32.mrb[0].mxu0
          %v545 = vadd.f32 %v471, %v544
          %v546 = vpop.f32.mrb[0].mxu0
          %547 = vmatprep.mubr.f32.mxu0 0.0
          %548 = vmatmul.mubr.f32.gmra.mrb[0].mxu0 %v388
          %v549 = vpop.f32.mrb[0].mxu0
          %v550 = vadd.f32 %v471, %v549
          %v551 = vpop.f32.mrb[0].mxu0
          %552 = vmatprep.mubr.f32.mxu0 0.0
          %553 = vmatmul.mubr.f32.gmra.mrb[0].mxu0 %v389
          %v554 = vpop.f32.mrb[0].mxu0
          %v555 = vadd.f32 %v471, %v554
          %v556 = vpop.f32.mrb[0].mxu0
          %557 = vmatprep.mubr.f32.mxu0 0.0
          %558 = vmatmul.mubr.f32.gmra.mrb[0].mxu0 %v390
          %v559 = vpop.f32.mrb[0].mxu0
          %v560 = vadd.f32 %v471, %v559
          %v561 = vpop.f32.mrb[0].mxu0
          %562 = vmatprep.mubr.f32.mxu0 0.0
          %563 = vmatmul.mubr.f32.gmra.mrb[0].mxu0 %v391
          %v564 = vpop.f32.mrb[0].mxu0
          %v565 = vadd.f32 %v471, %v564
          %v566 = vpop.f32.mrb[0].mxu0
          %567 = vmatprep.mubr.f32.mxu0 0.0
          %568 = vmatmul.mubr.f32.gmra.mrb[0].mxu0 %v392
          %v569 = vpop.f32.mrb[0].mxu0
          %v570 = vadd.f32 %v471, %v569
          %v571 = vpop.f32.mrb[0].mxu0
          %572 = vmatprep.mubr.f32.mxu0 0.0
          %573 = vmatmul.mubr.f32.gmra.mrb[0].mxu0 %v393
          %v574 = vpop.f32.mrb[0].mxu0
          %v575 = vadd.f32 %v471, %v574
          %v576 = vpop.f32.mrb[0].mxu0
          %577 = vmatprep.mubr.f32.mxu0 0.0
          %578 = vmatmul.mubr.f32.gmra.mrb[0].mxu0 %v394
          %v579 = vpop.f32.mrb[0].mxu0
          %v580 = vadd.f32 %v471, %v579
          %v581 = vpop.f32.mrb[0].mxu0
          %582 = vmatprep.mubr.f32.mxu0 0.0
          %583 = vmatmul.mubr.f32.gmra.mrb[0].mxu0 %v395
          %v584 = vpop.f32.mrb[0].mxu0
          %v585 = vadd.f32 %v471, %v584
          %v586 = vpop.f32.mrb[0].mxu0
          %587 = vmatprep.mubr.f32.mxu0 0.0
          %588 = vmatmul.mubr.f32.gmra.mrb[0].mxu0 %v396
          %v589 = vpop.f32.mrb[0].mxu0
          %v590 = vadd.f32 %v471, %v589
          %v591 = vpop.f32.mrb[0].mxu0
          %592 = vmatprep.mubr.f32.mxu0 0.0
          %593 = vmatmul.mubr.f32.gmra.mrb[0].mxu0 %v397
          %v594 = vpop.f32.mrb[0].mxu0
          %v595 = vadd.f32 %v471, %v594
          %v596 = vpop.f32.mrb[0].mxu0
          %597 = vmatprep.mubr.f32.mxu0 0.0
          %598 = vmatmul.mubr.f32.gmra.mrb[0].mxu0 %v398
          %v599 = vpop.f32.mrb[0].mxu0
          %v600 = vadd.f32 %v471, %v599
          %v601 = vpop.f32.mrb[0].mxu0
          %602 = vmatprep.mubr.f32.mxu0 0.0
          %603 = vmatmul.mubr.f32.gmra.mrb[0].mxu0 %v399
          %v604 = vpop.f32.mrb[0].mxu0
          %v605 = vadd.f32 %v471, %v604
          %v606 = vpop.f32.mrb[0].mxu0
          %607 = vmatprep.mubr.f32.mxu0 0.0
          %608 = vmatmul.mubr.f32.gmra.mrb[0].mxu0 %v400
          %v609 = vpop.f32.mrb[0].mxu0
          %v610 = vadd.f32 %v471, %v609
          %v611 = vpop.f32.mrb[0].mxu0
          %612 = vmatprep.mubr.f32.mxu0 0.0
          %613 = vmatmul.mubr.f32.gmra.mrb[0].mxu0 %v401
          %v614 = vpop.f32.mrb[0].mxu0
          %v615 = vadd.f32 %v471, %v614
          %v616 = vpop.f32.mrb[0].mxu0
          %617 = vmatprep.mubr.f32.mxu0 0.0
          %618 = vmatmul.mubr.f32.gmra.mrb[0].mxu0 %v402
          %v619 = vpop.f32.mrb[0].mxu0
          %v620 = vadd.f32 %v471, %v619
          %v621 = vpop.f32.mrb[0].mxu0
          %622 = vmatprep.mubr.f32.mxu0 0.0
          %623 = vmatmul.mubr.f32.gmra.mrb[0].mxu0 %v403
          %v624 = vpop.f32.mrb[0].mxu0
          %v625 = vadd.f32 %v471, %v624
          %v626 = vpop.f32.mrb[0].mxu0
          %627 = vmatprep.mubr.f32.mxu0 0.0
          %628 = vmatmul.mubr.f32.gmra.mrb[0].mxu0 %v404
          %v629 = vpop.f32.mrb[0].mxu0
          %v630 = vadd.f32 %v471, %v629
          %v631 = vpop.f32.mrb[0].mxu0
          %632 = vmatprep.mubr.f32.mxu0 0.0
          %633 = vmatmul.mubr.f32.gmra.mrb[0].mxu0 %v405
          %v634 = vpop.f32.mrb[0].mxu0
          %v635 = vadd.f32 %v471, %v634
          %v636 = vpop.f32.mrb[0].mxu0
          %637 = vmatprep.mubr.f32.mxu0 0.0
          %638 = vmatmul.mubr.f32.gmra.mrb[0].mxu0 %v406
          %v639 = vpop.f32.mrb[0].mxu0
          %v640 = vadd.f32 %v471, %v639
          %v641 = vpop.f32.mrb[0].mxu0
          %642 = vmatprep.mubr.f32.mxu0 0.0
          %643 = vmatmul.mubr.f32.gmra.mrb[0].mxu0 %v407
          %v644 = vpop.f32.mrb[0].mxu0
          %v645 = vadd.f32 %v471, %v644
          %v646 = vpop.f32.mrb[0].mxu0
          %647 = vmatprep.mubr.f32.mxu0 0.0
          %648 = vmatmul.mubr.f32.gmra.mrb[0].mxu0 %v408
          %v649 = vpop.f32.mrb[0].mxu0
          %v650 = vadd.f32 %v471, %v649
          %v651 = vpop.f32.mrb[0].mxu0
          %652 = vmatprep.mubr.f32.mxu0 0.0
          %653 = vmatmul.mubr.f32.gmra.mrb[0].mxu0 %v409
          %v654 = vpop.f32.mrb[0].mxu0
          %v655 = vadd.f32 %v471, %v654
          %v656 = vpop.f32.mrb[0].mxu0
          %657 = vmatprep.mubr.f32.mxu0 0.0
          %658 = vmatmul.mubr.f32.gmra.mrb[0].mxu0 %v410
          %v659 = vpop.f32.mrb[0].mxu0
          %v660 = vadd.f32 %v471, %v659
          %v661 = vpop.f32.mrb[0].mxu0
          %662 = vmatprep.mubr.f32.mxu0 0.0
          %663 = vmatmul.mubr.f32.gmra.mrb[0].mxu0 %v411
          %v664 = vpop.f32.mrb[0].mxu0
          %v665 = vadd.f32 %v471, %v664
          %v666 = vpop.f32.mrb[0].mxu0
          %667 = vmatprep.mubr.f32.mxu0 0.0
          %668 = vmatmul.mubr.f32.gmra.mrb[0].mxu0 %v412
          %v669 = vpop.f32.mrb[0].mxu0
          %v670 = vadd.f32 %v471, %v669
          %v671 = vpop.f32.mrb[0].mxu0
          %672 = vmatprep.mubr.f32.mxu0 0.0
          %673 = vmatmul.mubr.f32.gmra.mrb[0].mxu0 %v413
          %v674 = vpop.f32.mrb[0].mxu0
          %v675 = vadd.f32 %v471, %v674
          %v676 = vpop.f32.mrb[0].mxu0
          %677 = vmatprep.mubr.f32.mxu0 0.0
          %678 = vmatmul.mubr.f32.gmra.mrb[0].mxu0 %v414
          %v679 = vpop.f32.mrb[0].mxu0
          %v680 = vadd.f32 %v471, %v679
          %v681 = vpop.f32.mrb[0].mxu0
          %682 = vmatprep.mubr.f32.mxu0 0.0
          %683 = vmatmul.mubr.f32.gmra.mrb[0].mxu0 %v415
          %v684 = vpop.f32.mrb[0].mxu0
          %v685 = vadd.f32 %v471, %v684
          %v686 = vpop.f32.mrb[0].mxu0
          %687 = vmatprep.mubr.f32.mxu0 0.0
          %688 = vmatmul.mubr.f32.gmra.mrb[0].mxu0 %v416
          %v689 = vpop.f32.mrb[0].mxu0
          %v690 = vadd.f32 %v471, %v689
          %v691 = vpop.f32.mrb[0].mxu0
          %692 = vmatprep.mubr.f32.mxu0 0.0
          %693 = vmatmul.mubr.f32.gmra.mrb[0].mxu0 %v417
          %v694 = vpop.f32.mrb[0].mxu0
          %v695 = vadd.f32 %v471, %v694
          %v696 = vpop.f32.mrb[0].mxu0
          %697 = vmatprep.mubr.f32.mxu0 0.0
          %698 = vmatmul.mubr.f32.gmra.mrb[0].mxu0 %v418
          %v699 = vpop.f32.mrb[0].mxu0
          %v700 = vadd.f32 %v471, %v699
          %v701 = vpop.f32.mrb[0].mxu0
          %702 = vmatprep.mubr.f32.mxu0 0.0
          %703 = vmatmul.mubr.f32.gmra.mrb[0].mxu0 %v419
          %v704 = vpop.f32.mrb[0].mxu0
          %v705 = vadd.f32 %v471, %v704
          %v706 = vpop.f32.mrb[0].mxu0
          %707 = vmatprep.mubr.f32.mxu0 0.0
          %708 = vmatmul.mubr.f32.gmra.mrb[0].mxu0 %v420
          %v709 = vpop.f32.mrb[0].mxu0
          %v710 = vadd.f32 %v471, %v709
          %v711 = vpop.f32.mrb[0].mxu0
          %712 = vmatprep.mubr.f32.mxu0 0.0
          %713 = vmatmul.mubr.f32.gmra.mrb[0].mxu0 %v421
          %v714 = vpop.f32.mrb[0].mxu0
          %v715 = vadd.f32 %v471, %v714
          %v716 = vpop.f32.mrb[0].mxu0
          %717 = vmatprep.mubr.f32.mxu0 0.0
          %718 = vmatmul.mubr.f32.gmra.mrb[0].mxu0 %v422
          %v719 = vpop.f32.mrb[0].mxu0
          %v720 = vadd.f32 %v471, %v719
          %v721 = vpop.f32.mrb[0].mxu0
          %722 = vmatprep.mubr.f32.mxu0 0.0
          %723 = vmatmul.mubr.f32.gmra.mrb[0].mxu0 %v423
          %v724 = vpop.f32.mrb[0].mxu0
          %v725 = vadd.f32 %v471, %v724
          %v726 = vpop.f32.mrb[0].mxu0
          %727 = vmatprep.mubr.f32.mxu0 0.0
          %728 = vmatmul.mubr.f32.gmra.mrb[0].mxu0 %v424
          %v729 = vpop.f32.mrb[0].mxu0
          %v730 = vadd.f32 %v471, %v729
          %v731 = vpop.f32.mrb[0].mxu0
          %732 = vmatprep.mubr.f32.mxu0 0.0
          %733 = vmatmul.mubr.f32.gmra.mrb[0].mxu0 %v425
          %v734 = vpop.f32.mrb[0].mxu0
          %v735 = vadd.f32 %v471, %v734
          %v736 = vpop.f32.mrb[0].mxu0
          %737 = vmatprep.mubr.f32.mxu0 0.0
          %738 = vmatmul.mubr.f32.gmra.mrb[0].mxu0 %v426
          %v739 = vpop.f32.mrb[0].mxu0
          %v740 = vadd.f32 %v471, %v739
          %v741 = vpop.f32.mrb[0].mxu0
          %742 = vmatprep.mubr.f32.mxu0 0.0
          %743 = vmatmul.mubr.f32.gmra.mrb[0].mxu0 %v427
          %v744 = vpop.f32.mrb[0].mxu0
          %v745 = vadd.f32 %v471, %v744
          %v746 = vpop.f32.mrb[0].mxu0
          %747 = vmatprep.mubr.f32.mxu0 0.0
          %748 = vmatmul.mubr.f32.gmra.mrb[0].mxu0 %v428
          %v749 = vpop.f32.mrb[0].mxu0
          %v750 = vadd.f32 %v471, %v749
          %v751 = vpop.f32.mrb[0].mxu0
          %752 = vmatprep.mubr.f32.mxu0 0.0
          %753 = vmatmul.mubr.f32.gmra.mrb[0].mxu0 %v429
          %v754 = vpop.f32.mrb[0].mxu0
          %v755 = vadd.f32 %v471, %v754
          %v756 = vpop.f32.mrb[0].mxu0
          %757 = vmatprep.mubr.f32.mxu0 0.0
          %758 = vmatmul.mubr.f32.gmra.mrb[0].mxu0 %v430
          %v759 = vpop.f32.mrb[0].mxu0
          %v760 = vadd.f32 %v471, %v759
          %v761 = vpop.f32.mrb[0].mxu0
          %762 = vmatprep.mubr.f32.mxu0 0.0
          %763 = vmatmul.mubr.f32.gmra.mrb[0].mxu0 %v431
          %v764 = vpop.f32.mrb[0].mxu0
          %v765 = vadd.f32 %v471, %v764
          %v766 = vpop.f32.mrb[0].mxu0
          %767 = vmatprep.mubr.f32.mxu0 0.0
          %768 = vmatmul.mubr.f32.gmra.mrb[0].mxu0 %v432
          %v769 = vpop.f32.mrb[0].mxu0
          %v770 = vadd.f32 %v471, %v769
          %v771 = vpop.f32.mrb[0].mxu0
          %772 = vmatprep.mubr.f32.mxu0 0.0
          %773 = vmatmul.mubr.f32.gmra.mrb[0].mxu0 %v433
          %v774 = vpop.f32.mrb[0].mxu0
          %v775 = vadd.f32 %v471, %v774
          %v776 = vpop.f32.mrb[0].mxu0
          %777 = vmatprep.mubr.f32.mxu0 0.0
          %778 = vmatmul.mubr.f32.gmra.mrb[0].mxu0 %v434
          %v779 = vpop.f32.mrb[0].mxu0
          %v780 = vadd.f32 %v471, %v779
          %v781 = vpop.f32.mrb[0].mxu0
          %782 = vmatprep.mubr.f32.mxu0 0.0
          %783 = vmatmul.mubr.f32.gmra.mrb[0].mxu0 %v435
          %v784 = vpop.f32.mrb[0].mxu0
          %v785 = vadd.f32 %v471, %v784
          %v786 = vpop.f32.mrb[0].mxu0
          %787 = vmatprep.mubr.f32.mxu0 0.0
          %788 = vmatmul.mubr.f32.gmra.mrb[0].mxu0 %v436
          %v789 = vpop.f32.mrb[0].mxu0
          %v790 = vadd.f32 %v471, %v789
          %v791 = vpop.f32.mrb[0].mxu0
          %792 = vmatprep.mubr.f32.mxu0 0.0
          %793 = vmatmul.mubr.f32.gmra.mrb[0].mxu0 %v437
          %v794 = vpop.f32.mrb[0].mxu0
          %v795 = vadd.f32 %v471, %v794
          %v796 = vpop.f32.mrb[0].mxu0
          %797 = vmatprep.mubr.f32.mxu0 0.0
          %798 = vmatmul.mubr.f32.gmra.mrb[0].mxu0 %v438
          %v799 = vpop.f32.mrb[0].mxu0
          %v800 = vadd.f32 %v471, %v799
          %v801 = vpop.f32.mrb[0].mxu0
          %802 = vmatprep.mubr.f32.mxu0 0.0
          %803 = vmatmul.mubr.f32.gmra.mrb[0].mxu0 %v439
          %v804 = vpop.f32.mrb[0].mxu0
          %v805 = vadd.f32 %v471, %v804
          %v806 = vpop.f32.mrb[0].mxu0
          %807 = vmatprep.mubr.f32.mxu0 0.0
          %808 = vmatmul.mubr.f32.gmra.mrb[0].mxu0 %v440
          %v809 = vpop.f32.mrb[0].mxu0
          %v810 = vadd.f32 %v471, %v809
          %v811 = vpop.f32.mrb[0].mxu0
          %812 = vmatprep.mubr.f32.mxu0 0.0
          %813 = vmatmul.mubr.f32.gmra.mrb[0].mxu0 %v441
          %v814 = vpop.f32.mrb[0].mxu0
          %v815 = vadd.f32 %v471, %v814
          %v816 = vpop.f32.mrb[0].mxu0
          %817 = vmatprep.mubr.f32.mxu0 0.0
          %818 = vmatmul.mubr.f32.gmra.mrb[0].mxu0 %v442
          %v819 = vpop.f32.mrb[0].mxu0
          %v820 = vadd.f32 %v471, %v819
          %v821 = vpop.f32.mrb[0].mxu0
          %822 = vmatprep.mubr.f32.mxu0 0.0
          %823 = vmatmul.mubr.f32.gmra.mrb[0].mxu0 %v443
          %v824 = vpop.f32.mrb[0].mxu0
          %v825 = vadd.f32 %v471, %v824
          %v826 = vpop.f32.mrb[0].mxu0
          %827 = vmatprep.mubr.f32.mxu0 0.0
          %828 = vmatmul.mubr.f32.gmra.mrb[0].mxu0 %v444
          %v829 = vpop.f32.mrb[0].mxu0
          %v830 = vadd.f32 %v471, %v829
          %v831 = vpop.f32.mrb[0].mxu0
          %832 = vmatprep.mubr.f32.mxu0 0.0
          %833 = vmatmul.mubr.f32.gmra.mrb[0].mxu0 %v445
          %v834 = vpop.f32.mrb[0].mxu0
          %v835 = vadd.f32 %v471, %v834
          %v836 = vpop.f32.mrb[0].mxu0
          %837 = vmatprep.mubr.f32.mxu0 0.0
          %838 = vmatmul.mubr.f32.gmra.mrb[0].mxu0 %v446
          %v839 = vpop.f32.mrb[0].mxu0
          %v840 = vadd.f32 %v471, %v839
          %v841 = vpop.f32.mrb[0].mxu0
          %842 = vmatprep.mubr.f32.mxu0 0.0
          %843 = vmatmul.mubr.f32.gmra.mrb[0].mxu0 %v447
          %v844 = vpop.f32.mrb[0].mxu0
          %v845 = vadd.f32 %v471, %v844
          %v846 = vpop.f32.mrb[0].mxu0
          %847 = vmatprep.mubr.f32.mxu0 0.0
          %848 = vmatmul.mubr.f32.gmra.mrb[0].mxu0 %v448
          %v849 = vpop.f32.mrb[0].mxu0
          %v850 = vadd.f32 %v471, %v849
          %v851 = vpop.f32.mrb[0].mxu0
          %852 = vmatprep.mubr.f32.mxu0 0.0
          %853 = vmatmul.mubr.f32.gmra.mrb[0].mxu0 %v449
          %v854 = vpop.f32.mrb[0].mxu0
          %v855 = vadd.f32 %v471, %v854
          %v856 = vpop.f32.mrb[0].mxu0
          %857 = vdwg.mxu0
          %858 = vst [vmem:[#allocation2] sm:$0xff] %v540
          %859 = vst [vmem:[#allocation2 + $0x8] sm:$0xff] %v545
          %860 = vst [vmem:[#allocation2 + $0x10] sm:$0xff] %v550
          %861 = vst [vmem:[#allocation2 + $0x18] sm:$0xff] %v555
          %862 = vst [vmem:[#allocation2 + $0x20] sm:$0xff] %v560
          %863 = vst [vmem:[#allocation2 + $0x28] sm:$0xff] %v565
          %864 = vst [vmem:[#allocation2 + $0x30] sm:$0xff] %v570
          %865 = vst [vmem:[#allocation2 + $0x38] sm:$0xff] %v575
          %866 = vst [vmem:[#allocation2 + $0x40] sm:$0xff] %v580
          %867 = vst [vmem:[#allocation2 + $0x48] sm:$0xff] %v585
          %868 = vst [vmem:[#allocation2 + $0x50] sm:$0xff] %v590
          %869 = vst [vmem:[#allocation2 + $0x58] sm:$0xff] %v595
          %870 = vst [vmem:[#allocation2 + $0x60] sm:$0xff] %v600
          %871 = vst [vmem:[#allocation2 + $0x68] sm:$0xff] %v605
          %872 = vst [vmem:[#allocation2 + $0x70] sm:$0xff] %v610
          %873 = vst [vmem:[#allocation2 + $0x78] sm:$0xff] %v615
          %874 = vst [vmem:[#allocation2 + $0x80] sm:$0xff] %v620
          %875 = vst [vmem:[#allocation2 + $0x88] sm:$0xff] %v625
          %876 = vst [vmem:[#allocation2 + $0x90] sm:$0xff] %v630
          %877 = vst [vmem:[#allocation2 + $0x98] sm:$0xff] %v635
          %878 = vst [vmem:[#allocation2 + $0xa0] sm:$0xff] %v640
          %879 = vst [vmem:[#allocation2 + $0xa8] sm:$0xff] %v645
          %880 = vst [vmem:[#allocation2 + $0xb0] sm:$0xff] %v650
          %881 = vst [vmem:[#allocation2 + $0xb8] sm:$0xff] %v655
          %882 = vst [vmem:[#allocation2 + $0xc0] sm:$0xff] %v660
          %883 = vst [vmem:[#allocation2 + $0xc8] sm:$0xff] %v665
          %884 = vst [vmem:[#allocation2 + $0xd0] sm:$0xff] %v670
          %885 = vst [vmem:[#allocation2 + $0xd8] sm:$0xff] %v675
          %886 = vst [vmem:[#allocation2 + $0xe0] sm:$0xff] %v680
          %887 = vst [vmem:[#allocation2 + $0xe8] sm:$0xff] %v685
          %888 = vst [vmem:[#allocation2 + $0xf0] sm:$0xff] %v690
          %889 = vst [vmem:[#allocation2 + $0xf8] sm:$0xff] %v695
          %890 = vst [vmem:[#allocation2 + $0x100] sm:$0xff] %v700
          %891 = vst [vmem:[#allocation2 + $0x108] sm:$0xff] %v705
          %892 = vst [vmem:[#allocation2 + $0x110] sm:$0xff] %v710
          %893 = vst [vmem:[#allocation2 + $0x118] sm:$0xff] %v715
          %894 = vst [vmem:[#allocation2 + $0x120] sm:$0xff] %v720
          %895 = vst [vmem:[#allocation2 + $0x128] sm:$0xff] %v725
          %896 = vst [vmem:[#allocation2 + $0x130] sm:$0xff] %v730
          %897 = vst [vmem:[#allocation2 + $0x138] sm:$0xff] %v735
          %898 = vst [vmem:[#allocation2 + $0x140] sm:$0xff] %v740
          %899 = vst [vmem:[#allocation2 + $0x148] sm:$0xff] %v745
          %900 = vst [vmem:[#allocation2 + $0x150] sm:$0xff] %v750
          %901 = vst [vmem:[#allocation2 + $0x158] sm:$0xff] %v755
          %902 = vst [vmem:[#allocation2 + $0x160] sm:$0xff] %v760
          %903 = vst [vmem:[#allocation2 + $0x168] sm:$0xff] %v765
          %904 = vst [vmem:[#allocation2 + $0x170] sm:$0xff] %v770
          %905 = vst [vmem:[#allocation2 + $0x178] sm:$0xff] %v775
          %906 = vst [vmem:[#allocation2 + $0x180] sm:$0xff] %v780
          %907 = vst [vmem:[#allocation2 + $0x188] sm:$0xff] %v785
          %908 = vst [vmem:[#allocation2 + $0x190] sm:$0xff] %v790
          %909 = vst [vmem:[#allocation2 + $0x198] sm:$0xff] %v795
          %910 = vst [vmem:[#allocation2 + $0x1a0] sm:$0xff] %v800
          %911 = vst [vmem:[#allocation2 + $0x1a8] sm:$0xff] %v805
          %912 = vst [vmem:[#allocation2 + $0x1b0] sm:$0xff] %v810
          %913 = vst [vmem:[#allocation2 + $0x1b8] sm:$0xff] %v815
          %914 = vst [vmem:[#allocation2 + $0x1c0] sm:$0xff] %v820
          %915 = vst [vmem:[#allocation2 + $0x1c8] sm:$0xff] %v825
          %916 = vst [vmem:[#allocation2 + $0x1d0] sm:$0xff] %v830
          %917 = vst [vmem:[#allocation2 + $0x1d8] sm:$0xff] %v835
          %918 = vst [vmem:[#allocation2 + $0x1e0] sm:$0xff] %v840
          %919 = vst [vmem:[#allocation2 + $0x1e8] sm:$0xff] %v845
          %920 = vst [vmem:[#allocation2 + $0x1f0] sm:$0xff] %v850
          %921 = vst [vmem:[#allocation2 + $0x1f8] sm:$0xff] %v855
          %vm922 = vcmask 7168
          %923 = vst.msk [vmem:[#allocation3] sm:$0xff] %vm922, -inf
          %924 = vst.msk [vmem:[#allocation3 + $0x8] sm:$0xff] %vm922, -inf
          %925 = vst.msk [vmem:[#allocation3 + $0x10] sm:$0xff] %vm922, -inf
          %926 = vst.msk [vmem:[#allocation3 + $0x18] sm:$0xff] %vm922, -inf
          %927 = vst.msk [vmem:[#allocation3 + $0x20] sm:$0xff] %vm922, -inf
          %928 = vst.msk [vmem:[#allocation3 + $0x28] sm:$0xff] %vm922, -inf
          %929 = vst.msk [vmem:[#allocation3 + $0x30] sm:$0xff] %vm922, -inf
          %930 = vst.msk [vmem:[#allocation3 + $0x38] sm:$0xff] %vm922, -inf
          %931 = vst.msk [vmem:[#allocation3 + $0x40] sm:$0xff] %vm922, -inf
          %932 = vst.msk [vmem:[#allocation3 + $0x48] sm:$0xff] %vm922, -inf
          %933 = vst.msk [vmem:[#allocation3 + $0x50] sm:$0xff] %vm922, -inf
          %934 = vst.msk [vmem:[#allocation3 + $0x58] sm:$0xff] %vm922, -inf
          %935 = vst.msk [vmem:[#allocation3 + $0x60] sm:$0xff] %vm922, -inf
          %936 = vst.msk [vmem:[#allocation3 + $0x68] sm:$0xff] %vm922, -inf
          %937 = vst.msk [vmem:[#allocation3 + $0x70] sm:$0xff] %vm922, -inf
          %938 = vst.msk [vmem:[#allocation3 + $0x78] sm:$0xff] %vm922, -inf
          %939 = vst.msk [vmem:[#allocation3 + $0x80] sm:$0xff] %vm922, -inf
          %940 = vst.msk [vmem:[#allocation3 + $0x88] sm:$0xff] %vm922, -inf
          %941 = vst.msk [vmem:[#allocation3 + $0x90] sm:$0xff] %vm922, -inf
          %942 = vst.msk [vmem:[#allocation3 + $0x98] sm:$0xff] %vm922, -inf
          %943 = vst.msk [vmem:[#allocation3 + $0xa0] sm:$0xff] %vm922, -inf
          %944 = vst.msk [vmem:[#allocation3 + $0xa8] sm:$0xff] %vm922, -inf
          %945 = vst.msk [vmem:[#allocation3 + $0xb0] sm:$0xff] %vm922, -inf
          %946 = vst.msk [vmem:[#allocation3 + $0xb8] sm:$0xff] %vm922, -inf
          %947 = vst.msk [vmem:[#allocation3 + $0xc0] sm:$0xff] %vm922, -inf
          %948 = vst.msk [vmem:[#allocation3 + $0xc8] sm:$0xff] %vm922, -inf
          %949 = vst.msk [vmem:[#allocation3 + $0xd0] sm:$0xff] %vm922, -inf
          %950 = vst.msk [vmem:[#allocation3 + $0xd8] sm:$0xff] %vm922, -inf
          %951 = vst.msk [vmem:[#allocation3 + $0xe0] sm:$0xff] %vm922, -inf
          %952 = vst.msk [vmem:[#allocation3 + $0xe8] sm:$0xff] %vm922, -inf
          %953 = vst.msk [vmem:[#allocation3 + $0xf0] sm:$0xff] %vm922, -inf
          %954 = vst.msk [vmem:[#allocation3 + $0xf8] sm:$0xff] %vm922, -inf
          %955 = vst.msk [vmem:[#allocation3 + $0x100] sm:$0xff] %vm922, -inf
          %956 = vst.msk [vmem:[#allocation3 + $0x108] sm:$0xff] %vm922, -inf
          %957 = vst.msk [vmem:[#allocation3 + $0x110] sm:$0xff] %vm922, -inf
          %958 = vst.msk [vmem:[#allocation3 + $0x118] sm:$0xff] %vm922, -inf
          %959 = vst.msk [vmem:[#allocation3 + $0x120] sm:$0xff] %vm922, -inf
          %960 = vst.msk [vmem:[#allocation3 + $0x128] sm:$0xff] %vm922, -inf
          %961 = vst.msk [vmem:[#allocation3 + $0x130] sm:$0xff] %vm922, -inf
          %962 = vst.msk [vmem:[#allocation3 + $0x138] sm:$0xff] %vm922, -inf
          %963 = vst.msk [vmem:[#allocation3 + $0x140] sm:$0xff] %vm922, -inf
          %964 = vst.msk [vmem:[#allocation3 + $0x148] sm:$0xff] %vm922, -inf
          %965 = vst.msk [vmem:[#allocation3 + $0x150] sm:$0xff] %vm922, -inf
          %966 = vst.msk [vmem:[#allocation3 + $0x158] sm:$0xff] %vm922, -inf
          %967 = vst.msk [vmem:[#allocation3 + $0x160] sm:$0xff] %vm922, -inf
          %968 = vst.msk [vmem:[#allocation3 + $0x168] sm:$0xff] %vm922, -inf
          %969 = vst.msk [vmem:[#allocation3 + $0x170] sm:$0xff] %vm922, -inf
          %970 = vst.msk [vmem:[#allocation3 + $0x178] sm:$0xff] %vm922, -inf
          %971 = vst.msk [vmem:[#allocation3 + $0x180] sm:$0xff] %vm922, -inf
          %972 = vst.msk [vmem:[#allocation3 + $0x188] sm:$0xff] %vm922, -inf
          %973 = vst.msk [vmem:[#allocation3 + $0x190] sm:$0xff] %vm922, -inf
          %974 = vst.msk [vmem:[#allocation3 + $0x198] sm:$0xff] %vm922, -inf
          %975 = vst.msk [vmem:[#allocation3 + $0x1a0] sm:$0xff] %vm922, -inf
          %976 = vst.msk [vmem:[#allocation3 + $0x1a8] sm:$0xff] %vm922, -inf
          %977 = vst.msk [vmem:[#allocation3 + $0x1b0] sm:$0xff] %vm922, -inf
          %978 = vst.msk [vmem:[#allocation3 + $0x1b8] sm:$0xff] %vm922, -inf
          %979 = vst.msk [vmem:[#allocation3 + $0x1c0] sm:$0xff] %vm922, -inf
          %980 = vst.msk [vmem:[#allocation3 + $0x1c8] sm:$0xff] %vm922, -inf
          %981 = vst.msk [vmem:[#allocation3 + $0x1d0] sm:$0xff] %vm922, -inf
          %982 = vst.msk [vmem:[#allocation3 + $0x1d8] sm:$0xff] %vm922, -inf
          %983 = vst.msk [vmem:[#allocation3 + $0x1e0] sm:$0xff] %vm922, -inf
          %984 = vst.msk [vmem:[#allocation3 + $0x1e8] sm:$0xff] %vm922, -inf
          %985 = vst.msk [vmem:[#allocation3 + $0x1f0] sm:$0xff] %vm922, -inf
          %986 = vst.msk [vmem:[#allocation3 + $0x1f8] sm:$0xff] %vm922, -inf
          %987 = vst.msk [vmem:[#allocation4] sm:$0xff] %vm922, 0.0
          %988 = vst.msk [vmem:[#allocation4 + $0x8] sm:$0xff] %vm922, 0.0
          %989 = vst.msk [vmem:[#allocation4 + $0x10] sm:$0xff] %vm922, 0.0
          %990 = vst.msk [vmem:[#allocation4 + $0x18] sm:$0xff] %vm922, 0.0
          %991 = vst.msk [vmem:[#allocation4 + $0x20] sm:$0xff] %vm922, 0.0
          %992 = vst.msk [vmem:[#allocation4 + $0x28] sm:$0xff] %vm922, 0.0
          %993 = vst.msk [vmem:[#allocation4 + $0x30] sm:$0xff] %vm922, 0.0
          %994 = vst.msk [vmem:[#allocation4 + $0x38] sm:$0xff] %vm922, 0.0
          %995 = vst.msk [vmem:[#allocation4 + $0x40] sm:$0xff] %vm922, 0.0
          %996 = vst.msk [vmem:[#allocation4 + $0x48] sm:$0xff] %vm922, 0.0
          %997 = vst.msk [vmem:[#allocation4 + $0x50] sm:$0xff] %vm922, 0.0
          %998 = vst.msk [vmem:[#allocation4 + $0x58] sm:$0xff] %vm922, 0.0
          %999 = vst.msk [vmem:[#allocation4 + $0x60] sm:$0xff] %vm922, 0.0
          %1000 = vst.msk [vmem:[#allocation4 + $0x68] sm:$0xff] %vm922, 0.0
          %1001 = vst.msk [vmem:[#allocation4 + $0x70] sm:$0xff] %vm922, 0.0
          %1002 = vst.msk [vmem:[#allocation4 + $0x78] sm:$0xff] %vm922, 0.0
          %1003 = vst.msk [vmem:[#allocation4 + $0x80] sm:$0xff] %vm922, 0.0
          %1004 = vst.msk [vmem:[#allocation4 + $0x88] sm:$0xff] %vm922, 0.0
          %1005 = vst.msk [vmem:[#allocation4 + $0x90] sm:$0xff] %vm922, 0.0
          %1006 = vst.msk [vmem:[#allocation4 + $0x98] sm:$0xff] %vm922, 0.0
          %1007 = vst.msk [vmem:[#allocation4 + $0xa0] sm:$0xff] %vm922, 0.0
          %1008 = vst.msk [vmem:[#allocation4 + $0xa8] sm:$0xff] %vm922, 0.0
          %1009 = vst.msk [vmem:[#allocation4 + $0xb0] sm:$0xff] %vm922, 0.0
          %1010 = vst.msk [vmem:[#allocation4 + $0xb8] sm:$0xff] %vm922, 0.0
          %1011 = vst.msk [vmem:[#allocation4 + $0xc0] sm:$0xff] %vm922, 0.0
          %1012 = vst.msk [vmem:[#allocation4 + $0xc8] sm:$0xff] %vm922, 0.0
          %1013 = vst.msk [vmem:[#allocation4 + $0xd0] sm:$0xff] %vm922, 0.0
          %1014 = vst.msk [vmem:[#allocation4 + $0xd8] sm:$0xff] %vm922, 0.0
          %1015 = vst.msk [vmem:[#allocation4 + $0xe0] sm:$0xff] %vm922, 0.0
          %1016 = vst.msk [vmem:[#allocation4 + $0xe8] sm:$0xff] %vm922, 0.0
          %1017 = vst.msk [vmem:[#allocation4 + $0xf0] sm:$0xff] %vm922, 0.0
          %1018 = vst.msk [vmem:[#allocation4 + $0xf8] sm:$0xff] %vm922, 0.0
          %1019 = vst.msk [vmem:[#allocation4 + $0x100] sm:$0xff] %vm922, 0.0
          %1020 = vst.msk [vmem:[#allocation4 + $0x108] sm:$0xff] %vm922, 0.0
          %1021 = vst.msk [vmem:[#allocation4 + $0x110] sm:$0xff] %vm922, 0.0
          %1022 = vst.msk [vmem:[#allocation4 + $0x118] sm:$0xff] %vm922, 0.0
          %1023 = vst.msk [vmem:[#allocation4 + $0x120] sm:$0xff] %vm922, 0.0
          %1024 = vst.msk [vmem:[#allocation4 + $0x128] sm:$0xff] %vm922, 0.0
          %1025 = vst.msk [vmem:[#allocation4 + $0x130] sm:$0xff] %vm922, 0.0
          %1026 = vst.msk [vmem:[#allocation4 + $0x138] sm:$0xff] %vm922, 0.0
          %1027 = vst.msk [vmem:[#allocation4 + $0x140] sm:$0xff] %vm922, 0.0
          %1028 = vst.msk [vmem:[#allocation4 + $0x148] sm:$0xff] %vm922, 0.0
          %1029 = vst.msk [vmem:[#allocation4 + $0x150] sm:$0xff] %vm922, 0.0
          %1030 = vst.msk [vmem:[#allocation4 + $0x158] sm:$0xff] %vm922, 0.0
          %1031 = vst.msk [vmem:[#allocation4 + $0x160] sm:$0xff] %vm922, 0.0
          %1032 = vst.msk [vmem:[#allocation4 + $0x168] sm:$0xff] %vm922, 0.0
          %1033 = vst.msk [vmem:[#allocation4 + $0x170] sm:$0xff] %vm922, 0.0
          %1034 = vst.msk [vmem:[#allocation4 + $0x178] sm:$0xff] %vm922, 0.0
          %1035 = vst.msk [vmem:[#allocation4 + $0x180] sm:$0xff] %vm922, 0.0
          %1036 = vst.msk [vmem:[#allocation4 + $0x188] sm:$0xff] %vm922, 0.0
          %1037 = vst.msk [vmem:[#allocation4 + $0x190] sm:$0xff] %vm922, 0.0
          %1038 = vst.msk [vmem:[#allocation4 + $0x198] sm:$0xff] %vm922, 0.0
          %1039 = vst.msk [vmem:[#allocation4 + $0x1a0] sm:$0xff] %vm922, 0.0
          %1040 = vst.msk [vmem:[#allocation4 + $0x1a8] sm:$0xff] %vm922, 0.0
          %1041 = vst.msk [vmem:[#allocation4 + $0x1b0] sm:$0xff] %vm922, 0.0
          %1042 = vst.msk [vmem:[#allocation4 + $0x1b8] sm:$0xff] %vm922, 0.0
          %1043 = vst.msk [vmem:[#allocation4 + $0x1c0] sm:$0xff] %vm922, 0.0
          %1044 = vst.msk [vmem:[#allocation4 + $0x1c8] sm:$0xff] %vm922, 0.0
          %1045 = vst.msk [vmem:[#allocation4 + $0x1d0] sm:$0xff] %vm922, 0.0
          %1046 = vst.msk [vmem:[#allocation4 + $0x1d8] sm:$0xff] %vm922, 0.0
          %1047 = vst.msk [vmem:[#allocation4 + $0x1e0] sm:$0xff] %vm922, 0.0
          %1048 = vst.msk [vmem:[#allocation4 + $0x1e8] sm:$0xff] %vm922, 0.0
          %1049 = vst.msk [vmem:[#allocation4 + $0x1f0] sm:$0xff] %vm922, 0.0
          %1050 = vst.msk [vmem:[#allocation4 + $0x1f8] sm:$0xff] %vm922, 0.0
          %1051 = vst [vmem:[#allocation5] sm:$0xff] 0.0
          %1052 = vst [vmem:[#allocation5 + $0x8] sm:$0xff] 0.0
          %1053 = vst [vmem:[#allocation5 + $0x10] sm:$0xff] 0.0
          %1054 = vst [vmem:[#allocation5 + $0x18] sm:$0xff] 0.0
          %1055 = vst [vmem:[#allocation5 + $0x20] sm:$0xff] 0.0
          %1056 = vst [vmem:[#allocation5 + $0x28] sm:$0xff] 0.0
          %1057 = vst [vmem:[#allocation5 + $0x30] sm:$0xff] 0.0
          %1058 = vst [vmem:[#allocation5 + $0x38] sm:$0xff] 0.0
          %1059 = vst [vmem:[#allocation5 + $0x40] sm:$0xff] 0.0
          %1060 = vst [vmem:[#allocation5 + $0x48] sm:$0xff] 0.0
          %1061 = vst [vmem:[#allocation5 + $0x50] sm:$0xff] 0.0
          %1062 = vst [vmem:[#allocation5 + $0x58] sm:$0xff] 0.0
          %1063 = vst [vmem:[#allocation5 + $0x60] sm:$0xff] 0.0
          %1064 = vst [vmem:[#allocation5 + $0x68] sm:$0xff] 0.0
          %1065 = vst [vmem:[#allocation5 + $0x70] sm:$0xff] 0.0
          %1066 = vst [vmem:[#allocation5 + $0x78] sm:$0xff] 0.0
          %1067 = vst [vmem:[#allocation5 + $0x80] sm:$0xff] 0.0
          %1068 = vst [vmem:[#allocation5 + $0x88] sm:$0xff] 0.0
          %1069 = vst [vmem:[#allocation5 + $0x90] sm:$0xff] 0.0
          %1070 = vst [vmem:[#allocation5 + $0x98] sm:$0xff] 0.0
          %1071 = vst [vmem:[#allocation5 + $0xa0] sm:$0xff] 0.0
          %1072 = vst [vmem:[#allocation5 + $0xa8] sm:$0xff] 0.0
          %1073 = vst [vmem:[#allocation5 + $0xb0] sm:$0xff] 0.0
          %1074 = vst [vmem:[#allocation5 + $0xb8] sm:$0xff] 0.0
          %1075 = vst [vmem:[#allocation5 + $0xc0] sm:$0xff] 0.0
          %1076 = vst [vmem:[#allocation5 + $0xc8] sm:$0xff] 0.0
          %1077 = vst [vmem:[#allocation5 + $0xd0] sm:$0xff] 0.0
          %1078 = vst [vmem:[#allocation5 + $0xd8] sm:$0xff] 0.0
          %1079 = vst [vmem:[#allocation5 + $0xe0] sm:$0xff] 0.0
          %1080 = vst [vmem:[#allocation5 + $0xe8] sm:$0xff] 0.0
          %1081 = vst [vmem:[#allocation5 + $0xf0] sm:$0xff] 0.0
          %1082 = vst [vmem:[#allocation5 + $0xf8] sm:$0xff] 0.0
          %1083 = vst [vmem:[#allocation5 + $0x100] sm:$0xff] 0.0
          %1084 = vst [vmem:[#allocation5 + $0x108] sm:$0xff] 0.0
          %1085 = vst [vmem:[#allocation5 + $0x110] sm:$0xff] 0.0
          %1086 = vst [vmem:[#allocation5 + $0x118] sm:$0xff] 0.0
          %1087 = vst [vmem:[#allocation5 + $0x120] sm:$0xff] 0.0
          %1088 = vst [vmem:[#allocation5 + $0x128] sm:$0xff] 0.0
          %1089 = vst [vmem:[#allocation5 + $0x130] sm:$0xff] 0.0
          %1090 = vst [vmem:[#allocation5 + $0x138] sm:$0xff] 0.0
          %1091 = vst [vmem:[#allocation5 + $0x140] sm:$0xff] 0.0
          %1092 = vst [vmem:[#allocation5 + $0x148] sm:$0xff] 0.0
          %1093 = vst [vmem:[#allocation5 + $0x150] sm:$0xff] 0.0
          %1094 = vst [vmem:[#allocation5 + $0x158] sm:$0xff] 0.0
          %1095 = vst [vmem:[#allocation5 + $0x160] sm:$0xff] 0.0
          %1096 = vst [vmem:[#allocation5 + $0x168] sm:$0xff] 0.0
          %1097 = vst [vmem:[#allocation5 + $0x170] sm:$0xff] 0.0
          %1098 = vst [vmem:[#allocation5 + $0x178] sm:$0xff] 0.0
          %1099 = vst [vmem:[#allocation5 + $0x180] sm:$0xff] 0.0
          %1100 = vst [vmem:[#allocation5 + $0x188] sm:$0xff] 0.0
          %1101 = vst [vmem:[#allocation5 + $0x190] sm:$0xff] 0.0
          %1102 = vst [vmem:[#allocation5 + $0x198] sm:$0xff] 0.0
          %1103 = vst [vmem:[#allocation5 + $0x1a0] sm:$0xff] 0.0
          %1104 = vst [vmem:[#allocation5 + $0x1a8] sm:$0xff] 0.0
          %1105 = vst [vmem:[#allocation5 + $0x1b0] sm:$0xff] 0.0
          %1106 = vst [vmem:[#allocation5 + $0x1b8] sm:$0xff] 0.0
          %1107 = vst [vmem:[#allocation5 + $0x1c0] sm:$0xff] 0.0
          %1108 = vst [vmem:[#allocation5 + $0x1c8] sm:$0xff] 0.0
          %1109 = vst [vmem:[#allocation5 + $0x1d0] sm:$0xff] 0.0
          %1110 = vst [vmem:[#allocation5 + $0x1d8] sm:$0xff] 0.0
          %1111 = vst [vmem:[#allocation5 + $0x1e0] sm:$0xff] 0.0
          %1112 = vst [vmem:[#allocation5 + $0x1e8] sm:$0xff] 0.0
          %1113 = vst [vmem:[#allocation5 + $0x1f0] sm:$0xff] 0.0
          %1114 = vst [vmem:[#allocation5 + $0x1f8] sm:$0xff] 0.0
        $region52: #{nonlocal_block_embedded_gaussian.3} parent=47 // pred_fallthru
          _
        %v1115 = vld [vmem:[#allocation2] sm:$0xff]
        %v1116 = vld [vmem:[#allocation2 + $0x8] sm:$0xff]
        %v1117 = vld [vmem:[#allocation2 + $0x10] sm:$0xff]
        %v1118 = vld [vmem:[#allocation2 + $0x18] sm:$0xff]
        %v1119 = vld [vmem:[#allocation2 + $0x20] sm:$0xff]
        %v1120 = vld [vmem:[#allocation2 + $0x28] sm:$0xff]
        %v1121 = vld [vmem:[#allocation2 + $0x30] sm:$0xff]
        %v1122 = vld [vmem:[#allocation2 + $0x38] sm:$0xff]
        %v1123 = vld [vmem:[#allocation2 + $0x40] sm:$0xff]
        %v1124 = vld [vmem:[#allocation2 + $0x48] sm:$0xff]
        %v1125 = vld [vmem:[#allocation2 + $0x50] sm:$0xff]
        %v1126 = vld [vmem:[#allocation2 + $0x58] sm:$0xff]
        %v1127 = vld [vmem:[#allocation2 + $0x60] sm:$0xff]
        %v1128 = vld [vmem:[#allocation2 + $0x68] sm:$0xff]
        %v1129 = vld [vmem:[#allocation2 + $0x70] sm:$0xff]
        %v1130 = vld [vmem:[#allocation2 + $0x78] sm:$0xff]
        %v1131 = vld [vmem:[#allocation2 + $0x80] sm:$0xff]
        %v1132 = vld [vmem:[#allocation2 + $0x88] sm:$0xff]
        %v1133 = vld [vmem:[#allocation2 + $0x90] sm:$0xff]
        %v1134 = vld [vmem:[#allocation2 + $0x98] sm:$0xff]
        %v1135 = vld [vmem:[#allocation2 + $0xa0] sm:$0xff]
        %v1136 = vld [vmem:[#allocation2 + $0xa8] sm:$0xff]
        %v1137 = vld [vmem:[#allocation2 + $0xb0] sm:$0xff]
        %v1138 = vld [vmem:[#allocation2 + $0xb8] sm:$0xff]
        %v1139 = vld [vmem:[#allocation2 + $0xc0] sm:$0xff]
        %v1140 = vld [vmem:[#allocation2 + $0xc8] sm:$0xff]
        %v1141 = vld [vmem:[#allocation2 + $0xd0] sm:$0xff]
        %v1142 = vld [vmem:[#allocation2 + $0xd8] sm:$0xff]
        %v1143 = vld [vmem:[#allocation2 + $0xe0] sm:$0xff]
        %v1144 = vld [vmem:[#allocation2 + $0xe8] sm:$0xff]
        %v1145 = vld [vmem:[#allocation2 + $0xf0] sm:$0xff]
        %v1146 = vld [vmem:[#allocation2 + $0xf8] sm:$0xff]
        %v1147 = vld [vmem:[#allocation2 + $0x100] sm:$0xff]
        %v1148 = vld [vmem:[#allocation2 + $0x108] sm:$0xff]
        %v1149 = vld [vmem:[#allocation2 + $0x110] sm:$0xff]
        %v1150 = vld [vmem:[#allocation2 + $0x118] sm:$0xff]
        %v1151 = vld [vmem:[#allocation2 + $0x120] sm:$0xff]
        %v1152 = vld [vmem:[#allocation2 + $0x128] sm:$0xff]
        %v1153 = vld [vmem:[#allocation2 + $0x130] sm:$0xff]
        %v1154 = vld [vmem:[#allocation2 + $0x138] sm:$0xff]
        %v1155 = vld [vmem:[#allocation2 + $0x140] sm:$0xff]
        %v1156 = vld [vmem:[#allocation2 + $0x148] sm:$0xff]
        %v1157 = vld [vmem:[#allocation2 + $0x150] sm:$0xff]
        %v1158 = vld [vmem:[#allocation2 + $0x158] sm:$0xff]
        %v1159 = vld [vmem:[#allocation2 + $0x160] sm:$0xff]
        %v1160 = vld [vmem:[#allocation2 + $0x168] sm:$0xff]
        %v1161 = vld [vmem:[#allocation2 + $0x170] sm:$0xff]
        %v1162 = vld [vmem:[#allocation2 + $0x178] sm:$0xff]
        %v1163 = vld [vmem:[#allocation2 + $0x180] sm:$0xff]
        %v1164 = vld [vmem:[#allocation2 + $0x188] sm:$0xff]
        %v1165 = vld [vmem:[#allocation2 + $0x190] sm:$0xff]
        %v1166 = vld [vmem:[#allocation2 + $0x198] sm:$0xff]
        %v1167 = vld [vmem:[#allocation2 + $0x1a0] sm:$0xff]
        %v1168 = vld [vmem:[#allocation2 + $0x1a8] sm:$0xff]
        %v1169 = vld [vmem:[#allocation2 + $0x1b0] sm:$0xff]
        %v1170 = vld [vmem:[#allocation2 + $0x1b8] sm:$0xff]
        %v1171 = vld [vmem:[#allocation2 + $0x1c0] sm:$0xff]
        %v1172 = vld [vmem:[#allocation2 + $0x1c8] sm:$0xff]
        %v1173 = vld [vmem:[#allocation2 + $0x1d0] sm:$0xff]
        %v1174 = vld [vmem:[#allocation2 + $0x1d8] sm:$0xff]
        %v1175 = vld [vmem:[#allocation2 + $0x1e0] sm:$0xff]
        %v1176 = vld [vmem:[#allocation2 + $0x1e8] sm:$0xff]
        %v1177 = vld [vmem:[#allocation2 + $0x1f0] sm:$0xff]
        %v1178 = vld [vmem:[#allocation2 + $0x1f8] sm:$0xff]
        %v1179 = vld [vmem:[%s370] sm:$0xff]
        %v1180 = vld [vmem:[%s370 + $0x8] sm:$0xff]
        %v1181 = vld [vmem:[%s370 + $0x10] sm:$0xff]
        %v1182 = vld [vmem:[%s370 + $0x18] sm:$0xff]
        %v1183 = vld [vmem:[%s370 + $0x20] sm:$0xff]
        %v1184 = vld [vmem:[%s370 + $0x28] sm:$0xff]
        %v1185 = vld [vmem:[%s370 + $0x30] sm:$0xff]
        %v1186 = vld [vmem:[%s370 + $0x38] sm:$0xff]
        %v1187 = vld [vmem:[%s370 + $0x40] sm:$0xff]
        %v1188 = vld [vmem:[%s370 + $0x48] sm:$0xff]
        %v1189 = vld [vmem:[%s370 + $0x50] sm:$0xff]
        %v1190 = vld [vmem:[%s370 + $0x58] sm:$0xff]
        %v1191 = vld [vmem:[%s370 + $0x60] sm:$0xff]
        %v1192 = vld [vmem:[%s370 + $0x68] sm:$0xff]
        %v1193 = vld [vmem:[%s370 + $0x70] sm:$0xff]
        %v1194 = vld [vmem:[%s370 + $0x78] sm:$0xff]
        %1195 = vmatprep.subr.mxu0 0.0
        %1196 = vmatpush1.msra.mxu0 %v1179
        %1197 = vmatprep.subr.mxu0 0.0
        %1198 = vmatpush1.msra.mxu0 %v1180
        %1199 = vmatprep.subr.mxu0 0.0
        %1200 = vmatpush1.msra.mxu0 %v1181
        %1201 = vmatprep.subr.mxu0 0.0
        %1202 = vmatpush1.msra.mxu0 %v1182
        %1203 = vmatprep.subr.mxu0 0.0
        %1204 = vmatpush1.msra.mxu0 %v1183
        %1205 = vmatprep.subr.mxu0 0.0
        %1206 = vmatpush1.msra.mxu0 %v1184
        %1207 = vmatprep.subr.mxu0 0.0
        %1208 = vmatpush1.msra.mxu0 %v1185
        %1209 = vmatprep.subr.mxu0 0.0
        %1210 = vmatpush1.msra.mxu0 %v1186
        %1211 = vmatprep.subr.mxu0 0.0
        %1212 = vmatpush1.msra.mxu0 %v1187
        %1213 = vmatprep.subr.mxu0 0.0
        %1214 = vmatpush1.msra.mxu0 %v1188
        %1215 = vmatprep.subr.mxu0 0.0
        %1216 = vmatpush1.msra.mxu0 %v1189
        %1217 = vmatprep.subr.mxu0 0.0
        %1218 = vmatpush1.msra.mxu0 %v1190
        %1219 = vmatprep.subr.mxu0 0.0
        %1220 = vmatpush1.msra.mxu0 %v1191
        %1221 = vmatprep.subr.mxu0 0.0
        %1222 = vmatpush1.msra.mxu0 %v1192
        %1223 = vmatprep.subr.mxu0 0.0
        %1224 = vmatpush1.msra.mxu0 %v1193
        %1225 = vmatprep.subr.mxu0 0.0
        %1226 = vmatpush1.msra.mxu0 %v1194
        %1227 = vmatprep.subr.mxu0 0.0
        %1228 = vmatpush1.msra.mxu0 0.0
        %1229 = vmatprep.subr.mxu0 0.0
        %1230 = vmatpush1.msra.mxu0 0.0
        %1231 = vmatprep.subr.mxu0 0.0
        %1232 = vmatpush1.msra.mxu0 0.0
        %1233 = vmatprep.subr.mxu0 0.0
        %1234 = vmatpush1.msra.mxu0 0.0
        %1235 = vmatprep.subr.mxu0 0.0
        %1236 = vmatpush1.msra.mxu0 0.0
        %1237 = vmatprep.subr.mxu0 0.0
        %1238 = vmatpush1.msra.mxu0 0.0
        %1239 = vmatprep.subr.mxu0 0.0
        %1240 = vmatpush1.msra.mxu0 0.0
        %1241 = vmatprep.subr.mxu0 0.0
        %1242 = vmatpush1.msra.mxu0 0.0
        %1243 = vmatprep.subr.mxu0 0.0
        %1244 = vmatpush1.msra.mxu0 0.0
        %1245 = vmatprep.subr.mxu0 0.0
        %1246 = vmatpush1.msra.mxu0 0.0
        %1247 = vmatprep.subr.mxu0 0.0
        %1248 = vmatpush1.msra.mxu0 0.0
        %1249 = vmatprep.subr.mxu0 0.0
        %1250 = vmatpush1.msra.mxu0 0.0
        %1251 = vmatprep.subr.mxu0 0.0
        %1252 = vmatpush1.msra.mxu0 0.0
        %1253 = vmatprep.subr.mxu0 0.0
        %1254 = vmatpush1.msra.mxu0 0.0
        %1255 = vmatprep.subr.mxu0 0.0
        %1256 = vmatpush1.msra.mxu0 0.0
        %1257 = vmatprep.subr.mxu0 0.0
        %1258 = vmatpush1.msra.mxu0 0.0
        %1259 = vmatprep.mubr.f32.mxu0 0.0
        %1260 = vmatmul.mubr.f32.gmra.mrb[0].mxu0 %v1115
        %v1261 = vpop.f32.mrb[0].mxu0
        %v1262 = vadd.f32 0.0, %v1261
        %v1263 = vpop.f32.mrb[0].mxu0
        %1264 = vmatprep.mubr.f32.mxu0 0.0
        %1265 = vmatmul.mubr.f32.gmra.mrb[0].mxu0 %v1116
        %v1266 = vpop.f32.mrb[0].mxu0
        %v1267 = vadd.f32 0.0, %v1266
        %v1268 = vpop.f32.mrb[0].mxu0
        %1269 = vmatprep.mubr.f32.mxu0 0.0
        %1270 = vmatmul.mubr.f32.gmra.mrb[0].mxu0 %v1117
        %v1271 = vpop.f32.mrb[0].mxu0
        %v1272 = vadd.f32 0.0, %v1271
        %v1273 = vpop.f32.mrb[0].mxu0
        %1274 = vmatprep.mubr.f32.mxu0 0.0
        %1275 = vmatmul.mubr.f32.gmra.mrb[0].mxu0 %v1118
        %v1276 = vpop.f32.mrb[0].mxu0
        %v1277 = vadd.f32 0.0, %v1276
        %v1278 = vpop.f32.mrb[0].mxu0
        %1279 = vmatprep.mubr.f32.mxu0 0.0
        %1280 = vmatmul.mubr.f32.gmra.mrb[0].mxu0 %v1119
        %v1281 = vpop.f32.mrb[0].mxu0
        %v1282 = vadd.f32 0.0, %v1281
        %v1283 = vpop.f32.mrb[0].mxu0
        %1284 = vmatprep.mubr.f32.mxu0 0.0
        %1285 = vmatmul.mubr.f32.gmra.mrb[0].mxu0 %v1120
        %v1286 = vpop.f32.mrb[0].mxu0
        %v1287 = vadd.f32 0.0, %v1286
        %v1288 = vpop.f32.mrb[0].mxu0
        %1289 = vmatprep.mubr.f32.mxu0 0.0
        %1290 = vmatmul.mubr.f32.gmra.mrb[0].mxu0 %v1121
        %v1291 = vpop.f32.mrb[0].mxu0
        %v1292 = vadd.f32 0.0, %v1291
        %v1293 = vpop.f32.mrb[0].mxu0
        %1294 = vmatprep.mubr.f32.mxu0 0.0
        %1295 = vmatmul.mubr.f32.gmra.mrb[0].mxu0 %v1122
        %v1296 = vpop.f32.mrb[0].mxu0
        %v1297 = vadd.f32 0.0, %v1296
        %v1298 = vpop.f32.mrb[0].mxu0
        %1299 = vmatprep.mubr.f32.mxu0 0.0
        %1300 = vmatmul.mubr.f32.gmra.mrb[0].mxu0 %v1123
        %v1301 = vpop.f32.mrb[0].mxu0
        %v1302 = vadd.f32 0.0, %v1301
        %v1303 = vpop.f32.mrb[0].mxu0
        %1304 = vmatprep.mubr.f32.mxu0 0.0
        %1305 = vmatmul.mubr.f32.gmra.mrb[0].mxu0 %v1124
        %v1306 = vpop.f32.mrb[0].mxu0
        %v1307 = vadd.f32 0.0, %v1306
        %v1308 = vpop.f32.mrb[0].mxu0
        %1309 = vmatprep.mubr.f32.mxu0 0.0
        %1310 = vmatmul.mubr.f32.gmra.mrb[0].mxu0 %v1125
        %v1311 = vpop.f32.mrb[0].mxu0
        %v1312 = vadd.f32 0.0, %v1311
        %v1313 = vpop.f32.mrb[0].mxu0
        %1314 = vmatprep.mubr.f32.mxu0 0.0
        %1315 = vmatmul.mubr.f32.gmra.mrb[0].mxu0 %v1126
        %v1316 = vpop.f32.mrb[0].mxu0
        %v1317 = vadd.f32 0.0, %v1316
        %v1318 = vpop.f32.mrb[0].mxu0
        %1319 = vmatprep.mubr.f32.mxu0 0.0
        %1320 = vmatmul.mubr.f32.gmra.mrb[0].mxu0 %v1127
        %v1321 = vpop.f32.mrb[0].mxu0
        %v1322 = vadd.f32 0.0, %v1321
        %v1323 = vpop.f32.mrb[0].mxu0
        %1324 = vmatprep.mubr.f32.mxu0 0.0
        %1325 = vmatmul.mubr.f32.gmra.mrb[0].mxu0 %v1128
        %v1326 = vpop.f32.mrb[0].mxu0
        %v1327 = vadd.f32 0.0, %v1326
        %v1328 = vpop.f32.mrb[0].mxu0
        %1329 = vmatprep.mubr.f32.mxu0 0.0
        %1330 = vmatmul.mubr.f32.gmra.mrb[0].mxu0 %v1129
        %v1331 = vpop.f32.mrb[0].mxu0
        %v1332 = vadd.f32 0.0, %v1331
        %v1333 = vpop.f32.mrb[0].mxu0
        %1334 = vmatprep.mubr.f32.mxu0 0.0
        %1335 = vmatmul.mubr.f32.gmra.mrb[0].mxu0 %v1130
        %v1336 = vpop.f32.mrb[0].mxu0
        %v1337 = vadd.f32 0.0, %v1336
        %v1338 = vpop.f32.mrb[0].mxu0
        %1339 = vmatprep.mubr.f32.mxu0 0.0
        %1340 = vmatmul.mubr.f32.gmra.mrb[0].mxu0 %v1131
        %v1341 = vpop.f32.mrb[0].mxu0
        %v1342 = vadd.f32 0.0, %v1341
        %v1343 = vpop.f32.mrb[0].mxu0
        %1344 = vmatprep.mubr.f32.mxu0 0.0
        %1345 = vmatmul.mubr.f32.gmra.mrb[0].mxu0 %v1132
        %v1346 = vpop.f32.mrb[0].mxu0
        %v1347 = vadd.f32 0.0, %v1346
        %v1348 = vpop.f32.mrb[0].mxu0
        %1349 = vmatprep.mubr.f32.mxu0 0.0
        %1350 = vmatmul.mubr.f32.gmra.mrb[0].mxu0 %v1133
        %v1351 = vpop.f32.mrb[0].mxu0
        %v1352 = vadd.f32 0.0, %v1351
        %v1353 = vpop.f32.mrb[0].mxu0
        %1354 = vmatprep.mubr.f32.mxu0 0.0
        %1355 = vmatmul.mubr.f32.gmra.mrb[0].mxu0 %v1134
        %v1356 = vpop.f32.mrb[0].mxu0
        %v1357 = vadd.f32 0.0, %v1356
        %v1358 = vpop.f32.mrb[0].mxu0
        %1359 = vmatprep.mubr.f32.mxu0 0.0
        %1360 = vmatmul.mubr.f32.gmra.mrb[0].mxu0 %v1135
        %v1361 = vpop.f32.mrb[0].mxu0
        %v1362 = vadd.f32 0.0, %v1361
        %v1363 = vpop.f32.mrb[0].mxu0
        %1364 = vmatprep.mubr.f32.mxu0 0.0
        %1365 = vmatmul.mubr.f32.gmra.mrb[0].mxu0 %v1136
        %v1366 = vpop.f32.mrb[0].mxu0
        %v1367 = vadd.f32 0.0, %v1366
        %v1368 = vpop.f32.mrb[0].mxu0
        %1369 = vmatprep.mubr.f32.mxu0 0.0
        %1370 = vmatmul.mubr.f32.gmra.mrb[0].mxu0 %v1137
        %v1371 = vpop.f32.mrb[0].mxu0
        %v1372 = vadd.f32 0.0, %v1371
        %v1373 = vpop.f32.mrb[0].mxu0
        %1374 = vmatprep.mubr.f32.mxu0 0.0
        %1375 = vmatmul.mubr.f32.gmra.mrb[0].mxu0 %v1138
        %v1376 = vpop.f32.mrb[0].mxu0
        %v1377 = vadd.f32 0.0, %v1376
        %v1378 = vpop.f32.mrb[0].mxu0
        %1379 = vmatprep.mubr.f32.mxu0 0.0
        %1380 = vmatmul.mubr.f32.gmra.mrb[0].mxu0 %v1139
        %v1381 = vpop.f32.mrb[0].mxu0
        %v1382 = vadd.f32 0.0, %v1381
        %v1383 = vpop.f32.mrb[0].mxu0
        %1384 = vmatprep.mubr.f32.mxu0 0.0
        %1385 = vmatmul.mubr.f32.gmra.mrb[0].mxu0 %v1140
        %v1386 = vpop.f32.mrb[0].mxu0
        %v1387 = vadd.f32 0.0, %v1386
        %v1388 = vpop.f32.mrb[0].mxu0
        %1389 = vmatprep.mubr.f32.mxu0 0.0
        %1390 = vmatmul.mubr.f32.gmra.mrb[0].mxu0 %v1141
        %v1391 = vpop.f32.mrb[0].mxu0
        %v1392 = vadd.f32 0.0, %v1391
        %v1393 = vpop.f32.mrb[0].mxu0
        %1394 = vmatprep.mubr.f32.mxu0 0.0
        %1395 = vmatmul.mubr.f32.gmra.mrb[0].mxu0 %v1142
        %v1396 = vpop.f32.mrb[0].mxu0
        %v1397 = vadd.f32 0.0, %v1396
        %v1398 = vpop.f32.mrb[0].mxu0
        %1399 = vmatprep.mubr.f32.mxu0 0.0
        %1400 = vmatmul.mubr.f32.gmra.mrb[0].mxu0 %v1143
        %v1401 = vpop.f32.mrb[0].mxu0
        %v1402 = vadd.f32 0.0, %v1401
        %v1403 = vpop.f32.mrb[0].mxu0
        %1404 = vmatprep.mubr.f32.mxu0 0.0
        %1405 = vmatmul.mubr.f32.gmra.mrb[0].mxu0 %v1144
        %v1406 = vpop.f32.mrb[0].mxu0
        %v1407 = vadd.f32 0.0, %v1406
        %v1408 = vpop.f32.mrb[0].mxu0
        %1409 = vmatprep.mubr.f32.mxu0 0.0
        %1410 = vmatmul.mubr.f32.gmra.mrb[0].mxu0 %v1145
        %v1411 = vpop.f32.mrb[0].mxu0
        %v1412 = vadd.f32 0.0, %v1411
        %v1413 = vpop.f32.mrb[0].mxu0
        %1414 = vmatprep.mubr.f32.mxu0 0.0
        %1415 = vmatmul.mubr.f32.gmra.mrb[0].mxu0 %v1146
        %v1416 = vpop.f32.mrb[0].mxu0
        %v1417 = vadd.f32 0.0, %v1416
        %v1418 = vpop.f32.mrb[0].mxu0
        %1419 = vmatprep.mubr.f32.mxu0 0.0
        %1420 = vmatmul.mubr.f32.gmra.mrb[0].mxu0 %v1147
        %v1421 = vpop.f32.mrb[0].mxu0
        %v1422 = vadd.f32 0.0, %v1421
        %v1423 = vpop.f32.mrb[0].mxu0
        %1424 = vmatprep.mubr.f32.mxu0 0.0
        %1425 = vmatmul.mubr.f32.gmra.mrb[0].mxu0 %v1148
        %v1426 = vpop.f32.mrb[0].mxu0
        %v1427 = vadd.f32 0.0, %v1426
        %v1428 = vpop.f32.mrb[0].mxu0
        %1429 = vmatprep.mubr.f32.mxu0 0.0
        %1430 = vmatmul.mubr.f32.gmra.mrb[0].mxu0 %v1149
        %v1431 = vpop.f32.mrb[0].mxu0
        %v1432 = vadd.f32 0.0, %v1431
        %v1433 = vpop.f32.mrb[0].mxu0
        %1434 = vmatprep.mubr.f32.mxu0 0.0
        %1435 = vmatmul.mubr.f32.gmra.mrb[0].mxu0 %v1150
        %v1436 = vpop.f32.mrb[0].mxu0
        %v1437 = vadd.f32 0.0, %v1436
        %v1438 = vpop.f32.mrb[0].mxu0
        %1439 = vmatprep.mubr.f32.mxu0 0.0
        %1440 = vmatmul.mubr.f32.gmra.mrb[0].mxu0 %v1151
        %v1441 = vpop.f32.mrb[0].mxu0
        %v1442 = vadd.f32 0.0, %v1441
        %v1443 = vpop.f32.mrb[0].mxu0
        %1444 = vmatprep.mubr.f32.mxu0 0.0
        %1445 = vmatmul.mubr.f32.gmra.mrb[0].mxu0 %v1152
        %v1446 = vpop.f32.mrb[0].mxu0
        %v1447 = vadd.f32 0.0, %v1446
        %v1448 = vpop.f32.mrb[0].mxu0
        %1449 = vmatprep.mubr.f32.mxu0 0.0
        %1450 = vmatmul.mubr.f32.gmra.mrb[0].mxu0 %v1153
        %v1451 = vpop.f32.mrb[0].mxu0
        %v1452 = vadd.f32 0.0, %v1451
        %v1453 = vpop.f32.mrb[0].mxu0
        %1454 = vmatprep.mubr.f32.mxu0 0.0
        %1455 = vmatmul.mubr.f32.gmra.mrb[0].mxu0 %v1154
        %v1456 = vpop.f32.mrb[0].mxu0
        %v1457 = vadd.f32 0.0, %v1456
        %v1458 = vpop.f32.mrb[0].mxu0
        %1459 = vmatprep.mubr.f32.mxu0 0.0
        %1460 = vmatmul.mubr.f32.gmra.mrb[0].mxu0 %v1155
        %v1461 = vpop.f32.mrb[0].mxu0
        %v1462 = vadd.f32 0.0, %v1461
        %v1463 = vpop.f32.mrb[0].mxu0
        %1464 = vmatprep.mubr.f32.mxu0 0.0
        %1465 = vmatmul.mubr.f32.gmra.mrb[0].mxu0 %v1156
        %v1466 = vpop.f32.mrb[0].mxu0
        %v1467 = vadd.f32 0.0, %v1466
        %v1468 = vpop.f32.mrb[0].mxu0
        %1469 = vmatprep.mubr.f32.mxu0 0.0
        %1470 = vmatmul.mubr.f32.gmra.mrb[0].mxu0 %v1157
        %v1471 = vpop.f32.mrb[0].mxu0
        %v1472 = vadd.f32 0.0, %v1471
        %v1473 = vpop.f32.mrb[0].mxu0
        %1474 = vmatprep.mubr.f32.mxu0 0.0
        %1475 = vmatmul.mubr.f32.gmra.mrb[0].mxu0 %v1158
        %v1476 = vpop.f32.mrb[0].mxu0
        %v1477 = vadd.f32 0.0, %v1476
        %v1478 = vpop.f32.mrb[0].mxu0
        %1479 = vmatprep.mubr.f32.mxu0 0.0
        %1480 = vmatmul.mubr.f32.gmra.mrb[0].mxu0 %v1159
        %v1481 = vpop.f32.mrb[0].mxu0
        %v1482 = vadd.f32 0.0, %v1481
        %v1483 = vpop.f32.mrb[0].mxu0
        %1484 = vmatprep.mubr.f32.mxu0 0.0
        %1485 = vmatmul.mubr.f32.gmra.mrb[0].mxu0 %v1160
        %v1486 = vpop.f32.mrb[0].mxu0
        %v1487 = vadd.f32 0.0, %v1486
        %v1488 = vpop.f32.mrb[0].mxu0
        %1489 = vmatprep.mubr.f32.mxu0 0.0
        %1490 = vmatmul.mubr.f32.gmra.mrb[0].mxu0 %v1161
        %v1491 = vpop.f32.mrb[0].mxu0
        %v1492 = vadd.f32 0.0, %v1491
        %v1493 = vpop.f32.mrb[0].mxu0
        %1494 = vmatprep.mubr.f32.mxu0 0.0
        %1495 = vmatmul.mubr.f32.gmra.mrb[0].mxu0 %v1162
        %v1496 = vpop.f32.mrb[0].mxu0
        %v1497 = vadd.f32 0.0, %v1496
        %v1498 = vpop.f32.mrb[0].mxu0
        %1499 = vmatprep.mubr.f32.mxu0 0.0
        %1500 = vmatmul.mubr.f32.gmra.mrb[0].mxu0 %v1163
        %v1501 = vpop.f32.mrb[0].mxu0
        %v1502 = vadd.f32 0.0, %v1501
        %v1503 = vpop.f32.mrb[0].mxu0
        %1504 = vmatprep.mubr.f32.mxu0 0.0
        %1505 = vmatmul.mubr.f32.gmra.mrb[0].mxu0 %v1164
        %v1506 = vpop.f32.mrb[0].mxu0
        %v1507 = vadd.f32 0.0, %v1506
        %v1508 = vpop.f32.mrb[0].mxu0
        %1509 = vmatprep.mubr.f32.mxu0 0.0
        %1510 = vmatmul.mubr.f32.gmra.mrb[0].mxu0 %v1165
        %v1511 = vpop.f32.mrb[0].mxu0
        %v1512 = vadd.f32 0.0, %v1511
        %v1513 = vpop.f32.mrb[0].mxu0
        %1514 = vmatprep.mubr.f32.mxu0 0.0
        %1515 = vmatmul.mubr.f32.gmra.mrb[0].mxu0 %v1166
        %v1516 = vpop.f32.mrb[0].mxu0
        %v1517 = vadd.f32 0.0, %v1516
        %v1518 = vpop.f32.mrb[0].mxu0
        %1519 = vmatprep.mubr.f32.mxu0 0.0
        %1520 = vmatmul.mubr.f32.gmra.mrb[0].mxu0 %v1167
        %v1521 = vpop.f32.mrb[0].mxu0
        %v1522 = vadd.f32 0.0, %v1521
        %v1523 = vpop.f32.mrb[0].mxu0
        %1524 = vmatprep.mubr.f32.mxu0 0.0
        %1525 = vmatmul.mubr.f32.gmra.mrb[0].mxu0 %v1168
        %v1526 = vpop.f32.mrb[0].mxu0
        %v1527 = vadd.f32 0.0, %v1526
        %v1528 = vpop.f32.mrb[0].mxu0
        %1529 = vmatprep.mubr.f32.mxu0 0.0
        %1530 = vmatmul.mubr.f32.gmra.mrb[0].mxu0 %v1169
        %v1531 = vpop.f32.mrb[0].mxu0
        %v1532 = vadd.f32 0.0, %v1531
        %v1533 = vpop.f32.mrb[0].mxu0
        %1534 = vmatprep.mubr.f32.mxu0 0.0
        %1535 = vmatmul.mubr.f32.gmra.mrb[0].mxu0 %v1170
        %v1536 = vpop.f32.mrb[0].mxu0
        %v1537 = vadd.f32 0.0, %v1536
        %v1538 = vpop.f32.mrb[0].mxu0
        %1539 = vmatprep.mubr.f32.mxu0 0.0
        %1540 = vmatmul.mubr.f32.gmra.mrb[0].mxu0 %v1171
        %v1541 = vpop.f32.mrb[0].mxu0
        %v1542 = vadd.f32 0.0, %v1541
        %v1543 = vpop.f32.mrb[0].mxu0
        %1544 = vmatprep.mubr.f32.mxu0 0.0
        %1545 = vmatmul.mubr.f32.gmra.mrb[0].mxu0 %v1172
        %v1546 = vpop.f32.mrb[0].mxu0
        %v1547 = vadd.f32 0.0, %v1546
        %v1548 = vpop.f32.mrb[0].mxu0
        %1549 = vmatprep.mubr.f32.mxu0 0.0
        %1550 = vmatmul.mubr.f32.gmra.mrb[0].mxu0 %v1173
        %v1551 = vpop.f32.mrb[0].mxu0
        %v1552 = vadd.f32 0.0, %v1551
        %v1553 = vpop.f32.mrb[0].mxu0
        %1554 = vmatprep.mubr.f32.mxu0 0.0
        %1555 = vmatmul.mubr.f32.gmra.mrb[0].mxu0 %v1174
        %v1556 = vpop.f32.mrb[0].mxu0
        %v1557 = vadd.f32 0.0, %v1556
        %v1558 = vpop.f32.mrb[0].mxu0
        %1559 = vmatprep.mubr.f32.mxu0 0.0
        %1560 = vmatmul.mubr.f32.gmra.mrb[0].mxu0 %v1175
        %v1561 = vpop.f32.mrb[0].mxu0
        %v1562 = vadd.f32 0.0, %v1561
        %v1563 = vpop.f32.mrb[0].mxu0
        %1564 = vmatprep.mubr.f32.mxu0 0.0
        %1565 = vmatmul.mubr.f32.gmra.mrb[0].mxu0 %v1176
        %v1566 = vpop.f32.mrb[0].mxu0
        %v1567 = vadd.f32 0.0, %v1566
        %v1568 = vpop.f32.mrb[0].mxu0
        %1569 = vmatprep.mubr.f32.mxu0 0.0
        %1570 = vmatmul.mubr.f32.gmra.mrb[0].mxu0 %v1177
        %v1571 = vpop.f32.mrb[0].mxu0
        %v1572 = vadd.f32 0.0, %v1571
        %v1573 = vpop.f32.mrb[0].mxu0
        %1574 = vmatprep.mubr.f32.mxu0 0.0
        %1575 = vmatmul.mubr.f32.gmra.mrb[0].mxu0 %v1178
        %v1576 = vpop.f32.mrb[0].mxu0
        %v1577 = vadd.f32 0.0, %v1576
        %v1578 = vpop.f32.mrb[0].mxu0
        %1579 = vdwg.mxu0
        %s1580 = smul.u32 %s28, 128
        %v1581 = vlaneseq
        %v1582 = vand.u32 %v1581, 127
        %v1583 = vstv %s1580
        %v1584 = vadd.s32 %v1583, %v1582
        %vm1585 = vcmp.lt.s32.totalorder %v1584, 16
        %v1586 = vsel %vm1585, %v1262, -inf
        %v1587 = vsel %vm1585, %v1267, -inf
        %v1588 = vsel %vm1585, %v1272, -inf
        %v1589 = vsel %vm1585, %v1277, -inf
        %v1590 = vsel %vm1585, %v1282, -inf
        %v1591 = vsel %vm1585, %v1287, -inf
        %v1592 = vsel %vm1585, %v1292, -inf
        %v1593 = vsel %vm1585, %v1297, -inf
        %v1594 = vsel %vm1585, %v1302, -inf
        %v1595 = vsel %vm1585, %v1307, -inf
        %v1596 = vsel %vm1585, %v1312, -inf
        %v1597 = vsel %vm1585, %v1317, -inf
        %v1598 = vsel %vm1585, %v1322, -inf
        %v1599 = vsel %vm1585, %v1327, -inf
        %v1600 = vsel %vm1585, %v1332, -inf
        %v1601 = vsel %vm1585, %v1337, -inf
        %v1602 = vsel %vm1585, %v1342, -inf
        %v1603 = vsel %vm1585, %v1347, -inf
        %v1604 = vsel %vm1585, %v1352, -inf
        %v1605 = vsel %vm1585, %v1357, -inf
        %v1606 = vsel %vm1585, %v1362, -inf
        %v1607 = vsel %vm1585, %v1367, -inf
        %v1608 = vsel %vm1585, %v1372, -inf
        %v1609 = vsel %vm1585, %v1377, -inf
        %v1610 = vsel %vm1585, %v1382, -inf
        %v1611 = vsel %vm1585, %v1387, -inf
        %v1612 = vsel %vm1585, %v1392, -inf
        %v1613 = vsel %vm1585, %v1397, -inf
        %v1614 = vsel %vm1585, %v1402, -inf
        %v1615 = vsel %vm1585, %v1407, -inf
        %v1616 = vsel %vm1585, %v1412, -inf
        %v1617 = vsel %vm1585, %v1417, -inf
        %v1618 = vsel %vm1585, %v1422, -inf
        %v1619 = vsel %vm1585, %v1427, -inf
        %v1620 = vsel %vm1585, %v1432, -inf
        %v1621 = vsel %vm1585, %v1437, -inf
        %v1622 = vsel %vm1585, %v1442, -inf
        %v1623 = vsel %vm1585, %v1447, -inf
        %v1624 = vsel %vm1585, %v1452, -inf
        %v1625 = vsel %vm1585, %v1457, -inf
        %v1626 = vsel %vm1585, %v1462, -inf
        %v1627 = vsel %vm1585, %v1467, -inf
        %v1628 = vsel %vm1585, %v1472, -inf
        %v1629 = vsel %vm1585, %v1477, -inf
        %v1630 = vsel %vm1585, %v1482, -inf
        %v1631 = vsel %vm1585, %v1487, -inf
        %v1632 = vsel %vm1585, %v1492, -inf
        %v1633 = vsel %vm1585, %v1497, -inf
        %v1634 = vsel %vm1585, %v1502, -inf
        %v1635 = vsel %vm1585, %v1507, -inf
        %v1636 = vsel %vm1585, %v1512, -inf
        %v1637 = vsel %vm1585, %v1517, -inf
        %v1638 = vsel %vm1585, %v1522, -inf
        %v1639 = vsel %vm1585, %v1527, -inf
        %v1640 = vsel %vm1585, %v1532, -inf
        %v1641 = vsel %vm1585, %v1537, -inf
        %v1642 = vsel %vm1585, %v1542, -inf
        %v1643 = vsel %vm1585, %v1547, -inf
        %v1644 = vsel %vm1585, %v1552, -inf
        %v1645 = vsel %vm1585, %v1557, -inf
        %v1646 = vsel %vm1585, %v1562, -inf
        %v1647 = vsel %vm1585, %v1567, -inf
        %v1648 = vsel %vm1585, %v1572, -inf
        %v1649 = vsel %vm1585, %v1577, -inf
        %v1650 = vld [vmem:[#allocation3] sm:$0xff]
        %v1651 = vld [vmem:[#allocation3 + $0x8] sm:$0xff]
        %v1652 = vld [vmem:[#allocation3 + $0x10] sm:$0xff]
        %v1653 = vld [vmem:[#allocation3 + $0x18] sm:$0xff]
        %v1654 = vld [vmem:[#allocation3 + $0x20] sm:$0xff]
        %v1655 = vld [vmem:[#allocation3 + $0x28] sm:$0xff]
        %v1656 = vld [vmem:[#allocation3 + $0x30] sm:$0xff]
        %v1657 = vld [vmem:[#allocation3 + $0x38] sm:$0xff]
        %v1658 = vld [vmem:[#allocation3 + $0x40] sm:$0xff]
        %v1659 = vld [vmem:[#allocation3 + $0x48] sm:$0xff]
        %v1660 = vld [vmem:[#allocation3 + $0x50] sm:$0xff]
        %v1661 = vld [vmem:[#allocation3 + $0x58] sm:$0xff]
        %v1662 = vld [vmem:[#allocation3 + $0x60] sm:$0xff]
        %v1663 = vld [vmem:[#allocation3 + $0x68] sm:$0xff]
        %v1664 = vld [vmem:[#allocation3 + $0x70] sm:$0xff]
        %v1665 = vld [vmem:[#allocation3 + $0x78] sm:$0xff]
        %v1666 = vld [vmem:[#allocation3 + $0x80] sm:$0xff]
        %v1667 = vld [vmem:[#allocation3 + $0x88] sm:$0xff]
        %v1668 = vld [vmem:[#allocation3 + $0x90] sm:$0xff]
        %v1669 = vld [vmem:[#allocation3 + $0x98] sm:$0xff]
        %v1670 = vld [vmem:[#allocation3 + $0xa0] sm:$0xff]
        %v1671 = vld [vmem:[#allocation3 + $0xa8] sm:$0xff]
        %v1672 = vld [vmem:[#allocation3 + $0xb0] sm:$0xff]
        %v1673 = vld [vmem:[#allocation3 + $0xb8] sm:$0xff]
        %v1674 = vld [vmem:[#allocation3 + $0xc0] sm:$0xff]
        %v1675 = vld [vmem:[#allocation3 + $0xc8] sm:$0xff]
        %v1676 = vld [vmem:[#allocation3 + $0xd0] sm:$0xff]
        %v1677 = vld [vmem:[#allocation3 + $0xd8] sm:$0xff]
        %v1678 = vld [vmem:[#allocation3 + $0xe0] sm:$0xff]
        %v1679 = vld [vmem:[#allocation3 + $0xe8] sm:$0xff]
        %v1680 = vld [vmem:[#allocation3 + $0xf0] sm:$0xff]
        %v1681 = vld [vmem:[#allocation3 + $0xf8] sm:$0xff]
        %v1682 = vld [vmem:[#allocation3 + $0x100] sm:$0xff]
        %v1683 = vld [vmem:[#allocation3 + $0x108] sm:$0xff]
        %v1684 = vld [vmem:[#allocation3 + $0x110] sm:$0xff]
        %v1685 = vld [vmem:[#allocation3 + $0x118] sm:$0xff]
        %v1686 = vld [vmem:[#allocation3 + $0x120] sm:$0xff]
        %v1687 = vld [vmem:[#allocation3 + $0x128] sm:$0xff]
        %v1688 = vld [vmem:[#allocation3 + $0x130] sm:$0xff]
        %v1689 = vld [vmem:[#allocation3 + $0x138] sm:$0xff]
        %v1690 = vld [vmem:[#allocation3 + $0x140] sm:$0xff]
        %v1691 = vld [vmem:[#allocation3 + $0x148] sm:$0xff]
        %v1692 = vld [vmem:[#allocation3 + $0x150] sm:$0xff]
        %v1693 = vld [vmem:[#allocation3 + $0x158] sm:$0xff]
        %v1694 = vld [vmem:[#allocation3 + $0x160] sm:$0xff]
        %v1695 = vld [vmem:[#allocation3 + $0x168] sm:$0xff]
        %v1696 = vld [vmem:[#allocation3 + $0x170] sm:$0xff]
        %v1697 = vld [vmem:[#allocation3 + $0x178] sm:$0xff]
        %v1698 = vld [vmem:[#allocation3 + $0x180] sm:$0xff]
        %v1699 = vld [vmem:[#allocation3 + $0x188] sm:$0xff]
        %v1700 = vld [vmem:[#allocation3 + $0x190] sm:$0xff]
        %v1701 = vld [vmem:[#allocation3 + $0x198] sm:$0xff]
        %v1702 = vld [vmem:[#allocation3 + $0x1a0] sm:$0xff]
        %v1703 = vld [vmem:[#allocation3 + $0x1a8] sm:$0xff]
        %v1704 = vld [vmem:[#allocation3 + $0x1b0] sm:$0xff]
        %v1705 = vld [vmem:[#allocation3 + $0x1b8] sm:$0xff]
        %v1706 = vld [vmem:[#allocation3 + $0x1c0] sm:$0xff]
        %v1707 = vld [vmem:[#allocation3 + $0x1c8] sm:$0xff]
        %v1708 = vld [vmem:[#allocation3 + $0x1d0] sm:$0xff]
        %v1709 = vld [vmem:[#allocation3 + $0x1d8] sm:$0xff]
        %v1710 = vld [vmem:[#allocation3 + $0x1e0] sm:$0xff]
        %v1711 = vld [vmem:[#allocation3 + $0x1e8] sm:$0xff]
        %v1712 = vld [vmem:[#allocation3 + $0x1f0] sm:$0xff]
        %v1713 = vld [vmem:[#allocation3 + $0x1f8] sm:$0xff]
        %1714 = vmax.xlane.f32.xlu0 %v1586
        %v1715 = vpop.xlane.xlu0 %1714
        %1716 = vmax.xlane.f32.xlu0 %v1587
        %v1717 = vpop.xlane.xlu0 %1716
        %1718 = vmax.xlane.f32.xlu0 %v1588
        %v1719 = vpop.xlane.xlu0 %1718
        %1720 = vmax.xlane.f32.xlu0 %v1589
        %v1721 = vpop.xlane.xlu0 %1720
        %1722 = vmax.xlane.f32.xlu0 %v1590
        %v1723 = vpop.xlane.xlu0 %1722
        %1724 = vmax.xlane.f32.xlu0 %v1591
        %v1725 = vpop.xlane.xlu0 %1724
        %1726 = vmax.xlane.f32.xlu0 %v1592
        %v1727 = vpop.xlane.xlu0 %1726
        %1728 = vmax.xlane.f32.xlu0 %v1593
        %v1729 = vpop.xlane.xlu0 %1728
        %1730 = vmax.xlane.f32.xlu0 %v1594
        %v1731 = vpop.xlane.xlu0 %1730
        %1732 = vmax.xlane.f32.xlu0 %v1595
        %v1733 = vpop.xlane.xlu0 %1732
        %1734 = vmax.xlane.f32.xlu0 %v1596
        %v1735 = vpop.xlane.xlu0 %1734
        %1736 = vmax.xlane.f32.xlu0 %v1597
        %v1737 = vpop.xlane.xlu0 %1736
        %1738 = vmax.xlane.f32.xlu0 %v1598
        %v1739 = vpop.xlane.xlu0 %1738
        %1740 = vmax.xlane.f32.xlu0 %v1599
        %v1741 = vpop.xlane.xlu0 %1740
        %1742 = vmax.xlane.f32.xlu0 %v1600
        %v1743 = vpop.xlane.xlu0 %1742
        %1744 = vmax.xlane.f32.xlu0 %v1601
        %v1745 = vpop.xlane.xlu0 %1744
        %1746 = vmax.xlane.f32.xlu0 %v1602
        %v1747 = vpop.xlane.xlu0 %1746
        %1748 = vmax.xlane.f32.xlu0 %v1603
        %v1749 = vpop.xlane.xlu0 %1748
        %1750 = vmax.xlane.f32.xlu0 %v1604
        %v1751 = vpop.xlane.xlu0 %1750
        %1752 = vmax.xlane.f32.xlu0 %v1605
        %v1753 = vpop.xlane.xlu0 %1752
        %1754 = vmax.xlane.f32.xlu0 %v1606
        %v1755 = vpop.xlane.xlu0 %1754
        %1756 = vmax.xlane.f32.xlu0 %v1607
        %v1757 = vpop.xlane.xlu0 %1756
        %1758 = vmax.xlane.f32.xlu0 %v1608
        %v1759 = vpop.xlane.xlu0 %1758
        %1760 = vmax.xlane.f32.xlu0 %v1609
        %v1761 = vpop.xlane.xlu0 %1760
        %1762 = vmax.xlane.f32.xlu0 %v1610
        %v1763 = vpop.xlane.xlu0 %1762
        %1764 = vmax.xlane.f32.xlu0 %v1611
        %v1765 = vpop.xlane.xlu0 %1764
        %1766 = vmax.xlane.f32.xlu0 %v1612
        %v1767 = vpop.xlane.xlu0 %1766
        %1768 = vmax.xlane.f32.xlu0 %v1613
        %v1769 = vpop.xlane.xlu0 %1768
        %1770 = vmax.xlane.f32.xlu0 %v1614
        %v1771 = vpop.xlane.xlu0 %1770
        %1772 = vmax.xlane.f32.xlu0 %v1615
        %v1773 = vpop.xlane.xlu0 %1772
        %1774 = vmax.xlane.f32.xlu0 %v1616
        %v1775 = vpop.xlane.xlu0 %1774
        %1776 = vmax.xlane.f32.xlu0 %v1617
        %v1777 = vpop.xlane.xlu0 %1776
        %1778 = vmax.xlane.f32.xlu0 %v1618
        %v1779 = vpop.xlane.xlu0 %1778
        %1780 = vmax.xlane.f32.xlu0 %v1619
        %v1781 = vpop.xlane.xlu0 %1780
        %1782 = vmax.xlane.f32.xlu0 %v1620
        %v1783 = vpop.xlane.xlu0 %1782
        %1784 = vmax.xlane.f32.xlu0 %v1621
        %v1785 = vpop.xlane.xlu0 %1784
        %1786 = vmax.xlane.f32.xlu0 %v1622
        %v1787 = vpop.xlane.xlu0 %1786
        %1788 = vmax.xlane.f32.xlu0 %v1623
        %v1789 = vpop.xlane.xlu0 %1788
        %1790 = vmax.xlane.f32.xlu0 %v1624
        %v1791 = vpop.xlane.xlu0 %1790
        %1792 = vmax.xlane.f32.xlu0 %v1625
        %v1793 = vpop.xlane.xlu0 %1792
        %1794 = vmax.xlane.f32.xlu0 %v1626
        %v1795 = vpop.xlane.xlu0 %1794
        %1796 = vmax.xlane.f32.xlu0 %v1627
        %v1797 = vpop.xlane.xlu0 %1796
        %1798 = vmax.xlane.f32.xlu0 %v1628
        %v1799 = vpop.xlane.xlu0 %1798
        %1800 = vmax.xlane.f32.xlu0 %v1629
        %v1801 = vpop.xlane.xlu0 %1800
        %1802 = vmax.xlane.f32.xlu0 %v1630
        %v1803 = vpop.xlane.xlu0 %1802
        %1804 = vmax.xlane.f32.xlu0 %v1631
        %v1805 = vpop.xlane.xlu0 %1804
        %1806 = vmax.xlane.f32.xlu0 %v1632
        %v1807 = vpop.xlane.xlu0 %1806
        %1808 = vmax.xlane.f32.xlu0 %v1633
        %v1809 = vpop.xlane.xlu0 %1808
        %1810 = vmax.xlane.f32.xlu0 %v1634
        %v1811 = vpop.xlane.xlu0 %1810
        %1812 = vmax.xlane.f32.xlu0 %v1635
        %v1813 = vpop.xlane.xlu0 %1812
        %1814 = vmax.xlane.f32.xlu0 %v1636
        %v1815 = vpop.xlane.xlu0 %1814
        %1816 = vmax.xlane.f32.xlu0 %v1637
        %v1817 = vpop.xlane.xlu0 %1816
        %1818 = vmax.xlane.f32.xlu0 %v1638
        %v1819 = vpop.xlane.xlu0 %1818
        %1820 = vmax.xlane.f32.xlu0 %v1639
        %v1821 = vpop.xlane.xlu0 %1820
        %1822 = vmax.xlane.f32.xlu0 %v1640
        %v1823 = vpop.xlane.xlu0 %1822
        %1824 = vmax.xlane.f32.xlu0 %v1641
        %v1825 = vpop.xlane.xlu0 %1824
        %1826 = vmax.xlane.f32.xlu0 %v1642
        %v1827 = vpop.xlane.xlu0 %1826
        %1828 = vmax.xlane.f32.xlu0 %v1643
        %v1829 = vpop.xlane.xlu0 %1828
        %1830 = vmax.xlane.f32.xlu0 %v1644
        %v1831 = vpop.xlane.xlu0 %1830
        %1832 = vmax.xlane.f32.xlu0 %v1645
        %v1833 = vpop.xlane.xlu0 %1832
        %1834 = vmax.xlane.f32.xlu0 %v1646
        %v1835 = vpop.xlane.xlu0 %1834
        %1836 = vmax.xlane.f32.xlu0 %v1647
        %v1837 = vpop.xlane.xlu0 %1836
        %1838 = vmax.xlane.f32.xlu0 %v1648
        %v1839 = vpop.xlane.xlu0 %1838
        %1840 = vmax.xlane.f32.xlu0 %v1649
        %v1841 = vpop.xlane.xlu0 %1840
        %v1842 = vmax.f32 %v1650, %v1715
        %v1843 = vmax.f32 %v1651, %v1717
        %v1844 = vmax.f32 %v1652, %v1719
        %v1845 = vmax.f32 %v1653, %v1721
        %v1846 = vmax.f32 %v1654, %v1723
        %v1847 = vmax.f32 %v1655, %v1725
        %v1848 = vmax.f32 %v1656, %v1727
        %v1849 = vmax.f32 %v1657, %v1729
        %v1850 = vmax.f32 %v1658, %v1731
        %v1851 = vmax.f32 %v1659, %v1733
        %v1852 = vmax.f32 %v1660, %v1735
        %v1853 = vmax.f32 %v1661, %v1737
        %v1854 = vmax.f32 %v1662, %v1739
        %v1855 = vmax.f32 %v1663, %v1741
        %v1856 = vmax.f32 %v1664, %v1743
        %v1857 = vmax.f32 %v1665, %v1745
        %v1858 = vmax.f32 %v1666, %v1747
        %v1859 = vmax.f32 %v1667, %v1749
        %v1860 = vmax.f32 %v1668, %v1751
        %v1861 = vmax.f32 %v1669, %v1753
        %v1862 = vmax.f32 %v1670, %v1755
        %v1863 = vmax.f32 %v1671, %v1757
        %v1864 = vmax.f32 %v1672, %v1759
        %v1865 = vmax.f32 %v1673, %v1761
        %v1866 = vmax.f32 %v1674, %v1763
        %v1867 = vmax.f32 %v1675, %v1765
        %v1868 = vmax.f32 %v1676, %v1767
        %v1869 = vmax.f32 %v1677, %v1769
        %v1870 = vmax.f32 %v1678, %v1771
        %v1871 = vmax.f32 %v1679, %v1773
        %v1872 = vmax.f32 %v1680, %v1775
        %v1873 = vmax.f32 %v1681, %v1777
        %v1874 = vmax.f32 %v1682, %v1779
        %v1875 = vmax.f32 %v1683, %v1781
        %v1876 = vmax.f32 %v1684, %v1783
        %v1877 = vmax.f32 %v1685, %v1785
        %v1878 = vmax.f32 %v1686, %v1787
        %v1879 = vmax.f32 %v1687, %v1789
        %v1880 = vmax.f32 %v1688, %v1791
        %v1881 = vmax.f32 %v1689, %v1793
        %v1882 = vmax.f32 %v1690, %v1795
        %v1883 = vmax.f32 %v1691, %v1797
        %v1884 = vmax.f32 %v1692, %v1799
        %v1885 = vmax.f32 %v1693, %v1801
        %v1886 = vmax.f32 %v1694, %v1803
        %v1887 = vmax.f32 %v1695, %v1805
        %v1888 = vmax.f32 %v1696, %v1807
        %v1889 = vmax.f32 %v1697, %v1809
        %v1890 = vmax.f32 %v1698, %v1811
        %v1891 = vmax.f32 %v1699, %v1813
        %v1892 = vmax.f32 %v1700, %v1815
        %v1893 = vmax.f32 %v1701, %v1817
        %v1894 = vmax.f32 %v1702, %v1819
        %v1895 = vmax.f32 %v1703, %v1821
        %v1896 = vmax.f32 %v1704, %v1823
        %v1897 = vmax.f32 %v1705, %v1825
        %v1898 = vmax.f32 %v1706, %v1827
        %v1899 = vmax.f32 %v1707, %v1829
        %v1900 = vmax.f32 %v1708, %v1831
        %v1901 = vmax.f32 %v1709, %v1833
        %v1902 = vmax.f32 %v1710, %v1835
        %v1903 = vmax.f32 %v1711, %v1837
        %v1904 = vmax.f32 %v1712, %v1839
        %v1905 = vmax.f32 %v1713, %v1841
        %v1906 = vsub.f32 %v1650, %v1842
        %v1907 = vsub.f32 %v1651, %v1843
        %v1908 = vsub.f32 %v1652, %v1844
        %v1909 = vsub.f32 %v1653, %v1845
        %v1910 = vsub.f32 %v1654, %v1846
        %v1911 = vsub.f32 %v1655, %v1847
        %v1912 = vsub.f32 %v1656, %v1848
        %v1913 = vsub.f32 %v1657, %v1849
        %v1914 = vsub.f32 %v1658, %v1850
        %v1915 = vsub.f32 %v1659, %v1851
        %v1916 = vsub.f32 %v1660, %v1852
        %v1917 = vsub.f32 %v1661, %v1853
        %v1918 = vsub.f32 %v1662, %v1854
        %v1919 = vsub.f32 %v1663, %v1855
        %v1920 = vsub.f32 %v1664, %v1856
        %v1921 = vsub.f32 %v1665, %v1857
        %v1922 = vsub.f32 %v1666, %v1858
        %v1923 = vsub.f32 %v1667, %v1859
        %v1924 = vsub.f32 %v1668, %v1860
        %v1925 = vsub.f32 %v1669, %v1861
        %v1926 = vsub.f32 %v1670, %v1862
        %v1927 = vsub.f32 %v1671, %v1863
        %v1928 = vsub.f32 %v1672, %v1864
        %v1929 = vsub.f32 %v1673, %v1865
        %v1930 = vsub.f32 %v1674, %v1866
        %v1931 = vsub.f32 %v1675, %v1867
        %v1932 = vsub.f32 %v1676, %v1868
        %v1933 = vsub.f32 %v1677, %v1869
        %v1934 = vsub.f32 %v1678, %v1870
        %v1935 = vsub.f32 %v1679, %v1871
        %v1936 = vsub.f32 %v1680, %v1872
        %v1937 = vsub.f32 %v1681, %v1873
        %v1938 = vsub.f32 %v1682, %v1874
        %v1939 = vsub.f32 %v1683, %v1875
        %v1940 = vsub.f32 %v1684, %v1876
        %v1941 = vsub.f32 %v1685, %v1877
        %v1942 = vsub.f32 %v1686, %v1878
        %v1943 = vsub.f32 %v1687, %v1879
        %v1944 = vsub.f32 %v1688, %v1880
        %v1945 = vsub.f32 %v1689, %v1881
        %v1946 = vsub.f32 %v1690, %v1882
        %v1947 = vsub.f32 %v1691, %v1883
        %v1948 = vsub.f32 %v1692, %v1884
        %v1949 = vsub.f32 %v1693, %v1885
        %v1950 = vsub.f32 %v1694, %v1886
        %v1951 = vsub.f32 %v1695, %v1887
        %v1952 = vsub.f32 %v1696, %v1888
        %v1953 = vsub.f32 %v1697, %v1889
        %v1954 = vsub.f32 %v1698, %v1890
        %v1955 = vsub.f32 %v1699, %v1891
        %v1956 = vsub.f32 %v1700, %v1892
        %v1957 = vsub.f32 %v1701, %v1893
        %v1958 = vsub.f32 %v1702, %v1894
        %v1959 = vsub.f32 %v1703, %v1895
        %v1960 = vsub.f32 %v1704, %v1896
        %v1961 = vsub.f32 %v1705, %v1897
        %v1962 = vsub.f32 %v1706, %v1898
        %v1963 = vsub.f32 %v1707, %v1899
        %v1964 = vsub.f32 %v1708, %v1900
        %v1965 = vsub.f32 %v1709, %v1901
        %v1966 = vsub.f32 %v1710, %v1902
        %v1967 = vsub.f32 %v1711, %v1903
        %v1968 = vsub.f32 %v1712, %v1904
        %v1969 = vsub.f32 %v1713, %v1905
        %v1970 = vmul.f32 %v1906, 1.442695
        %v1971 = vpow.pop %v1970
        %v1972 = vmul.f32 %v1907, 1.442695
        %v1973 = vpow.pop %v1972
        %v1974 = vmul.f32 %v1908, 1.442695
        %v1975 = vpow.pop %v1974
        %v1976 = vmul.f32 %v1909, 1.442695
        %v1977 = vpow.pop %v1976
        %v1978 = vmul.f32 %v1910, 1.442695
        %v1979 = vpow.pop %v1978
        %v1980 = vmul.f32 %v1911, 1.442695
        %v1981 = vpow.pop %v1980
        %v1982 = vmul.f32 %v1912, 1.442695
        %v1983 = vpow.pop %v1982
        %v1984 = vmul.f32 %v1913, 1.442695
        %v1985 = vpow.pop %v1984
        %v1986 = vmul.f32 %v1914, 1.442695
        %v1987 = vpow.pop %v1986
        %v1988 = vmul.f32 %v1915, 1.442695
        %v1989 = vpow.pop %v1988
        %v1990 = vmul.f32 %v1916, 1.442695
        %v1991 = vpow.pop %v1990
        %v1992 = vmul.f32 %v1917, 1.442695
        %v1993 = vpow.pop %v1992
        %v1994 = vmul.f32 %v1918, 1.442695
        %v1995 = vpow.pop %v1994
        %v1996 = vmul.f32 %v1919, 1.442695
        %v1997 = vpow.pop %v1996
        %v1998 = vmul.f32 %v1920, 1.442695
        %v1999 = vpow.pop %v1998
        %v2000 = vmul.f32 %v1921, 1.442695
        %v2001 = vpow.pop %v2000
        %v2002 = vmul.f32 %v1922, 1.442695
        %v2003 = vpow.pop %v2002
        %v2004 = vmul.f32 %v1923, 1.442695
        %v2005 = vpow.pop %v2004
        %v2006 = vmul.f32 %v1924, 1.442695
        %v2007 = vpow.pop %v2006
        %v2008 = vmul.f32 %v1925, 1.442695
        %v2009 = vpow.pop %v2008
        %v2010 = vmul.f32 %v1926, 1.442695
        %v2011 = vpow.pop %v2010
        %v2012 = vmul.f32 %v1927, 1.442695
        %v2013 = vpow.pop %v2012
        %v2014 = vmul.f32 %v1928, 1.442695
        %v2015 = vpow.pop %v2014
        %v2016 = vmul.f32 %v1929, 1.442695
        %v2017 = vpow.pop %v2016
        %v2018 = vmul.f32 %v1930, 1.442695
        %v2019 = vpow.pop %v2018
        %v2020 = vmul.f32 %v1931, 1.442695
        %v2021 = vpow.pop %v2020
        %v2022 = vmul.f32 %v1932, 1.442695
        %v2023 = vpow.pop %v2022
        %v2024 = vmul.f32 %v1933, 1.442695
        %v2025 = vpow.pop %v2024
        %v2026 = vmul.f32 %v1934, 1.442695
        %v2027 = vpow.pop %v2026
        %v2028 = vmul.f32 %v1935, 1.442695
        %v2029 = vpow.pop %v2028
        %v2030 = vmul.f32 %v1936, 1.442695
        %v2031 = vpow.pop %v2030
        %v2032 = vmul.f32 %v1937, 1.442695
        %v2033 = vpow.pop %v2032
        %v2034 = vmul.f32 %v1938, 1.442695
        %v2035 = vpow.pop %v2034
        %v2036 = vmul.f32 %v1939, 1.442695
        %v2037 = vpow.pop %v2036
        %v2038 = vmul.f32 %v1940, 1.442695
        %v2039 = vpow.pop %v2038
        %v2040 = vmul.f32 %v1941, 1.442695
        %v2041 = vpow.pop %v2040
        %v2042 = vmul.f32 %v1942, 1.442695
        %v2043 = vpow.pop %v2042
        %v2044 = vmul.f32 %v1943, 1.442695
        %v2045 = vpow.pop %v2044
        %v2046 = vmul.f32 %v1944, 1.442695
        %v2047 = vpow.pop %v2046
        %v2048 = vmul.f32 %v1945, 1.442695
        %v2049 = vpow.pop %v2048
        %v2050 = vmul.f32 %v1946, 1.442695
        %v2051 = vpow.pop %v2050
        %v2052 = vmul.f32 %v1947, 1.442695
        %v2053 = vpow.pop %v2052
        %v2054 = vmul.f32 %v1948, 1.442695
        %v2055 = vpow.pop %v2054
        %v2056 = vmul.f32 %v1949, 1.442695
        %v2057 = vpow.pop %v2056
        %v2058 = vmul.f32 %v1950, 1.442695
        %v2059 = vpow.pop %v2058
        %v2060 = vmul.f32 %v1951, 1.442695
        %v2061 = vpow.pop %v2060
        %v2062 = vmul.f32 %v1952, 1.442695
        %v2063 = vpow.pop %v2062
        %v2064 = vmul.f32 %v1953, 1.442695
        %v2065 = vpow.pop %v2064
        %v2066 = vmul.f32 %v1954, 1.442695
        %v2067 = vpow.pop %v2066
        %v2068 = vmul.f32 %v1955, 1.442695
        %v2069 = vpow.pop %v2068
        %v2070 = vmul.f32 %v1956, 1.442695
        %v2071 = vpow.pop %v2070
        %v2072 = vmul.f32 %v1957, 1.442695
        %v2073 = vpow.pop %v2072
        %v2074 = vmul.f32 %v1958, 1.442695
        %v2075 = vpow.pop %v2074
        %v2076 = vmul.f32 %v1959, 1.442695
        %v2077 = vpow.pop %v2076
        %v2078 = vmul.f32 %v1960, 1.442695
        %v2079 = vpow.pop %v2078
        %v2080 = vmul.f32 %v1961, 1.442695
        %v2081 = vpow.pop %v2080
        %v2082 = vmul.f32 %v1962, 1.442695
        %v2083 = vpow.pop %v2082
        %v2084 = vmul.f32 %v1963, 1.442695
        %v2085 = vpow.pop %v2084
        %v2086 = vmul.f32 %v1964, 1.442695
        %v2087 = vpow.pop %v2086
        %v2088 = vmul.f32 %v1965, 1.442695
        %v2089 = vpow.pop %v2088
        %v2090 = vmul.f32 %v1966, 1.442695
        %v2091 = vpow.pop %v2090
        %v2092 = vmul.f32 %v1967, 1.442695
        %v2093 = vpow.pop %v2092
        %v2094 = vmul.f32 %v1968, 1.442695
        %v2095 = vpow.pop %v2094
        %v2096 = vmul.f32 %v1969, 1.442695
        %v2097 = vpow.pop %v2096
        %2099 = vset.pattern.permute.xlu0 0
        %2100 = vperm.xlu0 %2099, %v1842
        %v2101 = vpop.permute.xlu0 %2100
        %2104 = vset.pattern.permute.xlu0 0
        %2105 = vperm.xlu0 %2104, %v1843
        %v2106 = vpop.permute.xlu0 %2105
        %2109 = vset.pattern.permute.xlu0 0
        %2110 = vperm.xlu0 %2109, %v1844
        %v2111 = vpop.permute.xlu0 %2110
        %2114 = vset.pattern.permute.xlu0 0
        %2115 = vperm.xlu0 %2114, %v1845
        %v2116 = vpop.permute.xlu0 %2115
        %2119 = vset.pattern.permute.xlu0 0
        %2120 = vperm.xlu0 %2119, %v1846
        %v2121 = vpop.permute.xlu0 %2120
        %2124 = vset.pattern.permute.xlu0 0
        %2125 = vperm.xlu0 %2124, %v1847
        %v2126 = vpop.permute.xlu0 %2125
        %2129 = vset.pattern.permute.xlu0 0
        %2130 = vperm.xlu0 %2129, %v1848
        %v2131 = vpop.permute.xlu0 %2130
        %2134 = vset.pattern.permute.xlu0 0
        %2135 = vperm.xlu0 %2134, %v1849
        %v2136 = vpop.permute.xlu0 %2135
        %2139 = vset.pattern.permute.xlu0 0
        %2140 = vperm.xlu0 %2139, %v1850
        %v2141 = vpop.permute.xlu0 %2140
        %2144 = vset.pattern.permute.xlu0 0
        %2145 = vperm.xlu0 %2144, %v1851
        %v2146 = vpop.permute.xlu0 %2145
        %2149 = vset.pattern.permute.xlu0 0
        %2150 = vperm.xlu0 %2149, %v1852
        %v2151 = vpop.permute.xlu0 %2150
        %2154 = vset.pattern.permute.xlu0 0
        %2155 = vperm.xlu0 %2154, %v1853
        %v2156 = vpop.permute.xlu0 %2155
        %2159 = vset.pattern.permute.xlu0 0
        %2160 = vperm.xlu0 %2159, %v1854
        %v2161 = vpop.permute.xlu0 %2160
        %2164 = vset.pattern.permute.xlu0 0
        %2165 = vperm.xlu0 %2164, %v1855
        %v2166 = vpop.permute.xlu0 %2165
        %2169 = vset.pattern.permute.xlu0 0
        %2170 = vperm.xlu0 %2169, %v1856
        %v2171 = vpop.permute.xlu0 %2170
        %2174 = vset.pattern.permute.xlu0 0
        %2175 = vperm.xlu0 %2174, %v1857
        %v2176 = vpop.permute.xlu0 %2175
        %2179 = vset.pattern.permute.xlu0 0
        %2180 = vperm.xlu0 %2179, %v1858
        %v2181 = vpop.permute.xlu0 %2180
        %2184 = vset.pattern.permute.xlu0 0
        %2185 = vperm.xlu0 %2184, %v1859
        %v2186 = vpop.permute.xlu0 %2185
        %2189 = vset.pattern.permute.xlu0 0
        %2190 = vperm.xlu0 %2189, %v1860
        %v2191 = vpop.permute.xlu0 %2190
        %2194 = vset.pattern.permute.xlu0 0
        %2195 = vperm.xlu0 %2194, %v1861
        %v2196 = vpop.permute.xlu0 %2195
        %2199 = vset.pattern.permute.xlu0 0
        %2200 = vperm.xlu0 %2199, %v1862
        %v2201 = vpop.permute.xlu0 %2200
        %2204 = vset.pattern.permute.xlu0 0
        %2205 = vperm.xlu0 %2204, %v1863
        %v2206 = vpop.permute.xlu0 %2205
        %2209 = vset.pattern.permute.xlu0 0
        %2210 = vperm.xlu0 %2209, %v1864
        %v2211 = vpop.permute.xlu0 %2210
        %2214 = vset.pattern.permute.xlu0 0
        %2215 = vperm.xlu0 %2214, %v1865
        %v2216 = vpop.permute.xlu0 %2215
        %2219 = vset.pattern.permute.xlu0 0
        %2220 = vperm.xlu0 %2219, %v1866
        %v2221 = vpop.permute.xlu0 %2220
        %2224 = vset.pattern.permute.xlu0 0
        %2225 = vperm.xlu0 %2224, %v1867
        %v2226 = vpop.permute.xlu0 %2225
        %2229 = vset.pattern.permute.xlu0 0
        %2230 = vperm.xlu0 %2229, %v1868
        %v2231 = vpop.permute.xlu0 %2230
        %2234 = vset.pattern.permute.xlu0 0
        %2235 = vperm.xlu0 %2234, %v1869
        %v2236 = vpop.permute.xlu0 %2235
        %2239 = vset.pattern.permute.xlu0 0
        %2240 = vperm.xlu0 %2239, %v1870
        %v2241 = vpop.permute.xlu0 %2240
        %2244 = vset.pattern.permute.xlu0 0
        %2245 = vperm.xlu0 %2244, %v1871
        %v2246 = vpop.permute.xlu0 %2245
        %2249 = vset.pattern.permute.xlu0 0
        %2250 = vperm.xlu0 %2249, %v1872
        %v2251 = vpop.permute.xlu0 %2250
        %2254 = vset.pattern.permute.xlu0 0
        %2255 = vperm.xlu0 %2254, %v1873
        %v2256 = vpop.permute.xlu0 %2255
        %2259 = vset.pattern.permute.xlu0 0
        %2260 = vperm.xlu0 %2259, %v1874
        %v2261 = vpop.permute.xlu0 %2260
        %2264 = vset.pattern.permute.xlu0 0
        %2265 = vperm.xlu0 %2264, %v1875
        %v2266 = vpop.permute.xlu0 %2265
        %2269 = vset.pattern.permute.xlu0 0
        %2270 = vperm.xlu0 %2269, %v1876
        %v2271 = vpop.permute.xlu0 %2270
        %2274 = vset.pattern.permute.xlu0 0
        %2275 = vperm.xlu0 %2274, %v1877
        %v2276 = vpop.permute.xlu0 %2275
        %2279 = vset.pattern.permute.xlu0 0
        %2280 = vperm.xlu0 %2279, %v1878
        %v2281 = vpop.permute.xlu0 %2280
        %2284 = vset.pattern.permute.xlu0 0
        %2285 = vperm.xlu0 %2284, %v1879
        %v2286 = vpop.permute.xlu0 %2285
        %2289 = vset.pattern.permute.xlu0 0
        %2290 = vperm.xlu0 %2289, %v1880
        %v2291 = vpop.permute.xlu0 %2290
        %2294 = vset.pattern.permute.xlu0 0
        %2295 = vperm.xlu0 %2294, %v1881
        %v2296 = vpop.permute.xlu0 %2295
        %2299 = vset.pattern.permute.xlu0 0
        %2300 = vperm.xlu0 %2299, %v1882
        %v2301 = vpop.permute.xlu0 %2300
        %2304 = vset.pattern.permute.xlu0 0
        %2305 = vperm.xlu0 %2304, %v1883
        %v2306 = vpop.permute.xlu0 %2305
        %2309 = vset.pattern.permute.xlu0 0
        %2310 = vperm.xlu0 %2309, %v1884
        %v2311 = vpop.permute.xlu0 %2310
        %2314 = vset.pattern.permute.xlu0 0
        %2315 = vperm.xlu0 %2314, %v1885
        %v2316 = vpop.permute.xlu0 %2315
        %2319 = vset.pattern.permute.xlu0 0
        %2320 = vperm.xlu0 %2319, %v1886
        %v2321 = vpop.permute.xlu0 %2320
        %2324 = vset.pattern.permute.xlu0 0
        %2325 = vperm.xlu0 %2324, %v1887
        %v2326 = vpop.permute.xlu0 %2325
        %2329 = vset.pattern.permute.xlu0 0
        %2330 = vperm.xlu0 %2329, %v1888
        %v2331 = vpop.permute.xlu0 %2330
        %2334 = vset.pattern.permute.xlu0 0
        %2335 = vperm.xlu0 %2334, %v1889
        %v2336 = vpop.permute.xlu0 %2335
        %2339 = vset.pattern.permute.xlu0 0
        %2340 = vperm.xlu0 %2339, %v1890
        %v2341 = vpop.permute.xlu0 %2340
        %2344 = vset.pattern.permute.xlu0 0
        %2345 = vperm.xlu0 %2344, %v1891
        %v2346 = vpop.permute.xlu0 %2345
        %2349 = vset.pattern.permute.xlu0 0
        %2350 = vperm.xlu0 %2349, %v1892
        %v2351 = vpop.permute.xlu0 %2350
        %2354 = vset.pattern.permute.xlu0 0
        %2355 = vperm.xlu0 %2354, %v1893
        %v2356 = vpop.permute.xlu0 %2355
        %2359 = vset.pattern.permute.xlu0 0
        %2360 = vperm.xlu0 %2359, %v1894
        %v2361 = vpop.permute.xlu0 %2360
        %2364 = vset.pattern.permute.xlu0 0
        %2365 = vperm.xlu0 %2364, %v1895
        %v2366 = vpop.permute.xlu0 %2365
        %2369 = vset.pattern.permute.xlu0 0
        %2370 = vperm.xlu0 %2369, %v1896
        %v2371 = vpop.permute.xlu0 %2370
        %2374 = vset.pattern.permute.xlu0 0
        %2375 = vperm.xlu0 %2374, %v1897
        %v2376 = vpop.permute.xlu0 %2375
        %2379 = vset.pattern.permute.xlu0 0
        %2380 = vperm.xlu0 %2379, %v1898
        %v2381 = vpop.permute.xlu0 %2380
        %2384 = vset.pattern.permute.xlu0 0
        %2385 = vperm.xlu0 %2384, %v1899
        %v2386 = vpop.permute.xlu0 %2385
        %2389 = vset.pattern.permute.xlu0 0
        %2390 = vperm.xlu0 %2389, %v1900
        %v2391 = vpop.permute.xlu0 %2390
        %2394 = vset.pattern.permute.xlu0 0
        %2395 = vperm.xlu0 %2394, %v1901
        %v2396 = vpop.permute.xlu0 %2395
        %2399 = vset.pattern.permute.xlu0 0
        %2400 = vperm.xlu0 %2399, %v1902
        %v2401 = vpop.permute.xlu0 %2400
        %2404 = vset.pattern.permute.xlu0 0
        %2405 = vperm.xlu0 %2404, %v1903
        %v2406 = vpop.permute.xlu0 %2405
        %2409 = vset.pattern.permute.xlu0 0
        %2410 = vperm.xlu0 %2409, %v1904
        %v2411 = vpop.permute.xlu0 %2410
        %2414 = vset.pattern.permute.xlu0 0
        %2415 = vperm.xlu0 %2414, %v1905
        %v2416 = vpop.permute.xlu0 %2415
        %v2418 = vsub.f32 %v1586, %v2101
        %v2419 = vsub.f32 %v1587, %v2106
        %v2420 = vsub.f32 %v1588, %v2111
        %v2421 = vsub.f32 %v1589, %v2116
        %v2422 = vsub.f32 %v1590, %v2121
        %v2423 = vsub.f32 %v1591, %v2126
        %v2424 = vsub.f32 %v1592, %v2131
        %v2425 = vsub.f32 %v1593, %v2136
        %v2426 = vsub.f32 %v1594, %v2141
        %v2427 = vsub.f32 %v1595, %v2146
        %v2428 = vsub.f32 %v1596, %v2151
        %v2429 = vsub.f32 %v1597, %v2156
        %v2430 = vsub.f32 %v1598, %v2161
        %v2431 = vsub.f32 %v1599, %v2166
        %v2432 = vsub.f32 %v1600, %v2171
        %v2433 = vsub.f32 %v1601, %v2176
        %v2434 = vsub.f32 %v1602, %v2181
        %v2435 = vsub.f32 %v1603, %v2186
        %v2436 = vsub.f32 %v1604, %v2191
        %v2437 = vsub.f32 %v1605, %v2196
        %v2438 = vsub.f32 %v1606, %v2201
        %v2439 = vsub.f32 %v1607, %v2206
        %v2440 = vsub.f32 %v1608, %v2211
        %v2441 = vsub.f32 %v1609, %v2216
        %v2442 = vsub.f32 %v1610, %v2221
        %v2443 = vsub.f32 %v1611, %v2226
        %v2444 = vsub.f32 %v1612, %v2231
        %v2445 = vsub.f32 %v1613, %v2236
        %v2446 = vsub.f32 %v1614, %v2241
        %v2447 = vsub.f32 %v1615, %v2246
        %v2448 = vsub.f32 %v1616, %v2251
        %v2449 = vsub.f32 %v1617, %v2256
        %v2450 = vsub.f32 %v1618, %v2261
        %v2451 = vsub.f32 %v1619, %v2266
        %v2452 = vsub.f32 %v1620, %v2271
        %v2453 = vsub.f32 %v1621, %v2276
        %v2454 = vsub.f32 %v1622, %v2281
        %v2455 = vsub.f32 %v1623, %v2286
        %v2456 = vsub.f32 %v1624, %v2291
        %v2457 = vsub.f32 %v1625, %v2296
        %v2458 = vsub.f32 %v1626, %v2301
        %v2459 = vsub.f32 %v1627, %v2306
        %v2460 = vsub.f32 %v1628, %v2311
        %v2461 = vsub.f32 %v1629, %v2316
        %v2462 = vsub.f32 %v1630, %v2321
        %v2463 = vsub.f32 %v1631, %v2326
        %v2464 = vsub.f32 %v1632, %v2331
        %v2465 = vsub.f32 %v1633, %v2336
        %v2466 = vsub.f32 %v1634, %v2341
        %v2467 = vsub.f32 %v1635, %v2346
        %v2468 = vsub.f32 %v1636, %v2351
        %v2469 = vsub.f32 %v1637, %v2356
        %v2470 = vsub.f32 %v1638, %v2361
        %v2471 = vsub.f32 %v1639, %v2366
        %v2472 = vsub.f32 %v1640, %v2371
        %v2473 = vsub.f32 %v1641, %v2376
        %v2474 = vsub.f32 %v1642, %v2381
        %v2475 = vsub.f32 %v1643, %v2386
        %v2476 = vsub.f32 %v1644, %v2391
        %v2477 = vsub.f32 %v1645, %v2396
        %v2478 = vsub.f32 %v1646, %v2401
        %v2479 = vsub.f32 %v1647, %v2406
        %v2480 = vsub.f32 %v1648, %v2411
        %v2481 = vsub.f32 %v1649, %v2416
        %v2482 = vmul.f32 %v2418, 1.442695
        %v2483 = vpow.pop %v2482
        %v2484 = vmul.f32 %v2419, 1.442695
        %v2485 = vpow.pop %v2484
        %v2486 = vmul.f32 %v2420, 1.442695
        %v2487 = vpow.pop %v2486
        %v2488 = vmul.f32 %v2421, 1.442695
        %v2489 = vpow.pop %v2488
        %v2490 = vmul.f32 %v2422, 1.442695
        %v2491 = vpow.pop %v2490
        %v2492 = vmul.f32 %v2423, 1.442695
        %v2493 = vpow.pop %v2492
        %v2494 = vmul.f32 %v2424, 1.442695
        %v2495 = vpow.pop %v2494
        %v2496 = vmul.f32 %v2425, 1.442695
        %v2497 = vpow.pop %v2496
        %v2498 = vmul.f32 %v2426, 1.442695
        %v2499 = vpow.pop %v2498
        %v2500 = vmul.f32 %v2427, 1.442695
        %v2501 = vpow.pop %v2500
        %v2502 = vmul.f32 %v2428, 1.442695
        %v2503 = vpow.pop %v2502
        %v2504 = vmul.f32 %v2429, 1.442695
        %v2505 = vpow.pop %v2504
        %v2506 = vmul.f32 %v2430, 1.442695
        %v2507 = vpow.pop %v2506
        %v2508 = vmul.f32 %v2431, 1.442695
        %v2509 = vpow.pop %v2508
        %v2510 = vmul.f32 %v2432, 1.442695
        %v2511 = vpow.pop %v2510
        %v2512 = vmul.f32 %v2433, 1.442695
        %v2513 = vpow.pop %v2512
        %v2514 = vmul.f32 %v2434, 1.442695
        %v2515 = vpow.pop %v2514
        %v2516 = vmul.f32 %v2435, 1.442695
        %v2517 = vpow.pop %v2516
        %v2518 = vmul.f32 %v2436, 1.442695
        %v2519 = vpow.pop %v2518
        %v2520 = vmul.f32 %v2437, 1.442695
        %v2521 = vpow.pop %v2520
        %v2522 = vmul.f32 %v2438, 1.442695
        %v2523 = vpow.pop %v2522
        %v2524 = vmul.f32 %v2439, 1.442695
        %v2525 = vpow.pop %v2524
        %v2526 = vmul.f32 %v2440, 1.442695
        %v2527 = vpow.pop %v2526
        %v2528 = vmul.f32 %v2441, 1.442695
        %v2529 = vpow.pop %v2528
        %v2530 = vmul.f32 %v2442, 1.442695
        %v2531 = vpow.pop %v2530
        %v2532 = vmul.f32 %v2443, 1.442695
        %v2533 = vpow.pop %v2532
        %v2534 = vmul.f32 %v2444, 1.442695
        %v2535 = vpow.pop %v2534
        %v2536 = vmul.f32 %v2445, 1.442695
        %v2537 = vpow.pop %v2536
        %v2538 = vmul.f32 %v2446, 1.442695
        %v2539 = vpow.pop %v2538
        %v2540 = vmul.f32 %v2447, 1.442695
        %v2541 = vpow.pop %v2540
        %v2542 = vmul.f32 %v2448, 1.442695
        %v2543 = vpow.pop %v2542
        %v2544 = vmul.f32 %v2449, 1.442695
        %v2545 = vpow.pop %v2544
        %v2546 = vmul.f32 %v2450, 1.442695
        %v2547 = vpow.pop %v2546
        %v2548 = vmul.f32 %v2451, 1.442695
        %v2549 = vpow.pop %v2548
        %v2550 = vmul.f32 %v2452, 1.442695
        %v2551 = vpow.pop %v2550
        %v2552 = vmul.f32 %v2453, 1.442695
        %v2553 = vpow.pop %v2552
        %v2554 = vmul.f32 %v2454, 1.442695
        %v2555 = vpow.pop %v2554
        %v2556 = vmul.f32 %v2455, 1.442695
        %v2557 = vpow.pop %v2556
        %v2558 = vmul.f32 %v2456, 1.442695
        %v2559 = vpow.pop %v2558
        %v2560 = vmul.f32 %v2457, 1.442695
        %v2561 = vpow.pop %v2560
        %v2562 = vmul.f32 %v2458, 1.442695
        %v2563 = vpow.pop %v2562
        %v2564 = vmul.f32 %v2459, 1.442695
        %v2565 = vpow.pop %v2564
        %v2566 = vmul.f32 %v2460, 1.442695
        %v2567 = vpow.pop %v2566
        %v2568 = vmul.f32 %v2461, 1.442695
        %v2569 = vpow.pop %v2568
        %v2570 = vmul.f32 %v2462, 1.442695
        %v2571 = vpow.pop %v2570
        %v2572 = vmul.f32 %v2463, 1.442695
        %v2573 = vpow.pop %v2572
        %v2574 = vmul.f32 %v2464, 1.442695
        %v2575 = vpow.pop %v2574
        %v2576 = vmul.f32 %v2465, 1.442695
        %v2577 = vpow.pop %v2576
        %v2578 = vmul.f32 %v2466, 1.442695
        %v2579 = vpow.pop %v2578
        %v2580 = vmul.f32 %v2467, 1.442695
        %v2581 = vpow.pop %v2580
        %v2582 = vmul.f32 %v2468, 1.442695
        %v2583 = vpow.pop %v2582
        %v2584 = vmul.f32 %v2469, 1.442695
        %v2585 = vpow.pop %v2584
        %v2586 = vmul.f32 %v2470, 1.442695
        %v2587 = vpow.pop %v2586
        %v2588 = vmul.f32 %v2471, 1.442695
        %v2589 = vpow.pop %v2588
        %v2590 = vmul.f32 %v2472, 1.442695
        %v2591 = vpow.pop %v2590
        %v2592 = vmul.f32 %v2473, 1.442695
        %v2593 = vpow.pop %v2592
        %v2594 = vmul.f32 %v2474, 1.442695
        %v2595 = vpow.pop %v2594
        %v2596 = vmul.f32 %v2475, 1.442695
        %v2597 = vpow.pop %v2596
        %v2598 = vmul.f32 %v2476, 1.442695
        %v2599 = vpow.pop %v2598
        %v2600 = vmul.f32 %v2477, 1.442695
        %v2601 = vpow.pop %v2600
        %v2602 = vmul.f32 %v2478, 1.442695
        %v2603 = vpow.pop %v2602
        %v2604 = vmul.f32 %v2479, 1.442695
        %v2605 = vpow.pop %v2604
        %v2606 = vmul.f32 %v2480, 1.442695
        %v2607 = vpow.pop %v2606
        %v2608 = vmul.f32 %v2481, 1.442695
        %v2609 = vpow.pop %v2608
        %v2610 = vld [vmem:[#allocation4] sm:$0xff]
        %v2611 = vld [vmem:[#allocation4 + $0x8] sm:$0xff]
        %v2612 = vld [vmem:[#allocation4 + $0x10] sm:$0xff]
        %v2613 = vld [vmem:[#allocation4 + $0x18] sm:$0xff]
        %v2614 = vld [vmem:[#allocation4 + $0x20] sm:$0xff]
        %v2615 = vld [vmem:[#allocation4 + $0x28] sm:$0xff]
        %v2616 = vld [vmem:[#allocation4 + $0x30] sm:$0xff]
        %v2617 = vld [vmem:[#allocation4 + $0x38] sm:$0xff]
        %v2618 = vld [vmem:[#allocation4 + $0x40] sm:$0xff]
        %v2619 = vld [vmem:[#allocation4 + $0x48] sm:$0xff]
        %v2620 = vld [vmem:[#allocation4 + $0x50] sm:$0xff]
        %v2621 = vld [vmem:[#allocation4 + $0x58] sm:$0xff]
        %v2622 = vld [vmem:[#allocation4 + $0x60] sm:$0xff]
        %v2623 = vld [vmem:[#allocation4 + $0x68] sm:$0xff]
        %v2624 = vld [vmem:[#allocation4 + $0x70] sm:$0xff]
        %v2625 = vld [vmem:[#allocation4 + $0x78] sm:$0xff]
        %v2626 = vld [vmem:[#allocation4 + $0x80] sm:$0xff]
        %v2627 = vld [vmem:[#allocation4 + $0x88] sm:$0xff]
        %v2628 = vld [vmem:[#allocation4 + $0x90] sm:$0xff]
        %v2629 = vld [vmem:[#allocation4 + $0x98] sm:$0xff]
        %v2630 = vld [vmem:[#allocation4 + $0xa0] sm:$0xff]
        %v2631 = vld [vmem:[#allocation4 + $0xa8] sm:$0xff]
        %v2632 = vld [vmem:[#allocation4 + $0xb0] sm:$0xff]
        %v2633 = vld [vmem:[#allocation4 + $0xb8] sm:$0xff]
        %v2634 = vld [vmem:[#allocation4 + $0xc0] sm:$0xff]
        %v2635 = vld [vmem:[#allocation4 + $0xc8] sm:$0xff]
        %v2636 = vld [vmem:[#allocation4 + $0xd0] sm:$0xff]
        %v2637 = vld [vmem:[#allocation4 + $0xd8] sm:$0xff]
        %v2638 = vld [vmem:[#allocation4 + $0xe0] sm:$0xff]
        %v2639 = vld [vmem:[#allocation4 + $0xe8] sm:$0xff]
        %v2640 = vld [vmem:[#allocation4 + $0xf0] sm:$0xff]
        %v2641 = vld [vmem:[#allocation4 + $0xf8] sm:$0xff]
        %v2642 = vld [vmem:[#allocation4 + $0x100] sm:$0xff]
        %v2643 = vld [vmem:[#allocation4 + $0x108] sm:$0xff]
        %v2644 = vld [vmem:[#allocation4 + $0x110] sm:$0xff]
        %v2645 = vld [vmem:[#allocation4 + $0x118] sm:$0xff]
        %v2646 = vld [vmem:[#allocation4 + $0x120] sm:$0xff]
        %v2647 = vld [vmem:[#allocation4 + $0x128] sm:$0xff]
        %v2648 = vld [vmem:[#allocation4 + $0x130] sm:$0xff]
        %v2649 = vld [vmem:[#allocation4 + $0x138] sm:$0xff]
        %v2650 = vld [vmem:[#allocation4 + $0x140] sm:$0xff]
        %v2651 = vld [vmem:[#allocation4 + $0x148] sm:$0xff]
        %v2652 = vld [vmem:[#allocation4 + $0x150] sm:$0xff]
        %v2653 = vld [vmem:[#allocation4 + $0x158] sm:$0xff]
        %v2654 = vld [vmem:[#allocation4 + $0x160] sm:$0xff]
        %v2655 = vld [vmem:[#allocation4 + $0x168] sm:$0xff]
        %v2656 = vld [vmem:[#allocation4 + $0x170] sm:$0xff]
        %v2657 = vld [vmem:[#allocation4 + $0x178] sm:$0xff]
        %v2658 = vld [vmem:[#allocation4 + $0x180] sm:$0xff]
        %v2659 = vld [vmem:[#allocation4 + $0x188] sm:$0xff]
        %v2660 = vld [vmem:[#allocation4 + $0x190] sm:$0xff]
        %v2661 = vld [vmem:[#allocation4 + $0x198] sm:$0xff]
        %v2662 = vld [vmem:[#allocation4 + $0x1a0] sm:$0xff]
        %v2663 = vld [vmem:[#allocation4 + $0x1a8] sm:$0xff]
        %v2664 = vld [vmem:[#allocation4 + $0x1b0] sm:$0xff]
        %v2665 = vld [vmem:[#allocation4 + $0x1b8] sm:$0xff]
        %v2666 = vld [vmem:[#allocation4 + $0x1c0] sm:$0xff]
        %v2667 = vld [vmem:[#allocation4 + $0x1c8] sm:$0xff]
        %v2668 = vld [vmem:[#allocation4 + $0x1d0] sm:$0xff]
        %v2669 = vld [vmem:[#allocation4 + $0x1d8] sm:$0xff]
        %v2670 = vld [vmem:[#allocation4 + $0x1e0] sm:$0xff]
        %v2671 = vld [vmem:[#allocation4 + $0x1e8] sm:$0xff]
        %v2672 = vld [vmem:[#allocation4 + $0x1f0] sm:$0xff]
        %v2673 = vld [vmem:[#allocation4 + $0x1f8] sm:$0xff]
        %v2674 = vmul.f32 %v1971, %v2610
        %v2675 = vmul.f32 %v1973, %v2611
        %v2676 = vmul.f32 %v1975, %v2612
        %v2677 = vmul.f32 %v1977, %v2613
        %v2678 = vmul.f32 %v1979, %v2614
        %v2679 = vmul.f32 %v1981, %v2615
        %v2680 = vmul.f32 %v1983, %v2616
        %v2681 = vmul.f32 %v1985, %v2617
        %v2682 = vmul.f32 %v1987, %v2618
        %v2683 = vmul.f32 %v1989, %v2619
        %v2684 = vmul.f32 %v1991, %v2620
        %v2685 = vmul.f32 %v1993, %v2621
        %v2686 = vmul.f32 %v1995, %v2622
        %v2687 = vmul.f32 %v1997, %v2623
        %v2688 = vmul.f32 %v1999, %v2624
        %v2689 = vmul.f32 %v2001, %v2625
        %v2690 = vmul.f32 %v2003, %v2626
        %v2691 = vmul.f32 %v2005, %v2627
        %v2692 = vmul.f32 %v2007, %v2628
        %v2693 = vmul.f32 %v2009, %v2629
        %v2694 = vmul.f32 %v2011, %v2630
        %v2695 = vmul.f32 %v2013, %v2631
        %v2696 = vmul.f32 %v2015, %v2632
        %v2697 = vmul.f32 %v2017, %v2633
        %v2698 = vmul.f32 %v2019, %v2634
        %v2699 = vmul.f32 %v2021, %v2635
        %v2700 = vmul.f32 %v2023, %v2636
        %v2701 = vmul.f32 %v2025, %v2637
        %v2702 = vmul.f32 %v2027, %v2638
        %v2703 = vmul.f32 %v2029, %v2639
        %v2704 = vmul.f32 %v2031, %v2640
        %v2705 = vmul.f32 %v2033, %v2641
        %v2706 = vmul.f32 %v2035, %v2642
        %v2707 = vmul.f32 %v2037, %v2643
        %v2708 = vmul.f32 %v2039, %v2644
        %v2709 = vmul.f32 %v2041, %v2645
        %v2710 = vmul.f32 %v2043, %v2646
        %v2711 = vmul.f32 %v2045, %v2647
        %v2712 = vmul.f32 %v2047, %v2648
        %v2713 = vmul.f32 %v2049, %v2649
        %v2714 = vmul.f32 %v2051, %v2650
        %v2715 = vmul.f32 %v2053, %v2651
        %v2716 = vmul.f32 %v2055, %v2652
        %v2717 = vmul.f32 %v2057, %v2653
        %v2718 = vmul.f32 %v2059, %v2654
        %v2719 = vmul.f32 %v2061, %v2655
        %v2720 = vmul.f32 %v2063, %v2656
        %v2721 = vmul.f32 %v2065, %v2657
        %v2722 = vmul.f32 %v2067, %v2658
        %v2723 = vmul.f32 %v2069, %v2659
        %v2724 = vmul.f32 %v2071, %v2660
        %v2725 = vmul.f32 %v2073, %v2661
        %v2726 = vmul.f32 %v2075, %v2662
        %v2727 = vmul.f32 %v2077, %v2663
        %v2728 = vmul.f32 %v2079, %v2664
        %v2729 = vmul.f32 %v2081, %v2665
        %v2730 = vmul.f32 %v2083, %v2666
        %v2731 = vmul.f32 %v2085, %v2667
        %v2732 = vmul.f32 %v2087, %v2668
        %v2733 = vmul.f32 %v2089, %v2669
        %v2734 = vmul.f32 %v2091, %v2670
        %v2735 = vmul.f32 %v2093, %v2671
        %v2736 = vmul.f32 %v2095, %v2672
        %v2737 = vmul.f32 %v2097, %v2673
        %2738 = vadd.xlane.f32.xlu0 %v2483
        %v2739 = vpop.xlane.xlu0 %2738
        %2740 = vadd.xlane.f32.xlu0 %v2485
        %v2741 = vpop.xlane.xlu0 %2740
        %2742 = vadd.xlane.f32.xlu0 %v2487
        %v2743 = vpop.xlane.xlu0 %2742
        %2744 = vadd.xlane.f32.xlu0 %v2489
        %v2745 = vpop.xlane.xlu0 %2744
        %2746 = vadd.xlane.f32.xlu0 %v2491
        %v2747 = vpop.xlane.xlu0 %2746
        %2748 = vadd.xlane.f32.xlu0 %v2493
        %v2749 = vpop.xlane.xlu0 %2748
        %2750 = vadd.xlane.f32.xlu0 %v2495
        %v2751 = vpop.xlane.xlu0 %2750
        %2752 = vadd.xlane.f32.xlu0 %v2497
        %v2753 = vpop.xlane.xlu0 %2752
        %2754 = vadd.xlane.f32.xlu0 %v2499
        %v2755 = vpop.xlane.xlu0 %2754
        %2756 = vadd.xlane.f32.xlu0 %v2501
        %v2757 = vpop.xlane.xlu0 %2756
        %2758 = vadd.xlane.f32.xlu0 %v2503
        %v2759 = vpop.xlane.xlu0 %2758
        %2760 = vadd.xlane.f32.xlu0 %v2505
        %v2761 = vpop.xlane.xlu0 %2760
        %2762 = vadd.xlane.f32.xlu0 %v2507
        %v2763 = vpop.xlane.xlu0 %2762
        %2764 = vadd.xlane.f32.xlu0 %v2509
        %v2765 = vpop.xlane.xlu0 %2764
        %2766 = vadd.xlane.f32.xlu0 %v2511
        %v2767 = vpop.xlane.xlu0 %2766
        %2768 = vadd.xlane.f32.xlu0 %v2513
        %v2769 = vpop.xlane.xlu0 %2768
        %2770 = vadd.xlane.f32.xlu0 %v2515
        %v2771 = vpop.xlane.xlu0 %2770
        %2772 = vadd.xlane.f32.xlu0 %v2517
        %v2773 = vpop.xlane.xlu0 %2772
        %2774 = vadd.xlane.f32.xlu0 %v2519
        %v2775 = vpop.xlane.xlu0 %2774
        %2776 = vadd.xlane.f32.xlu0 %v2521
        %v2777 = vpop.xlane.xlu0 %2776
        %2778 = vadd.xlane.f32.xlu0 %v2523
        %v2779 = vpop.xlane.xlu0 %2778
        %2780 = vadd.xlane.f32.xlu0 %v2525
        %v2781 = vpop.xlane.xlu0 %2780
        %2782 = vadd.xlane.f32.xlu0 %v2527
        %v2783 = vpop.xlane.xlu0 %2782
        %2784 = vadd.xlane.f32.xlu0 %v2529
        %v2785 = vpop.xlane.xlu0 %2784
        %2786 = vadd.xlane.f32.xlu0 %v2531
        %v2787 = vpop.xlane.xlu0 %2786
        %2788 = vadd.xlane.f32.xlu0 %v2533
        %v2789 = vpop.xlane.xlu0 %2788
        %2790 = vadd.xlane.f32.xlu0 %v2535
        %v2791 = vpop.xlane.xlu0 %2790
        %2792 = vadd.xlane.f32.xlu0 %v2537
        %v2793 = vpop.xlane.xlu0 %2792
        %2794 = vadd.xlane.f32.xlu0 %v2539
        %v2795 = vpop.xlane.xlu0 %2794
        %2796 = vadd.xlane.f32.xlu0 %v2541
        %v2797 = vpop.xlane.xlu0 %2796
        %2798 = vadd.xlane.f32.xlu0 %v2543
        %v2799 = vpop.xlane.xlu0 %2798
        %2800 = vadd.xlane.f32.xlu0 %v2545
        %v2801 = vpop.xlane.xlu0 %2800
        %2802 = vadd.xlane.f32.xlu0 %v2547
        %v2803 = vpop.xlane.xlu0 %2802
        %2804 = vadd.xlane.f32.xlu0 %v2549
        %v2805 = vpop.xlane.xlu0 %2804
        %2806 = vadd.xlane.f32.xlu0 %v2551
        %v2807 = vpop.xlane.xlu0 %2806
        %2808 = vadd.xlane.f32.xlu0 %v2553
        %v2809 = vpop.xlane.xlu0 %2808
        %2810 = vadd.xlane.f32.xlu0 %v2555
        %v2811 = vpop.xlane.xlu0 %2810
        %2812 = vadd.xlane.f32.xlu0 %v2557
        %v2813 = vpop.xlane.xlu0 %2812
        %2814 = vadd.xlane.f32.xlu0 %v2559
        %v2815 = vpop.xlane.xlu0 %2814
        %2816 = vadd.xlane.f32.xlu0 %v2561
        %v2817 = vpop.xlane.xlu0 %2816
        %2818 = vadd.xlane.f32.xlu0 %v2563
        %v2819 = vpop.xlane.xlu0 %2818
        %2820 = vadd.xlane.f32.xlu0 %v2565
        %v2821 = vpop.xlane.xlu0 %2820
        %2822 = vadd.xlane.f32.xlu0 %v2567
        %v2823 = vpop.xlane.xlu0 %2822
        %2824 = vadd.xlane.f32.xlu0 %v2569
        %v2825 = vpop.xlane.xlu0 %2824
        %2826 = vadd.xlane.f32.xlu0 %v2571
        %v2827 = vpop.xlane.xlu0 %2826
        %2828 = vadd.xlane.f32.xlu0 %v2573
        %v2829 = vpop.xlane.xlu0 %2828
        %2830 = vadd.xlane.f32.xlu0 %v2575
        %v2831 = vpop.xlane.xlu0 %2830
        %2832 = vadd.xlane.f32.xlu0 %v2577
        %v2833 = vpop.xlane.xlu0 %2832
        %2834 = vadd.xlane.f32.xlu0 %v2579
        %v2835 = vpop.xlane.xlu0 %2834
        %2836 = vadd.xlane.f32.xlu0 %v2581
        %v2837 = vpop.xlane.xlu0 %2836
        %2838 = vadd.xlane.f32.xlu0 %v2583
        %v2839 = vpop.xlane.xlu0 %2838
        %2840 = vadd.xlane.f32.xlu0 %v2585
        %v2841 = vpop.xlane.xlu0 %2840
        %2842 = vadd.xlane.f32.xlu0 %v2587
        %v2843 = vpop.xlane.xlu0 %2842
        %2844 = vadd.xlane.f32.xlu0 %v2589
        %v2845 = vpop.xlane.xlu0 %2844
        %2846 = vadd.xlane.f32.xlu0 %v2591
        %v2847 = vpop.xlane.xlu0 %2846
        %2848 = vadd.xlane.f32.xlu0 %v2593
        %v2849 = vpop.xlane.xlu0 %2848
        %2850 = vadd.xlane.f32.xlu0 %v2595
        %v2851 = vpop.xlane.xlu0 %2850
        %2852 = vadd.xlane.f32.xlu0 %v2597
        %v2853 = vpop.xlane.xlu0 %2852
        %2854 = vadd.xlane.f32.xlu0 %v2599
        %v2855 = vpop.xlane.xlu0 %2854
        %2856 = vadd.xlane.f32.xlu0 %v2601
        %v2857 = vpop.xlane.xlu0 %2856
        %2858 = vadd.xlane.f32.xlu0 %v2603
        %v2859 = vpop.xlane.xlu0 %2858
        %2860 = vadd.xlane.f32.xlu0 %v2605
        %v2861 = vpop.xlane.xlu0 %2860
        %2862 = vadd.xlane.f32.xlu0 %v2607
        %v2863 = vpop.xlane.xlu0 %2862
        %2864 = vadd.xlane.f32.xlu0 %v2609
        %v2865 = vpop.xlane.xlu0 %2864
        %v2866 = vadd.f32 %v2674, %v2739
        %v2867 = vadd.f32 %v2675, %v2741
        %v2868 = vadd.f32 %v2676, %v2743
        %v2869 = vadd.f32 %v2677, %v2745
        %v2870 = vadd.f32 %v2678, %v2747
        %v2871 = vadd.f32 %v2679, %v2749
        %v2872 = vadd.f32 %v2680, %v2751
        %v2873 = vadd.f32 %v2681, %v2753
        %v2874 = vadd.f32 %v2682, %v2755
        %v2875 = vadd.f32 %v2683, %v2757
        %v2876 = vadd.f32 %v2684, %v2759
        %v2877 = vadd.f32 %v2685, %v2761
        %v2878 = vadd.f32 %v2686, %v2763
        %v2879 = vadd.f32 %v2687, %v2765
        %v2880 = vadd.f32 %v2688, %v2767
        %v2881 = vadd.f32 %v2689, %v2769
        %v2882 = vadd.f32 %v2690, %v2771
        %v2883 = vadd.f32 %v2691, %v2773
        %v2884 = vadd.f32 %v2692, %v2775
        %v2885 = vadd.f32 %v2693, %v2777
        %v2886 = vadd.f32 %v2694, %v2779
        %v2887 = vadd.f32 %v2695, %v2781
        %v2888 = vadd.f32 %v2696, %v2783
        %v2889 = vadd.f32 %v2697, %v2785
        %v2890 = vadd.f32 %v2698, %v2787
        %v2891 = vadd.f32 %v2699, %v2789
        %v2892 = vadd.f32 %v2700, %v2791
        %v2893 = vadd.f32 %v2701, %v2793
        %v2894 = vadd.f32 %v2702, %v2795
        %v2895 = vadd.f32 %v2703, %v2797
        %v2896 = vadd.f32 %v2704, %v2799
        %v2897 = vadd.f32 %v2705, %v2801
        %v2898 = vadd.f32 %v2706, %v2803
        %v2899 = vadd.f32 %v2707, %v2805
        %v2900 = vadd.f32 %v2708, %v2807
        %v2901 = vadd.f32 %v2709, %v2809
        %v2902 = vadd.f32 %v2710, %v2811
        %v2903 = vadd.f32 %v2711, %v2813
        %v2904 = vadd.f32 %v2712, %v2815
        %v2905 = vadd.f32 %v2713, %v2817
        %v2906 = vadd.f32 %v2714, %v2819
        %v2907 = vadd.f32 %v2715, %v2821
        %v2908 = vadd.f32 %v2716, %v2823
        %v2909 = vadd.f32 %v2717, %v2825
        %v2910 = vadd.f32 %v2718, %v2827
        %v2911 = vadd.f32 %v2719, %v2829
        %v2912 = vadd.f32 %v2720, %v2831
        %v2913 = vadd.f32 %v2721, %v2833
        %v2914 = vadd.f32 %v2722, %v2835
        %v2915 = vadd.f32 %v2723, %v2837
        %v2916 = vadd.f32 %v2724, %v2839
        %v2917 = vadd.f32 %v2725, %v2841
        %v2918 = vadd.f32 %v2726, %v2843
        %v2919 = vadd.f32 %v2727, %v2845
        %v2920 = vadd.f32 %v2728, %v2847
        %v2921 = vadd.f32 %v2729, %v2849
        %v2922 = vadd.f32 %v2730, %v2851
        %v2923 = vadd.f32 %v2731, %v2853
        %v2924 = vadd.f32 %v2732, %v2855
        %v2925 = vadd.f32 %v2733, %v2857
        %v2926 = vadd.f32 %v2734, %v2859
        %v2927 = vadd.f32 %v2735, %v2861
        %v2928 = vadd.f32 %v2736, %v2863
        %v2929 = vadd.f32 %v2737, %v2865
        %vm2930 = vcmask 7168
        %2931 = vst.msk [vmem:[#allocation4] sm:$0xff] %vm2930, %v2866
        %2932 = vst.msk [vmem:[#allocation4 + $0x8] sm:$0xff] %vm2930, %v2867
        %2933 = vst.msk [vmem:[#allocation4 + $0x10] sm:$0xff] %vm2930, %v2868
        %2934 = vst.msk [vmem:[#allocation4 + $0x18] sm:$0xff] %vm2930, %v2869
        %2935 = vst.msk [vmem:[#allocation4 + $0x20] sm:$0xff] %vm2930, %v2870
        %2936 = vst.msk [vmem:[#allocation4 + $0x28] sm:$0xff] %vm2930, %v2871
        %2937 = vst.msk [vmem:[#allocation4 + $0x30] sm:$0xff] %vm2930, %v2872
        %2938 = vst.msk [vmem:[#allocation4 + $0x38] sm:$0xff] %vm2930, %v2873
        %2939 = vst.msk [vmem:[#allocation4 + $0x40] sm:$0xff] %vm2930, %v2874
        %2940 = vst.msk [vmem:[#allocation4 + $0x48] sm:$0xff] %vm2930, %v2875
        %2941 = vst.msk [vmem:[#allocation4 + $0x50] sm:$0xff] %vm2930, %v2876
        %2942 = vst.msk [vmem:[#allocation4 + $0x58] sm:$0xff] %vm2930, %v2877
        %2943 = vst.msk [vmem:[#allocation4 + $0x60] sm:$0xff] %vm2930, %v2878
        %2944 = vst.msk [vmem:[#allocation4 + $0x68] sm:$0xff] %vm2930, %v2879
        %2945 = vst.msk [vmem:[#allocation4 + $0x70] sm:$0xff] %vm2930, %v2880
        %2946 = vst.msk [vmem:[#allocation4 + $0x78] sm:$0xff] %vm2930, %v2881
        %2947 = vst.msk [vmem:[#allocation4 + $0x80] sm:$0xff] %vm2930, %v2882
        %2948 = vst.msk [vmem:[#allocation4 + $0x88] sm:$0xff] %vm2930, %v2883
        %2949 = vst.msk [vmem:[#allocation4 + $0x90] sm:$0xff] %vm2930, %v2884
        %2950 = vst.msk [vmem:[#allocation4 + $0x98] sm:$0xff] %vm2930, %v2885
        %2951 = vst.msk [vmem:[#allocation4 + $0xa0] sm:$0xff] %vm2930, %v2886
        %2952 = vst.msk [vmem:[#allocation4 + $0xa8] sm:$0xff] %vm2930, %v2887
        %2953 = vst.msk [vmem:[#allocation4 + $0xb0] sm:$0xff] %vm2930, %v2888
        %2954 = vst.msk [vmem:[#allocation4 + $0xb8] sm:$0xff] %vm2930, %v2889
        %2955 = vst.msk [vmem:[#allocation4 + $0xc0] sm:$0xff] %vm2930, %v2890
        %2956 = vst.msk [vmem:[#allocation4 + $0xc8] sm:$0xff] %vm2930, %v2891
        %2957 = vst.msk [vmem:[#allocation4 + $0xd0] sm:$0xff] %vm2930, %v2892
        %2958 = vst.msk [vmem:[#allocation4 + $0xd8] sm:$0xff] %vm2930, %v2893
        %2959 = vst.msk [vmem:[#allocation4 + $0xe0] sm:$0xff] %vm2930, %v2894
        %2960 = vst.msk [vmem:[#allocation4 + $0xe8] sm:$0xff] %vm2930, %v2895
        %2961 = vst.msk [vmem:[#allocation4 + $0xf0] sm:$0xff] %vm2930, %v2896
        %2962 = vst.msk [vmem:[#allocation4 + $0xf8] sm:$0xff] %vm2930, %v2897
        %2963 = vst.msk [vmem:[#allocation4 + $0x100] sm:$0xff] %vm2930, %v2898
        %2964 = vst.msk [vmem:[#allocation4 + $0x108] sm:$0xff] %vm2930, %v2899
        %2965 = vst.msk [vmem:[#allocation4 + $0x110] sm:$0xff] %vm2930, %v2900
        %2966 = vst.msk [vmem:[#allocation4 + $0x118] sm:$0xff] %vm2930, %v2901
        %2967 = vst.msk [vmem:[#allocation4 + $0x120] sm:$0xff] %vm2930, %v2902
        %2968 = vst.msk [vmem:[#allocation4 + $0x128] sm:$0xff] %vm2930, %v2903
        %2969 = vst.msk [vmem:[#allocation4 + $0x130] sm:$0xff] %vm2930, %v2904
        %2970 = vst.msk [vmem:[#allocation4 + $0x138] sm:$0xff] %vm2930, %v2905
        %2971 = vst.msk [vmem:[#allocation4 + $0x140] sm:$0xff] %vm2930, %v2906
        %2972 = vst.msk [vmem:[#allocation4 + $0x148] sm:$0xff] %vm2930, %v2907
        %2973 = vst.msk [vmem:[#allocation4 + $0x150] sm:$0xff] %vm2930, %v2908
        %2974 = vst.msk [vmem:[#allocation4 + $0x158] sm:$0xff] %vm2930, %v2909
        %2975 = vst.msk [vmem:[#allocation4 + $0x160] sm:$0xff] %vm2930, %v2910
        %2976 = vst.msk [vmem:[#allocation4 + $0x168] sm:$0xff] %vm2930, %v2911
        %2977 = vst.msk [vmem:[#allocation4 + $0x170] sm:$0xff] %vm2930, %v2912
        %2978 = vst.msk [vmem:[#allocation4 + $0x178] sm:$0xff] %vm2930, %v2913
        %2979 = vst.msk [vmem:[#allocation4 + $0x180] sm:$0xff] %vm2930, %v2914
        %2980 = vst.msk [vmem:[#allocation4 + $0x188] sm:$0xff] %vm2930, %v2915
        %2981 = vst.msk [vmem:[#allocation4 + $0x190] sm:$0xff] %vm2930, %v2916
        %2982 = vst.msk [vmem:[#allocation4 + $0x198] sm:$0xff] %vm2930, %v2917
        %2983 = vst.msk [vmem:[#allocation4 + $0x1a0] sm:$0xff] %vm2930, %v2918
        %2984 = vst.msk [vmem:[#allocation4 + $0x1a8] sm:$0xff] %vm2930, %v2919
        %2985 = vst.msk [vmem:[#allocation4 + $0x1b0] sm:$0xff] %vm2930, %v2920
        %2986 = vst.msk [vmem:[#allocation4 + $0x1b8] sm:$0xff] %vm2930, %v2921
        %2987 = vst.msk [vmem:[#allocation4 + $0x1c0] sm:$0xff] %vm2930, %v2922
        %2988 = vst.msk [vmem:[#allocation4 + $0x1c8] sm:$0xff] %vm2930, %v2923
        %2989 = vst.msk [vmem:[#allocation4 + $0x1d0] sm:$0xff] %vm2930, %v2924
        %2990 = vst.msk [vmem:[#allocation4 + $0x1d8] sm:$0xff] %vm2930, %v2925
        %2991 = vst.msk [vmem:[#allocation4 + $0x1e0] sm:$0xff] %vm2930, %v2926
        %2992 = vst.msk [vmem:[#allocation4 + $0x1e8] sm:$0xff] %vm2930, %v2927
        %2993 = vst.msk [vmem:[#allocation4 + $0x1f0] sm:$0xff] %vm2930, %v2928
        %2994 = vst.msk [vmem:[#allocation4 + $0x1f8] sm:$0xff] %vm2930, %v2929
        %v2995 = vld [vmem:[#allocation5] sm:$0xff]
        %v2996 = vld [vmem:[#allocation5 + $0x8] sm:$0xff]
        %v2997 = vld [vmem:[#allocation5 + $0x10] sm:$0xff]
        %v2998 = vld [vmem:[#allocation5 + $0x18] sm:$0xff]
        %v2999 = vld [vmem:[#allocation5 + $0x20] sm:$0xff]
        %v3000 = vld [vmem:[#allocation5 + $0x28] sm:$0xff]
        %v3001 = vld [vmem:[#allocation5 + $0x30] sm:$0xff]
        %v3002 = vld [vmem:[#allocation5 + $0x38] sm:$0xff]
        %v3003 = vld [vmem:[#allocation5 + $0x40] sm:$0xff]
        %v3004 = vld [vmem:[#allocation5 + $0x48] sm:$0xff]
        %v3005 = vld [vmem:[#allocation5 + $0x50] sm:$0xff]
        %v3006 = vld [vmem:[#allocation5 + $0x58] sm:$0xff]
        %v3007 = vld [vmem:[#allocation5 + $0x60] sm:$0xff]
        %v3008 = vld [vmem:[#allocation5 + $0x68] sm:$0xff]
        %v3009 = vld [vmem:[#allocation5 + $0x70] sm:$0xff]
        %v3010 = vld [vmem:[#allocation5 + $0x78] sm:$0xff]
        %v3011 = vld [vmem:[#allocation5 + $0x80] sm:$0xff]
        %v3012 = vld [vmem:[#allocation5 + $0x88] sm:$0xff]
        %v3013 = vld [vmem:[#allocation5 + $0x90] sm:$0xff]
        %v3014 = vld [vmem:[#allocation5 + $0x98] sm:$0xff]
        %v3015 = vld [vmem:[#allocation5 + $0xa0] sm:$0xff]
        %v3016 = vld [vmem:[#allocation5 + $0xa8] sm:$0xff]
        %v3017 = vld [vmem:[#allocation5 + $0xb0] sm:$0xff]
        %v3018 = vld [vmem:[#allocation5 + $0xb8] sm:$0xff]
        %v3019 = vld [vmem:[#allocation5 + $0xc0] sm:$0xff]
        %v3020 = vld [vmem:[#allocation5 + $0xc8] sm:$0xff]
        %v3021 = vld [vmem:[#allocation5 + $0xd0] sm:$0xff]
        %v3022 = vld [vmem:[#allocation5 + $0xd8] sm:$0xff]
        %v3023 = vld [vmem:[#allocation5 + $0xe0] sm:$0xff]
        %v3024 = vld [vmem:[#allocation5 + $0xe8] sm:$0xff]
        %v3025 = vld [vmem:[#allocation5 + $0xf0] sm:$0xff]
        %v3026 = vld [vmem:[#allocation5 + $0xf8] sm:$0xff]
        %v3027 = vld [vmem:[#allocation5 + $0x100] sm:$0xff]
        %v3028 = vld [vmem:[#allocation5 + $0x108] sm:$0xff]
        %v3029 = vld [vmem:[#allocation5 + $0x110] sm:$0xff]
        %v3030 = vld [vmem:[#allocation5 + $0x118] sm:$0xff]
        %v3031 = vld [vmem:[#allocation5 + $0x120] sm:$0xff]
        %v3032 = vld [vmem:[#allocation5 + $0x128] sm:$0xff]
        %v3033 = vld [vmem:[#allocation5 + $0x130] sm:$0xff]
        %v3034 = vld [vmem:[#allocation5 + $0x138] sm:$0xff]
        %v3035 = vld [vmem:[#allocation5 + $0x140] sm:$0xff]
        %v3036 = vld [vmem:[#allocation5 + $0x148] sm:$0xff]
        %v3037 = vld [vmem:[#allocation5 + $0x150] sm:$0xff]
        %v3038 = vld [vmem:[#allocation5 + $0x158] sm:$0xff]
        %v3039 = vld [vmem:[#allocation5 + $0x160] sm:$0xff]
        %v3040 = vld [vmem:[#allocation5 + $0x168] sm:$0xff]
        %v3041 = vld [vmem:[#allocation5 + $0x170] sm:$0xff]
        %v3042 = vld [vmem:[#allocation5 + $0x178] sm:$0xff]
        %v3043 = vld [vmem:[#allocation5 + $0x180] sm:$0xff]
        %v3044 = vld [vmem:[#allocation5 + $0x188] sm:$0xff]
        %v3045 = vld [vmem:[#allocation5 + $0x190] sm:$0xff]
        %v3046 = vld [vmem:[#allocation5 + $0x198] sm:$0xff]
        %v3047 = vld [vmem:[#allocation5 + $0x1a0] sm:$0xff]
        %v3048 = vld [vmem:[#allocation5 + $0x1a8] sm:$0xff]
        %v3049 = vld [vmem:[#allocation5 + $0x1b0] sm:$0xff]
        %v3050 = vld [vmem:[#allocation5 + $0x1b8] sm:$0xff]
        %v3051 = vld [vmem:[#allocation5 + $0x1c0] sm:$0xff]
        %v3052 = vld [vmem:[#allocation5 + $0x1c8] sm:$0xff]
        %v3053 = vld [vmem:[#allocation5 + $0x1d0] sm:$0xff]
        %v3054 = vld [vmem:[#allocation5 + $0x1d8] sm:$0xff]
        %v3055 = vld [vmem:[#allocation5 + $0x1e0] sm:$0xff]
        %v3056 = vld [vmem:[#allocation5 + $0x1e8] sm:$0xff]
        %v3057 = vld [vmem:[#allocation5 + $0x1f0] sm:$0xff]
        %v3058 = vld [vmem:[#allocation5 + $0x1f8] sm:$0xff]
        %3060 = vset.pattern.permute.xlu0 0
        %3061 = vperm.xlu0 %3060, %v1971
        %v3062 = vpop.permute.xlu0 %3061
        %3065 = vset.pattern.permute.xlu0 0
        %3066 = vperm.xlu0 %3065, %v1973
        %v3067 = vpop.permute.xlu0 %3066
        %3070 = vset.pattern.permute.xlu0 0
        %3071 = vperm.xlu0 %3070, %v1975
        %v3072 = vpop.permute.xlu0 %3071
        %3075 = vset.pattern.permute.xlu0 0
        %3076 = vperm.xlu0 %3075, %v1977
        %v3077 = vpop.permute.xlu0 %3076
        %3080 = vset.pattern.permute.xlu0 0
        %3081 = vperm.xlu0 %3080, %v1979
        %v3082 = vpop.permute.xlu0 %3081
        %3085 = vset.pattern.permute.xlu0 0
        %3086 = vperm.xlu0 %3085, %v1981
        %v3087 = vpop.permute.xlu0 %3086
        %3090 = vset.pattern.permute.xlu0 0
        %3091 = vperm.xlu0 %3090, %v1983
        %v3092 = vpop.permute.xlu0 %3091
        %3095 = vset.pattern.permute.xlu0 0
        %3096 = vperm.xlu0 %3095, %v1985
        %v3097 = vpop.permute.xlu0 %3096
        %3100 = vset.pattern.permute.xlu0 0
        %3101 = vperm.xlu0 %3100, %v1987
        %v3102 = vpop.permute.xlu0 %3101
        %3105 = vset.pattern.permute.xlu0 0
        %3106 = vperm.xlu0 %3105, %v1989
        %v3107 = vpop.permute.xlu0 %3106
        %3110 = vset.pattern.permute.xlu0 0
        %3111 = vperm.xlu0 %3110, %v1991
        %v3112 = vpop.permute.xlu0 %3111
        %3115 = vset.pattern.permute.xlu0 0
        %3116 = vperm.xlu0 %3115, %v1993
        %v3117 = vpop.permute.xlu0 %3116
        %3120 = vset.pattern.permute.xlu0 0
        %3121 = vperm.xlu0 %3120, %v1995
        %v3122 = vpop.permute.xlu0 %3121
        %3125 = vset.pattern.permute.xlu0 0
        %3126 = vperm.xlu0 %3125, %v1997
        %v3127 = vpop.permute.xlu0 %3126
        %3130 = vset.pattern.permute.xlu0 0
        %3131 = vperm.xlu0 %3130, %v1999
        %v3132 = vpop.permute.xlu0 %3131
        %3135 = vset.pattern.permute.xlu0 0
        %3136 = vperm.xlu0 %3135, %v2001
        %v3137 = vpop.permute.xlu0 %3136
        %3140 = vset.pattern.permute.xlu0 0
        %3141 = vperm.xlu0 %3140, %v2003
        %v3142 = vpop.permute.xlu0 %3141
        %3145 = vset.pattern.permute.xlu0 0
        %3146 = vperm.xlu0 %3145, %v2005
        %v3147 = vpop.permute.xlu0 %3146
        %3150 = vset.pattern.permute.xlu0 0
        %3151 = vperm.xlu0 %3150, %v2007
        %v3152 = vpop.permute.xlu0 %3151
        %3155 = vset.pattern.permute.xlu0 0
        %3156 = vperm.xlu0 %3155, %v2009
        %v3157 = vpop.permute.xlu0 %3156
        %3160 = vset.pattern.permute.xlu0 0
        %3161 = vperm.xlu0 %3160, %v2011
        %v3162 = vpop.permute.xlu0 %3161
        %3165 = vset.pattern.permute.xlu0 0
        %3166 = vperm.xlu0 %3165, %v2013
        %v3167 = vpop.permute.xlu0 %3166
        %3170 = vset.pattern.permute.xlu0 0
        %3171 = vperm.xlu0 %3170, %v2015
        %v3172 = vpop.permute.xlu0 %3171
        %3175 = vset.pattern.permute.xlu0 0
        %3176 = vperm.xlu0 %3175, %v2017
        %v3177 = vpop.permute.xlu0 %3176
        %3180 = vset.pattern.permute.xlu0 0
        %3181 = vperm.xlu0 %3180, %v2019
        %v3182 = vpop.permute.xlu0 %3181
        %3185 = vset.pattern.permute.xlu0 0
        %3186 = vperm.xlu0 %3185, %v2021
        %v3187 = vpop.permute.xlu0 %3186
        %3190 = vset.pattern.permute.xlu0 0
        %3191 = vperm.xlu0 %3190, %v2023
        %v3192 = vpop.permute.xlu0 %3191
        %3195 = vset.pattern.permute.xlu0 0
        %3196 = vperm.xlu0 %3195, %v2025
        %v3197 = vpop.permute.xlu0 %3196
        %3200 = vset.pattern.permute.xlu0 0
        %3201 = vperm.xlu0 %3200, %v2027
        %v3202 = vpop.permute.xlu0 %3201
        %3205 = vset.pattern.permute.xlu0 0
        %3206 = vperm.xlu0 %3205, %v2029
        %v3207 = vpop.permute.xlu0 %3206
        %3210 = vset.pattern.permute.xlu0 0
        %3211 = vperm.xlu0 %3210, %v2031
        %v3212 = vpop.permute.xlu0 %3211
        %3215 = vset.pattern.permute.xlu0 0
        %3216 = vperm.xlu0 %3215, %v2033
        %v3217 = vpop.permute.xlu0 %3216
        %3220 = vset.pattern.permute.xlu0 0
        %3221 = vperm.xlu0 %3220, %v2035
        %v3222 = vpop.permute.xlu0 %3221
        %3225 = vset.pattern.permute.xlu0 0
        %3226 = vperm.xlu0 %3225, %v2037
        %v3227 = vpop.permute.xlu0 %3226
        %3230 = vset.pattern.permute.xlu0 0
        %3231 = vperm.xlu0 %3230, %v2039
        %v3232 = vpop.permute.xlu0 %3231
        %3235 = vset.pattern.permute.xlu0 0
        %3236 = vperm.xlu0 %3235, %v2041
        %v3237 = vpop.permute.xlu0 %3236
        %3240 = vset.pattern.permute.xlu0 0
        %3241 = vperm.xlu0 %3240, %v2043
        %v3242 = vpop.permute.xlu0 %3241
        %3245 = vset.pattern.permute.xlu0 0
        %3246 = vperm.xlu0 %3245, %v2045
        %v3247 = vpop.permute.xlu0 %3246
        %3250 = vset.pattern.permute.xlu0 0
        %3251 = vperm.xlu0 %3250, %v2047
        %v3252 = vpop.permute.xlu0 %3251
        %3255 = vset.pattern.permute.xlu0 0
        %3256 = vperm.xlu0 %3255, %v2049
        %v3257 = vpop.permute.xlu0 %3256
        %3260 = vset.pattern.permute.xlu0 0
        %3261 = vperm.xlu0 %3260, %v2051
        %v3262 = vpop.permute.xlu0 %3261
        %3265 = vset.pattern.permute.xlu0 0
        %3266 = vperm.xlu0 %3265, %v2053
        %v3267 = vpop.permute.xlu0 %3266
        %3270 = vset.pattern.permute.xlu0 0
        %3271 = vperm.xlu0 %3270, %v2055
        %v3272 = vpop.permute.xlu0 %3271
        %3275 = vset.pattern.permute.xlu0 0
        %3276 = vperm.xlu0 %3275, %v2057
        %v3277 = vpop.permute.xlu0 %3276
        %3280 = vset.pattern.permute.xlu0 0
        %3281 = vperm.xlu0 %3280, %v2059
        %v3282 = vpop.permute.xlu0 %3281
        %3285 = vset.pattern.permute.xlu0 0
        %3286 = vperm.xlu0 %3285, %v2061
        %v3287 = vpop.permute.xlu0 %3286
        %3290 = vset.pattern.permute.xlu0 0
        %3291 = vperm.xlu0 %3290, %v2063
        %v3292 = vpop.permute.xlu0 %3291
        %3295 = vset.pattern.permute.xlu0 0
        %3296 = vperm.xlu0 %3295, %v2065
        %v3297 = vpop.permute.xlu0 %3296
        %3300 = vset.pattern.permute.xlu0 0
        %3301 = vperm.xlu0 %3300, %v2067
        %v3302 = vpop.permute.xlu0 %3301
        %3305 = vset.pattern.permute.xlu0 0
        %3306 = vperm.xlu0 %3305, %v2069
        %v3307 = vpop.permute.xlu0 %3306
        %3310 = vset.pattern.permute.xlu0 0
        %3311 = vperm.xlu0 %3310, %v2071
        %v3312 = vpop.permute.xlu0 %3311
        %3315 = vset.pattern.permute.xlu0 0
        %3316 = vperm.xlu0 %3315, %v2073
        %v3317 = vpop.permute.xlu0 %3316
        %3320 = vset.pattern.permute.xlu0 0
        %3321 = vperm.xlu0 %3320, %v2075
        %v3322 = vpop.permute.xlu0 %3321
        %3325 = vset.pattern.permute.xlu0 0
        %3326 = vperm.xlu0 %3325, %v2077
        %v3327 = vpop.permute.xlu0 %3326
        %3330 = vset.pattern.permute.xlu0 0
        %3331 = vperm.xlu0 %3330, %v2079
        %v3332 = vpop.permute.xlu0 %3331
        %3335 = vset.pattern.permute.xlu0 0
        %3336 = vperm.xlu0 %3335, %v2081
        %v3337 = vpop.permute.xlu0 %3336
        %3340 = vset.pattern.permute.xlu0 0
        %3341 = vperm.xlu0 %3340, %v2083
        %v3342 = vpop.permute.xlu0 %3341
        %3345 = vset.pattern.permute.xlu0 0
        %3346 = vperm.xlu0 %3345, %v2085
        %v3347 = vpop.permute.xlu0 %3346
        %3350 = vset.pattern.permute.xlu0 0
        %3351 = vperm.xlu0 %3350, %v2087
        %v3352 = vpop.permute.xlu0 %3351
        %3355 = vset.pattern.permute.xlu0 0
        %3356 = vperm.xlu0 %3355, %v2089
        %v3357 = vpop.permute.xlu0 %3356
        %3360 = vset.pattern.permute.xlu0 0
        %3361 = vperm.xlu0 %3360, %v2091
        %v3362 = vpop.permute.xlu0 %3361
        %3365 = vset.pattern.permute.xlu0 0
        %3366 = vperm.xlu0 %3365, %v2093
        %v3367 = vpop.permute.xlu0 %3366
        %3370 = vset.pattern.permute.xlu0 0
        %3371 = vperm.xlu0 %3370, %v2095
        %v3372 = vpop.permute.xlu0 %3371
        %3375 = vset.pattern.permute.xlu0 0
        %3376 = vperm.xlu0 %3375, %v2097
        %v3377 = vpop.permute.xlu0 %3376
        %v3379 = vmul.f32 %v3062, %v2995
        %v3380 = vmul.f32 %v3067, %v2996
        %v3381 = vmul.f32 %v3072, %v2997
        %v3382 = vmul.f32 %v3077, %v2998
        %v3383 = vmul.f32 %v3082, %v2999
        %v3384 = vmul.f32 %v3087, %v3000
        %v3385 = vmul.f32 %v3092, %v3001
        %v3386 = vmul.f32 %v3097, %v3002
        %v3387 = vmul.f32 %v3102, %v3003
        %v3388 = vmul.f32 %v3107, %v3004
        %v3389 = vmul.f32 %v3112, %v3005
        %v3390 = vmul.f32 %v3117, %v3006
        %v3391 = vmul.f32 %v3122, %v3007
        %v3392 = vmul.f32 %v3127, %v3008
        %v3393 = vmul.f32 %v3132, %v3009
        %v3394 = vmul.f32 %v3137, %v3010
        %v3395 = vmul.f32 %v3142, %v3011
        %v3396 = vmul.f32 %v3147, %v3012
        %v3397 = vmul.f32 %v3152, %v3013
        %v3398 = vmul.f32 %v3157, %v3014
        %v3399 = vmul.f32 %v3162, %v3015
        %v3400 = vmul.f32 %v3167, %v3016
        %v3401 = vmul.f32 %v3172, %v3017
        %v3402 = vmul.f32 %v3177, %v3018
        %v3403 = vmul.f32 %v3182, %v3019
        %v3404 = vmul.f32 %v3187, %v3020
        %v3405 = vmul.f32 %v3192, %v3021
        %v3406 = vmul.f32 %v3197, %v3022
        %v3407 = vmul.f32 %v3202, %v3023
        %v3408 = vmul.f32 %v3207, %v3024
        %v3409 = vmul.f32 %v3212, %v3025
        %v3410 = vmul.f32 %v3217, %v3026
        %v3411 = vmul.f32 %v3222, %v3027
        %v3412 = vmul.f32 %v3227, %v3028
        %v3413 = vmul.f32 %v3232, %v3029
        %v3414 = vmul.f32 %v3237, %v3030
        %v3415 = vmul.f32 %v3242, %v3031
        %v3416 = vmul.f32 %v3247, %v3032
        %v3417 = vmul.f32 %v3252, %v3033
        %v3418 = vmul.f32 %v3257, %v3034
        %v3419 = vmul.f32 %v3262, %v3035
        %v3420 = vmul.f32 %v3267, %v3036
        %v3421 = vmul.f32 %v3272, %v3037
        %v3422 = vmul.f32 %v3277, %v3038
        %v3423 = vmul.f32 %v3282, %v3039
        %v3424 = vmul.f32 %v3287, %v3040
        %v3425 = vmul.f32 %v3292, %v3041
        %v3426 = vmul.f32 %v3297, %v3042
        %v3427 = vmul.f32 %v3302, %v3043
        %v3428 = vmul.f32 %v3307, %v3044
        %v3429 = vmul.f32 %v3312, %v3045
        %v3430 = vmul.f32 %v3317, %v3046
        %v3431 = vmul.f32 %v3322, %v3047
        %v3432 = vmul.f32 %v3327, %v3048
        %v3433 = vmul.f32 %v3332, %v3049
        %v3434 = vmul.f32 %v3337, %v3050
        %v3435 = vmul.f32 %v3342, %v3051
        %v3436 = vmul.f32 %v3347, %v3052
        %v3437 = vmul.f32 %v3352, %v3053
        %v3438 = vmul.f32 %v3357, %v3054
        %v3439 = vmul.f32 %v3362, %v3055
        %v3440 = vmul.f32 %v3367, %v3056
        %v3441 = vmul.f32 %v3372, %v3057
        %v3442 = vmul.f32 %v3377, %v3058
        %v3443 = vld [vmem:[%s379] sm:$0xff]
        %v3444 = vld [vmem:[%s379 + $0x8] sm:$0xff]
        %v3445 = vld [vmem:[%s379 + $0x10] sm:$0xff]
        %v3446 = vld [vmem:[%s379 + $0x18] sm:$0xff]
        %v3447 = vld [vmem:[%s379 + $0x20] sm:$0xff]
        %v3448 = vld [vmem:[%s379 + $0x28] sm:$0xff]
        %v3449 = vld [vmem:[%s379 + $0x30] sm:$0xff]
        %v3450 = vld [vmem:[%s379 + $0x38] sm:$0xff]
        %v3451 = vld [vmem:[%s379 + $0x40] sm:$0xff]
        %v3452 = vld [vmem:[%s379 + $0x48] sm:$0xff]
        %v3453 = vld [vmem:[%s379 + $0x50] sm:$0xff]
        %v3454 = vld [vmem:[%s379 + $0x58] sm:$0xff]
        %v3455 = vld [vmem:[%s379 + $0x60] sm:$0xff]
        %v3456 = vld [vmem:[%s379 + $0x68] sm:$0xff]
        %v3457 = vld [vmem:[%s379 + $0x70] sm:$0xff]
        %v3458 = vld [vmem:[%s379 + $0x78] sm:$0xff]
        %3459 = vmatprep.subr.mxu0 0.0
        %3460 = vmatpush1.msra.mxu0 %v3443
        %3461 = vmatprep.subr.mxu0 0.0
        %3462 = vmatpush1.msra.mxu0 %v3444
        %3463 = vmatprep.subr.mxu0 0.0
        %3464 = vmatpush1.msra.mxu0 %v3445
        %3465 = vmatprep.subr.mxu0 0.0
        %3466 = vmatpush1.msra.mxu0 %v3446
        %3467 = vmatprep.subr.mxu0 0.0
        %3468 = vmatpush1.msra.mxu0 %v3447
        %3469 = vmatprep.subr.mxu0 0.0
        %3470 = vmatpush1.msra.mxu0 %v3448
        %3471 = vmatprep.subr.mxu0 0.0
        %3472 = vmatpush1.msra.mxu0 %v3449
        %3473 = vmatprep.subr.mxu0 0.0
        %3474 = vmatpush1.msra.mxu0 %v3450
        %3475 = vmatprep.subr.mxu0 0.0
        %3476 = vmatpush1.msra.mxu0 %v3451
        %3477 = vmatprep.subr.mxu0 0.0
        %3478 = vmatpush1.msra.mxu0 %v3452
        %3479 = vmatprep.subr.mxu0 0.0
        %3480 = vmatpush1.msra.mxu0 %v3453
        %3481 = vmatprep.subr.mxu0 0.0
        %3482 = vmatpush1.msra.mxu0 %v3454
        %3483 = vmatprep.subr.mxu0 0.0
        %3484 = vmatpush1.msra.mxu0 %v3455
        %3485 = vmatprep.subr.mxu0 0.0
        %3486 = vmatpush1.msra.mxu0 %v3456
        %3487 = vmatprep.subr.mxu0 0.0
        %3488 = vmatpush1.msra.mxu0 %v3457
        %3489 = vmatprep.subr.mxu0 0.0
        %3490 = vmatpush1.msra.mxu0 %v3458
        %3491 = vmatprep.subr.mxu0 0.0
        %3492 = vmatpush1.msra.mxu0 0.0
        %3493 = vmatprep.subr.mxu0 0.0
        %3494 = vmatpush1.msra.mxu0 0.0
        %3495 = vmatprep.subr.mxu0 0.0
        %3496 = vmatpush1.msra.mxu0 0.0
        %3497 = vmatprep.subr.mxu0 0.0
        %3498 = vmatpush1.msra.mxu0 0.0
        %3499 = vmatprep.subr.mxu0 0.0
        %3500 = vmatpush1.msra.mxu0 0.0
        %3501 = vmatprep.subr.mxu0 0.0
        %3502 = vmatpush1.msra.mxu0 0.0
        %3503 = vmatprep.subr.mxu0 0.0
        %3504 = vmatpush1.msra.mxu0 0.0
        %3505 = vmatprep.subr.mxu0 0.0
        %3506 = vmatpush1.msra.mxu0 0.0
        %3507 = vmatprep.subr.mxu0 0.0
        %3508 = vmatpush1.msra.mxu0 0.0
        %3509 = vmatprep.subr.mxu0 0.0
        %3510 = vmatpush1.msra.mxu0 0.0
        %3511 = vmatprep.subr.mxu0 0.0
        %3512 = vmatpush1.msra.mxu0 0.0
        %3513 = vmatprep.subr.mxu0 0.0
        %3514 = vmatpush1.msra.mxu0 0.0
        %3515 = vmatprep.subr.mxu0 0.0
        %3516 = vmatpush1.msra.mxu0 0.0
        %3517 = vmatprep.subr.mxu0 0.0
        %3518 = vmatpush1.msra.mxu0 0.0
        %3519 = vmatprep.subr.mxu0 0.0
        %3520 = vmatpush1.msra.mxu0 0.0
        %3521 = vmatprep.subr.mxu0 0.0
        %3522 = vmatpush1.msra.mxu0 0.0
        %3523 = vmatprep.mubr.f32.mxu0 0.0
        %3524 = vmatmul.mubr.f32.gmra.mrb[0].mxu0 %v2483
        %v3525 = vpop.f32.mrb[0].mxu0
        %v3526 = vadd.f32 0.0, %v3525
        %v3527 = vpop.f32.mrb[0].mxu0
        %3528 = vmatprep.mubr.f32.mxu0 0.0
        %3529 = vmatmul.mubr.f32.gmra.mrb[0].mxu0 %v2485
        %v3530 = vpop.f32.mrb[0].mxu0
        %v3531 = vadd.f32 0.0, %v3530
        %v3532 = vpop.f32.mrb[0].mxu0
        %3533 = vmatprep.mubr.f32.mxu0 0.0
        %3534 = vmatmul.mubr.f32.gmra.mrb[0].mxu0 %v2487
        %v3535 = vpop.f32.mrb[0].mxu0
        %v3536 = vadd.f32 0.0, %v3535
        %v3537 = vpop.f32.mrb[0].mxu0
        %3538 = vmatprep.mubr.f32.mxu0 0.0
        %3539 = vmatmul.mubr.f32.gmra.mrb[0].mxu0 %v2489
        %v3540 = vpop.f32.mrb[0].mxu0
        %v3541 = vadd.f32 0.0, %v3540
        %v3542 = vpop.f32.mrb[0].mxu0
        %3543 = vmatprep.mubr.f32.mxu0 0.0
        %3544 = vmatmul.mubr.f32.gmra.mrb[0].mxu0 %v2491
        %v3545 = vpop.f32.mrb[0].mxu0
        %v3546 = vadd.f32 0.0, %v3545
        %v3547 = vpop.f32.mrb[0].mxu0
        %3548 = vmatprep.mubr.f32.mxu0 0.0
        %3549 = vmatmul.mubr.f32.gmra.mrb[0].mxu0 %v2493
        %v3550 = vpop.f32.mrb[0].mxu0
        %v3551 = vadd.f32 0.0, %v3550
        %v3552 = vpop.f32.mrb[0].mxu0
        %3553 = vmatprep.mubr.f32.mxu0 0.0
        %3554 = vmatmul.mubr.f32.gmra.mrb[0].mxu0 %v2495
        %v3555 = vpop.f32.mrb[0].mxu0
        %v3556 = vadd.f32 0.0, %v3555
        %v3557 = vpop.f32.mrb[0].mxu0
        %3558 = vmatprep.mubr.f32.mxu0 0.0
        %3559 = vmatmul.mubr.f32.gmra.mrb[0].mxu0 %v2497
        %v3560 = vpop.f32.mrb[0].mxu0
        %v3561 = vadd.f32 0.0, %v3560
        %v3562 = vpop.f32.mrb[0].mxu0
        %3563 = vmatprep.mubr.f32.mxu0 0.0
        %3564 = vmatmul.mubr.f32.gmra.mrb[0].mxu0 %v2499
        %v3565 = vpop.f32.mrb[0].mxu0
        %v3566 = vadd.f32 0.0, %v3565
        %v3567 = vpop.f32.mrb[0].mxu0
        %3568 = vmatprep.mubr.f32.mxu0 0.0
        %3569 = vmatmul.mubr.f32.gmra.mrb[0].mxu0 %v2501
        %v3570 = vpop.f32.mrb[0].mxu0
        %v3571 = vadd.f32 0.0, %v3570
        %v3572 = vpop.f32.mrb[0].mxu0
        %3573 = vmatprep.mubr.f32.mxu0 0.0
        %3574 = vmatmul.mubr.f32.gmra.mrb[0].mxu0 %v2503
        %v3575 = vpop.f32.mrb[0].mxu0
        %v3576 = vadd.f32 0.0, %v3575
        %v3577 = vpop.f32.mrb[0].mxu0
        %3578 = vmatprep.mubr.f32.mxu0 0.0
        %3579 = vmatmul.mubr.f32.gmra.mrb[0].mxu0 %v2505
        %v3580 = vpop.f32.mrb[0].mxu0
        %v3581 = vadd.f32 0.0, %v3580
        %v3582 = vpop.f32.mrb[0].mxu0
        %3583 = vmatprep.mubr.f32.mxu0 0.0
        %3584 = vmatmul.mubr.f32.gmra.mrb[0].mxu0 %v2507
        %v3585 = vpop.f32.mrb[0].mxu0
        %v3586 = vadd.f32 0.0, %v3585
        %v3587 = vpop.f32.mrb[0].mxu0
        %3588 = vmatprep.mubr.f32.mxu0 0.0
        %3589 = vmatmul.mubr.f32.gmra.mrb[0].mxu0 %v2509
        %v3590 = vpop.f32.mrb[0].mxu0
        %v3591 = vadd.f32 0.0, %v3590
        %v3592 = vpop.f32.mrb[0].mxu0
        %3593 = vmatprep.mubr.f32.mxu0 0.0
        %3594 = vmatmul.mubr.f32.gmra.mrb[0].mxu0 %v2511
        %v3595 = vpop.f32.mrb[0].mxu0
        %v3596 = vadd.f32 0.0, %v3595
        %v3597 = vpop.f32.mrb[0].mxu0
        %3598 = vmatprep.mubr.f32.mxu0 0.0
        %3599 = vmatmul.mubr.f32.gmra.mrb[0].mxu0 %v2513
        %v3600 = vpop.f32.mrb[0].mxu0
        %v3601 = vadd.f32 0.0, %v3600
        %v3602 = vpop.f32.mrb[0].mxu0
        %3603 = vmatprep.mubr.f32.mxu0 0.0
        %3604 = vmatmul.mubr.f32.gmra.mrb[0].mxu0 %v2515
        %v3605 = vpop.f32.mrb[0].mxu0
        %v3606 = vadd.f32 0.0, %v3605
        %v3607 = vpop.f32.mrb[0].mxu0
        %3608 = vmatprep.mubr.f32.mxu0 0.0
        %3609 = vmatmul.mubr.f32.gmra.mrb[0].mxu0 %v2517
        %v3610 = vpop.f32.mrb[0].mxu0
        %v3611 = vadd.f32 0.0, %v3610
        %v3612 = vpop.f32.mrb[0].mxu0
        %3613 = vmatprep.mubr.f32.mxu0 0.0
        %3614 = vmatmul.mubr.f32.gmra.mrb[0].mxu0 %v2519
        %v3615 = vpop.f32.mrb[0].mxu0
        %v3616 = vadd.f32 0.0, %v3615
        %v3617 = vpop.f32.mrb[0].mxu0
        %3618 = vmatprep.mubr.f32.mxu0 0.0
        %3619 = vmatmul.mubr.f32.gmra.mrb[0].mxu0 %v2521
        %v3620 = vpop.f32.mrb[0].mxu0
        %v3621 = vadd.f32 0.0, %v3620
        %v3622 = vpop.f32.mrb[0].mxu0
        %3623 = vmatprep.mubr.f32.mxu0 0.0
        %3624 = vmatmul.mubr.f32.gmra.mrb[0].mxu0 %v2523
        %v3625 = vpop.f32.mrb[0].mxu0
        %v3626 = vadd.f32 0.0, %v3625
        %v3627 = vpop.f32.mrb[0].mxu0
        %3628 = vmatprep.mubr.f32.mxu0 0.0
        %3629 = vmatmul.mubr.f32.gmra.mrb[0].mxu0 %v2525
        %v3630 = vpop.f32.mrb[0].mxu0
        %v3631 = vadd.f32 0.0, %v3630
        %v3632 = vpop.f32.mrb[0].mxu0
        %3633 = vmatprep.mubr.f32.mxu0 0.0
        %3634 = vmatmul.mubr.f32.gmra.mrb[0].mxu0 %v2527
        %v3635 = vpop.f32.mrb[0].mxu0
        %v3636 = vadd.f32 0.0, %v3635
        %v3637 = vpop.f32.mrb[0].mxu0
        %3638 = vmatprep.mubr.f32.mxu0 0.0
        %3639 = vmatmul.mubr.f32.gmra.mrb[0].mxu0 %v2529
        %v3640 = vpop.f32.mrb[0].mxu0
        %v3641 = vadd.f32 0.0, %v3640
        %v3642 = vpop.f32.mrb[0].mxu0
        %3643 = vmatprep.mubr.f32.mxu0 0.0
        %3644 = vmatmul.mubr.f32.gmra.mrb[0].mxu0 %v2531
        %v3645 = vpop.f32.mrb[0].mxu0
        %v3646 = vadd.f32 0.0, %v3645
        %v3647 = vpop.f32.mrb[0].mxu0
        %3648 = vmatprep.mubr.f32.mxu0 0.0
        %3649 = vmatmul.mubr.f32.gmra.mrb[0].mxu0 %v2533
        %v3650 = vpop.f32.mrb[0].mxu0
        %v3651 = vadd.f32 0.0, %v3650
        %v3652 = vpop.f32.mrb[0].mxu0
        %3653 = vmatprep.mubr.f32.mxu0 0.0
        %3654 = vmatmul.mubr.f32.gmra.mrb[0].mxu0 %v2535
        %v3655 = vpop.f32.mrb[0].mxu0
        %v3656 = vadd.f32 0.0, %v3655
        %v3657 = vpop.f32.mrb[0].mxu0
        %3658 = vmatprep.mubr.f32.mxu0 0.0
        %3659 = vmatmul.mubr.f32.gmra.mrb[0].mxu0 %v2537
        %v3660 = vpop.f32.mrb[0].mxu0
        %v3661 = vadd.f32 0.0, %v3660
        %v3662 = vpop.f32.mrb[0].mxu0
        %3663 = vmatprep.mubr.f32.mxu0 0.0
        %3664 = vmatmul.mubr.f32.gmra.mrb[0].mxu0 %v2539
        %v3665 = vpop.f32.mrb[0].mxu0
        %v3666 = vadd.f32 0.0, %v3665
        %v3667 = vpop.f32.mrb[0].mxu0
        %3668 = vmatprep.mubr.f32.mxu0 0.0
        %3669 = vmatmul.mubr.f32.gmra.mrb[0].mxu0 %v2541
        %v3670 = vpop.f32.mrb[0].mxu0
        %v3671 = vadd.f32 0.0, %v3670
        %v3672 = vpop.f32.mrb[0].mxu0
        %3673 = vmatprep.mubr.f32.mxu0 0.0
        %3674 = vmatmul.mubr.f32.gmra.mrb[0].mxu0 %v2543
        %v3675 = vpop.f32.mrb[0].mxu0
        %v3676 = vadd.f32 0.0, %v3675
        %v3677 = vpop.f32.mrb[0].mxu0
        %3678 = vmatprep.mubr.f32.mxu0 0.0
        %3679 = vmatmul.mubr.f32.gmra.mrb[0].mxu0 %v2545
        %v3680 = vpop.f32.mrb[0].mxu0
        %v3681 = vadd.f32 0.0, %v3680
        %v3682 = vpop.f32.mrb[0].mxu0
        %3683 = vmatprep.mubr.f32.mxu0 0.0
        %3684 = vmatmul.mubr.f32.gmra.mrb[0].mxu0 %v2547
        %v3685 = vpop.f32.mrb[0].mxu0
        %v3686 = vadd.f32 0.0, %v3685
        %v3687 = vpop.f32.mrb[0].mxu0
        %3688 = vmatprep.mubr.f32.mxu0 0.0
        %3689 = vmatmul.mubr.f32.gmra.mrb[0].mxu0 %v2549
        %v3690 = vpop.f32.mrb[0].mxu0
        %v3691 = vadd.f32 0.0, %v3690
        %v3692 = vpop.f32.mrb[0].mxu0
        %3693 = vmatprep.mubr.f32.mxu0 0.0
        %3694 = vmatmul.mubr.f32.gmra.mrb[0].mxu0 %v2551
        %v3695 = vpop.f32.mrb[0].mxu0
        %v3696 = vadd.f32 0.0, %v3695
        %v3697 = vpop.f32.mrb[0].mxu0
        %3698 = vmatprep.mubr.f32.mxu0 0.0
        %3699 = vmatmul.mubr.f32.gmra.mrb[0].mxu0 %v2553
        %v3700 = vpop.f32.mrb[0].mxu0
        %v3701 = vadd.f32 0.0, %v3700
        %v3702 = vpop.f32.mrb[0].mxu0
        %3703 = vmatprep.mubr.f32.mxu0 0.0
        %3704 = vmatmul.mubr.f32.gmra.mrb[0].mxu0 %v2555
        %v3705 = vpop.f32.mrb[0].mxu0
        %v3706 = vadd.f32 0.0, %v3705
        %v3707 = vpop.f32.mrb[0].mxu0
        %3708 = vmatprep.mubr.f32.mxu0 0.0
        %3709 = vmatmul.mubr.f32.gmra.mrb[0].mxu0 %v2557
        %v3710 = vpop.f32.mrb[0].mxu0
        %v3711 = vadd.f32 0.0, %v3710
        %v3712 = vpop.f32.mrb[0].mxu0
        %3713 = vmatprep.mubr.f32.mxu0 0.0
        %3714 = vmatmul.mubr.f32.gmra.mrb[0].mxu0 %v2559
        %v3715 = vpop.f32.mrb[0].mxu0
        %v3716 = vadd.f32 0.0, %v3715
        %v3717 = vpop.f32.mrb[0].mxu0
        %3718 = vmatprep.mubr.f32.mxu0 0.0
        %3719 = vmatmul.mubr.f32.gmra.mrb[0].mxu0 %v2561
        %v3720 = vpop.f32.mrb[0].mxu0
        %v3721 = vadd.f32 0.0, %v3720
        %v3722 = vpop.f32.mrb[0].mxu0
        %3723 = vmatprep.mubr.f32.mxu0 0.0
        %3724 = vmatmul.mubr.f32.gmra.mrb[0].mxu0 %v2563
        %v3725 = vpop.f32.mrb[0].mxu0
        %v3726 = vadd.f32 0.0, %v3725
        %v3727 = vpop.f32.mrb[0].mxu0
        %3728 = vmatprep.mubr.f32.mxu0 0.0
        %3729 = vmatmul.mubr.f32.gmra.mrb[0].mxu0 %v2565
        %v3730 = vpop.f32.mrb[0].mxu0
        %v3731 = vadd.f32 0.0, %v3730
        %v3732 = vpop.f32.mrb[0].mxu0
        %3733 = vmatprep.mubr.f32.mxu0 0.0
        %3734 = vmatmul.mubr.f32.gmra.mrb[0].mxu0 %v2567
        %v3735 = vpop.f32.mrb[0].mxu0
        %v3736 = vadd.f32 0.0, %v3735
        %v3737 = vpop.f32.mrb[0].mxu0
        %3738 = vmatprep.mubr.f32.mxu0 0.0
        %3739 = vmatmul.mubr.f32.gmra.mrb[0].mxu0 %v2569
        %v3740 = vpop.f32.mrb[0].mxu0
        %v3741 = vadd.f32 0.0, %v3740
        %v3742 = vpop.f32.mrb[0].mxu0
        %3743 = vmatprep.mubr.f32.mxu0 0.0
        %3744 = vmatmul.mubr.f32.gmra.mrb[0].mxu0 %v2571
        %v3745 = vpop.f32.mrb[0].mxu0
        %v3746 = vadd.f32 0.0, %v3745
        %v3747 = vpop.f32.mrb[0].mxu0
        %3748 = vmatprep.mubr.f32.mxu0 0.0
        %3749 = vmatmul.mubr.f32.gmra.mrb[0].mxu0 %v2573
        %v3750 = vpop.f32.mrb[0].mxu0
        %v3751 = vadd.f32 0.0, %v3750
        %v3752 = vpop.f32.mrb[0].mxu0
        %3753 = vmatprep.mubr.f32.mxu0 0.0
        %3754 = vmatmul.mubr.f32.gmra.mrb[0].mxu0 %v2575
        %v3755 = vpop.f32.mrb[0].mxu0
        %v3756 = vadd.f32 0.0, %v3755
        %v3757 = vpop.f32.mrb[0].mxu0
        %3758 = vmatprep.mubr.f32.mxu0 0.0
        %3759 = vmatmul.mubr.f32.gmra.mrb[0].mxu0 %v2577
        %v3760 = vpop.f32.mrb[0].mxu0
        %v3761 = vadd.f32 0.0, %v3760
        %v3762 = vpop.f32.mrb[0].mxu0
        %3763 = vmatprep.mubr.f32.mxu0 0.0
        %3764 = vmatmul.mubr.f32.gmra.mrb[0].mxu0 %v2579
        %v3765 = vpop.f32.mrb[0].mxu0
        %v3766 = vadd.f32 0.0, %v3765
        %v3767 = vpop.f32.mrb[0].mxu0
        %3768 = vmatprep.mubr.f32.mxu0 0.0
        %3769 = vmatmul.mubr.f32.gmra.mrb[0].mxu0 %v2581
        %v3770 = vpop.f32.mrb[0].mxu0
        %v3771 = vadd.f32 0.0, %v3770
        %v3772 = vpop.f32.mrb[0].mxu0
        %3773 = vmatprep.mubr.f32.mxu0 0.0
        %3774 = vmatmul.mubr.f32.gmra.mrb[0].mxu0 %v2583
        %v3775 = vpop.f32.mrb[0].mxu0
        %v3776 = vadd.f32 0.0, %v3775
        %v3777 = vpop.f32.mrb[0].mxu0
        %3778 = vmatprep.mubr.f32.mxu0 0.0
        %3779 = vmatmul.mubr.f32.gmra.mrb[0].mxu0 %v2585
        %v3780 = vpop.f32.mrb[0].mxu0
        %v3781 = vadd.f32 0.0, %v3780
        %v3782 = vpop.f32.mrb[0].mxu0
        %3783 = vmatprep.mubr.f32.mxu0 0.0
        %3784 = vmatmul.mubr.f32.gmra.mrb[0].mxu0 %v2587
        %v3785 = vpop.f32.mrb[0].mxu0
        %v3786 = vadd.f32 0.0, %v3785
        %v3787 = vpop.f32.mrb[0].mxu0
        %3788 = vmatprep.mubr.f32.mxu0 0.0
        %3789 = vmatmul.mubr.f32.gmra.mrb[0].mxu0 %v2589
        %v3790 = vpop.f32.mrb[0].mxu0
        %v3791 = vadd.f32 0.0, %v3790
        %v3792 = vpop.f32.mrb[0].mxu0
        %3793 = vmatprep.mubr.f32.mxu0 0.0
        %3794 = vmatmul.mubr.f32.gmra.mrb[0].mxu0 %v2591
        %v3795 = vpop.f32.mrb[0].mxu0
        %v3796 = vadd.f32 0.0, %v3795
        %v3797 = vpop.f32.mrb[0].mxu0
        %3798 = vmatprep.mubr.f32.mxu0 0.0
        %3799 = vmatmul.mubr.f32.gmra.mrb[0].mxu0 %v2593
        %v3800 = vpop.f32.mrb[0].mxu0
        %v3801 = vadd.f32 0.0, %v3800
        %v3802 = vpop.f32.mrb[0].mxu0
        %3803 = vmatprep.mubr.f32.mxu0 0.0
        %3804 = vmatmul.mubr.f32.gmra.mrb[0].mxu0 %v2595
        %v3805 = vpop.f32.mrb[0].mxu0
        %v3806 = vadd.f32 0.0, %v3805
        %v3807 = vpop.f32.mrb[0].mxu0
        %3808 = vmatprep.mubr.f32.mxu0 0.0
        %3809 = vmatmul.mubr.f32.gmra.mrb[0].mxu0 %v2597
        %v3810 = vpop.f32.mrb[0].mxu0
        %v3811 = vadd.f32 0.0, %v3810
        %v3812 = vpop.f32.mrb[0].mxu0
        %3813 = vmatprep.mubr.f32.mxu0 0.0
        %3814 = vmatmul.mubr.f32.gmra.mrb[0].mxu0 %v2599
        %v3815 = vpop.f32.mrb[0].mxu0
        %v3816 = vadd.f32 0.0, %v3815
        %v3817 = vpop.f32.mrb[0].mxu0
        %3818 = vmatprep.mubr.f32.mxu0 0.0
        %3819 = vmatmul.mubr.f32.gmra.mrb[0].mxu0 %v2601
        %v3820 = vpop.f32.mrb[0].mxu0
        %v3821 = vadd.f32 0.0, %v3820
        %v3822 = vpop.f32.mrb[0].mxu0
        %3823 = vmatprep.mubr.f32.mxu0 0.0
        %3824 = vmatmul.mubr.f32.gmra.mrb[0].mxu0 %v2603
        %v3825 = vpop.f32.mrb[0].mxu0
        %v3826 = vadd.f32 0.0, %v3825
        %v3827 = vpop.f32.mrb[0].mxu0
        %3828 = vmatprep.mubr.f32.mxu0 0.0
        %3829 = vmatmul.mubr.f32.gmra.mrb[0].mxu0 %v2605
        %v3830 = vpop.f32.mrb[0].mxu0
        %v3831 = vadd.f32 0.0, %v3830
        %v3832 = vpop.f32.mrb[0].mxu0
        %3833 = vmatprep.mubr.f32.mxu0 0.0
        %3834 = vmatmul.mubr.f32.gmra.mrb[0].mxu0 %v2607
        %v3835 = vpop.f32.mrb[0].mxu0
        %v3836 = vadd.f32 0.0, %v3835
        %v3837 = vpop.f32.mrb[0].mxu0
        %3838 = vmatprep.mubr.f32.mxu0 0.0
        %3839 = vmatmul.mubr.f32.gmra.mrb[0].mxu0 %v2609
        %v3840 = vpop.f32.mrb[0].mxu0
        %v3841 = vadd.f32 0.0, %v3840
        %v3842 = vpop.f32.mrb[0].mxu0
        %3843 = vdwg.mxu0
        %v3844 = vadd.f32 %v3379, %v3526
        %v3845 = vadd.f32 %v3380, %v3531
        %v3846 = vadd.f32 %v3381, %v3536
        %v3847 = vadd.f32 %v3382, %v3541
        %v3848 = vadd.f32 %v3383, %v3546
        %v3849 = vadd.f32 %v3384, %v3551
        %v3850 = vadd.f32 %v3385, %v3556
        %v3851 = vadd.f32 %v3386, %v3561
        %v3852 = vadd.f32 %v3387, %v3566
        %v3853 = vadd.f32 %v3388, %v3571
        %v3854 = vadd.f32 %v3389, %v3576
        %v3855 = vadd.f32 %v3390, %v3581
        %v3856 = vadd.f32 %v3391, %v3586
        %v3857 = vadd.f32 %v3392, %v3591
        %v3858 = vadd.f32 %v3393, %v3596
        %v3859 = vadd.f32 %v3394, %v3601
        %v3860 = vadd.f32 %v3395, %v3606
        %v3861 = vadd.f32 %v3396, %v3611
        %v3862 = vadd.f32 %v3397, %v3616
        %v3863 = vadd.f32 %v3398, %v3621
        %v3864 = vadd.f32 %v3399, %v3626
        %v3865 = vadd.f32 %v3400, %v3631
        %v3866 = vadd.f32 %v3401, %v3636
        %v3867 = vadd.f32 %v3402, %v3641
        %v3868 = vadd.f32 %v3403, %v3646
        %v3869 = vadd.f32 %v3404, %v3651
        %v3870 = vadd.f32 %v3405, %v3656
        %v3871 = vadd.f32 %v3406, %v3661
        %v3872 = vadd.f32 %v3407, %v3666
        %v3873 = vadd.f32 %v3408, %v3671
        %v3874 = vadd.f32 %v3409, %v3676
        %v3875 = vadd.f32 %v3410, %v3681
        %v3876 = vadd.f32 %v3411, %v3686
        %v3877 = vadd.f32 %v3412, %v3691
        %v3878 = vadd.f32 %v3413, %v3696
        %v3879 = vadd.f32 %v3414, %v3701
        %v3880 = vadd.f32 %v3415, %v3706
        %v3881 = vadd.f32 %v3416, %v3711
        %v3882 = vadd.f32 %v3417, %v3716
        %v3883 = vadd.f32 %v3418, %v3721
        %v3884 = vadd.f32 %v3419, %v3726
        %v3885 = vadd.f32 %v3420, %v3731
        %v3886 = vadd.f32 %v3421, %v3736
        %v3887 = vadd.f32 %v3422, %v3741
        %v3888 = vadd.f32 %v3423, %v3746
        %v3889 = vadd.f32 %v3424, %v3751
        %v3890 = vadd.f32 %v3425, %v3756
        %v3891 = vadd.f32 %v3426, %v3761
        %v3892 = vadd.f32 %v3427, %v3766
        %v3893 = vadd.f32 %v3428, %v3771
        %v3894 = vadd.f32 %v3429, %v3776
        %v3895 = vadd.f32 %v3430, %v3781
        %v3896 = vadd.f32 %v3431, %v3786
        %v3897 = vadd.f32 %v3432, %v3791
        %v3898 = vadd.f32 %v3433, %v3796
        %v3899 = vadd.f32 %v3434, %v3801
        %v3900 = vadd.f32 %v3435, %v3806
        %v3901 = vadd.f32 %v3436, %v3811
        %v3902 = vadd.f32 %v3437, %v3816
        %v3903 = vadd.f32 %v3438, %v3821
        %v3904 = vadd.f32 %v3439, %v3826
        %v3905 = vadd.f32 %v3440, %v3831
        %v3906 = vadd.f32 %v3441, %v3836
        %v3907 = vadd.f32 %v3442, %v3841
        %3908 = vst [vmem:[#allocation5] sm:$0xff] %v3844
        %3909 = vst [vmem:[#allocation5 + $0x8] sm:$0xff] %v3845
        %3910 = vst [vmem:[#allocation5 + $0x10] sm:$0xff] %v3846
        %3911 = vst [vmem:[#allocation5 + $0x18] sm:$0xff] %v3847
        %3912 = vst [vmem:[#allocation5 + $0x20] sm:$0xff] %v3848
        %3913 = vst [vmem:[#allocation5 + $0x28] sm:$0xff] %v3849
        %3914 = vst [vmem:[#allocation5 + $0x30] sm:$0xff] %v3850
        %3915 = vst [vmem:[#allocation5 + $0x38] sm:$0xff] %v3851
        %3916 = vst [vmem:[#allocation5 + $0x40] sm:$0xff] %v3852
        %3917 = vst [vmem:[#allocation5 + $0x48] sm:$0xff] %v3853
        %3918 = vst [vmem:[#allocation5 + $0x50] sm:$0xff] %v3854
        %3919 = vst [vmem:[#allocation5 + $0x58] sm:$0xff] %v3855
        %3920 = vst [vmem:[#allocation5 + $0x60] sm:$0xff] %v3856
        %3921 = vst [vmem:[#allocation5 + $0x68] sm:$0xff] %v3857
        %3922 = vst [vmem:[#allocation5 + $0x70] sm:$0xff] %v3858
        %3923 = vst [vmem:[#allocation5 + $0x78] sm:$0xff] %v3859
        %3924 = vst [vmem:[#allocation5 + $0x80] sm:$0xff] %v3860
        %3925 = vst [vmem:[#allocation5 + $0x88] sm:$0xff] %v3861
        %3926 = vst [vmem:[#allocation5 + $0x90] sm:$0xff] %v3862
        %3927 = vst [vmem:[#allocation5 + $0x98] sm:$0xff] %v3863
        %3928 = vst [vmem:[#allocation5 + $0xa0] sm:$0xff] %v3864
        %3929 = vst [vmem:[#allocation5 + $0xa8] sm:$0xff] %v3865
        %3930 = vst [vmem:[#allocation5 + $0xb0] sm:$0xff] %v3866
        %3931 = vst [vmem:[#allocation5 + $0xb8] sm:$0xff] %v3867
        %3932 = vst [vmem:[#allocation5 + $0xc0] sm:$0xff] %v3868
        %3933 = vst [vmem:[#allocation5 + $0xc8] sm:$0xff] %v3869
        %3934 = vst [vmem:[#allocation5 + $0xd0] sm:$0xff] %v3870
        %3935 = vst [vmem:[#allocation5 + $0xd8] sm:$0xff] %v3871
        %3936 = vst [vmem:[#allocation5 + $0xe0] sm:$0xff] %v3872
        %3937 = vst [vmem:[#allocation5 + $0xe8] sm:$0xff] %v3873
        %3938 = vst [vmem:[#allocation5 + $0xf0] sm:$0xff] %v3874
        %3939 = vst [vmem:[#allocation5 + $0xf8] sm:$0xff] %v3875
        %3940 = vst [vmem:[#allocation5 + $0x100] sm:$0xff] %v3876
        %3941 = vst [vmem:[#allocation5 + $0x108] sm:$0xff] %v3877
        %3942 = vst [vmem:[#allocation5 + $0x110] sm:$0xff] %v3878
        %3943 = vst [vmem:[#allocation5 + $0x118] sm:$0xff] %v3879
        %3944 = vst [vmem:[#allocation5 + $0x120] sm:$0xff] %v3880
        %3945 = vst [vmem:[#allocation5 + $0x128] sm:$0xff] %v3881
        %3946 = vst [vmem:[#allocation5 + $0x130] sm:$0xff] %v3882
        %3947 = vst [vmem:[#allocation5 + $0x138] sm:$0xff] %v3883
        %3948 = vst [vmem:[#allocation5 + $0x140] sm:$0xff] %v3884
        %3949 = vst [vmem:[#allocation5 + $0x148] sm:$0xff] %v3885
        %3950 = vst [vmem:[#allocation5 + $0x150] sm:$0xff] %v3886
        %3951 = vst [vmem:[#allocation5 + $0x158] sm:$0xff] %v3887
        %3952 = vst [vmem:[#allocation5 + $0x160] sm:$0xff] %v3888
        %3953 = vst [vmem:[#allocation5 + $0x168] sm:$0xff] %v3889
        %3954 = vst [vmem:[#allocation5 + $0x170] sm:$0xff] %v3890
        %3955 = vst [vmem:[#allocation5 + $0x178] sm:$0xff] %v3891
        %3956 = vst [vmem:[#allocation5 + $0x180] sm:$0xff] %v3892
        %3957 = vst [vmem:[#allocation5 + $0x188] sm:$0xff] %v3893
        %3958 = vst [vmem:[#allocation5 + $0x190] sm:$0xff] %v3894
        %3959 = vst [vmem:[#allocation5 + $0x198] sm:$0xff] %v3895
        %3960 = vst [vmem:[#allocation5 + $0x1a0] sm:$0xff] %v3896
        %3961 = vst [vmem:[#allocation5 + $0x1a8] sm:$0xff] %v3897
        %3962 = vst [vmem:[#allocation5 + $0x1b0] sm:$0xff] %v3898
        %3963 = vst [vmem:[#allocation5 + $0x1b8] sm:$0xff] %v3899
        %3964 = vst [vmem:[#allocation5 + $0x1c0] sm:$0xff] %v3900
        %3965 = vst [vmem:[#allocation5 + $0x1c8] sm:$0xff] %v3901
        %3966 = vst [vmem:[#allocation5 + $0x1d0] sm:$0xff] %v3902
        %3967 = vst [vmem:[#allocation5 + $0x1d8] sm:$0xff] %v3903
        %3968 = vst [vmem:[#allocation5 + $0x1e0] sm:$0xff] %v3904
        %3969 = vst [vmem:[#allocation5 + $0x1e8] sm:$0xff] %v3905
        %3970 = vst [vmem:[#allocation5 + $0x1f0] sm:$0xff] %v3906
        %3971 = vst [vmem:[#allocation5 + $0x1f8] sm:$0xff] %v3907
        %3972 = vst.msk [vmem:[#allocation3] sm:$0xff] %vm2930, %v1842
        %3973 = vst.msk [vmem:[#allocation3 + $0x8] sm:$0xff] %vm2930, %v1843
        %3974 = vst.msk [vmem:[#allocation3 + $0x10] sm:$0xff] %vm2930, %v1844
        %3975 = vst.msk [vmem:[#allocation3 + $0x18] sm:$0xff] %vm2930, %v1845
        %3976 = vst.msk [vmem:[#allocation3 + $0x20] sm:$0xff] %vm2930, %v1846
        %3977 = vst.msk [vmem:[#allocation3 + $0x28] sm:$0xff] %vm2930, %v1847
        %3978 = vst.msk [vmem:[#allocation3 + $0x30] sm:$0xff] %vm2930, %v1848
        %3979 = vst.msk [vmem:[#allocation3 + $0x38] sm:$0xff] %vm2930, %v1849
        %3980 = vst.msk [vmem:[#allocation3 + $0x40] sm:$0xff] %vm2930, %v1850
        %3981 = vst.msk [vmem:[#allocation3 + $0x48] sm:$0xff] %vm2930, %v1851
        %3982 = vst.msk [vmem:[#allocation3 + $0x50] sm:$0xff] %vm2930, %v1852
        %3983 = vst.msk [vmem:[#allocation3 + $0x58] sm:$0xff] %vm2930, %v1853
        %3984 = vst.msk [vmem:[#allocation3 + $0x60] sm:$0xff] %vm2930, %v1854
        %3985 = vst.msk [vmem:[#allocation3 + $0x68] sm:$0xff] %vm2930, %v1855
        %3986 = vst.msk [vmem:[#allocation3 + $0x70] sm:$0xff] %vm2930, %v1856
        %3987 = vst.msk [vmem:[#allocation3 + $0x78] sm:$0xff] %vm2930, %v1857
        %3988 = vst.msk [vmem:[#allocation3 + $0x80] sm:$0xff] %vm2930, %v1858
        %3989 = vst.msk [vmem:[#allocation3 + $0x88] sm:$0xff] %vm2930, %v1859
        %3990 = vst.msk [vmem:[#allocation3 + $0x90] sm:$0xff] %vm2930, %v1860
        %3991 = vst.msk [vmem:[#allocation3 + $0x98] sm:$0xff] %vm2930, %v1861
        %3992 = vst.msk [vmem:[#allocation3 + $0xa0] sm:$0xff] %vm2930, %v1862
        %3993 = vst.msk [vmem:[#allocation3 + $0xa8] sm:$0xff] %vm2930, %v1863
        %3994 = vst.msk [vmem:[#allocation3 + $0xb0] sm:$0xff] %vm2930, %v1864
        %3995 = vst.msk [vmem:[#allocation3 + $0xb8] sm:$0xff] %vm2930, %v1865
        %3996 = vst.msk [vmem:[#allocation3 + $0xc0] sm:$0xff] %vm2930, %v1866
        %3997 = vst.msk [vmem:[#allocation3 + $0xc8] sm:$0xff] %vm2930, %v1867
        %3998 = vst.msk [vmem:[#allocation3 + $0xd0] sm:$0xff] %vm2930, %v1868
        %3999 = vst.msk [vmem:[#allocation3 + $0xd8] sm:$0xff] %vm2930, %v1869
        %4000 = vst.msk [vmem:[#allocation3 + $0xe0] sm:$0xff] %vm2930, %v1870
        %4001 = vst.msk [vmem:[#allocation3 + $0xe8] sm:$0xff] %vm2930, %v1871
        %4002 = vst.msk [vmem:[#allocation3 + $0xf0] sm:$0xff] %vm2930, %v1872
        %4003 = vst.msk [vmem:[#allocation3 + $0xf8] sm:$0xff] %vm2930, %v1873
        %4004 = vst.msk [vmem:[#allocation3 + $0x100] sm:$0xff] %vm2930, %v1874
        %4005 = vst.msk [vmem:[#allocation3 + $0x108] sm:$0xff] %vm2930, %v1875
        %4006 = vst.msk [vmem:[#allocation3 + $0x110] sm:$0xff] %vm2930, %v1876
        %4007 = vst.msk [vmem:[#allocation3 + $0x118] sm:$0xff] %vm2930, %v1877
        %4008 = vst.msk [vmem:[#allocation3 + $0x120] sm:$0xff] %vm2930, %v1878
        %4009 = vst.msk [vmem:[#allocation3 + $0x128] sm:$0xff] %vm2930, %v1879
        %4010 = vst.msk [vmem:[#allocation3 + $0x130] sm:$0xff] %vm2930, %v1880
        %4011 = vst.msk [vmem:[#allocation3 + $0x138] sm:$0xff] %vm2930, %v1881
        %4012 = vst.msk [vmem:[#allocation3 + $0x140] sm:$0xff] %vm2930, %v1882
        %4013 = vst.msk [vmem:[#allocation3 + $0x148] sm:$0xff] %vm2930, %v1883
        %4014 = vst.msk [vmem:[#allocation3 + $0x150] sm:$0xff] %vm2930, %v1884
        %4015 = vst.msk [vmem:[#allocation3 + $0x158] sm:$0xff] %vm2930, %v1885
        %4016 = vst.msk [vmem:[#allocation3 + $0x160] sm:$0xff] %vm2930, %v1886
        %4017 = vst.msk [vmem:[#allocation3 + $0x168] sm:$0xff] %vm2930, %v1887
        %4018 = vst.msk [vmem:[#allocation3 + $0x170] sm:$0xff] %vm2930, %v1888
        %4019 = vst.msk [vmem:[#allocation3 + $0x178] sm:$0xff] %vm2930, %v1889
        %4020 = vst.msk [vmem:[#allocation3 + $0x180] sm:$0xff] %vm2930, %v1890
        %4021 = vst.msk [vmem:[#allocation3 + $0x188] sm:$0xff] %vm2930, %v1891
        %4022 = vst.msk [vmem:[#allocation3 + $0x190] sm:$0xff] %vm2930, %v1892
        %4023 = vst.msk [vmem:[#allocation3 + $0x198] sm:$0xff] %vm2930, %v1893
        %4024 = vst.msk [vmem:[#allocation3 + $0x1a0] sm:$0xff] %vm2930, %v1894
        %4025 = vst.msk [vmem:[#allocation3 + $0x1a8] sm:$0xff] %vm2930, %v1895
        %4026 = vst.msk [vmem:[#allocation3 + $0x1b0] sm:$0xff] %vm2930, %v1896
        %4027 = vst.msk [vmem:[#allocation3 + $0x1b8] sm:$0xff] %vm2930, %v1897
        %4028 = vst.msk [vmem:[#allocation3 + $0x1c0] sm:$0xff] %vm2930, %v1898
        %4029 = vst.msk [vmem:[#allocation3 + $0x1c8] sm:$0xff] %vm2930, %v1899
        %4030 = vst.msk [vmem:[#allocation3 + $0x1d0] sm:$0xff] %vm2930, %v1900
        %4031 = vst.msk [vmem:[#allocation3 + $0x1d8] sm:$0xff] %vm2930, %v1901
        %4032 = vst.msk [vmem:[#allocation3 + $0x1e0] sm:$0xff] %vm2930, %v1902
        %4033 = vst.msk [vmem:[#allocation3 + $0x1e8] sm:$0xff] %vm2930, %v1903
        %4034 = vst.msk [vmem:[#allocation3 + $0x1f0] sm:$0xff] %vm2930, %v1904
        %4035 = vst.msk [vmem:[#allocation3 + $0x1f8] sm:$0xff] %vm2930, %v1905
        // Predicated region
        $region53: #{nonlocal_block_embedded_gaussian.3} parent=47 // pred_check
          %p4036 = pneg %p382
        $region54: #{nonlocal_block_embedded_gaussian.3} parent=47 // pred_check_branch
          %4038 = sbr.rel (%p4036) target = $region56
        $region55: #{nonlocal_block_embedded_gaussian.3} parent=47 // pred_region
          %v4039 = vld [vmem:[#allocation5] sm:$0xff]
          %v4040 = vld [vmem:[#allocation5 + $0x8] sm:$0xff]
          %v4041 = vld [vmem:[#allocation5 + $0x10] sm:$0xff]
          %v4042 = vld [vmem:[#allocation5 + $0x18] sm:$0xff]
          %v4043 = vld [vmem:[#allocation5 + $0x20] sm:$0xff]
          %v4044 = vld [vmem:[#allocation5 + $0x28] sm:$0xff]
          %v4045 = vld [vmem:[#allocation5 + $0x30] sm:$0xff]
          %v4046 = vld [vmem:[#allocation5 + $0x38] sm:$0xff]
          %v4047 = vld [vmem:[#allocation5 + $0x40] sm:$0xff]
          %v4048 = vld [vmem:[#allocation5 + $0x48] sm:$0xff]
          %v4049 = vld [vmem:[#allocation5 + $0x50] sm:$0xff]
          %v4050 = vld [vmem:[#allocation5 + $0x58] sm:$0xff]
          %v4051 = vld [vmem:[#allocation5 + $0x60] sm:$0xff]
          %v4052 = vld [vmem:[#allocation5 + $0x68] sm:$0xff]
          %v4053 = vld [vmem:[#allocation5 + $0x70] sm:$0xff]
          %v4054 = vld [vmem:[#allocation5 + $0x78] sm:$0xff]
          %v4055 = vld [vmem:[#allocation5 + $0x80] sm:$0xff]
          %v4056 = vld [vmem:[#allocation5 + $0x88] sm:$0xff]
          %v4057 = vld [vmem:[#allocation5 + $0x90] sm:$0xff]
          %v4058 = vld [vmem:[#allocation5 + $0x98] sm:$0xff]
          %v4059 = vld [vmem:[#allocation5 + $0xa0] sm:$0xff]
          %v4060 = vld [vmem:[#allocation5 + $0xa8] sm:$0xff]
          %v4061 = vld [vmem:[#allocation5 + $0xb0] sm:$0xff]
          %v4062 = vld [vmem:[#allocation5 + $0xb8] sm:$0xff]
          %v4063 = vld [vmem:[#allocation5 + $0xc0] sm:$0xff]
          %v4064 = vld [vmem:[#allocation5 + $0xc8] sm:$0xff]
          %v4065 = vld [vmem:[#allocation5 + $0xd0] sm:$0xff]
          %v4066 = vld [vmem:[#allocation5 + $0xd8] sm:$0xff]
          %v4067 = vld [vmem:[#allocation5 + $0xe0] sm:$0xff]
          %v4068 = vld [vmem:[#allocation5 + $0xe8] sm:$0xff]
          %v4069 = vld [vmem:[#allocation5 + $0xf0] sm:$0xff]
          %v4070 = vld [vmem:[#allocation5 + $0xf8] sm:$0xff]
          %v4071 = vld [vmem:[#allocation5 + $0x100] sm:$0xff]
          %v4072 = vld [vmem:[#allocation5 + $0x108] sm:$0xff]
          %v4073 = vld [vmem:[#allocation5 + $0x110] sm:$0xff]
          %v4074 = vld [vmem:[#allocation5 + $0x118] sm:$0xff]
          %v4075 = vld [vmem:[#allocation5 + $0x120] sm:$0xff]
          %v4076 = vld [vmem:[#allocation5 + $0x128] sm:$0xff]
          %v4077 = vld [vmem:[#allocation5 + $0x130] sm:$0xff]
          %v4078 = vld [vmem:[#allocation5 + $0x138] sm:$0xff]
          %v4079 = vld [vmem:[#allocation5 + $0x140] sm:$0xff]
          %v4080 = vld [vmem:[#allocation5 + $0x148] sm:$0xff]
          %v4081 = vld [vmem:[#allocation5 + $0x150] sm:$0xff]
          %v4082 = vld [vmem:[#allocation5 + $0x158] sm:$0xff]
          %v4083 = vld [vmem:[#allocation5 + $0x160] sm:$0xff]
          %v4084 = vld [vmem:[#allocation5 + $0x168] sm:$0xff]
          %v4085 = vld [vmem:[#allocation5 + $0x170] sm:$0xff]
          %v4086 = vld [vmem:[#allocation5 + $0x178] sm:$0xff]
          %v4087 = vld [vmem:[#allocation5 + $0x180] sm:$0xff]
          %v4088 = vld [vmem:[#allocation5 + $0x188] sm:$0xff]
          %v4089 = vld [vmem:[#allocation5 + $0x190] sm:$0xff]
          %v4090 = vld [vmem:[#allocation5 + $0x198] sm:$0xff]
          %v4091 = vld [vmem:[#allocation5 + $0x1a0] sm:$0xff]
          %v4092 = vld [vmem:[#allocation5 + $0x1a8] sm:$0xff]
          %v4093 = vld [vmem:[#allocation5 + $0x1b0] sm:$0xff]
          %v4094 = vld [vmem:[#allocation5 + $0x1b8] sm:$0xff]
          %v4095 = vld [vmem:[#allocation5 + $0x1c0] sm:$0xff]
          %v4096 = vld [vmem:[#allocation5 + $0x1c8] sm:$0xff]
          %v4097 = vld [vmem:[#allocation5 + $0x1d0] sm:$0xff]
          %v4098 = vld [vmem:[#allocation5 + $0x1d8] sm:$0xff]
          %v4099 = vld [vmem:[#allocation5 + $0x1e0] sm:$0xff]
          %v4100 = vld [vmem:[#allocation5 + $0x1e8] sm:$0xff]
          %v4101 = vld [vmem:[#allocation5 + $0x1f0] sm:$0xff]
          %v4102 = vld [vmem:[#allocation5 + $0x1f8] sm:$0xff]
          %v4103 = vld [vmem:[#allocation4] sm:$0xff]
          %v4104 = vld [vmem:[#allocation4 + $0x8] sm:$0xff]
          %v4105 = vld [vmem:[#allocation4 + $0x10] sm:$0xff]
          %v4106 = vld [vmem:[#allocation4 + $0x18] sm:$0xff]
          %v4107 = vld [vmem:[#allocation4 + $0x20] sm:$0xff]
          %v4108 = vld [vmem:[#allocation4 + $0x28] sm:$0xff]
          %v4109 = vld [vmem:[#allocation4 + $0x30] sm:$0xff]
          %v4110 = vld [vmem:[#allocation4 + $0x38] sm:$0xff]
          %v4111 = vld [vmem:[#allocation4 + $0x40] sm:$0xff]
          %v4112 = vld [vmem:[#allocation4 + $0x48] sm:$0xff]
          %v4113 = vld [vmem:[#allocation4 + $0x50] sm:$0xff]
          %v4114 = vld [vmem:[#allocation4 + $0x58] sm:$0xff]
          %v4115 = vld [vmem:[#allocation4 + $0x60] sm:$0xff]
          %v4116 = vld [vmem:[#allocation4 + $0x68] sm:$0xff]
          %v4117 = vld [vmem:[#allocation4 + $0x70] sm:$0xff]
          %v4118 = vld [vmem:[#allocation4 + $0x78] sm:$0xff]
          %v4119 = vld [vmem:[#allocation4 + $0x80] sm:$0xff]
          %v4120 = vld [vmem:[#allocation4 + $0x88] sm:$0xff]
          %v4121 = vld [vmem:[#allocation4 + $0x90] sm:$0xff]
          %v4122 = vld [vmem:[#allocation4 + $0x98] sm:$0xff]
          %v4123 = vld [vmem:[#allocation4 + $0xa0] sm:$0xff]
          %v4124 = vld [vmem:[#allocation4 + $0xa8] sm:$0xff]
          %v4125 = vld [vmem:[#allocation4 + $0xb0] sm:$0xff]
          %v4126 = vld [vmem:[#allocation4 + $0xb8] sm:$0xff]
          %v4127 = vld [vmem:[#allocation4 + $0xc0] sm:$0xff]
          %v4128 = vld [vmem:[#allocation4 + $0xc8] sm:$0xff]
          %v4129 = vld [vmem:[#allocation4 + $0xd0] sm:$0xff]
          %v4130 = vld [vmem:[#allocation4 + $0xd8] sm:$0xff]
          %v4131 = vld [vmem:[#allocation4 + $0xe0] sm:$0xff]
          %v4132 = vld [vmem:[#allocation4 + $0xe8] sm:$0xff]
          %v4133 = vld [vmem:[#allocation4 + $0xf0] sm:$0xff]
          %v4134 = vld [vmem:[#allocation4 + $0xf8] sm:$0xff]
          %v4135 = vld [vmem:[#allocation4 + $0x100] sm:$0xff]
          %v4136 = vld [vmem:[#allocation4 + $0x108] sm:$0xff]
          %v4137 = vld [vmem:[#allocation4 + $0x110] sm:$0xff]
          %v4138 = vld [vmem:[#allocation4 + $0x118] sm:$0xff]
          %v4139 = vld [vmem:[#allocation4 + $0x120] sm:$0xff]
          %v4140 = vld [vmem:[#allocation4 + $0x128] sm:$0xff]
          %v4141 = vld [vmem:[#allocation4 + $0x130] sm:$0xff]
          %v4142 = vld [vmem:[#allocation4 + $0x138] sm:$0xff]
          %v4143 = vld [vmem:[#allocation4 + $0x140] sm:$0xff]
          %v4144 = vld [vmem:[#allocation4 + $0x148] sm:$0xff]
          %v4145 = vld [vmem:[#allocation4 + $0x150] sm:$0xff]
          %v4146 = vld [vmem:[#allocation4 + $0x158] sm:$0xff]
          %v4147 = vld [vmem:[#allocation4 + $0x160] sm:$0xff]
          %v4148 = vld [vmem:[#allocation4 + $0x168] sm:$0xff]
          %v4149 = vld [vmem:[#allocation4 + $0x170] sm:$0xff]
          %v4150 = vld [vmem:[#allocation4 + $0x178] sm:$0xff]
          %v4151 = vld [vmem:[#allocation4 + $0x180] sm:$0xff]
          %v4152 = vld [vmem:[#allocation4 + $0x188] sm:$0xff]
          %v4153 = vld [vmem:[#allocation4 + $0x190] sm:$0xff]
          %v4154 = vld [vmem:[#allocation4 + $0x198] sm:$0xff]
          %v4155 = vld [vmem:[#allocation4 + $0x1a0] sm:$0xff]
          %v4156 = vld [vmem:[#allocation4 + $0x1a8] sm:$0xff]
          %v4157 = vld [vmem:[#allocation4 + $0x1b0] sm:$0xff]
          %v4158 = vld [vmem:[#allocation4 + $0x1b8] sm:$0xff]
          %v4159 = vld [vmem:[#allocation4 + $0x1c0] sm:$0xff]
          %v4160 = vld [vmem:[#allocation4 + $0x1c8] sm:$0xff]
          %v4161 = vld [vmem:[#allocation4 + $0x1d0] sm:$0xff]
          %v4162 = vld [vmem:[#allocation4 + $0x1d8] sm:$0xff]
          %v4163 = vld [vmem:[#allocation4 + $0x1e0] sm:$0xff]
          %v4164 = vld [vmem:[#allocation4 + $0x1e8] sm:$0xff]
          %v4165 = vld [vmem:[#allocation4 + $0x1f0] sm:$0xff]
          %v4166 = vld [vmem:[#allocation4 + $0x1f8] sm:$0xff]
          %v4167 = vrcp.pop %v4103
          %v4168 = vrcp.pop %v4104
          %v4169 = vrcp.pop %v4105
          %v4170 = vrcp.pop %v4106
          %v4171 = vrcp.pop %v4107
          %v4172 = vrcp.pop %v4108
          %v4173 = vrcp.pop %v4109
          %v4174 = vrcp.pop %v4110
          %v4175 = vrcp.pop %v4111
          %v4176 = vrcp.pop %v4112
          %v4177 = vrcp.pop %v4113
          %v4178 = vrcp.pop %v4114
          %v4179 = vrcp.pop %v4115
          %v4180 = vrcp.pop %v4116
          %v4181 = vrcp.pop %v4117
          %v4182 = vrcp.pop %v4118
          %v4183 = vrcp.pop %v4119
          %v4184 = vrcp.pop %v4120
          %v4185 = vrcp.pop %v4121
          %v4186 = vrcp.pop %v4122
          %v4187 = vrcp.pop %v4123
          %v4188 = vrcp.pop %v4124
          %v4189 = vrcp.pop %v4125
          %v4190 = vrcp.pop %v4126
          %v4191 = vrcp.pop %v4127
          %v4192 = vrcp.pop %v4128
          %v4193 = vrcp.pop %v4129
          %v4194 = vrcp.pop %v4130
          %v4195 = vrcp.pop %v4131
          %v4196 = vrcp.pop %v4132
          %v4197 = vrcp.pop %v4133
          %v4198 = vrcp.pop %v4134
          %v4199 = vrcp.pop %v4135
          %v4200 = vrcp.pop %v4136
          %v4201 = vrcp.pop %v4137
          %v4202 = vrcp.pop %v4138
          %v4203 = vrcp.pop %v4139
          %v4204 = vrcp.pop %v4140
          %v4205 = vrcp.pop %v4141
          %v4206 = vrcp.pop %v4142
          %v4207 = vrcp.pop %v4143
          %v4208 = vrcp.pop %v4144
          %v4209 = vrcp.pop %v4145
          %v4210 = vrcp.pop %v4146
          %v4211 = vrcp.pop %v4147
          %v4212 = vrcp.pop %v4148
          %v4213 = vrcp.pop %v4149
          %v4214 = vrcp.pop %v4150
          %v4215 = vrcp.pop %v4151
          %v4216 = vrcp.pop %v4152
          %v4217 = vrcp.pop %v4153
          %v4218 = vrcp.pop %v4154
          %v4219 = vrcp.pop %v4155
          %v4220 = vrcp.pop %v4156
          %v4221 = vrcp.pop %v4157
          %v4222 = vrcp.pop %v4158
          %v4223 = vrcp.pop %v4159
          %v4224 = vrcp.pop %v4160
          %v4225 = vrcp.pop %v4161
          %v4226 = vrcp.pop %v4162
          %v4227 = vrcp.pop %v4163
          %v4228 = vrcp.pop %v4164
          %v4229 = vrcp.pop %v4165
          %v4230 = vrcp.pop %v4166
          %4232 = vset.pattern.permute.xlu0 0
          %4233 = vperm.xlu0 %4232, %v4167
          %v4234 = vpop.permute.xlu0 %4233
          %4237 = vset.pattern.permute.xlu0 0
          %4238 = vperm.xlu0 %4237, %v4168
          %v4239 = vpop.permute.xlu0 %4238
          %4242 = vset.pattern.permute.xlu0 0
          %4243 = vperm.xlu0 %4242, %v4169
          %v4244 = vpop.permute.xlu0 %4243
          %4247 = vset.pattern.permute.xlu0 0
          %4248 = vperm.xlu0 %4247, %v4170
          %v4249 = vpop.permute.xlu0 %4248
          %4252 = vset.pattern.permute.xlu0 0
          %4253 = vperm.xlu0 %4252, %v4171
          %v4254 = vpop.permute.xlu0 %4253
          %4257 = vset.pattern.permute.xlu0 0
          %4258 = vperm.xlu0 %4257, %v4172
          %v4259 = vpop.permute.xlu0 %4258
          %4262 = vset.pattern.permute.xlu0 0
          %4263 = vperm.xlu0 %4262, %v4173
          %v4264 = vpop.permute.xlu0 %4263
          %4267 = vset.pattern.permute.xlu0 0
          %4268 = vperm.xlu0 %4267, %v4174
          %v4269 = vpop.permute.xlu0 %4268
          %4272 = vset.pattern.permute.xlu0 0
          %4273 = vperm.xlu0 %4272, %v4175
          %v4274 = vpop.permute.xlu0 %4273
          %4277 = vset.pattern.permute.xlu0 0
          %4278 = vperm.xlu0 %4277, %v4176
          %v4279 = vpop.permute.xlu0 %4278
          %4282 = vset.pattern.permute.xlu0 0
          %4283 = vperm.xlu0 %4282, %v4177
          %v4284 = vpop.permute.xlu0 %4283
          %4287 = vset.pattern.permute.xlu0 0
          %4288 = vperm.xlu0 %4287, %v4178
          %v4289 = vpop.permute.xlu0 %4288
          %4292 = vset.pattern.permute.xlu0 0
          %4293 = vperm.xlu0 %4292, %v4179
          %v4294 = vpop.permute.xlu0 %4293
          %4297 = vset.pattern.permute.xlu0 0
          %4298 = vperm.xlu0 %4297, %v4180
          %v4299 = vpop.permute.xlu0 %4298
          %4302 = vset.pattern.permute.xlu0 0
          %4303 = vperm.xlu0 %4302, %v4181
          %v4304 = vpop.permute.xlu0 %4303
          %4307 = vset.pattern.permute.xlu0 0
          %4308 = vperm.xlu0 %4307, %v4182
          %v4309 = vpop.permute.xlu0 %4308
          %4312 = vset.pattern.permute.xlu0 0
          %4313 = vperm.xlu0 %4312, %v4183
          %v4314 = vpop.permute.xlu0 %4313
          %4317 = vset.pattern.permute.xlu0 0
          %4318 = vperm.xlu0 %4317, %v4184
          %v4319 = vpop.permute.xlu0 %4318
          %4322 = vset.pattern.permute.xlu0 0
          %4323 = vperm.xlu0 %4322, %v4185
          %v4324 = vpop.permute.xlu0 %4323
          %4327 = vset.pattern.permute.xlu0 0
          %4328 = vperm.xlu0 %4327, %v4186
          %v4329 = vpop.permute.xlu0 %4328
          %4332 = vset.pattern.permute.xlu0 0
          %4333 = vperm.xlu0 %4332, %v4187
          %v4334 = vpop.permute.xlu0 %4333
          %4337 = vset.pattern.permute.xlu0 0
          %4338 = vperm.xlu0 %4337, %v4188
          %v4339 = vpop.permute.xlu0 %4338
          %4342 = vset.pattern.permute.xlu0 0
          %4343 = vperm.xlu0 %4342, %v4189
          %v4344 = vpop.permute.xlu0 %4343
          %4347 = vset.pattern.permute.xlu0 0
          %4348 = vperm.xlu0 %4347, %v4190
          %v4349 = vpop.permute.xlu0 %4348
          %4352 = vset.pattern.permute.xlu0 0
          %4353 = vperm.xlu0 %4352, %v4191
          %v4354 = vpop.permute.xlu0 %4353
          %4357 = vset.pattern.permute.xlu0 0
          %4358 = vperm.xlu0 %4357, %v4192
          %v4359 = vpop.permute.xlu0 %4358
          %4362 = vset.pattern.permute.xlu0 0
          %4363 = vperm.xlu0 %4362, %v4193
          %v4364 = vpop.permute.xlu0 %4363
          %4367 = vset.pattern.permute.xlu0 0
          %4368 = vperm.xlu0 %4367, %v4194
          %v4369 = vpop.permute.xlu0 %4368
          %4372 = vset.pattern.permute.xlu0 0
          %4373 = vperm.xlu0 %4372, %v4195
          %v4374 = vpop.permute.xlu0 %4373
          %4377 = vset.pattern.permute.xlu0 0
          %4378 = vperm.xlu0 %4377, %v4196
          %v4379 = vpop.permute.xlu0 %4378
          %4382 = vset.pattern.permute.xlu0 0
          %4383 = vperm.xlu0 %4382, %v4197
          %v4384 = vpop.permute.xlu0 %4383
          %4387 = vset.pattern.permute.xlu0 0
          %4388 = vperm.xlu0 %4387, %v4198
          %v4389 = vpop.permute.xlu0 %4388
          %4392 = vset.pattern.permute.xlu0 0
          %4393 = vperm.xlu0 %4392, %v4199
          %v4394 = vpop.permute.xlu0 %4393
          %4397 = vset.pattern.permute.xlu0 0
          %4398 = vperm.xlu0 %4397, %v4200
          %v4399 = vpop.permute.xlu0 %4398
          %4402 = vset.pattern.permute.xlu0 0
          %4403 = vperm.xlu0 %4402, %v4201
          %v4404 = vpop.permute.xlu0 %4403
          %4407 = vset.pattern.permute.xlu0 0
          %4408 = vperm.xlu0 %4407, %v4202
          %v4409 = vpop.permute.xlu0 %4408
          %4412 = vset.pattern.permute.xlu0 0
          %4413 = vperm.xlu0 %4412, %v4203
          %v4414 = vpop.permute.xlu0 %4413
          %4417 = vset.pattern.permute.xlu0 0
          %4418 = vperm.xlu0 %4417, %v4204
          %v4419 = vpop.permute.xlu0 %4418
          %4422 = vset.pattern.permute.xlu0 0
          %4423 = vperm.xlu0 %4422, %v4205
          %v4424 = vpop.permute.xlu0 %4423
          %4427 = vset.pattern.permute.xlu0 0
          %4428 = vperm.xlu0 %4427, %v4206
          %v4429 = vpop.permute.xlu0 %4428
          %4432 = vset.pattern.permute.xlu0 0
          %4433 = vperm.xlu0 %4432, %v4207
          %v4434 = vpop.permute.xlu0 %4433
          %4437 = vset.pattern.permute.xlu0 0
          %4438 = vperm.xlu0 %4437, %v4208
          %v4439 = vpop.permute.xlu0 %4438
          %4442 = vset.pattern.permute.xlu0 0
          %4443 = vperm.xlu0 %4442, %v4209
          %v4444 = vpop.permute.xlu0 %4443
          %4447 = vset.pattern.permute.xlu0 0
          %4448 = vperm.xlu0 %4447, %v4210
          %v4449 = vpop.permute.xlu0 %4448
          %4452 = vset.pattern.permute.xlu0 0
          %4453 = vperm.xlu0 %4452, %v4211
          %v4454 = vpop.permute.xlu0 %4453
          %4457 = vset.pattern.permute.xlu0 0
          %4458 = vperm.xlu0 %4457, %v4212
          %v4459 = vpop.permute.xlu0 %4458
          %4462 = vset.pattern.permute.xlu0 0
          %4463 = vperm.xlu0 %4462, %v4213
          %v4464 = vpop.permute.xlu0 %4463
          %4467 = vset.pattern.permute.xlu0 0
          %4468 = vperm.xlu0 %4467, %v4214
          %v4469 = vpop.permute.xlu0 %4468
          %4472 = vset.pattern.permute.xlu0 0
          %4473 = vperm.xlu0 %4472, %v4215
          %v4474 = vpop.permute.xlu0 %4473
          %4477 = vset.pattern.permute.xlu0 0
          %4478 = vperm.xlu0 %4477, %v4216
          %v4479 = vpop.permute.xlu0 %4478
          %4482 = vset.pattern.permute.xlu0 0
          %4483 = vperm.xlu0 %4482, %v4217
          %v4484 = vpop.permute.xlu0 %4483
          %4487 = vset.pattern.permute.xlu0 0
          %4488 = vperm.xlu0 %4487, %v4218
          %v4489 = vpop.permute.xlu0 %4488
          %4492 = vset.pattern.permute.xlu0 0
          %4493 = vperm.xlu0 %4492, %v4219
          %v4494 = vpop.permute.xlu0 %4493
          %4497 = vset.pattern.permute.xlu0 0
          %4498 = vperm.xlu0 %4497, %v4220
          %v4499 = vpop.permute.xlu0 %4498
          %4502 = vset.pattern.permute.xlu0 0
          %4503 = vperm.xlu0 %4502, %v4221
          %v4504 = vpop.permute.xlu0 %4503
          %4507 = vset.pattern.permute.xlu0 0
          %4508 = vperm.xlu0 %4507, %v4222
          %v4509 = vpop.permute.xlu0 %4508
          %4512 = vset.pattern.permute.xlu0 0
          %4513 = vperm.xlu0 %4512, %v4223
          %v4514 = vpop.permute.xlu0 %4513
          %4517 = vset.pattern.permute.xlu0 0
          %4518 = vperm.xlu0 %4517, %v4224
          %v4519 = vpop.permute.xlu0 %4518
          %4522 = vset.pattern.permute.xlu0 0
          %4523 = vperm.xlu0 %4522, %v4225
          %v4524 = vpop.permute.xlu0 %4523
          %4527 = vset.pattern.permute.xlu0 0
          %4528 = vperm.xlu0 %4527, %v4226
          %v4529 = vpop.permute.xlu0 %4528
          %4532 = vset.pattern.permute.xlu0 0
          %4533 = vperm.xlu0 %4532, %v4227
          %v4534 = vpop.permute.xlu0 %4533
          %4537 = vset.pattern.permute.xlu0 0
          %4538 = vperm.xlu0 %4537, %v4228
          %v4539 = vpop.permute.xlu0 %4538
          %4542 = vset.pattern.permute.xlu0 0
          %4543 = vperm.xlu0 %4542, %v4229
          %v4544 = vpop.permute.xlu0 %4543
          %4547 = vset.pattern.permute.xlu0 0
          %4548 = vperm.xlu0 %4547, %v4230
          %v4549 = vpop.permute.xlu0 %4548
          %v4551 = vmul.f32 %v4039, %v4234
          %v4552 = vmul.f32 %v4040, %v4239
          %v4553 = vmul.f32 %v4041, %v4244
          %v4554 = vmul.f32 %v4042, %v4249
          %v4555 = vmul.f32 %v4043, %v4254
          %v4556 = vmul.f32 %v4044, %v4259
          %v4557 = vmul.f32 %v4045, %v4264
          %v4558 = vmul.f32 %v4046, %v4269
          %v4559 = vmul.f32 %v4047, %v4274
          %v4560 = vmul.f32 %v4048, %v4279
          %v4561 = vmul.f32 %v4049, %v4284
          %v4562 = vmul.f32 %v4050, %v4289
          %v4563 = vmul.f32 %v4051, %v4294
          %v4564 = vmul.f32 %v4052, %v4299
          %v4565 = vmul.f32 %v4053, %v4304
          %v4566 = vmul.f32 %v4054, %v4309
          %v4567 = vmul.f32 %v4055, %v4314
          %v4568 = vmul.f32 %v4056, %v4319
          %v4569 = vmul.f32 %v4057, %v4324
          %v4570 = vmul.f32 %v4058, %v4329
          %v4571 = vmul.f32 %v4059, %v4334
          %v4572 = vmul.f32 %v4060, %v4339
          %v4573 = vmul.f32 %v4061, %v4344
          %v4574 = vmul.f32 %v4062, %v4349
          %v4575 = vmul.f32 %v4063, %v4354
          %v4576 = vmul.f32 %v4064, %v4359
          %v4577 = vmul.f32 %v4065, %v4364
          %v4578 = vmul.f32 %v4066, %v4369
          %v4579 = vmul.f32 %v4067, %v4374
          %v4580 = vmul.f32 %v4068, %v4379
          %v4581 = vmul.f32 %v4069, %v4384
          %v4582 = vmul.f32 %v4070, %v4389
          %v4583 = vmul.f32 %v4071, %v4394
          %v4584 = vmul.f32 %v4072, %v4399
          %v4585 = vmul.f32 %v4073, %v4404
          %v4586 = vmul.f32 %v4074, %v4409
          %v4587 = vmul.f32 %v4075, %v4414
          %v4588 = vmul.f32 %v4076, %v4419
          %v4589 = vmul.f32 %v4077, %v4424
          %v4590 = vmul.f32 %v4078, %v4429
          %v4591 = vmul.f32 %v4079, %v4434
          %v4592 = vmul.f32 %v4080, %v4439
          %v4593 = vmul.f32 %v4081, %v4444
          %v4594 = vmul.f32 %v4082, %v4449
          %v4595 = vmul.f32 %v4083, %v4454
          %v4596 = vmul.f32 %v4084, %v4459
          %v4597 = vmul.f32 %v4085, %v4464
          %v4598 = vmul.f32 %v4086, %v4469
          %v4599 = vmul.f32 %v4087, %v4474
          %v4600 = vmul.f32 %v4088, %v4479
          %v4601 = vmul.f32 %v4089, %v4484
          %v4602 = vmul.f32 %v4090, %v4489
          %v4603 = vmul.f32 %v4091, %v4494
          %v4604 = vmul.f32 %v4092, %v4499
          %v4605 = vmul.f32 %v4093, %v4504
          %v4606 = vmul.f32 %v4094, %v4509
          %v4607 = vmul.f32 %v4095, %v4514
          %v4608 = vmul.f32 %v4096, %v4519
          %v4609 = vmul.f32 %v4097, %v4524
          %v4610 = vmul.f32 %v4098, %v4529
          %v4611 = vmul.f32 %v4099, %v4534
          %v4612 = vmul.f32 %v4100, %v4539
          %v4613 = vmul.f32 %v4101, %v4544
          %v4614 = vmul.f32 %v4102, %v4549
          %v4615 = vld [vmem:[%s5] sm:$0xff]
          %v4616 = vld [vmem:[%s5 + $0x8] sm:$0xff]
          %v4617 = vld [vmem:[%s5 + $0x10] sm:$0xff]
          %v4618 = vld [vmem:[%s5 + $0x18] sm:$0xff]
          %v4619 = vld [vmem:[%s5 + $0x20] sm:$0xff]
          %v4620 = vld [vmem:[%s5 + $0x28] sm:$0xff]
          %v4621 = vld [vmem:[%s5 + $0x30] sm:$0xff]
          %v4622 = vld [vmem:[%s5 + $0x38] sm:$0xff]
          %v4623 = vld [vmem:[%s5 + $0x40] sm:$0xff]
          %v4624 = vld [vmem:[%s5 + $0x48] sm:$0xff]
          %v4625 = vld [vmem:[%s5 + $0x50] sm:$0xff]
          %v4626 = vld [vmem:[%s5 + $0x58] sm:$0xff]
          %v4627 = vld [vmem:[%s5 + $0x60] sm:$0xff]
          %v4628 = vld [vmem:[%s5 + $0x68] sm:$0xff]
          %v4629 = vld [vmem:[%s5 + $0x70] sm:$0xff]
          %v4630 = vld [vmem:[%s5 + $0x78] sm:$0xff]
          %v4631 = vld [vmem:[%s6] sm:$0x1]
          %v4633 = vlaneseq
          %v4634 = vshrl.u32 %v4633, 7
          %v4635 = vsub.s32 0, %v4634
          %v4636 = vrot.slane %v4631, %v4635
          %4638 = vmatprep.subr.mxu0 0.0
          %4639 = vmatpush1.msra.mxu0 %v4615
          %4640 = vmatprep.subr.mxu0 0.0
          %4641 = vmatpush1.msra.mxu0 %v4616
          %4642 = vmatprep.subr.mxu0 0.0
          %4643 = vmatpush1.msra.mxu0 %v4617
          %4644 = vmatprep.subr.mxu0 0.0
          %4645 = vmatpush1.msra.mxu0 %v4618
          %4646 = vmatprep.subr.mxu0 0.0
          %4647 = vmatpush1.msra.mxu0 %v4619
          %4648 = vmatprep.subr.mxu0 0.0
          %4649 = vmatpush1.msra.mxu0 %v4620
          %4650 = vmatprep.subr.mxu0 0.0
          %4651 = vmatpush1.msra.mxu0 %v4621
          %4652 = vmatprep.subr.mxu0 0.0
          %4653 = vmatpush1.msra.mxu0 %v4622
          %4654 = vmatprep.subr.mxu0 0.0
          %4655 = vmatpush1.msra.mxu0 %v4623
          %4656 = vmatprep.subr.mxu0 0.0
          %4657 = vmatpush1.msra.mxu0 %v4624
          %4658 = vmatprep.subr.mxu0 0.0
          %4659 = vmatpush1.msra.mxu0 %v4625
          %4660 = vmatprep.subr.mxu0 0.0
          %4661 = vmatpush1.msra.mxu0 %v4626
          %4662 = vmatprep.subr.mxu0 0.0
          %4663 = vmatpush1.msra.mxu0 %v4627
          %4664 = vmatprep.subr.mxu0 0.0
          %4665 = vmatpush1.msra.mxu0 %v4628
          %4666 = vmatprep.subr.mxu0 0.0
          %4667 = vmatpush1.msra.mxu0 %v4629
          %4668 = vmatprep.subr.mxu0 0.0
          %4669 = vmatpush1.msra.mxu0 %v4630
          %4670 = vmatprep.subr.mxu0 0.0
          %4671 = vmatpush1.msra.mxu0 0.0
          %4672 = vmatprep.subr.mxu0 0.0
          %4673 = vmatpush1.msra.mxu0 0.0
          %4674 = vmatprep.subr.mxu0 0.0
          %4675 = vmatpush1.msra.mxu0 0.0
          %4676 = vmatprep.subr.mxu0 0.0
          %4677 = vmatpush1.msra.mxu0 0.0
          %4678 = vmatprep.subr.mxu0 0.0
          %4679 = vmatpush1.msra.mxu0 0.0
          %4680 = vmatprep.subr.mxu0 0.0
          %4681 = vmatpush1.msra.mxu0 0.0
          %4682 = vmatprep.subr.mxu0 0.0
          %4683 = vmatpush1.msra.mxu0 0.0
          %4684 = vmatprep.subr.mxu0 0.0
          %4685 = vmatpush1.msra.mxu0 0.0
          %4686 = vmatprep.subr.mxu0 0.0
          %4687 = vmatpush1.msra.mxu0 0.0
          %4688 = vmatprep.subr.mxu0 0.0
          %4689 = vmatpush1.msra.mxu0 0.0
          %4690 = vmatprep.subr.mxu0 0.0
          %4691 = vmatpush1.msra.mxu0 0.0
          %4692 = vmatprep.subr.mxu0 0.0
          %4693 = vmatpush1.msra.mxu0 0.0
          %4694 = vmatprep.subr.mxu0 0.0
          %4695 = vmatpush1.msra.mxu0 0.0
          %4696 = vmatprep.subr.mxu0 0.0
          %4697 = vmatpush1.msra.mxu0 0.0
          %4698 = vmatprep.subr.mxu0 0.0
          %4699 = vmatpush1.msra.mxu0 0.0
          %4700 = vmatprep.subr.mxu0 0.0
          %4701 = vmatpush1.msra.mxu0 0.0
          %4702 = vmatprep.mubr.f32.mxu0 0.0
          %4703 = vmatmul.mubr.f32.gmra.mrb[0].mxu0 %v4551
          %v4704 = vpop.f32.mrb[0].mxu0
          %v4705 = vadd.f32 %v4636, %v4704
          %v4706 = vpop.f32.mrb[0].mxu0
          %4707 = vmatprep.mubr.f32.mxu0 0.0
          %4708 = vmatmul.mubr.f32.gmra.mrb[0].mxu0 %v4552
          %v4709 = vpop.f32.mrb[0].mxu0
          %v4710 = vadd.f32 %v4636, %v4709
          %v4711 = vpop.f32.mrb[0].mxu0
          %4712 = vmatprep.mubr.f32.mxu0 0.0
          %4713 = vmatmul.mubr.f32.gmra.mrb[0].mxu0 %v4553
          %v4714 = vpop.f32.mrb[0].mxu0
          %v4715 = vadd.f32 %v4636, %v4714
          %v4716 = vpop.f32.mrb[0].mxu0
          %4717 = vmatprep.mubr.f32.mxu0 0.0
          %4718 = vmatmul.mubr.f32.gmra.mrb[0].mxu0 %v4554
          %v4719 = vpop.f32.mrb[0].mxu0
          %v4720 = vadd.f32 %v4636, %v4719
          %v4721 = vpop.f32.mrb[0].mxu0
          %4722 = vmatprep.mubr.f32.mxu0 0.0
          %4723 = vmatmul.mubr.f32.gmra.mrb[0].mxu0 %v4555
          %v4724 = vpop.f32.mrb[0].mxu0
          %v4725 = vadd.f32 %v4636, %v4724
          %v4726 = vpop.f32.mrb[0].mxu0
          %4727 = vmatprep.mubr.f32.mxu0 0.0
          %4728 = vmatmul.mubr.f32.gmra.mrb[0].mxu0 %v4556
          %v4729 = vpop.f32.mrb[0].mxu0
          %v4730 = vadd.f32 %v4636, %v4729
          %v4731 = vpop.f32.mrb[0].mxu0
          %4732 = vmatprep.mubr.f32.mxu0 0.0
          %4733 = vmatmul.mubr.f32.gmra.mrb[0].mxu0 %v4557
          %v4734 = vpop.f32.mrb[0].mxu0
          %v4735 = vadd.f32 %v4636, %v4734
          %v4736 = vpop.f32.mrb[0].mxu0
          %4737 = vmatprep.mubr.f32.mxu0 0.0
          %4738 = vmatmul.mubr.f32.gmra.mrb[0].mxu0 %v4558
          %v4739 = vpop.f32.mrb[0].mxu0
          %v4740 = vadd.f32 %v4636, %v4739
          %v4741 = vpop.f32.mrb[0].mxu0
          %4742 = vmatprep.mubr.f32.mxu0 0.0
          %4743 = vmatmul.mubr.f32.gmra.mrb[0].mxu0 %v4559
          %v4744 = vpop.f32.mrb[0].mxu0
          %v4745 = vadd.f32 %v4636, %v4744
          %v4746 = vpop.f32.mrb[0].mxu0
          %4747 = vmatprep.mubr.f32.mxu0 0.0
          %4748 = vmatmul.mubr.f32.gmra.mrb[0].mxu0 %v4560
          %v4749 = vpop.f32.mrb[0].mxu0
          %v4750 = vadd.f32 %v4636, %v4749
          %v4751 = vpop.f32.mrb[0].mxu0
          %4752 = vmatprep.mubr.f32.mxu0 0.0
          %4753 = vmatmul.mubr.f32.gmra.mrb[0].mxu0 %v4561
          %v4754 = vpop.f32.mrb[0].mxu0
          %v4755 = vadd.f32 %v4636, %v4754
          %v4756 = vpop.f32.mrb[0].mxu0
          %4757 = vmatprep.mubr.f32.mxu0 0.0
          %4758 = vmatmul.mubr.f32.gmra.mrb[0].mxu0 %v4562
          %v4759 = vpop.f32.mrb[0].mxu0
          %v4760 = vadd.f32 %v4636, %v4759
          %v4761 = vpop.f32.mrb[0].mxu0
          %4762 = vmatprep.mubr.f32.mxu0 0.0
          %4763 = vmatmul.mubr.f32.gmra.mrb[0].mxu0 %v4563
          %v4764 = vpop.f32.mrb[0].mxu0
          %v4765 = vadd.f32 %v4636, %v4764
          %v4766 = vpop.f32.mrb[0].mxu0
          %4767 = vmatprep.mubr.f32.mxu0 0.0
          %4768 = vmatmul.mubr.f32.gmra.mrb[0].mxu0 %v4564
          %v4769 = vpop.f32.mrb[0].mxu0
          %v4770 = vadd.f32 %v4636, %v4769
          %v4771 = vpop.f32.mrb[0].mxu0
          %4772 = vmatprep.mubr.f32.mxu0 0.0
          %4773 = vmatmul.mubr.f32.gmra.mrb[0].mxu0 %v4565
          %v4774 = vpop.f32.mrb[0].mxu0
          %v4775 = vadd.f32 %v4636, %v4774
          %v4776 = vpop.f32.mrb[0].mxu0
          %4777 = vmatprep.mubr.f32.mxu0 0.0
          %4778 = vmatmul.mubr.f32.gmra.mrb[0].mxu0 %v4566
          %v4779 = vpop.f32.mrb[0].mxu0
          %v4780 = vadd.f32 %v4636, %v4779
          %v4781 = vpop.f32.mrb[0].mxu0
          %4782 = vmatprep.mubr.f32.mxu0 0.0
          %4783 = vmatmul.mubr.f32.gmra.mrb[0].mxu0 %v4567
          %v4784 = vpop.f32.mrb[0].mxu0
          %v4785 = vadd.f32 %v4636, %v4784
          %v4786 = vpop.f32.mrb[0].mxu0
          %4787 = vmatprep.mubr.f32.mxu0 0.0
          %4788 = vmatmul.mubr.f32.gmra.mrb[0].mxu0 %v4568
          %v4789 = vpop.f32.mrb[0].mxu0
          %v4790 = vadd.f32 %v4636, %v4789
          %v4791 = vpop.f32.mrb[0].mxu0
          %4792 = vmatprep.mubr.f32.mxu0 0.0
          %4793 = vmatmul.mubr.f32.gmra.mrb[0].mxu0 %v4569
          %v4794 = vpop.f32.mrb[0].mxu0
          %v4795 = vadd.f32 %v4636, %v4794
          %v4796 = vpop.f32.mrb[0].mxu0
          %4797 = vmatprep.mubr.f32.mxu0 0.0
          %4798 = vmatmul.mubr.f32.gmra.mrb[0].mxu0 %v4570
          %v4799 = vpop.f32.mrb[0].mxu0
          %v4800 = vadd.f32 %v4636, %v4799
          %v4801 = vpop.f32.mrb[0].mxu0
          %4802 = vmatprep.mubr.f32.mxu0 0.0
          %4803 = vmatmul.mubr.f32.gmra.mrb[0].mxu0 %v4571
          %v4804 = vpop.f32.mrb[0].mxu0
          %v4805 = vadd.f32 %v4636, %v4804
          %v4806 = vpop.f32.mrb[0].mxu0
          %4807 = vmatprep.mubr.f32.mxu0 0.0
          %4808 = vmatmul.mubr.f32.gmra.mrb[0].mxu0 %v4572
          %v4809 = vpop.f32.mrb[0].mxu0
          %v4810 = vadd.f32 %v4636, %v4809
          %v4811 = vpop.f32.mrb[0].mxu0
          %4812 = vmatprep.mubr.f32.mxu0 0.0
          %4813 = vmatmul.mubr.f32.gmra.mrb[0].mxu0 %v4573
          %v4814 = vpop.f32.mrb[0].mxu0
          %v4815 = vadd.f32 %v4636, %v4814
          %v4816 = vpop.f32.mrb[0].mxu0
          %4817 = vmatprep.mubr.f32.mxu0 0.0
          %4818 = vmatmul.mubr.f32.gmra.mrb[0].mxu0 %v4574
          %v4819 = vpop.f32.mrb[0].mxu0
          %v4820 = vadd.f32 %v4636, %v4819
          %v4821 = vpop.f32.mrb[0].mxu0
          %4822 = vmatprep.mubr.f32.mxu0 0.0
          %4823 = vmatmul.mubr.f32.gmra.mrb[0].mxu0 %v4575
          %v4824 = vpop.f32.mrb[0].mxu0
          %v4825 = vadd.f32 %v4636, %v4824
          %v4826 = vpop.f32.mrb[0].mxu0
          %4827 = vmatprep.mubr.f32.mxu0 0.0
          %4828 = vmatmul.mubr.f32.gmra.mrb[0].mxu0 %v4576
          %v4829 = vpop.f32.mrb[0].mxu0
          %v4830 = vadd.f32 %v4636, %v4829
          %v4831 = vpop.f32.mrb[0].mxu0
          %4832 = vmatprep.mubr.f32.mxu0 0.0
          %4833 = vmatmul.mubr.f32.gmra.mrb[0].mxu0 %v4577
          %v4834 = vpop.f32.mrb[0].mxu0
          %v4835 = vadd.f32 %v4636, %v4834
          %v4836 = vpop.f32.mrb[0].mxu0
          %4837 = vmatprep.mubr.f32.mxu0 0.0
          %4838 = vmatmul.mubr.f32.gmra.mrb[0].mxu0 %v4578
          %v4839 = vpop.f32.mrb[0].mxu0
          %v4840 = vadd.f32 %v4636, %v4839
          %v4841 = vpop.f32.mrb[0].mxu0
          %4842 = vmatprep.mubr.f32.mxu0 0.0
          %4843 = vmatmul.mubr.f32.gmra.mrb[0].mxu0 %v4579
          %v4844 = vpop.f32.mrb[0].mxu0
          %v4845 = vadd.f32 %v4636, %v4844
          %v4846 = vpop.f32.mrb[0].mxu0
          %4847 = vmatprep.mubr.f32.mxu0 0.0
          %4848 = vmatmul.mubr.f32.gmra.mrb[0].mxu0 %v4580
          %v4849 = vpop.f32.mrb[0].mxu0
          %v4850 = vadd.f32 %v4636, %v4849
          %v4851 = vpop.f32.mrb[0].mxu0
          %4852 = vmatprep.mubr.f32.mxu0 0.0
          %4853 = vmatmul.mubr.f32.gmra.mrb[0].mxu0 %v4581
          %v4854 = vpop.f32.mrb[0].mxu0
          %v4855 = vadd.f32 %v4636, %v4854
          %v4856 = vpop.f32.mrb[0].mxu0
          %4857 = vmatprep.mubr.f32.mxu0 0.0
          %4858 = vmatmul.mubr.f32.gmra.mrb[0].mxu0 %v4582
          %v4859 = vpop.f32.mrb[0].mxu0
          %v4860 = vadd.f32 %v4636, %v4859
          %v4861 = vpop.f32.mrb[0].mxu0
          %4862 = vmatprep.mubr.f32.mxu0 0.0
          %4863 = vmatmul.mubr.f32.gmra.mrb[0].mxu0 %v4583
          %v4864 = vpop.f32.mrb[0].mxu0
          %v4865 = vadd.f32 %v4636, %v4864
          %v4866 = vpop.f32.mrb[0].mxu0
          %4867 = vmatprep.mubr.f32.mxu0 0.0
          %4868 = vmatmul.mubr.f32.gmra.mrb[0].mxu0 %v4584
          %v4869 = vpop.f32.mrb[0].mxu0
          %v4870 = vadd.f32 %v4636, %v4869
          %v4871 = vpop.f32.mrb[0].mxu0
          %4872 = vmatprep.mubr.f32.mxu0 0.0
          %4873 = vmatmul.mubr.f32.gmra.mrb[0].mxu0 %v4585
          %v4874 = vpop.f32.mrb[0].mxu0
          %v4875 = vadd.f32 %v4636, %v4874
          %v4876 = vpop.f32.mrb[0].mxu0
          %4877 = vmatprep.mubr.f32.mxu0 0.0
          %4878 = vmatmul.mubr.f32.gmra.mrb[0].mxu0 %v4586
          %v4879 = vpop.f32.mrb[0].mxu0
          %v4880 = vadd.f32 %v4636, %v4879
          %v4881 = vpop.f32.mrb[0].mxu0
          %4882 = vmatprep.mubr.f32.mxu0 0.0
          %4883 = vmatmul.mubr.f32.gmra.mrb[0].mxu0 %v4587
          %v4884 = vpop.f32.mrb[0].mxu0
          %v4885 = vadd.f32 %v4636, %v4884
          %v4886 = vpop.f32.mrb[0].mxu0
          %4887 = vmatprep.mubr.f32.mxu0 0.0
          %4888 = vmatmul.mubr.f32.gmra.mrb[0].mxu0 %v4588
          %v4889 = vpop.f32.mrb[0].mxu0
          %v4890 = vadd.f32 %v4636, %v4889
          %v4891 = vpop.f32.mrb[0].mxu0
          %4892 = vmatprep.mubr.f32.mxu0 0.0
          %4893 = vmatmul.mubr.f32.gmra.mrb[0].mxu0 %v4589
          %v4894 = vpop.f32.mrb[0].mxu0
          %v4895 = vadd.f32 %v4636, %v4894
          %v4896 = vpop.f32.mrb[0].mxu0
          %4897 = vmatprep.mubr.f32.mxu0 0.0
          %4898 = vmatmul.mubr.f32.gmra.mrb[0].mxu0 %v4590
          %v4899 = vpop.f32.mrb[0].mxu0
          %v4900 = vadd.f32 %v4636, %v4899
          %v4901 = vpop.f32.mrb[0].mxu0
          %4902 = vmatprep.mubr.f32.mxu0 0.0
          %4903 = vmatmul.mubr.f32.gmra.mrb[0].mxu0 %v4591
          %v4904 = vpop.f32.mrb[0].mxu0
          %v4905 = vadd.f32 %v4636, %v4904
          %v4906 = vpop.f32.mrb[0].mxu0
          %4907 = vmatprep.mubr.f32.mxu0 0.0
          %4908 = vmatmul.mubr.f32.gmra.mrb[0].mxu0 %v4592
          %v4909 = vpop.f32.mrb[0].mxu0
          %v4910 = vadd.f32 %v4636, %v4909
          %v4911 = vpop.f32.mrb[0].mxu0
          %4912 = vmatprep.mubr.f32.mxu0 0.0
          %4913 = vmatmul.mubr.f32.gmra.mrb[0].mxu0 %v4593
          %v4914 = vpop.f32.mrb[0].mxu0
          %v4915 = vadd.f32 %v4636, %v4914
          %v4916 = vpop.f32.mrb[0].mxu0
          %4917 = vmatprep.mubr.f32.mxu0 0.0
          %4918 = vmatmul.mubr.f32.gmra.mrb[0].mxu0 %v4594
          %v4919 = vpop.f32.mrb[0].mxu0
          %v4920 = vadd.f32 %v4636, %v4919
          %v4921 = vpop.f32.mrb[0].mxu0
          %4922 = vmatprep.mubr.f32.mxu0 0.0
          %4923 = vmatmul.mubr.f32.gmra.mrb[0].mxu0 %v4595
          %v4924 = vpop.f32.mrb[0].mxu0
          %v4925 = vadd.f32 %v4636, %v4924
          %v4926 = vpop.f32.mrb[0].mxu0
          %4927 = vmatprep.mubr.f32.mxu0 0.0
          %4928 = vmatmul.mubr.f32.gmra.mrb[0].mxu0 %v4596
          %v4929 = vpop.f32.mrb[0].mxu0
          %v4930 = vadd.f32 %v4636, %v4929
          %v4931 = vpop.f32.mrb[0].mxu0
          %4932 = vmatprep.mubr.f32.mxu0 0.0
          %4933 = vmatmul.mubr.f32.gmra.mrb[0].mxu0 %v4597
          %v4934 = vpop.f32.mrb[0].mxu0
          %v4935 = vadd.f32 %v4636, %v4934
          %v4936 = vpop.f32.mrb[0].mxu0
          %4937 = vmatprep.mubr.f32.mxu0 0.0
          %4938 = vmatmul.mubr.f32.gmra.mrb[0].mxu0 %v4598
          %v4939 = vpop.f32.mrb[0].mxu0
          %v4940 = vadd.f32 %v4636, %v4939
          %v4941 = vpop.f32.mrb[0].mxu0
          %4942 = vmatprep.mubr.f32.mxu0 0.0
          %4943 = vmatmul.mubr.f32.gmra.mrb[0].mxu0 %v4599
          %v4944 = vpop.f32.mrb[0].mxu0
          %v4945 = vadd.f32 %v4636, %v4944
          %v4946 = vpop.f32.mrb[0].mxu0
          %4947 = vmatprep.mubr.f32.mxu0 0.0
          %4948 = vmatmul.mubr.f32.gmra.mrb[0].mxu0 %v4600
          %v4949 = vpop.f32.mrb[0].mxu0
          %v4950 = vadd.f32 %v4636, %v4949
          %v4951 = vpop.f32.mrb[0].mxu0
          %4952 = vmatprep.mubr.f32.mxu0 0.0
          %4953 = vmatmul.mubr.f32.gmra.mrb[0].mxu0 %v4601
          %v4954 = vpop.f32.mrb[0].mxu0
          %v4955 = vadd.f32 %v4636, %v4954
          %v4956 = vpop.f32.mrb[0].mxu0
          %4957 = vmatprep.mubr.f32.mxu0 0.0
          %4958 = vmatmul.mubr.f32.gmra.mrb[0].mxu0 %v4602
          %v4959 = vpop.f32.mrb[0].mxu0
          %v4960 = vadd.f32 %v4636, %v4959
          %v4961 = vpop.f32.mrb[0].mxu0
          %4962 = vmatprep.mubr.f32.mxu0 0.0
          %4963 = vmatmul.mubr.f32.gmra.mrb[0].mxu0 %v4603
          %v4964 = vpop.f32.mrb[0].mxu0
          %v4965 = vadd.f32 %v4636, %v4964
          %v4966 = vpop.f32.mrb[0].mxu0
          %4967 = vmatprep.mubr.f32.mxu0 0.0
          %4968 = vmatmul.mubr.f32.gmra.mrb[0].mxu0 %v4604
          %v4969 = vpop.f32.mrb[0].mxu0
          %v4970 = vadd.f32 %v4636, %v4969
          %v4971 = vpop.f32.mrb[0].mxu0
          %4972 = vmatprep.mubr.f32.mxu0 0.0
          %4973 = vmatmul.mubr.f32.gmra.mrb[0].mxu0 %v4605
          %v4974 = vpop.f32.mrb[0].mxu0
          %v4975 = vadd.f32 %v4636, %v4974
          %v4976 = vpop.f32.mrb[0].mxu0
          %4977 = vmatprep.mubr.f32.mxu0 0.0
          %4978 = vmatmul.mubr.f32.gmra.mrb[0].mxu0 %v4606
          %v4979 = vpop.f32.mrb[0].mxu0
          %v4980 = vadd.f32 %v4636, %v4979
          %v4981 = vpop.f32.mrb[0].mxu0
          %4982 = vmatprep.mubr.f32.mxu0 0.0
          %4983 = vmatmul.mubr.f32.gmra.mrb[0].mxu0 %v4607
          %v4984 = vpop.f32.mrb[0].mxu0
          %v4985 = vadd.f32 %v4636, %v4984
          %v4986 = vpop.f32.mrb[0].mxu0
          %4987 = vmatprep.mubr.f32.mxu0 0.0
          %4988 = vmatmul.mubr.f32.gmra.mrb[0].mxu0 %v4608
          %v4989 = vpop.f32.mrb[0].mxu0
          %v4990 = vadd.f32 %v4636, %v4989
          %v4991 = vpop.f32.mrb[0].mxu0
          %4992 = vmatprep.mubr.f32.mxu0 0.0
          %4993 = vmatmul.mubr.f32.gmra.mrb[0].mxu0 %v4609
          %v4994 = vpop.f32.mrb[0].mxu0
          %v4995 = vadd.f32 %v4636, %v4994
          %v4996 = vpop.f32.mrb[0].mxu0
          %4997 = vmatprep.mubr.f32.mxu0 0.0
          %4998 = vmatmul.mubr.f32.gmra.mrb[0].mxu0 %v4610
          %v4999 = vpop.f32.mrb[0].mxu0
          %v5000 = vadd.f32 %v4636, %v4999
          %v5001 = vpop.f32.mrb[0].mxu0
          %5002 = vmatprep.mubr.f32.mxu0 0.0
          %5003 = vmatmul.mubr.f32.gmra.mrb[0].mxu0 %v4611
          %v5004 = vpop.f32.mrb[0].mxu0
          %v5005 = vadd.f32 %v4636, %v5004
          %v5006 = vpop.f32.mrb[0].mxu0
          %5007 = vmatprep.mubr.f32.mxu0 0.0
          %5008 = vmatmul.mubr.f32.gmra.mrb[0].mxu0 %v4612
          %v5009 = vpop.f32.mrb[0].mxu0
          %v5010 = vadd.f32 %v4636, %v5009
          %v5011 = vpop.f32.mrb[0].mxu0
          %5012 = vmatprep.mubr.f32.mxu0 0.0
          %5013 = vmatmul.mubr.f32.gmra.mrb[0].mxu0 %v4613
          %v5014 = vpop.f32.mrb[0].mxu0
          %v5015 = vadd.f32 %v4636, %v5014
          %v5016 = vpop.f32.mrb[0].mxu0
          %5017 = vmatprep.mubr.f32.mxu0 0.0
          %5018 = vmatmul.mubr.f32.gmra.mrb[0].mxu0 %v4614
          %v5019 = vpop.f32.mrb[0].mxu0
          %v5020 = vadd.f32 %v4636, %v5019
          %v5021 = vpop.f32.mrb[0].mxu0
          %5022 = vdwg.mxu0
          %v5023 = vld [vmem:[%s361] sm:$0xff]
          %v5024 = vld [vmem:[%s361 + $0x8] sm:$0xff]
          %v5025 = vld [vmem:[%s361 + $0x10] sm:$0xff]
          %v5026 = vld [vmem:[%s361 + $0x18] sm:$0xff]
          %v5027 = vld [vmem:[%s361 + $0x20] sm:$0xff]
          %v5028 = vld [vmem:[%s361 + $0x28] sm:$0xff]
          %v5029 = vld [vmem:[%s361 + $0x30] sm:$0xff]
          %v5030 = vld [vmem:[%s361 + $0x38] sm:$0xff]
          %v5031 = vld [vmem:[%s361 + $0x40] sm:$0xff]
          %v5032 = vld [vmem:[%s361 + $0x48] sm:$0xff]
          %v5033 = vld [vmem:[%s361 + $0x50] sm:$0xff]
          %v5034 = vld [vmem:[%s361 + $0x58] sm:$0xff]
          %v5035 = vld [vmem:[%s361 + $0x60] sm:$0xff]
          %v5036 = vld [vmem:[%s361 + $0x68] sm:$0xff]
          %v5037 = vld [vmem:[%s361 + $0x70] sm:$0xff]
          %v5038 = vld [vmem:[%s361 + $0x78] sm:$0xff]
          %v5039 = vld [vmem:[%s361 + $0x80] sm:$0xff]
          %v5040 = vld [vmem:[%s361 + $0x88] sm:$0xff]
          %v5041 = vld [vmem:[%s361 + $0x90] sm:$0xff]
          %v5042 = vld [vmem:[%s361 + $0x98] sm:$0xff]
          %v5043 = vld [vmem:[%s361 + $0xa0] sm:$0xff]
          %v5044 = vld [vmem:[%s361 + $0xa8] sm:$0xff]
          %v5045 = vld [vmem:[%s361 + $0xb0] sm:$0xff]
          %v5046 = vld [vmem:[%s361 + $0xb8] sm:$0xff]
          %v5047 = vld [vmem:[%s361 + $0xc0] sm:$0xff]
          %v5048 = vld [vmem:[%s361 + $0xc8] sm:$0xff]
          %v5049 = vld [vmem:[%s361 + $0xd0] sm:$0xff]
          %v5050 = vld [vmem:[%s361 + $0xd8] sm:$0xff]
          %v5051 = vld [vmem:[%s361 + $0xe0] sm:$0xff]
          %v5052 = vld [vmem:[%s361 + $0xe8] sm:$0xff]
          %v5053 = vld [vmem:[%s361 + $0xf0] sm:$0xff]
          %v5054 = vld [vmem:[%s361 + $0xf8] sm:$0xff]
          %v5055 = vld [vmem:[%s361 + $0x100] sm:$0xff]
          %v5056 = vld [vmem:[%s361 + $0x108] sm:$0xff]
          %v5057 = vld [vmem:[%s361 + $0x110] sm:$0xff]
          %v5058 = vld [vmem:[%s361 + $0x118] sm:$0xff]
          %v5059 = vld [vmem:[%s361 + $0x120] sm:$0xff]
          %v5060 = vld [vmem:[%s361 + $0x128] sm:$0xff]
          %v5061 = vld [vmem:[%s361 + $0x130] sm:$0xff]
          %v5062 = vld [vmem:[%s361 + $0x138] sm:$0xff]
          %v5063 = vld [vmem:[%s361 + $0x140] sm:$0xff]
          %v5064 = vld [vmem:[%s361 + $0x148] sm:$0xff]
          %v5065 = vld [vmem:[%s361 + $0x150] sm:$0xff]
          %v5066 = vld [vmem:[%s361 + $0x158] sm:$0xff]
          %v5067 = vld [vmem:[%s361 + $0x160] sm:$0xff]
          %v5068 = vld [vmem:[%s361 + $0x168] sm:$0xff]
          %v5069 = vld [vmem:[%s361 + $0x170] sm:$0xff]
          %v5070 = vld [vmem:[%s361 + $0x178] sm:$0xff]
          %v5071 = vld [vmem:[%s361 + $0x180] sm:$0xff]
          %v5072 = vld [vmem:[%s361 + $0x188] sm:$0xff]
          %v5073 = vld [vmem:[%s361 + $0x190] sm:$0xff]
          %v5074 = vld [vmem:[%s361 + $0x198] sm:$0xff]
          %v5075 = vld [vmem:[%s361 + $0x1a0] sm:$0xff]
          %v5076 = vld [vmem:[%s361 + $0x1a8] sm:$0xff]
          %v5077 = vld [vmem:[%s361 + $0x1b0] sm:$0xff]
          %v5078 = vld [vmem:[%s361 + $0x1b8] sm:$0xff]
          %v5079 = vld [vmem:[%s361 + $0x1c0] sm:$0xff]
          %v5080 = vld [vmem:[%s361 + $0x1c8] sm:$0xff]
          %v5081 = vld [vmem:[%s361 + $0x1d0] sm:$0xff]
          %v5082 = vld [vmem:[%s361 + $0x1d8] sm:$0xff]
          %v5083 = vld [vmem:[%s361 + $0x1e0] sm:$0xff]
          %v5084 = vld [vmem:[%s361 + $0x1e8] sm:$0xff]
          %v5085 = vld [vmem:[%s361 + $0x1f0] sm:$0xff]
          %v5086 = vld [vmem:[%s361 + $0x1f8] sm:$0xff]
          %v5087 = vadd.f32 %v4705, %v5023
          %v5088 = vadd.f32 %v4710, %v5024
          %v5089 = vadd.f32 %v4715, %v5025
          %v5090 = vadd.f32 %v4720, %v5026
          %v5091 = vadd.f32 %v4725, %v5027
          %v5092 = vadd.f32 %v4730, %v5028
          %v5093 = vadd.f32 %v4735, %v5029
          %v5094 = vadd.f32 %v4740, %v5030
          %v5095 = vadd.f32 %v4745, %v5031
          %v5096 = vadd.f32 %v4750, %v5032
          %v5097 = vadd.f32 %v4755, %v5033
          %v5098 = vadd.f32 %v4760, %v5034
          %v5099 = vadd.f32 %v4765, %v5035
          %v5100 = vadd.f32 %v4770, %v5036
          %v5101 = vadd.f32 %v4775, %v5037
          %v5102 = vadd.f32 %v4780, %v5038
          %v5103 = vadd.f32 %v4785, %v5039
          %v5104 = vadd.f32 %v4790, %v5040
          %v5105 = vadd.f32 %v4795, %v5041
          %v5106 = vadd.f32 %v4800, %v5042
          %v5107 = vadd.f32 %v4805, %v5043
          %v5108 = vadd.f32 %v4810, %v5044
          %v5109 = vadd.f32 %v4815, %v5045
          %v5110 = vadd.f32 %v4820, %v5046
          %v5111 = vadd.f32 %v4825, %v5047
          %v5112 = vadd.f32 %v4830, %v5048
          %v5113 = vadd.f32 %v4835, %v5049
          %v5114 = vadd.f32 %v4840, %v5050
          %v5115 = vadd.f32 %v4845, %v5051
          %v5116 = vadd.f32 %v4850, %v5052
          %v5117 = vadd.f32 %v4855, %v5053
          %v5118 = vadd.f32 %v4860, %v5054
          %v5119 = vadd.f32 %v4865, %v5055
          %v5120 = vadd.f32 %v4870, %v5056
          %v5121 = vadd.f32 %v4875, %v5057
          %v5122 = vadd.f32 %v4880, %v5058
          %v5123 = vadd.f32 %v4885, %v5059
          %v5124 = vadd.f32 %v4890, %v5060
          %v5125 = vadd.f32 %v4895, %v5061
          %v5126 = vadd.f32 %v4900, %v5062
          %v5127 = vadd.f32 %v4905, %v5063
          %v5128 = vadd.f32 %v4910, %v5064
          %v5129 = vadd.f32 %v4915, %v5065
          %v5130 = vadd.f32 %v4920, %v5066
          %v5131 = vadd.f32 %v4925, %v5067
          %v5132 = vadd.f32 %v4930, %v5068
          %v5133 = vadd.f32 %v4935, %v5069
          %v5134 = vadd.f32 %v4940, %v5070
          %v5135 = vadd.f32 %v4945, %v5071
          %v5136 = vadd.f32 %v4950, %v5072
          %v5137 = vadd.f32 %v4955, %v5073
          %v5138 = vadd.f32 %v4960, %v5074
          %v5139 = vadd.f32 %v4965, %v5075
          %v5140 = vadd.f32 %v4970, %v5076
          %v5141 = vadd.f32 %v4975, %v5077
          %v5142 = vadd.f32 %v4980, %v5078
          %v5143 = vadd.f32 %v4985, %v5079
          %v5144 = vadd.f32 %v4990, %v5080
          %v5145 = vadd.f32 %v4995, %v5081
          %v5146 = vadd.f32 %v5000, %v5082
          %v5147 = vadd.f32 %v5005, %v5083
          %v5148 = vadd.f32 %v5010, %v5084
          %v5149 = vadd.f32 %v5015, %v5085
          %v5150 = vadd.f32 %v5020, %v5086
          %5151 = vst [vmem:[%s352] sm:$0xff] %v5087
          %5152 = vst [vmem:[%s352 + $0x8] sm:$0xff] %v5088
          %5153 = vst [vmem:[%s352 + $0x10] sm:$0xff] %v5089
          %5154 = vst [vmem:[%s352 + $0x18] sm:$0xff] %v5090
          %5155 = vst [vmem:[%s352 + $0x20] sm:$0xff] %v5091
          %5156 = vst [vmem:[%s352 + $0x28] sm:$0xff] %v5092
          %5157 = vst [vmem:[%s352 + $0x30] sm:$0xff] %v5093
          %5158 = vst [vmem:[%s352 + $0x38] sm:$0xff] %v5094
          %5159 = vst [vmem:[%s352 + $0x40] sm:$0xff] %v5095
          %5160 = vst [vmem:[%s352 + $0x48] sm:$0xff] %v5096
          %5161 = vst [vmem:[%s352 + $0x50] sm:$0xff] %v5097
          %5162 = vst [vmem:[%s352 + $0x58] sm:$0xff] %v5098
          %5163 = vst [vmem:[%s352 + $0x60] sm:$0xff] %v5099
          %5164 = vst [vmem:[%s352 + $0x68] sm:$0xff] %v5100
          %5165 = vst [vmem:[%s352 + $0x70] sm:$0xff] %v5101
          %5166 = vst [vmem:[%s352 + $0x78] sm:$0xff] %v5102
          %5167 = vst [vmem:[%s352 + $0x80] sm:$0xff] %v5103
          %5168 = vst [vmem:[%s352 + $0x88] sm:$0xff] %v5104
          %5169 = vst [vmem:[%s352 + $0x90] sm:$0xff] %v5105
          %5170 = vst [vmem:[%s352 + $0x98] sm:$0xff] %v5106
          %5171 = vst [vmem:[%s352 + $0xa0] sm:$0xff] %v5107
          %5172 = vst [vmem:[%s352 + $0xa8] sm:$0xff] %v5108
          %5173 = vst [vmem:[%s352 + $0xb0] sm:$0xff] %v5109
          %5174 = vst [vmem:[%s352 + $0xb8] sm:$0xff] %v5110
          %5175 = vst [vmem:[%s352 + $0xc0] sm:$0xff] %v5111
          %5176 = vst [vmem:[%s352 + $0xc8] sm:$0xff] %v5112
          %5177 = vst [vmem:[%s352 + $0xd0] sm:$0xff] %v5113
          %5178 = vst [vmem:[%s352 + $0xd8] sm:$0xff] %v5114
          %5179 = vst [vmem:[%s352 + $0xe0] sm:$0xff] %v5115
          %5180 = vst [vmem:[%s352 + $0xe8] sm:$0xff] %v5116
          %5181 = vst [vmem:[%s352 + $0xf0] sm:$0xff] %v5117
          %5182 = vst [vmem:[%s352 + $0xf8] sm:$0xff] %v5118
          %5183 = vst [vmem:[%s352 + $0x100] sm:$0xff] %v5119
          %5184 = vst [vmem:[%s352 + $0x108] sm:$0xff] %v5120
          %5185 = vst [vmem:[%s352 + $0x110] sm:$0xff] %v5121
          %5186 = vst [vmem:[%s352 + $0x118] sm:$0xff] %v5122
          %5187 = vst [vmem:[%s352 + $0x120] sm:$0xff] %v5123
          %5188 = vst [vmem:[%s352 + $0x128] sm:$0xff] %v5124
          %5189 = vst [vmem:[%s352 + $0x130] sm:$0xff] %v5125
          %5190 = vst [vmem:[%s352 + $0x138] sm:$0xff] %v5126
          %5191 = vst [vmem:[%s352 + $0x140] sm:$0xff] %v5127
          %5192 = vst [vmem:[%s352 + $0x148] sm:$0xff] %v5128
          %5193 = vst [vmem:[%s352 + $0x150] sm:$0xff] %v5129
          %5194 = vst [vmem:[%s352 + $0x158] sm:$0xff] %v5130
          %5195 = vst [vmem:[%s352 + $0x160] sm:$0xff] %v5131
          %5196 = vst [vmem:[%s352 + $0x168] sm:$0xff] %v5132
          %5197 = vst [vmem:[%s352 + $0x170] sm:$0xff] %v5133
          %5198 = vst [vmem:[%s352 + $0x178] sm:$0xff] %v5134
          %5199 = vst [vmem:[%s352 + $0x180] sm:$0xff] %v5135
          %5200 = vst [vmem:[%s352 + $0x188] sm:$0xff] %v5136
          %5201 = vst [vmem:[%s352 + $0x190] sm:$0xff] %v5137
          %5202 = vst [vmem:[%s352 + $0x198] sm:$0xff] %v5138
          %5203 = vst [vmem:[%s352 + $0x1a0] sm:$0xff] %v5139
          %5204 = vst [vmem:[%s352 + $0x1a8] sm:$0xff] %v5140
          %5205 = vst [vmem:[%s352 + $0x1b0] sm:$0xff] %v5141
          %5206 = vst [vmem:[%s352 + $0x1b8] sm:$0xff] %v5142
          %5207 = vst [vmem:[%s352 + $0x1c0] sm:$0xff] %v5143
          %5208 = vst [vmem:[%s352 + $0x1c8] sm:$0xff] %v5144
          %5209 = vst [vmem:[%s352 + $0x1d0] sm:$0xff] %v5145
          %5210 = vst [vmem:[%s352 + $0x1d8] sm:$0xff] %v5146
          %5211 = vst [vmem:[%s352 + $0x1e0] sm:$0xff] %v5147
          %5212 = vst [vmem:[%s352 + $0x1e8] sm:$0xff] %v5148
          %5213 = vst [vmem:[%s352 + $0x1f0] sm:$0xff] %v5149
          %5214 = vst [vmem:[%s352 + $0x1f8] sm:$0xff] %v5150
        $region56: #{nonlocal_block_embedded_gaussian.3} parent=47 // pred_fallthru
          _
        %s5215 = sand.u32 %s218, 1
        %s5216 = scalar_lea.sflag [#allocation7], %s5215
        %s5217 = sand.u32 %s218, 1
        %s5218 = smul.addr %s5217, 512
        %s5219 = scalar_lea.vmem [#allocation6], %s5218
        // Predicated region
        $region57: #{nonlocal_block_embedded_gaussian.3} parent=47 // pred_check
          %p5220 = pneg %p228
        $region58: #{nonlocal_block_embedded_gaussian.3} parent=47 // pred_check_branch
          %5222 = sbr.rel (%p5220) target = $region60
        $region59: #{nonlocal_block_embedded_gaussian.3} parent=47 // pred_region
          %s5223 = smul.u32 64, %s27
          %s5225 = ssub.s32 8192, 8192
          %5226 = vsyncadd %s5216, %s5225
          %s5227 = smul.addr %s26, 128
          %s5228 = sadd.s32 %s5223, %s5227
          %s5229 = smul.addr %s5228, 128
          %s5230 = scalar_lea.hbm %s7, %s5229
          %s5231 = sshll.u32 %s5219, 4
          %s5232 = int_to_ptr.vmem [resolvable:$true] %s5231
          %5237 = dma.vmem_to_hbm [thread:$0]  %s5232, 8192, %s5230, %s5216, 128, 128, 8
        $region60: #{nonlocal_block_embedded_gaussian.3} parent=47 // pred_fallthru
          _
      $region48: #{nonlocal_block_embedded_gaussian.3} parent=5 // pred_fallthru
        _
      %p5238 = scmp.le.s32.totalorder 2, %s16
      // Predicated region
      $region61: #{nonlocal_block_embedded_gaussian.3} parent=5 // pred_check
        %p5239 = pneg %p5238
      $region62: #{nonlocal_block_embedded_gaussian.3} parent=5 // pred_check_branch
        %5241 = sbr.rel (%p5239) target = $region64
      $region63: #{nonlocal_block_embedded_gaussian.3} parent=5 // pred_region
        %s5242 = ssub.s32 %s16, 2
        // Predicated region
        $region65: #{nonlocal_block_embedded_gaussian.3} parent=63 // pred_check
          %p5243 = pneg %p234
        $region66: #{nonlocal_block_embedded_gaussian.3} parent=63 // pred_check_branch
          %5245 = sbr.rel (%p5243) target = $region68
        $region67: #{nonlocal_block_embedded_gaussian.3} parent=63 // pred_region
          %s5246 = sand.u32 %s219, 1
          %s5247 = scalar_lea.sflag [#allocation7], %s5246
          %s5248 = sand.u32 %s219, 1
          %s5249 = smul.addr %s5248, 512
          %s5250 = scalar_lea.vmem [#allocation6], %s5249
          %5251 = dma.done %s5247, 8192
        $region68: #{nonlocal_block_embedded_gaussian.3} parent=63 // pred_fallthru
          _
      $region64: #{nonlocal_block_embedded_gaussian.3} parent=5 // pred_fallthru
        _
    $region6: #{nonlocal_block_embedded_gaussian.3} parent=1 // loop_footer
      %s20 = sadd.s32 1, %s16
    $region7: #{nonlocal_block_embedded_gaussian.3} parent=1 // loop_footer_branch
      %15 = sbr.rel target = $region3
    $region8: #{nonlocal_block_embedded_gaussian.3} parent=1 // loop_exit
      _
    %5252 = vsyncpa [#allocation7], 1
    %s5253 = scalar_lea.sflag [#allocation7], 1
    %5254 = vsyncpa %s5253, 1

</llo_original>
